<compile_context>
chip_gen: v7x
topology: tpu7x:2x2x1
jax: 0.10.0
libtpu: 0.0.40
codegen_flags: <defaults>
</compile_context>

<pallas_src>
import numpy as np
import jax
import jax.numpy as jnp
from jax.experimental import pallas as pl
from jax.experimental.pallas import tpu as pltpu


def _envelope_kernel(
    x0_ref, pref_ref,
    w1_ref, w234_ref, wq_ref, w5q_ref, w5p_ref, w678_ref, wqs_ref, bias_ref,
    out_ref,
):
    """One batch tile of the full forward.

    Weights are VMEM-resident (constant index_map); activations stream per tile.
    Matmuls run bf16 on the MXU with f32 accumulation; bias/ReLU/max stay f32.
    Output is one lane-dense slab: [0:AR)=Q, [AR:AR+A)=q_scalar, [AR+A]=hq, rest zero.
    """
    f32, bf16 = jnp.float32, jnp.bfloat16

    H1 = w1_ref.shape[1]
    H2 = w5q_ref.shape[1]
    AR = wq_ref.shape[1]
    A = wqs_ref.shape[1]
    OUTW = out_ref.shape[1]

    relu = lambda t: jnp.maximum(t, 0.0)

    def lin(x, w, bias_row, width):
        # bf16 MXU matmul, f32 accumulation, f32 bias add (row slice of the bias slab).
        acc = jnp.dot(x.astype(bf16), w, preferred_element_type=f32)
        return acc + bias_ref[bias_row:bias_row + 1, 0:width]

    x = x0_ref[...]          # (bt, S+R) bf16 -- wrapper already did cat(state, pref)
    p = pref_ref[...]        # (bt, R)   bf16

    # trunk: affine1..affine4 with ReLU
    h = relu(lin(x, w1_ref[...], 0, H1))
    h = relu(lin(h, w234_ref[0], 1, H1))
    h = relu(lin(h, w234_ref[1], 2, H1))
    h = relu(lin(h, w234_ref[2], 3, H1))

    # Q head (no activation)
    Q = lin(h, wq_ref[...], 4, AR)                      # (bt, AR) f32

    # x = relu(affine5(cat(Q, pref)))  -- cat realized as a split matmul
    g = (jnp.dot(Q.astype(bf16), w5q_ref[...], preferred_element_type=f32)
         + jnp.dot(p, w5p_ref[...], preferred_element_type=f32)
         + bias_ref[5:6, 0:H2])
    g = relu(g)
    g = relu(lin(g, w678_ref[0], 6, H2))
    g = relu(lin(g, w678_ref[1], 7, H2))
    g = relu(lin(g, w678_ref[2], 8, H2))

    qs = lin(g, wqs_ref[...], 9, A)                     # (bt, A) f32
    hq = jnp.max(qs, axis=1, keepdims=True)             # .detach() is autograd-only -> no-op

    parts = [Q, qs, hq]
    pad_w = OUTW - (AR + A + 1)
    if pad_w > 0:
        parts.append(jnp.zeros((Q.shape[0], pad_w), f32))
    out_ref[...] = jnp.concatenate(parts, axis=1)       # single unmasked lane-dense store


def _init_linear(key, fan_in, fan_out):
    """Deterministic init mimicking PyTorch Linear default (uniform +-1/sqrt(fan_in)).
    Returned weight is (in, out)."""
    kw, kb = jax.random.split(key)
    bound = 1.0 / np.sqrt(fan_in)
    w = jax.random.uniform(kw, (fan_in, fan_out), jnp.float32, -bound, bound)
    b = jax.random.uniform(kb, (1, fan_out), jnp.float32, -bound, bound)
    return w, b


def make_params(state_size, action_size, reward_size, seed=0):
    """Raw f32 params in the module's logical layout (weights stored (in, out))."""
    S, A, R = state_size, action_size, reward_size
    H1 = (S + R) * 20
    AR = A * R
    H2 = (AR + R) * 20

    keys = jax.random.split(jax.random.PRNGKey(seed), 10)
    w1, b1 = _init_linear(keys[0], S + R, H1)
    w2, b2 = _init_linear(keys[1], H1, H1)
    w3, b3 = _init_linear(keys[2], H1, H1)
    w4, b4 = _init_linear(keys[3], H1, H1)
    wq, bq = _init_linear(keys[4], H1, AR)
    w5, b5 = _init_linear(keys[5], AR + R, H2)
    w6, b6 = _init_linear(keys[6], H2, H2)
    w7, b7 = _init_linear(keys[7], H2, H2)
    w8, b8 = _init_linear(keys[8], H2, H2)
    wqs, bqs = _init_linear(keys[9], H2, A)

    return dict(w1=w1, b1=b1, w2=w2, b2=b2, w3=w3, b3=b3, w4=w4, b4=b4,
                wq=wq, bq=bq, w5=w5, b5=b5, w6=w6, b6=b6, w7=w7, b7=b7,
                w8=w8, b8=b8, wqs=wqs, bqs=bqs)


def pack_params(raw, state_size, action_size, reward_size):
    """Kernel-layout params: bf16 stacked weight slabs + one f32 bias slab (10, Hmax).
    NOTE: bias-slab row order (b1,b2,b3,b4,bq,b5,b6,b7,b8,bqs) must stay in sync with
    the hard-coded row indices 0..9 inside _envelope_kernel."""
    A, R = action_size, reward_size
    AR = A * R
    H1 = raw["w1"].shape[1]
    H2 = raw["w5"].shape[1]
    bw = max(H1, H2, AR, A)
    bf16 = jnp.bfloat16

    def brow(b):
        b = b.reshape(1, -1).astype(jnp.float32)
        return jnp.pad(b, ((0, 0), (0, bw - b.shape[1])))

    bias = jnp.concatenate(
        [brow(raw[k]) for k in
         ("b1", "b2", "b3", "b4", "bq", "b5", "b6", "b7", "b8", "bqs")],
        axis=0)  # (10, bw) f32

    return dict(
        w1=raw["w1"].astype(bf16),
        w234=jnp.stack([raw["w2"], raw["w3"], raw["w4"]]).astype(bf16),
        wq=raw["wq"].astype(bf16),
        w5q=raw["w5"][:AR].astype(bf16),      # cat(Q, pref) split weights (wrapper glue)
        w5p=raw["w5"][AR:].astype(bf16),
        w678=jnp.stack([raw["w6"], raw["w7"], raw["w8"]]).astype(bf16),
        wqs=raw["wqs"].astype(bf16),
        bias=bias,
    )


def _round_up(x, m):
    return ((x + m - 1) // m) * m


def _batch_tile(B):
    """Chip-aware batch tile: multiple of 16 sublanes (bf16 packing), capped at the MXU
    row count (256 on v6e/v7x, 128 otherwise).  On v7x, split large single-tile batches
    so the parallel batch axis can shard across both TensorCores."""
    kind = ""
    try:
        kind = jax.devices()[0].device_kind.lower()
    except Exception:
        pass
    cap = 256 if ("v6" in kind or "v7" in kind) else 128
    bt = min(cap, _round_up(max(B, 1), 16))
    if "v7" in kind and B >= 32 and bt >= B:
        bt = _round_up((B + 1) // 2, 16)     # >=2 grid steps -> dual-TC sharding
    return bt


_SINGLE_BUFFER_WEIGHTS = None   # lazily probed: does this build accept pl.Buffered(1)?


def envelope_forward(state, preference, packed, action_size, reward_size):
    global _SINGLE_BUFFER_WEIGHTS

    B, S = state.shape
    A, R = action_size, reward_size
    AR = A * R
    H1 = packed["w1"].shape[1]
    H2 = packed["w5q"].shape[1]
    NB, BW = packed["bias"].shape
    OUTW = _round_up(AR + A + 1, 128)        # lane-dense packed output width

    # first torch.cat is free wrapper glue; inputs streamed as bf16 (halves input DMA)
    x0 = jnp.concatenate([state, preference], axis=1).astype(jnp.bfloat16)
    pref = preference.astype(jnp.bfloat16)

    bt = _batch_tile(B)
    b_pad = _round_up(B, bt)
    if b_pad != B:
        x0 = jnp.pad(x0, ((0, b_pad - B), (0, 0)))
        pref = jnp.pad(pref, ((0, b_pad - B), (0, 0)))
    grid = (b_pad // bt,)

    def build_call(single_buffer_weights):
        def batched(shape):
            return pl.BlockSpec(shape, lambda i: (i, 0))

        def resident(shape):
            nd = len(shape)
            idx = lambda i, _nd=nd: (0,) * _nd
            if single_buffer_weights:
                # constant index_map -> never re-fetched; 1 buffer halves VMEM footprint
                return pl.BlockSpec(shape, idx,
                                    pipeline_mode=pl.Buffered(buffer_count=1))
            return pl.BlockSpec(shape, idx)

        in_specs = [
            batched((bt, S + R)),            # x0 (bf16)
            batched((bt, R)),                # pref (bf16)
            resident((S + R, H1)),           # w1
            resident((3, H1, H1)),           # w234  (stacked affine2..4)
            resident((H1, AR)),              # wq
            resident((AR, H2)),              # w5q
            resident((R, H2)),               # w5p
            resident((3, H2, H2)),           # w678  (stacked affine6..8)
            resident((H2, A)),               # wqs
            resident((NB, BW)),              # bias slab (f32)
        ]
        out_specs = batched((bt, OUTW))      # one lane-dense output slab

        return pl.pallas_call(
            _envelope_kernel,
            out_shape=jax.ShapeDtypeStruct((b_pad, OUTW), jnp.float32),
            grid_spec=pltpu.PrefetchScalarGridSpec(
                num_scalar_prefetch=0,
                grid=grid,
                in_specs=in_specs,
                out_specs=out_specs,
            ),
            compiler_params=pltpu.CompilerParams(
                dimension_semantics=("parallel",),
                vmem_limit_bytes=32 << 20,   # safe on v5e/v6e (128 MiB) and v7x (64 MiB)
            ),
        )

    args = (x0, pref,
            packed["w1"], packed["w234"], packed["wq"],
            packed["w5q"], packed["w5p"], packed["w678"], packed["wqs"],
            packed["bias"])

    if _SINGLE_BUFFER_WEIGHTS is None:
        try:
            out = build_call(True)(*args)
            jax.block_until_ready(out)
            _SINGLE_BUFFER_WEIGHTS = True
        except Exception:
            # This jax build rejects Buffered(1); fall back to default double buffering.
            _SINGLE_BUFFER_WEIGHTS = False
            out = build_call(False)(*args)
    else:
        out = build_call(_SINGLE_BUFFER_WEIGHTS)(*args)

    Q = out[:B, 0:AR].reshape(B, A, R)       # matches torch Q.view(B, A, R)
    q_scalar = out[:B, AR:AR + A]
    hq = out[:B, AR + A]                     # matches torch max(dim=1)[0]
    return hq, Q, q_scalar


def _reference_forward(state, pref, raw, action_size, reward_size, use_bf16=True):
    """Pure-JAX reference mirroring the PyTorch forward.  With use_bf16=True it applies
    the same bf16 weight/activation quantization as the kernel (f32 accumulation,
    f32 bias/ReLU); with use_bf16=False it is the exact f32 module semantics."""
    bf16, f32 = jnp.bfloat16, jnp.float32
    relu = lambda t: jnp.maximum(t, 0.0)

    def lin(x, w, b):
        if use_bf16:
            return jnp.dot(x.astype(bf16), w.astype(bf16),
                           preferred_element_type=f32) + b
        return jnp.dot(x, w) + b

    x = jnp.concatenate([state, pref], axis=1)
    x = relu(lin(x, raw["w1"], raw["b1"]))
    x = relu(lin(x, raw["w2"], raw["b2"]))
    x = relu(lin(x, raw["w3"], raw["b3"]))
    x = relu(lin(x, raw["w4"], raw["b4"]))
    Qf = lin(x, raw["wq"], raw["bq"])
    inter = jnp.concatenate([Qf, pref], axis=1)
    x = relu(lin(inter, raw["w5"], raw["b5"]))
    x = relu(lin(x, raw["w6"], raw["b6"]))
    x = relu(lin(x, raw["w7"], raw["b7"]))
    x = relu(lin(x, raw["w8"], raw["b8"]))
    qs = lin(x, raw["wqs"], raw["bqs"])
    hq = jnp.max(qs, axis=1)
    Q = Qf.reshape(Qf.shape[0], action_size, reward_size)
    return hq, Q, qs


if __name__ == "__main__":
    # small, module-consistent shapes
    STATE_SIZE = 16
    ACTION_SIZE = 4
    REWARD_SIZE = 4
    BATCH = 2

    key = jax.random.PRNGKey(0)
    k_state, k_pref = jax.random.split(key)
    state = jax.random.normal(k_state, (BATCH, STATE_SIZE), jnp.float32)
    pref = jnp.abs(jax.random.normal(k_pref, (BATCH, REWARD_SIZE), jnp.float32))
    pref = pref / jnp.sum(pref, axis=1, keepdims=True)

    raw = make_params(STATE_SIZE, ACTION_SIZE, REWARD_SIZE, seed=0)
    packed = pack_params(raw, STATE_SIZE, ACTION_SIZE, REWARD_SIZE)

    hq, Q, q_scalar = envelope_forward(state, pref, packed, ACTION_SIZE, REWARD_SIZE)
    jax.block_until_ready((hq, Q, q_scalar))

    # strict check vs. a bf16-matched reference (same quantization as the kernel)
    hq_r, Q_r, qs_r = _reference_forward(state, pref, raw, ACTION_SIZE, REWARD_SIZE,
                                         use_bf16=True)
    np.testing.assert_allclose(np.asarray(hq), np.asarray(hq_r), rtol=2e-2, atol=1e-4)
    np.testing.assert_allclose(np.asarray(Q), np.asarray(Q_r), rtol=2e-2, atol=1e-4)
    np.testing.assert_allclose(np.asarray(q_scalar), np.asarray(qs_r), rtol=2e-2, atol=1e-4)

    # looser check vs. the exact f32 PyTorch-module semantics (bf16 rounding budget)
    hq_f, Q_f, qs_f = _reference_forward(state, pref, raw, ACTION_SIZE, REWARD_SIZE,
                                         use_bf16=False)
    np.testing.assert_allclose(np.asarray(hq), np.asarray(hq_f), rtol=5e-2, atol=5e-2)
    np.testing.assert_allclose(np.asarray(Q), np.asarray(Q_f), rtol=5e-2, atol=5e-2)
    np.testing.assert_allclose(np.asarray(q_scalar), np.asarray(qs_f), rtol=5e-2, atol=5e-2)

    assert hq.shape == (BATCH,)
    assert Q.shape == (BATCH, ACTION_SIZE, REWARD_SIZE)
    assert q_scalar.shape == (BATCH, ACTION_SIZE)

    print("KERNEL_OK")
</pallas_src>

<mosaic_0001>
module attributes {stable_mosaic.version = 11 : i64} {
  func.func @_envelope_kernel(%arg0: i32, %arg1: memref<16x20xbf16, #tpu.memory_space<vmem>>, %arg2: memref<16x4xbf16, #tpu.memory_space<vmem>>, %arg3: memref<20x400xbf16, #tpu.memory_space<vmem>>, %arg4: memref<3x400x400xbf16, #tpu.memory_space<vmem>>, %arg5: memref<400x16xbf16, #tpu.memory_space<vmem>>, %arg6: memref<16x400xbf16, #tpu.memory_space<vmem>>, %arg7: memref<4x400xbf16, #tpu.memory_space<vmem>>, %arg8: memref<3x400x400xbf16, #tpu.memory_space<vmem>>, %arg9: memref<400x4xbf16, #tpu.memory_space<vmem>>, %arg10: memref<10x400xf32, #tpu.memory_space<vmem>>, %arg11: memref<16x128xf32, #tpu.memory_space<vmem>>) attributes {dimension_semantics = [#tpu.dimension_semantics<parallel>], iteration_bounds = array<i64: 1>, scalar_prefetch = 0 : i64, scratch_operands = 0 : i64, tpu.core_type = #tpu.core_type<tc>, window_params = [{transform_indices = @transform_0, window_bounds = array<i64: 16, 20>}, {transform_indices = @transform_1, window_bounds = array<i64: 16, 4>}, {pipeline_mode = #tpu.pipeline_mode<synchronous>, transform_indices = @transform_2, window_bounds = array<i64: 20, 400>}, {pipeline_mode = #tpu.pipeline_mode<synchronous>, transform_indices = @transform_3, window_bounds = array<i64: 3, 400, 400>}, {pipeline_mode = #tpu.pipeline_mode<synchronous>, transform_indices = @transform_4, window_bounds = array<i64: 400, 16>}, {pipeline_mode = #tpu.pipeline_mode<synchronous>, transform_indices = @transform_5, window_bounds = array<i64: 16, 400>}, {pipeline_mode = #tpu.pipeline_mode<synchronous>, transform_indices = @transform_6, window_bounds = array<i64: 4, 400>}, {pipeline_mode = #tpu.pipeline_mode<synchronous>, transform_indices = @transform_7, window_bounds = array<i64: 3, 400, 400>}, {pipeline_mode = #tpu.pipeline_mode<synchronous>, transform_indices = @transform_8, window_bounds = array<i64: 400, 4>}, {pipeline_mode = #tpu.pipeline_mode<synchronous>, transform_indices = @transform_9, window_bounds = array<i64: 10, 400>}, {transform_indices = @transform_10, window_bounds = array<i64: 16, 128>}]} {
    %c0 = arith.constant 0 : index
    %c0_0 = arith.constant 0 : index
    %0 = vector.load %arg1[%c0, %c0_0] : memref<16x20xbf16, #tpu.memory_space<vmem>>, vector<16x20xbf16>
    %c0_1 = arith.constant 0 : index
    %c0_2 = arith.constant 0 : index
    %1 = vector.load %arg2[%c0_1, %c0_2] : memref<16x4xbf16, #tpu.memory_space<vmem>>, vector<16x4xbf16>
    %c0_3 = arith.constant 0 : index
    %c0_4 = arith.constant 0 : index
    %2 = vector.load %arg3[%c0_3, %c0_4] : memref<20x400xbf16, #tpu.memory_space<vmem>>, vector<20x400xbf16>
    %cst = arith.constant dense<0.000000e+00> : vector<16x400xf32>
    %3 = tpu.matmul %0, %2, %cst {dimension_numbers = #tpu.dot_dimension_numbers<[1], [0], [0], [1], [0, 0, 1, 1], [], []>} : vector<16x20xbf16>, vector<20x400xbf16>, vector<16x400xf32> -> vector<16x400xf32>
    %c0_5 = arith.constant 0 : index
    %c0_6 = arith.constant 0 : index
    %4 = vector.load %arg10[%c0_5, %c0_6] : memref<10x400xf32, #tpu.memory_space<vmem>>, vector<1x400xf32>
    %5 = vector.broadcast %4 : vector<1x400xf32> to vector<16x400xf32>
    %6 = arith.addf %3, %5 : vector<16x400xf32>
    %cst_7 = arith.constant 0.000000e+00 : f32
    %7 = vector.broadcast %cst_7 : f32 to vector<16x400xf32>
    %8 = arith.maximumf %6, %7 : vector<16x400xf32>
    %c0_8 = arith.constant 0 : index
    %c0_9 = arith.constant 0 : index
    %c0_10 = arith.constant 0 : index
    %9 = vector.load %arg4[%c0_8, %c0_9, %c0_10] : memref<3x400x400xbf16, #tpu.memory_space<vmem>>, vector<1x400x400xbf16>
    %10 = vector.shape_cast %9 : vector<1x400x400xbf16> to vector<400x400xbf16>
    %11 = arith.truncf %8 : vector<16x400xf32> to vector<16x400xbf16>
    %cst_11 = arith.constant dense<0.000000e+00> : vector<16x400xf32>
    %12 = tpu.matmul %11, %10, %cst_11 {dimension_numbers = #tpu.dot_dimension_numbers<[1], [0], [0], [1], [0, 0, 1, 1], [], []>} : vector<16x400xbf16>, vector<400x400xbf16>, vector<16x400xf32> -> vector<16x400xf32>
    %c1 = arith.constant 1 : index
    %c0_12 = arith.constant 0 : index
    %13 = vector.load %arg10[%c1, %c0_12] : memref<10x400xf32, #tpu.memory_space<vmem>>, vector<1x400xf32>
    %14 = vector.broadcast %13 : vector<1x400xf32> to vector<16x400xf32>
    %15 = arith.addf %12, %14 : vector<16x400xf32>
    %cst_13 = arith.constant 0.000000e+00 : f32
    %16 = vector.broadcast %cst_13 : f32 to vector<16x400xf32>
    %17 = arith.maximumf %15, %16 : vector<16x400xf32>
    %c1_14 = arith.constant 1 : index
    %c0_15 = arith.constant 0 : index
    %c0_16 = arith.constant 0 : index
    %18 = vector.load %arg4[%c1_14, %c0_15, %c0_16] : memref<3x400x400xbf16, #tpu.memory_space<vmem>>, vector<1x400x400xbf16>
    %19 = vector.shape_cast %18 : vector<1x400x400xbf16> to vector<400x400xbf16>
    %20 = arith.truncf %17 : vector<16x400xf32> to vector<16x400xbf16>
    %cst_17 = arith.constant dense<0.000000e+00> : vector<16x400xf32>
    %21 = tpu.matmul %20, %19, %cst_17 {dimension_numbers = #tpu.dot_dimension_numbers<[1], [0], [0], [1], [0, 0, 1, 1], [], []>} : vector<16x400xbf16>, vector<400x400xbf16>, vector<16x400xf32> -> vector<16x400xf32>
    %c2 = arith.constant 2 : index
    %c0_18 = arith.constant 0 : index
    %22 = vector.load %arg10[%c2, %c0_18] : memref<10x400xf32, #tpu.memory_space<vmem>>, vector<1x400xf32>
    %23 = vector.broadcast %22 : vector<1x400xf32> to vector<16x400xf32>
    %24 = arith.addf %21, %23 : vector<16x400xf32>
    %cst_19 = arith.constant 0.000000e+00 : f32
    %25 = vector.broadcast %cst_19 : f32 to vector<16x400xf32>
    %26 = arith.maximumf %24, %25 : vector<16x400xf32>
    %c2_20 = arith.constant 2 : index
    %c0_21 = arith.constant 0 : index
    %c0_22 = arith.constant 0 : index
    %27 = vector.load %arg4[%c2_20, %c0_21, %c0_22] : memref<3x400x400xbf16, #tpu.memory_space<vmem>>, vector<1x400x400xbf16>
    %28 = vector.shape_cast %27 : vector<1x400x400xbf16> to vector<400x400xbf16>
    %29 = arith.truncf %26 : vector<16x400xf32> to vector<16x400xbf16>
    %cst_23 = arith.constant dense<0.000000e+00> : vector<16x400xf32>
    %30 = tpu.matmul %29, %28, %cst_23 {dimension_numbers = #tpu.dot_dimension_numbers<[1], [0], [0], [1], [0, 0, 1, 1], [], []>} : vector<16x400xbf16>, vector<400x400xbf16>, vector<16x400xf32> -> vector<16x400xf32>
    %c3 = arith.constant 3 : index
    %c0_24 = arith.constant 0 : index
    %31 = vector.load %arg10[%c3, %c0_24] : memref<10x400xf32, #tpu.memory_space<vmem>>, vector<1x400xf32>
    %32 = vector.broadcast %31 : vector<1x400xf32> to vector<16x400xf32>
    %33 = arith.addf %30, %32 : vector<16x400xf32>
    %cst_25 = arith.constant 0.000000e+00 : f32
    %34 = vector.broadcast %cst_25 : f32 to vector<16x400xf32>
    %35 = arith.maximumf %33, %34 : vector<16x400xf32>
    %c0_26 = arith.constant 0 : index
    %c0_27 = arith.constant 0 : index
    %36 = vector.load %arg5[%c0_26, %c0_27] : memref<400x16xbf16, #tpu.memory_space<vmem>>, vector<400x16xbf16>
    %37 = arith.truncf %35 : vector<16x400xf32> to vector<16x400xbf16>
    %cst_28 = arith.constant dense<0.000000e+00> : vector<16x16xf32>
    %38 = tpu.matmul %37, %36, %cst_28 {dimension_numbers = #tpu.dot_dimension_numbers<[1], [0], [0], [1], [0, 0, 1, 1], [], []>} : vector<16x400xbf16>, vector<400x16xbf16>, vector<16x16xf32> -> vector<16x16xf32>
    %c4 = arith.constant 4 : index
    %c0_29 = arith.constant 0 : index
    %39 = vector.load %arg10[%c4, %c0_29] : memref<10x400xf32, #tpu.memory_space<vmem>>, vector<1x16xf32>
    %40 = vector.broadcast %39 : vector<1x16xf32> to vector<16x16xf32>
    %41 = arith.addf %38, %40 : vector<16x16xf32>
    %42 = arith.truncf %41 : vector<16x16xf32> to vector<16x16xbf16>
    %c0_30 = arith.constant 0 : index
    %c0_31 = arith.constant 0 : index
    %43 = vector.load %arg6[%c0_30, %c0_31] : memref<16x400xbf16, #tpu.memory_space<vmem>>, vector<16x400xbf16>
    %cst_32 = arith.constant dense<0.000000e+00> : vector<16x400xf32>
    %44 = tpu.matmul %42, %43, %cst_32 {dimension_numbers = #tpu.dot_dimension_numbers<[1], [0], [0], [1], [0, 0, 1, 1], [], []>} : vector<16x16xbf16>, vector<16x400xbf16>, vector<16x400xf32> -> vector<16x400xf32>
    %c0_33 = arith.constant 0 : index
    %c0_34 = arith.constant 0 : index
    %45 = vector.load %arg7[%c0_33, %c0_34] : memref<4x400xbf16, #tpu.memory_space<vmem>>, vector<4x400xbf16>
    %cst_35 = arith.constant dense<0.000000e+00> : vector<16x400xf32>
    %46 = tpu.matmul %1, %45, %cst_35 {dimension_numbers = #tpu.dot_dimension_numbers<[1], [0], [0], [1], [0, 0, 1, 1], [], []>} : vector<16x4xbf16>, vector<4x400xbf16>, vector<16x400xf32> -> vector<16x400xf32>
    %47 = arith.addf %44, %46 : vector<16x400xf32>
    %c5 = arith.constant 5 : index
    %c0_36 = arith.constant 0 : index
    %48 = vector.load %arg10[%c5, %c0_36] : memref<10x400xf32, #tpu.memory_space<vmem>>, vector<1x400xf32>
    %49 = vector.broadcast %48 : vector<1x400xf32> to vector<16x400xf32>
    %50 = arith.addf %47, %49 : vector<16x400xf32>
    %cst_37 = arith.constant 0.000000e+00 : f32
    %51 = vector.broadcast %cst_37 : f32 to vector<16x400xf32>
    %52 = arith.maximumf %50, %51 : vector<16x400xf32>
    %c0_38 = arith.constant 0 : index
    %c0_39 = arith.constant 0 : index
    %c0_40 = arith.constant 0 : index
    %53 = vector.load %arg8[%c0_38, %c0_39, %c0_40] : memref<3x400x400xbf16, #tpu.memory_space<vmem>>, vector<1x400x400xbf16>
    %54 = vector.shape_cast %53 : vector<1x400x400xbf16> to vector<400x400xbf16>
    %55 = arith.truncf %52 : vector<16x400xf32> to vector<16x400xbf16>
    %cst_41 = arith.constant dense<0.000000e+00> : vector<16x400xf32>
    %56 = tpu.matmul %55, %54, %cst_41 {dimension_numbers = #tpu.dot_dimension_numbers<[1], [0], [0], [1], [0, 0, 1, 1], [], []>} : vector<16x400xbf16>, vector<400x400xbf16>, vector<16x400xf32> -> vector<16x400xf32>
    %c6 = arith.constant 6 : index
    %c0_42 = arith.constant 0 : index
    %57 = vector.load %arg10[%c6, %c0_42] : memref<10x400xf32, #tpu.memory_space<vmem>>, vector<1x400xf32>
    %58 = vector.broadcast %57 : vector<1x400xf32> to vector<16x400xf32>
    %59 = arith.addf %56, %58 : vector<16x400xf32>
    %cst_43 = arith.constant 0.000000e+00 : f32
    %60 = vector.broadcast %cst_43 : f32 to vector<16x400xf32>
    %61 = arith.maximumf %59, %60 : vector<16x400xf32>
    %c1_44 = arith.constant 1 : index
    %c0_45 = arith.constant 0 : index
    %c0_46 = arith.constant 0 : index
    %62 = vector.load %arg8[%c1_44, %c0_45, %c0_46] : memref<3x400x400xbf16, #tpu.memory_space<vmem>>, vector<1x400x400xbf16>
    %63 = vector.shape_cast %62 : vector<1x400x400xbf16> to vector<400x400xbf16>
    %64 = arith.truncf %61 : vector<16x400xf32> to vector<16x400xbf16>
    %cst_47 = arith.constant dense<0.000000e+00> : vector<16x400xf32>
    %65 = tpu.matmul %64, %63, %cst_47 {dimension_numbers = #tpu.dot_dimension_numbers<[1], [0], [0], [1], [0, 0, 1, 1], [], []>} : vector<16x400xbf16>, vector<400x400xbf16>, vector<16x400xf32> -> vector<16x400xf32>
    %c7 = arith.constant 7 : index
    %c0_48 = arith.constant 0 : index
    %66 = vector.load %arg10[%c7, %c0_48] : memref<10x400xf32, #tpu.memory_space<vmem>>, vector<1x400xf32>
    %67 = vector.broadcast %66 : vector<1x400xf32> to vector<16x400xf32>
    %68 = arith.addf %65, %67 : vector<16x400xf32>
    %cst_49 = arith.constant 0.000000e+00 : f32
    %69 = vector.broadcast %cst_49 : f32 to vector<16x400xf32>
    %70 = arith.maximumf %68, %69 : vector<16x400xf32>
    %c2_50 = arith.constant 2 : index
    %c0_51 = arith.constant 0 : index
    %c0_52 = arith.constant 0 : index
    %71 = vector.load %arg8[%c2_50, %c0_51, %c0_52] : memref<3x400x400xbf16, #tpu.memory_space<vmem>>, vector<1x400x400xbf16>
    %72 = vector.shape_cast %71 : vector<1x400x400xbf16> to vector<400x400xbf16>
    %73 = arith.truncf %70 : vector<16x400xf32> to vector<16x400xbf16>
    %cst_53 = arith.constant dense<0.000000e+00> : vector<16x400xf32>
    %74 = tpu.matmul %73, %72, %cst_53 {dimension_numbers = #tpu.dot_dimension_numbers<[1], [0], [0], [1], [0, 0, 1, 1], [], []>} : vector<16x400xbf16>, vector<400x400xbf16>, vector<16x400xf32> -> vector<16x400xf32>
    %c8 = arith.constant 8 : index
    %c0_54 = arith.constant 0 : index
    %75 = vector.load %arg10[%c8, %c0_54] : memref<10x400xf32, #tpu.memory_space<vmem>>, vector<1x400xf32>
    %76 = vector.broadcast %75 : vector<1x400xf32> to vector<16x400xf32>
    %77 = arith.addf %74, %76 : vector<16x400xf32>
    %cst_55 = arith.constant 0.000000e+00 : f32
    %78 = vector.broadcast %cst_55 : f32 to vector<16x400xf32>
    %79 = arith.maximumf %77, %78 : vector<16x400xf32>
    %c0_56 = arith.constant 0 : index
    %c0_57 = arith.constant 0 : index
    %80 = vector.load %arg9[%c0_56, %c0_57] : memref<400x4xbf16, #tpu.memory_space<vmem>>, vector<400x4xbf16>
    %81 = arith.truncf %79 : vector<16x400xf32> to vector<16x400xbf16>
    %cst_58 = arith.constant dense<0.000000e+00> : vector<16x4xf32>
    %82 = tpu.matmul %81, %80, %cst_58 {dimension_numbers = #tpu.dot_dimension_numbers<[1], [0], [0], [1], [0, 0, 1, 1], [], []>} : vector<16x400xbf16>, vector<400x4xbf16>, vector<16x4xf32> -> vector<16x4xf32>
    %c9 = arith.constant 9 : index
    %c0_59 = arith.constant 0 : index
    %83 = vector.load %arg10[%c9, %c0_59] : memref<10x400xf32, #tpu.memory_space<vmem>>, vector<1x4xf32>
    %84 = vector.broadcast %83 : vector<1x4xf32> to vector<16x4xf32>
    %85 = arith.addf %82, %84 : vector<16x4xf32>
    %cst_60 = arith.constant dense<0xFF800000> : vector<16xf32>
    %86 = vector.multi_reduction <maximumf>, %85, %cst_60 [1] : vector<16x4xf32> to vector<16xf32>
    %87 = vector.shape_cast %86 : vector<16xf32> to vector<16x1xf32>
    %cst_61 = arith.constant 0.000000e+00 : f32
    %88 = vector.broadcast %cst_61 : f32 to vector<16x107xf32>
    %89 = tpu.concatenate %41, %85, %87, %88 in 1 : vector<16x16xf32>, vector<16x4xf32>, vector<16x1xf32>, vector<16x107xf32> -> vector<16x128xf32>
    %c0_62 = arith.constant 0 : index
    %c0_63 = arith.constant 0 : index
    %90 = vector.load %arg11[%c0_62, %c0_63] : memref<16x128xf32, #tpu.memory_space<vmem>>, vector<16x128xf32>
    tpu.vector_store %arg11[%c0_62, %c0_63], %89 {strides = array<i32>} : memref<16x128xf32, #tpu.memory_space<vmem>>, vector<16x128xf32>,
    return
  }
  func.func @transform_0(%arg0: i32) -> (i32, i32) {
    %c0_i32 = arith.constant 0 : i32
    %c0_i32_0 = arith.constant 0 : i32
    return %arg0, %c0_i32 : i32, i32
  }
  func.func @transform_1(%arg0: i32) -> (i32, i32) {
    %c0_i32 = arith.constant 0 : i32
    %c0_i32_0 = arith.constant 0 : i32
    return %arg0, %c0_i32 : i32, i32
  }
  func.func @transform_2(%arg0: i32) -> (i32, i32) {
    %c0_i32 = arith.constant 0 : i32
    %c0_i32_0 = arith.constant 0 : i32
    %c0_i32_1 = arith.constant 0 : i32
    return %c0_i32, %c0_i32_0 : i32, i32
  }
  func.func @transform_3(%arg0: i32) -> (i32, i32, i32) {
    %c0_i32 = arith.constant 0 : i32
    %c0_i32_0 = arith.constant 0 : i32
    %c0_i32_1 = arith.constant 0 : i32
    %c0_i32_2 = arith.constant 0 : i32
    return %c0_i32, %c0_i32_0, %c0_i32_1 : i32, i32, i32
  }
  func.func @transform_4(%arg0: i32) -> (i32, i32) {
    %c0_i32 = arith.constant 0 : i32
    %c0_i32_0 = arith.constant 0 : i32
    %c0_i32_1 = arith.constant 0 : i32
    return %c0_i32, %c0_i32_0 : i32, i32
  }
  func.func @transform_5(%arg0: i32) -> (i32, i32) {
    %c0_i32 = arith.constant 0 : i32
    %c0_i32_0 = arith.constant 0 : i32
    %c0_i32_1 = arith.constant 0 : i32
    return %c0_i32, %c0_i32_0 : i32, i32
  }
  func.func @transform_6(%arg0: i32) -> (i32, i32) {
    %c0_i32 = arith.constant 0 : i32
    %c0_i32_0 = arith.constant 0 : i32
    %c0_i32_1 = arith.constant 0 : i32
    return %c0_i32, %c0_i32_0 : i32, i32
  }
  func.func @transform_7(%arg0: i32) -> (i32, i32, i32) {
    %c0_i32 = arith.constant 0 : i32
    %c0_i32_0 = arith.constant 0 : i32
    %c0_i32_1 = arith.constant 0 : i32
    %c0_i32_2 = arith.constant 0 : i32
    return %c0_i32, %c0_i32_0, %c0_i32_1 : i32, i32, i32
  }
  func.func @transform_8(%arg0: i32) -> (i32, i32) {
    %c0_i32 = arith.constant 0 : i32
    %c0_i32_0 = arith.constant 0 : i32
    %c0_i32_1 = arith.constant 0 : i32
    return %c0_i32, %c0_i32_0 : i32, i32
  }
  func.func @transform_9(%arg0: i32) -> (i32, i32) {
    %c0_i32 = arith.constant 0 : i32
    %c0_i32_0 = arith.constant 0 : i32
    %c0_i32_1 = arith.constant 0 : i32
    return %c0_i32, %c0_i32_0 : i32, i32
  }
  func.func @transform_10(%arg0: i32) -> (i32, i32) {
    %c0_i32 = arith.constant 0 : i32
    %c0_i32_0 = arith.constant 0 : i32
    return %arg0, %c0_i32 : i32, i32
  }
}

module attributes {stable_mosaic.version = 11 : i64} {
  func.func @_envelope_kernel(%arg0: i32, %arg1: memref<16x20xbf16, #tpu.memory_space<vmem>>, %arg2: memref<16x4xbf16, #tpu.memory_space<vmem>>, %arg3: memref<20x400xbf16, #tpu.memory_space<vmem>>, %arg4: memref<3x400x400xbf16, #tpu.memory_space<vmem>>, %arg5: memref<400x16xbf16, #tpu.memory_space<vmem>>, %arg6: memref<16x400xbf16, #tpu.memory_space<vmem>>, %arg7: memref<4x400xbf16, #tpu.memory_space<vmem>>, %arg8: memref<3x400x400xbf16, #tpu.memory_space<vmem>>, %arg9: memref<400x4xbf16, #tpu.memory_space<vmem>>, %arg10: memref<10x400xf32, #tpu.memory_space<vmem>>, %arg11: memref<16x128xf32, #tpu.memory_space<vmem>>) attributes {dimension_semantics = [#tpu.dimension_semantics<parallel>], iteration_bounds = array<i64: 1>, scalar_prefetch = 0 : i64, scratch_operands = 0 : i64, tpu.core_type = #tpu.core_type<tc>, window_params = [{transform_indices = @transform_0, window_bounds = array<i64: 16, 20>}, {transform_indices = @transform_1, window_bounds = array<i64: 16, 4>}, {pipeline_mode = #tpu.pipeline_mode<synchronous>, transform_indices = @transform_2, window_bounds = array<i64: 20, 400>}, {pipeline_mode = #tpu.pipeline_mode<synchronous>, transform_indices = @transform_3, window_bounds = array<i64: 3, 400, 400>}, {pipeline_mode = #tpu.pipeline_mode<synchronous>, transform_indices = @transform_4, window_bounds = array<i64: 400, 16>}, {pipeline_mode = #tpu.pipeline_mode<synchronous>, transform_indices = @transform_5, window_bounds = array<i64: 16, 400>}, {pipeline_mode = #tpu.pipeline_mode<synchronous>, transform_indices = @transform_6, window_bounds = array<i64: 4, 400>}, {pipeline_mode = #tpu.pipeline_mode<synchronous>, transform_indices = @transform_7, window_bounds = array<i64: 3, 400, 400>}, {pipeline_mode = #tpu.pipeline_mode<synchronous>, transform_indices = @transform_8, window_bounds = array<i64: 400, 4>}, {pipeline_mode = #tpu.pipeline_mode<synchronous>, transform_indices = @transform_9, window_bounds = array<i64: 10, 400>}, {transform_indices = @transform_10, window_bounds = array<i64: 16, 128>}]} {
    %c0 = arith.constant 0 : index
    %c0_0 = arith.constant 0 : index
    %0 = vector.load %arg1[%c0, %c0_0] : memref<16x20xbf16, #tpu.memory_space<vmem>>, vector<16x20xbf16>
    %c0_1 = arith.constant 0 : index
    %c0_2 = arith.constant 0 : index
    %1 = vector.load %arg2[%c0_1, %c0_2] : memref<16x4xbf16, #tpu.memory_space<vmem>>, vector<16x4xbf16>
    %c0_3 = arith.constant 0 : index
    %c0_4 = arith.constant 0 : index
    %2 = vector.load %arg3[%c0_3, %c0_4] : memref<20x400xbf16, #tpu.memory_space<vmem>>, vector<20x400xbf16>
    %cst = arith.constant dense<0.000000e+00> : vector<16x400xf32>
    %3 = tpu.matmul %0, %2, %cst {dimension_numbers = #tpu.dot_dimension_numbers<[1], [0], [0], [1], [0, 0, 1, 1], [], []>} : vector<16x20xbf16>, vector<20x400xbf16>, vector<16x400xf32> -> vector<16x400xf32>
    %c0_5 = arith.constant 0 : index
    %c0_6 = arith.constant 0 : index
    %4 = vector.load %arg10[%c0_5, %c0_6] : memref<10x400xf32, #tpu.memory_space<vmem>>, vector<1x400xf32>
    %5 = vector.broadcast %4 : vector<1x400xf32> to vector<16x400xf32>
    %6 = arith.addf %3, %5 : vector<16x400xf32>
    %cst_7 = arith.constant 0.000000e+00 : f32
    %7 = vector.broadcast %cst_7 : f32 to vector<16x400xf32>
    %8 = arith.maximumf %6, %7 : vector<16x400xf32>
    %c0_8 = arith.constant 0 : index
    %c0_9 = arith.constant 0 : index
    %c0_10 = arith.constant 0 : index
    %9 = vector.load %arg4[%c0_8, %c0_9, %c0_10] : memref<3x400x400xbf16, #tpu.memory_space<vmem>>, vector<1x400x400xbf16>
    %10 = vector.shape_cast %9 : vector<1x400x400xbf16> to vector<400x400xbf16>
    %11 = arith.truncf %8 : vector<16x400xf32> to vector<16x400xbf16>
    %cst_11 = arith.constant dense<0.000000e+00> : vector<16x400xf32>
    %12 = tpu.matmul %11, %10, %cst_11 {dimension_numbers = #tpu.dot_dimension_numbers<[1], [0], [0], [1], [0, 0, 1, 1], [], []>} : vector<16x400xbf16>, vector<400x400xbf16>, vector<16x400xf32> -> vector<16x400xf32>
    %c1 = arith.constant 1 : index
    %c0_12 = arith.constant 0 : index
    %13 = vector.load %arg10[%c1, %c0_12] : memref<10x400xf32, #tpu.memory_space<vmem>>, vector<1x400xf32>
    %14 = vector.broadcast %13 : vector<1x400xf32> to vector<16x400xf32>
    %15 = arith.addf %12, %14 : vector<16x400xf32>
    %cst_13 = arith.constant 0.000000e+00 : f32
    %16 = vector.broadcast %cst_13 : f32 to vector<16x400xf32>
    %17 = arith.maximumf %15, %16 : vector<16x400xf32>
    %c1_14 = arith.constant 1 : index
    %c0_15 = arith.constant 0 : index
    %c0_16 = arith.constant 0 : index
    %18 = vector.load %arg4[%c1_14, %c0_15, %c0_16] : memref<3x400x400xbf16, #tpu.memory_space<vmem>>, vector<1x400x400xbf16>
    %19 = vector.shape_cast %18 : vector<1x400x400xbf16> to vector<400x400xbf16>
    %20 = arith.truncf %17 : vector<16x400xf32> to vector<16x400xbf16>
    %cst_17 = arith.constant dense<0.000000e+00> : vector<16x400xf32>
    %21 = tpu.matmul %20, %19, %cst_17 {dimension_numbers = #tpu.dot_dimension_numbers<[1], [0], [0], [1], [0, 0, 1, 1], [], []>} : vector<16x400xbf16>, vector<400x400xbf16>, vector<16x400xf32> -> vector<16x400xf32>
    %c2 = arith.constant 2 : index
    %c0_18 = arith.constant 0 : index
    %22 = vector.load %arg10[%c2, %c0_18] : memref<10x400xf32, #tpu.memory_space<vmem>>, vector<1x400xf32>
    %23 = vector.broadcast %22 : vector<1x400xf32> to vector<16x400xf32>
    %24 = arith.addf %21, %23 : vector<16x400xf32>
    %cst_19 = arith.constant 0.000000e+00 : f32
    %25 = vector.broadcast %cst_19 : f32 to vector<16x400xf32>
    %26 = arith.maximumf %24, %25 : vector<16x400xf32>
    %c2_20 = arith.constant 2 : index
    %c0_21 = arith.constant 0 : index
    %c0_22 = arith.constant 0 : index
    %27 = vector.load %arg4[%c2_20, %c0_21, %c0_22] : memref<3x400x400xbf16, #tpu.memory_space<vmem>>, vector<1x400x400xbf16>
    %28 = vector.shape_cast %27 : vector<1x400x400xbf16> to vector<400x400xbf16>
    %29 = arith.truncf %26 : vector<16x400xf32> to vector<16x400xbf16>
    %cst_23 = arith.constant dense<0.000000e+00> : vector<16x400xf32>
    %30 = tpu.matmul %29, %28, %cst_23 {dimension_numbers = #tpu.dot_dimension_numbers<[1], [0], [0], [1], [0, 0, 1, 1], [], []>} : vector<16x400xbf16>, vector<400x400xbf16>, vector<16x400xf32> -> vector<16x400xf32>
    %c3 = arith.constant 3 : index
    %c0_24 = arith.constant 0 : index
    %31 = vector.load %arg10[%c3, %c0_24] : memref<10x400xf32, #tpu.memory_space<vmem>>, vector<1x400xf32>
    %32 = vector.broadcast %31 : vector<1x400xf32> to vector<16x400xf32>
    %33 = arith.addf %30, %32 : vector<16x400xf32>
    %cst_25 = arith.constant 0.000000e+00 : f32
    %34 = vector.broadcast %cst_25 : f32 to vector<16x400xf32>
    %35 = arith.maximumf %33, %34 : vector<16x400xf32>
    %c0_26 = arith.constant 0 : index
    %c0_27 = arith.constant 0 : index
    %36 = vector.load %arg5[%c0_26, %c0_27] : memref<400x16xbf16, #tpu.memory_space<vmem>>, vector<400x16xbf16>
    %37 = arith.truncf %35 : vector<16x400xf32> to vector<16x400xbf16>
    %cst_28 = arith.constant dense<0.000000e+00> : vector<16x16xf32>
    %38 = tpu.matmul %37, %36, %cst_28 {dimension_numbers = #tpu.dot_dimension_numbers<[1], [0], [0], [1], [0, 0, 1, 1], [], []>} : vector<16x400xbf16>, vector<400x16xbf16>, vector<16x16xf32> -> vector<16x16xf32>
    %c4 = arith.constant 4 : index
    %c0_29 = arith.constant 0 : index
    %39 = vector.load %arg10[%c4, %c0_29] : memref<10x400xf32, #tpu.memory_space<vmem>>, vector<1x16xf32>
    %40 = vector.broadcast %39 : vector<1x16xf32> to vector<16x16xf32>
    %41 = arith.addf %38, %40 : vector<16x16xf32>
    %42 = arith.truncf %41 : vector<16x16xf32> to vector<16x16xbf16>
    %c0_30 = arith.constant 0 : index
    %c0_31 = arith.constant 0 : index
    %43 = vector.load %arg6[%c0_30, %c0_31] : memref<16x400xbf16, #tpu.memory_space<vmem>>, vector<16x400xbf16>
    %cst_32 = arith.constant dense<0.000000e+00> : vector<16x400xf32>
    %44 = tpu.matmul %42, %43, %cst_32 {dimension_numbers = #tpu.dot_dimension_numbers<[1], [0], [0], [1], [0, 0, 1, 1], [], []>} : vector<16x16xbf16>, vector<16x400xbf16>, vector<16x400xf32> -> vector<16x400xf32>
    %c0_33 = arith.constant 0 : index
    %c0_34 = arith.constant 0 : index
    %45 = vector.load %arg7[%c0_33, %c0_34] : memref<4x400xbf16, #tpu.memory_space<vmem>>, vector<4x400xbf16>
    %cst_35 = arith.constant dense<0.000000e+00> : vector<16x400xf32>
    %46 = tpu.matmul %1, %45, %cst_35 {dimension_numbers = #tpu.dot_dimension_numbers<[1], [0], [0], [1], [0, 0, 1, 1], [], []>} : vector<16x4xbf16>, vector<4x400xbf16>, vector<16x400xf32> -> vector<16x400xf32>
    %47 = arith.addf %44, %46 : vector<16x400xf32>
    %c5 = arith.constant 5 : index
    %c0_36 = arith.constant 0 : index
    %48 = vector.load %arg10[%c5, %c0_36] : memref<10x400xf32, #tpu.memory_space<vmem>>, vector<1x400xf32>
    %49 = vector.broadcast %48 : vector<1x400xf32> to vector<16x400xf32>
    %50 = arith.addf %47, %49 : vector<16x400xf32>
    %cst_37 = arith.constant 0.000000e+00 : f32
    %51 = vector.broadcast %cst_37 : f32 to vector<16x400xf32>
    %52 = arith.maximumf %50, %51 : vector<16x400xf32>
    %c0_38 = arith.constant 0 : index
    %c0_39 = arith.constant 0 : index
    %c0_40 = arith.constant 0 : index
    %53 = vector.load %arg8[%c0_38, %c0_39, %c0_40] : memref<3x400x400xbf16, #tpu.memory_space<vmem>>, vector<1x400x400xbf16>
    %54 = vector.shape_cast %53 : vector<1x400x400xbf16> to vector<400x400xbf16>
    %55 = arith.truncf %52 : vector<16x400xf32> to vector<16x400xbf16>
    %cst_41 = arith.constant dense<0.000000e+00> : vector<16x400xf32>
    %56 = tpu.matmul %55, %54, %cst_41 {dimension_numbers = #tpu.dot_dimension_numbers<[1], [0], [0], [1], [0, 0, 1, 1], [], []>} : vector<16x400xbf16>, vector<400x400xbf16>, vector<16x400xf32> -> vector<16x400xf32>
    %c6 = arith.constant 6 : index
    %c0_42 = arith.constant 0 : index
    %57 = vector.load %arg10[%c6, %c0_42] : memref<10x400xf32, #tpu.memory_space<vmem>>, vector<1x400xf32>
    %58 = vector.broadcast %57 : vector<1x400xf32> to vector<16x400xf32>
    %59 = arith.addf %56, %58 : vector<16x400xf32>
    %cst_43 = arith.constant 0.000000e+00 : f32
    %60 = vector.broadcast %cst_43 : f32 to vector<16x400xf32>
    %61 = arith.maximumf %59, %60 : vector<16x400xf32>
    %c1_44 = arith.constant 1 : index
    %c0_45 = arith.constant 0 : index
    %c0_46 = arith.constant 0 : index
    %62 = vector.load %arg8[%c1_44, %c0_45, %c0_46] : memref<3x400x400xbf16, #tpu.memory_space<vmem>>, vector<1x400x400xbf16>
    %63 = vector.shape_cast %62 : vector<1x400x400xbf16> to vector<400x400xbf16>
    %64 = arith.truncf %61 : vector<16x400xf32> to vector<16x400xbf16>
    %cst_47 = arith.constant dense<0.000000e+00> : vector<16x400xf32>
    %65 = tpu.matmul %64, %63, %cst_47 {dimension_numbers = #tpu.dot_dimension_numbers<[1], [0], [0], [1], [0, 0, 1, 1], [], []>} : vector<16x400xbf16>, vector<400x400xbf16>, vector<16x400xf32> -> vector<16x400xf32>
    %c7 = arith.constant 7 : index
    %c0_48 = arith.constant 0 : index
    %66 = vector.load %arg10[%c7, %c0_48] : memref<10x400xf32, #tpu.memory_space<vmem>>, vector<1x400xf32>
    %67 = vector.broadcast %66 : vector<1x400xf32> to vector<16x400xf32>
    %68 = arith.addf %65, %67 : vector<16x400xf32>
    %cst_49 = arith.constant 0.000000e+00 : f32
    %69 = vector.broadcast %cst_49 : f32 to vector<16x400xf32>
    %70 = arith.maximumf %68, %69 : vector<16x400xf32>
    %c2_50 = arith.constant 2 : index
    %c0_51 = arith.constant 0 : index
    %c0_52 = arith.constant 0 : index
    %71 = vector.load %arg8[%c2_50, %c0_51, %c0_52] : memref<3x400x400xbf16, #tpu.memory_space<vmem>>, vector<1x400x400xbf16>
    %72 = vector.shape_cast %71 : vector<1x400x400xbf16> to vector<400x400xbf16>
    %73 = arith.truncf %70 : vector<16x400xf32> to vector<16x400xbf16>
    %cst_53 = arith.constant dense<0.000000e+00> : vector<16x400xf32>
    %74 = tpu.matmul %73, %72, %cst_53 {dimension_numbers = #tpu.dot_dimension_numbers<[1], [0], [0], [1], [0, 0, 1, 1], [], []>} : vector<16x400xbf16>, vector<400x400xbf16>, vector<16x400xf32> -> vector<16x400xf32>
    %c8 = arith.constant 8 : index
    %c0_54 = arith.constant 0 : index
    %75 = vector.load %arg10[%c8, %c0_54] : memref<10x400xf32, #tpu.memory_space<vmem>>, vector<1x400xf32>
    %76 = vector.broadcast %75 : vector<1x400xf32> to vector<16x400xf32>
    %77 = arith.addf %74, %76 : vector<16x400xf32>
    %cst_55 = arith.constant 0.000000e+00 : f32
    %78 = vector.broadcast %cst_55 : f32 to vector<16x400xf32>
    %79 = arith.maximumf %77, %78 : vector<16x400xf32>
    %c0_56 = arith.constant 0 : index
    %c0_57 = arith.constant 0 : index
    %80 = vector.load %arg9[%c0_56, %c0_57] : memref<400x4xbf16, #tpu.memory_space<vmem>>, vector<400x4xbf16>
    %81 = arith.truncf %79 : vector<16x400xf32> to vector<16x400xbf16>
    %cst_58 = arith.constant dense<0.000000e+00> : vector<16x4xf32>
    %82 = tpu.matmul %81, %80, %cst_58 {dimension_numbers = #tpu.dot_dimension_numbers<[1], [0], [0], [1], [0, 0, 1, 1], [], []>} : vector<16x400xbf16>, vector<400x4xbf16>, vector<16x4xf32> -> vector<16x4xf32>
    %c9 = arith.constant 9 : index
    %c0_59 = arith.constant 0 : index
    %83 = vector.load %arg10[%c9, %c0_59] : memref<10x400xf32, #tpu.memory_space<vmem>>, vector<1x4xf32>
    %84 = vector.broadcast %83 : vector<1x4xf32> to vector<16x4xf32>
    %85 = arith.addf %82, %84 : vector<16x4xf32>
    %cst_60 = arith.constant dense<0xFF800000> : vector<16xf32>
    %86 = vector.multi_reduction <maximumf>, %85, %cst_60 [1] : vector<16x4xf32> to vector<16xf32>
    %87 = vector.shape_cast %86 : vector<16xf32> to vector<16x1xf32>
    %cst_61 = arith.constant 0.000000e+00 : f32
    %88 = vector.broadcast %cst_61 : f32 to vector<16x107xf32>
    %89 = tpu.concatenate %41, %85, %87, %88 in 1 : vector<16x16xf32>, vector<16x4xf32>, vector<16x1xf32>, vector<16x107xf32> -> vector<16x128xf32>
    %c0_62 = arith.constant 0 : index
    %c0_63 = arith.constant 0 : index
    %90 = vector.load %arg11[%c0_62, %c0_63] : memref<16x128xf32, #tpu.memory_space<vmem>>, vector<16x128xf32>
    tpu.vector_store %arg11[%c0_62, %c0_63], %89 {strides = array<i32>} : memref<16x128xf32, #tpu.memory_space<vmem>>, vector<16x128xf32>,
    return
  }
  func.func @transform_0(%arg0: i32) -> (i32, i32) {
    %c0_i32 = arith.constant 0 : i32
    %c0_i32_0 = arith.constant 0 : i32
    return %arg0, %c0_i32 : i32, i32
  }
  func.func @transform_1(%arg0: i32) -> (i32, i32) {
    %c0_i32 = arith.constant 0 : i32
    %c0_i32_0 = arith.constant 0 : i32
    return %arg0, %c0_i32 : i32, i32
  }
  func.func @transform_2(%arg0: i32) -> (i32, i32) {
    %c0_i32 = arith.constant 0 : i32
    %c0_i32_0 = arith.constant 0 : i32
    %c0_i32_1 = arith.constant 0 : i32
    return %c0_i32, %c0_i32_0 : i32, i32
  }
  func.func @transform_3(%arg0: i32) -> (i32, i32, i32) {
    %c0_i32 = arith.constant 0 : i32
    %c0_i32_0 = arith.constant 0 : i32
    %c0_i32_1 = arith.constant 0 : i32
    %c0_i32_2 = arith.constant 0 : i32
    return %c0_i32, %c0_i32_0, %c0_i32_1 : i32, i32, i32
  }
  func.func @transform_4(%arg0: i32) -> (i32, i32) {
    %c0_i32 = arith.constant 0 : i32
    %c0_i32_0 = arith.constant 0 : i32
    %c0_i32_1 = arith.constant 0 : i32
    return %c0_i32, %c0_i32_0 : i32, i32
  }
  func.func @transform_5(%arg0: i32) -> (i32, i32) {
    %c0_i32 = arith.constant 0 : i32
    %c0_i32_0 = arith.constant 0 : i32
    %c0_i32_1 = arith.constant 0 : i32
    return %c0_i32, %c0_i32_0 : i32, i32
  }
  func.func @transform_6(%arg0: i32) -> (i32, i32) {
    %c0_i32 = arith.constant 0 : i32
    %c0_i32_0 = arith.constant 0 : i32
    %c0_i32_1 = arith.constant 0 : i32
    return %c0_i32, %c0_i32_0 : i32, i32
  }
  func.func @transform_7(%arg0: i32) -> (i32, i32, i32) {
    %c0_i32 = arith.constant 0 : i32
    %c0_i32_0 = arith.constant 0 : i32
    %c0_i32_1 = arith.constant 0 : i32
    %c0_i32_2 = arith.constant 0 : i32
    return %c0_i32, %c0_i32_0, %c0_i32_1 : i32, i32, i32
  }
  func.func @transform_8(%arg0: i32) -> (i32, i32) {
    %c0_i32 = arith.constant 0 : i32
    %c0_i32_0 = arith.constant 0 : i32
    %c0_i32_1 = arith.constant 0 : i32
    return %c0_i32, %c0_i32_0 : i32, i32
  }
  func.func @transform_9(%arg0: i32) -> (i32, i32) {
    %c0_i32 = arith.constant 0 : i32
    %c0_i32_0 = arith.constant 0 : i32
    %c0_i32_1 = arith.constant 0 : i32
    return %c0_i32, %c0_i32_0 : i32, i32
  }
  func.func @transform_10(%arg0: i32) -> (i32, i32) {
    %c0_i32 = arith.constant 0 : i32
    %c0_i32_0 = arith.constant 0 : i32
    return %arg0, %c0_i32 : i32, i32
  }
}

</mosaic_0001>

<llo_original>
// kernel: tpu_custom_call.1
$region0: #{tpu_custom_call.1}
  #allocation0 [shape = 'u32[]', space=smem, size = 0x4, offset = 0x4, fixed_abs, tag = 'smem constant byte address 0x4 - core index']
  #allocation1 [shape = 'u32[144,128]{1,0:T(1,128)}', space=vmem, size = 0x12000, scoped, tag = 'internal scratch']
  %s0 = inlined_call_operand.hbm [shape: bf16[16,20], index: 0, kind: input, shape index: {}]
  %s1 = inlined_call_operand.vmem [shape: bf16[16,4], index: 1, kind: input, shape index: {}]
  %s2 = inlined_call_operand.hbm [shape: bf16[20,400], index: 2, kind: input, shape index: {}]
  %s3 = inlined_call_operand.hbm [shape: bf16[3,400,400], index: 3, kind: input, shape index: {}]
  %s4 = inlined_call_operand.vmem [shape: bf16[400,16], index: 4, kind: input, shape index: {}]
  %s5 = inlined_call_operand.hbm [shape: bf16[16,400], index: 5, kind: input, shape index: {}]
  %s6 = inlined_call_operand.hbm [shape: bf16[4,400], index: 6, kind: input, shape index: {}]
  %s7 = inlined_call_operand.hbm [shape: bf16[3,400,400], index: 7, kind: input, shape index: {}]
  %s8 = inlined_call_operand.vmem [shape: bf16[400,4], index: 8, kind: input, shape index: {}]
  %s9 = inlined_call_operand.hbm [shape: f32[10,400], index: 9, kind: input, shape index: {}]
  %s10 = inlined_call_operand.hbm [shape: f32[16,128], index: 10, kind: output, shape index: {}]
  %s11 = sld [smem:[#allocation0]]
  $region78: #{tpu_custom_call.1} parent=0
    _
  %s13 = ssub.s32 1, %s11
  %s14 = scalar_select 0, %s13, %s11
  $region1: #{tpu_custom_call.1} parent=0
    #allocation2 [shape = 'u8[4096]{0}', space=vmem, size = 0x1000, scoped, tag = 'input window, operand 0, single buffered']
    #allocation3 [shape = 's32[1]{0}', space=sflag, size = 0x4, scoped, tag = 'scoped memory for tpu_custom_call.1']
    #allocation4 [shape = 's32[1]{0}', space=sflag, size = 0x4, scoped, tag = 'scoped memory for tpu_custom_call.1']
    #allocation5 [shape = 'u8[24576]{0}', space=vmem, size = 0x6000, scoped, tag = 'input window, operand 2, single buffered']
    #allocation6 [shape = 's32[1]{0}', space=sflag, size = 0x4, scoped, tag = 'scoped memory for tpu_custom_call.1']
    #allocation7 [shape = 'u8[1228800]{0}', space=vmem, size = 0x12c000, scoped, tag = 'input window, operand 3, single buffered']
    #allocation8 [shape = 'u8[16384]{0}', space=vmem, size = 0x4000, scoped, tag = 'input window, operand 5, single buffered']
    #allocation9 [shape = 's32[1]{0}', space=sflag, size = 0x4, scoped, tag = 'scoped memory for tpu_custom_call.1']
    #allocation10 [shape = 'u8[4096]{0}', space=vmem, size = 0x1000, scoped, tag = 'input window, operand 6, single buffered']
    #allocation11 [shape = 'u8[1228800]{0}', space=vmem, size = 0x12c000, scoped, tag = 'input window, operand 7, single buffered']
    #allocation12 [shape = 's32[1]{0}', space=sflag, size = 0x4, scoped, tag = 'scoped memory for tpu_custom_call.1']
    #allocation13 [shape = 'u8[32768]{0}', space=vmem, size = 0x8000, scoped, tag = 'input window, operand 9, single buffered']
    #allocation14 [shape = 'u8[8192]{0}', space=vmem, size = 0x2000, scoped, tag = 'output window, operand 0, single buffered']
    %15 = vsyncpa [#allocation3], 0
    %16 = vsyncpa [#allocation6], 0
    %17 = vsyncpa [#allocation9], 0
    %18 = vsyncpa [#allocation12], 0
    %19 = vsyncpa [#allocation4], 0
    // Predicated region
    $region2: #{tpu_custom_call.1} parent=1 // pred_check
      _
    $region3: #{tpu_custom_call.1} parent=1 // pred_check_branch
      %21 = sbr.rel (0) target = $region5
    $region4: #{tpu_custom_call.1} parent=1 // pred_region
      %s23 = ssub.s32 128, 128
      %24 = vsyncadd [#allocation3], %s23
      %s25 = sshll.u32 [#allocation2], 4
      %s26 = int_to_ptr.vmem [resolvable:$true] %s25
      %31 = dma.hbm_to_vmem [thread:$0]  %s0, 128, %s26, [#allocation3], 64, 64, 4
    $region5: #{tpu_custom_call.1} parent=1 // pred_fallthru
      _
    // Predicated region
    $region6: #{tpu_custom_call.1} parent=1 // pred_check
      _
    $region7: #{tpu_custom_call.1} parent=1 // pred_check_branch
      %33 = sbr.rel (0) target = $region9
    $region8: #{tpu_custom_call.1} parent=1 // pred_region
      _
    $region9: #{tpu_custom_call.1} parent=1 // pred_fallthru
      _
    // Predicated region
    $region10: #{tpu_custom_call.1} parent=1 // pred_check
      _
    $region11: #{tpu_custom_call.1} parent=1 // pred_check_branch
      %35 = sbr.rel (0) target = $region13
    $region12: #{tpu_custom_call.1} parent=1 // pred_region
      %s37 = ssub.s32 768, 768
      %38 = vsyncadd [#allocation6], %s37
      %s39 = sshll.u32 [#allocation5], 4
      %s40 = int_to_ptr.vmem [resolvable:$true] %s39
      %45 = dma.hbm_to_vmem [thread:$0]  %s2, 768, %s40, [#allocation6], 256, 256, 16
    $region13: #{tpu_custom_call.1} parent=1 // pred_fallthru
      _
    // Predicated region
    $region14: #{tpu_custom_call.1} parent=1 // pred_check
      _
    $region15: #{tpu_custom_call.1} parent=1 // pred_check_branch
      %47 = sbr.rel (0) target = $region17
    $region16: #{tpu_custom_call.1} parent=1 // pred_region
      %s49 = ssub.s32 38400, 38400
      %50 = vsyncadd [#allocation6], %s49
      %s51 = sshll.u32 [#allocation7], 4
      %s52 = int_to_ptr.vmem [resolvable:$true] %s51
      %57 = dma.hbm_to_vmem [thread:$0]  %s3, 38400, %s52, [#allocation6], 256, 256, 16
    $region17: #{tpu_custom_call.1} parent=1 // pred_fallthru
      _
    // Predicated region
    $region18: #{tpu_custom_call.1} parent=1 // pred_check
      _
    $region19: #{tpu_custom_call.1} parent=1 // pred_check_branch
      %59 = sbr.rel (0) target = $region21
    $region20: #{tpu_custom_call.1} parent=1 // pred_region
      _
    $region21: #{tpu_custom_call.1} parent=1 // pred_fallthru
      _
    // Predicated region
    $region22: #{tpu_custom_call.1} parent=1 // pred_check
      _
    $region23: #{tpu_custom_call.1} parent=1 // pred_check_branch
      %61 = sbr.rel (0) target = $region25
    $region24: #{tpu_custom_call.1} parent=1 // pred_region
      %s63 = ssub.s32 512, 512
      %64 = vsyncadd [#allocation9], %s63
      %s65 = sshll.u32 [#allocation8], 4
      %s66 = int_to_ptr.vmem [resolvable:$true] %s65
      %71 = dma.hbm_to_vmem [thread:$0]  %s5, 512, %s66, [#allocation9], 256, 256, 16
    $region25: #{tpu_custom_call.1} parent=1 // pred_fallthru
      _
    // Predicated region
    $region26: #{tpu_custom_call.1} parent=1 // pred_check
      _
    $region27: #{tpu_custom_call.1} parent=1 // pred_check_branch
      %73 = sbr.rel (0) target = $region29
    $region28: #{tpu_custom_call.1} parent=1 // pred_region
      %s75 = ssub.s32 128, 128
      %76 = vsyncadd [#allocation9], %s75
      %s78 = sshll.u32 [#allocation10], 4
      %s79 = int_to_ptr.vmem [resolvable:$true] %s78
      %81 = dma.hbm_to_vmem [thread:$0]  %s6, 128, %s79, [#allocation9]
    $region29: #{tpu_custom_call.1} parent=1 // pred_fallthru
      _
    // Predicated region
    $region30: #{tpu_custom_call.1} parent=1 // pred_check
      _
    $region31: #{tpu_custom_call.1} parent=1 // pred_check_branch
      %83 = sbr.rel (0) target = $region33
    $region32: #{tpu_custom_call.1} parent=1 // pred_region
      %s85 = ssub.s32 38400, 38400
      %86 = vsyncadd [#allocation12], %s85
      %s87 = sshll.u32 [#allocation11], 4
      %s88 = int_to_ptr.vmem [resolvable:$true] %s87
      %93 = dma.hbm_to_vmem [thread:$0]  %s7, 38400, %s88, [#allocation12], 256, 256, 16
    $region33: #{tpu_custom_call.1} parent=1 // pred_fallthru
      _
    // Predicated region
    $region34: #{tpu_custom_call.1} parent=1 // pred_check
      _
    $region35: #{tpu_custom_call.1} parent=1 // pred_check_branch
      %95 = sbr.rel (0) target = $region37
    $region36: #{tpu_custom_call.1} parent=1 // pred_region
      _
    $region37: #{tpu_custom_call.1} parent=1 // pred_fallthru
      _
    // Predicated region
    $region38: #{tpu_custom_call.1} parent=1 // pred_check
      _
    $region39: #{tpu_custom_call.1} parent=1 // pred_check_branch
      %97 = sbr.rel (0) target = $region41
    $region40: #{tpu_custom_call.1} parent=1 // pred_region
      %s99 = ssub.s32 1024, 1024
      %100 = vsyncadd [#allocation12], %s99
      %s101 = sshll.u32 [#allocation13], 4
      %s102 = int_to_ptr.vmem [resolvable:$true] %s101
      %107 = dma.hbm_to_vmem [thread:$0]  %s9, 1024, %s102, [#allocation12], 512, 512, 32
    $region41: #{tpu_custom_call.1} parent=1 // pred_fallthru
      _
    // Predicated region
    $region42: #{tpu_custom_call.1} parent=1 // pred_check
      _
    $region43: #{tpu_custom_call.1} parent=1 // pred_check_branch
      %109 = sbr.rel (0) target = $region45
    $region44: #{tpu_custom_call.1} parent=1 // pred_region
      %110 = dma.done [#allocation3], 128
    $region45: #{tpu_custom_call.1} parent=1 // pred_fallthru
      _
    // Predicated region
    $region46: #{tpu_custom_call.1} parent=1 // pred_check
      _
    $region47: #{tpu_custom_call.1} parent=1 // pred_check_branch
      %112 = sbr.rel (0) target = $region49
    $region48: #{tpu_custom_call.1} parent=1 // pred_region
      %113 = dma.done [#allocation6], 768
    $region49: #{tpu_custom_call.1} parent=1 // pred_fallthru
      _
    // Predicated region
    $region50: #{tpu_custom_call.1} parent=1 // pred_check
      _
    $region51: #{tpu_custom_call.1} parent=1 // pred_check_branch
      %115 = sbr.rel (0) target = $region53
    $region52: #{tpu_custom_call.1} parent=1 // pred_region
      %116 = dma.done [#allocation6], 38400
    $region53: #{tpu_custom_call.1} parent=1 // pred_fallthru
      _
    // Predicated region
    $region54: #{tpu_custom_call.1} parent=1 // pred_check
      _
    $region55: #{tpu_custom_call.1} parent=1 // pred_check_branch
      %118 = sbr.rel (0) target = $region57
    $region56: #{tpu_custom_call.1} parent=1 // pred_region
      %119 = dma.done [#allocation9], 512
    $region57: #{tpu_custom_call.1} parent=1 // pred_fallthru
      _
    // Predicated region
    $region58: #{tpu_custom_call.1} parent=1 // pred_check
      _
    $region59: #{tpu_custom_call.1} parent=1 // pred_check_branch
      %121 = sbr.rel (0) target = $region61
    $region60: #{tpu_custom_call.1} parent=1 // pred_region
      %122 = dma.done [#allocation9], 128
    $region61: #{tpu_custom_call.1} parent=1 // pred_fallthru
      _
    // Predicated region
    $region62: #{tpu_custom_call.1} parent=1 // pred_check
      _
    $region63: #{tpu_custom_call.1} parent=1 // pred_check_branch
      %124 = sbr.rel (0) target = $region65
    $region64: #{tpu_custom_call.1} parent=1 // pred_region
      %125 = dma.done [#allocation12], 38400
    $region65: #{tpu_custom_call.1} parent=1 // pred_fallthru
      _
    // Predicated region
    $region66: #{tpu_custom_call.1} parent=1 // pred_check
      _
    $region67: #{tpu_custom_call.1} parent=1 // pred_check_branch
      %127 = sbr.rel (0) target = $region69
    $region68: #{tpu_custom_call.1} parent=1 // pred_region
      %128 = dma.done [#allocation12], 1024
    $region69: #{tpu_custom_call.1} parent=1 // pred_fallthru
      _
    %v130 = vld [vmem:[#allocation2] sm:$0xf]
    %v131 = vld [vmem:[#allocation2 + $0x4] sm:$0xf]
    %v132 = vld [vmem:[%s1] sm:$0xf]
    %v133 = vld [vmem:[%s1 + $0x4] sm:$0xf]
    %v134 = vld [vmem:[#allocation5] sm:$0xff]
    %v135 = vld [vmem:[#allocation5 + $0x8] sm:$0xff]
    %v136 = vld [vmem:[#allocation5 + $0x10] sm:$0xff]
    %v137 = vld [vmem:[#allocation5 + $0x18] sm:$0xff]
    %v138 = vld [vmem:[#allocation5 + $0x20] sm:$0x33]
    %v139 = vld [vmem:[#allocation5 + $0x28] sm:$0x33]
    %v140 = vld [vmem:[#allocation13] ss:$8 sm:$0xf]
    %v142 = vlaneseq
    %v143 = vshrl.u32 %v142, 7
    %v144 = vsub.s32 0, %v143
    %v145 = vrot.slane %v140, %v144
    %v146 = vlaneseq
    %v147 = vshrl.u32 %v146, 7
    %v148 = vsub.s32 1, %v147
    %v149 = vrot.slane %v140, %v148
    %v150 = vlaneseq
    %v151 = vshrl.u32 %v150, 7
    %v152 = vsub.s32 2, %v151
    %v153 = vrot.slane %v140, %v152
    %v154 = vlaneseq
    %v155 = vshrl.u32 %v154, 7
    %v156 = vsub.s32 3, %v155
    %v157 = vrot.slane %v140, %v156
    %v164 = vunpack.c.l.b16 %v130
    %v165 = vunpack.c.l.b16 %v131
    %v166 = vpack.c.b16 %v165, %v164
    %v173 = vunpack.c.l.b16 %v134
    %v174 = vunpack.c.h.b16 %v134
    %v175 = vunpack.c.l.b16 %v135
    %v176 = vunpack.c.h.b16 %v135
    %v177 = vunpack.c.l.b16 %v136
    %v178 = vunpack.c.h.b16 %v136
    %v179 = vunpack.c.l.b16 %v137
    %v180 = vunpack.c.h.b16 %v137
    %v181 = vunpack.c.l.b16 %v138
    %v182 = vunpack.c.h.b16 %v138
    %v183 = vunpack.c.l.b16 %v139
    %v184 = vunpack.c.h.b16 %v139
    %v185 = vpack.c.b16 %v177, %v173
    %v186 = vpack.c.b16 %v178, %v174
    %v187 = vpack.c.b16 %v179, %v175
    %v188 = vpack.c.b16 %v180, %v176
    %v189 = vpack.c.b16 %v181, %v181
    %v190 = vpack.c.b16 %v182, %v182
    %v191 = vpack.c.b16 %v183, %v183
    %v192 = vpack.c.b16 %v184, %v184
    %vm197 = vcmask 162816
    %v199 = vsel %vm197, %v166, 0
    %vm201 = vcmask 1041408
    %v203 = vsel %vm201, %v189, 0
    %v206 = vsel %vm201, %v190, 0
    %v209 = vsel %vm201, %v191, 0
    %v212 = vsel %vm201, %v192, 0
    %214 = vmatprep.subr.bf16.mxu0 %v186
    %215 = vmatpush1.bf16.msra.mxu0 %v185
    %216 = vmatprep.subr.bf16.mxu0 %v206
    %217 = vmatpush1.bf16.msra.mxu0 %v203
    %218 = vmatprep.subr.bf16.mxu0 0
    %219 = vmatpush1.bf16.msra.mxu0 0
    %220 = vmatprep.subr.bf16.mxu0 0
    %221 = vmatpush1.bf16.msra.mxu0 0
    %222 = vmatprep.subr.bf16.mxu0 0
    %223 = vmatpush1.bf16.msra.mxu0 0
    %224 = vmatprep.subr.bf16.mxu0 0
    %225 = vmatpush1.bf16.msra.mxu0 0
    %226 = vmatprep.subr.bf16.mxu0 0
    %227 = vmatpush1.bf16.msra.mxu0 0
    %228 = vmatprep.subr.bf16.mxu0 0
    %229 = vmatpush1.bf16.msra.mxu0 0
    %230 = vmatprep.subr.bf16.mxu0 0
    %231 = vmatpush1.bf16.msra.mxu0 0
    %232 = vmatprep.subr.bf16.mxu0 0
    %233 = vmatpush1.bf16.msra.mxu0 0
    %234 = vmatprep.subr.bf16.mxu0 0
    %235 = vmatpush1.bf16.msra.mxu0 0
    %236 = vmatprep.subr.bf16.mxu0 0
    %237 = vmatpush1.bf16.msra.mxu0 0
    %238 = vmatprep.subr.bf16.mxu0 0
    %239 = vmatpush1.bf16.msra.mxu0 0
    %240 = vmatprep.subr.bf16.mxu0 0
    %241 = vmatpush1.bf16.msra.mxu0 0
    %242 = vmatprep.subr.bf16.mxu0 0
    %243 = vmatpush1.bf16.msra.mxu0 0
    %244 = vmatprep.subr.bf16.mxu0 0
    %245 = vmatpush1.bf16.msra.mxu0 0
    %246 = vmatprep.mubr.bf16.mxu0 0
    %247 = vmatmul.mubr.bf16.gmra.mrb[0].mxu0 %v199
    %v248 = vpop.f32.mrb[0].mxu0
    %v249 = vadd.f32 %v145, %v248
    %v250 = vpop.f32.mrb[0].mxu0
    %v251 = vadd.f32 %v149, %v250
    %v252 = vpop.f32.mrb[0].mxu0
    %v253 = vadd.f32 %v145, %v252
    %v254 = vpop.f32.mrb[0].mxu0
    %v255 = vadd.f32 %v149, %v254
    %256 = vdwg.mxu0
    %257 = vmatprep.subr.bf16.mxu0 %v188
    %258 = vmatpush1.bf16.msra.mxu0 %v187
    %259 = vmatprep.subr.bf16.mxu0 %v212
    %260 = vmatpush1.bf16.msra.mxu0 %v209
    %261 = vmatprep.subr.bf16.mxu0 0
    %262 = vmatpush1.bf16.msra.mxu0 0
    %263 = vmatprep.subr.bf16.mxu0 0
    %264 = vmatpush1.bf16.msra.mxu0 0
    %265 = vmatprep.subr.bf16.mxu0 0
    %266 = vmatpush1.bf16.msra.mxu0 0
    %267 = vmatprep.subr.bf16.mxu0 0
    %268 = vmatpush1.bf16.msra.mxu0 0
    %269 = vmatprep.subr.bf16.mxu0 0
    %270 = vmatpush1.bf16.msra.mxu0 0
    %271 = vmatprep.subr.bf16.mxu0 0
    %272 = vmatpush1.bf16.msra.mxu0 0
    %273 = vmatprep.subr.bf16.mxu0 0
    %274 = vmatpush1.bf16.msra.mxu0 0
    %275 = vmatprep.subr.bf16.mxu0 0
    %276 = vmatpush1.bf16.msra.mxu0 0
    %277 = vmatprep.subr.bf16.mxu0 0
    %278 = vmatpush1.bf16.msra.mxu0 0
    %279 = vmatprep.subr.bf16.mxu0 0
    %280 = vmatpush1.bf16.msra.mxu0 0
    %281 = vmatprep.subr.bf16.mxu0 0
    %282 = vmatpush1.bf16.msra.mxu0 0
    %283 = vmatprep.subr.bf16.mxu0 0
    %284 = vmatpush1.bf16.msra.mxu0 0
    %285 = vmatprep.subr.bf16.mxu0 0
    %286 = vmatpush1.bf16.msra.mxu0 0
    %287 = vmatprep.subr.bf16.mxu0 0
    %288 = vmatpush1.bf16.msra.mxu0 0
    %289 = vmatprep.mubr.bf16.mxu0 0
    %290 = vmatmul.mubr.bf16.gmra.mrb[0].mxu0 %v199
    %v291 = vpop.f32.mrb[0].mxu0
    %v292 = vadd.f32 %v153, %v291
    %v293 = vpop.f32.mrb[0].mxu0
    %v294 = vadd.f32 %v157, %v293
    %v295 = vpop.f32.mrb[0].mxu0
    %v296 = vadd.f32 %v153, %v295
    %v297 = vpop.f32.mrb[0].mxu0
    %v298 = vadd.f32 %v157, %v297
    %299 = vdwg.mxu0
    %v300 = vmax.f32 %v249, 0.0
    %v301 = vmax.f32 %v251, 0.0
    %v302 = vmax.f32 %v292, 0.0
    %v303 = vmax.f32 %v294, 0.0
    %v304 = vmax.f32 %v253, 0.0
    %v305 = vmax.f32 %v255, 0.0
    %v306 = vmax.f32 %v296, 0.0
    %v307 = vmax.f32 %v298, 0.0
    %v308 = vld [vmem:[#allocation7] sm:$0xff]
    %v309 = vld [vmem:[#allocation7 + $0x8] sm:$0xff]
    %v310 = vld [vmem:[#allocation7 + $0x10] sm:$0xff]
    %v311 = vld [vmem:[#allocation7 + $0x18] sm:$0xff]
    %v312 = vld [vmem:[#allocation7 + $0x20] sm:$0xff]
    %v313 = vld [vmem:[#allocation7 + $0x28] sm:$0xff]
    %v314 = vld [vmem:[#allocation7 + $0x30] sm:$0xff]
    %v315 = vld [vmem:[#allocation7 + $0x38] sm:$0xff]
    %v316 = vld [vmem:[#allocation7 + $0x40] sm:$0xff]
    %v317 = vld [vmem:[#allocation7 + $0x48] sm:$0xff]
    %v318 = vld [vmem:[#allocation7 + $0x50] sm:$0xff]
    %v319 = vld [vmem:[#allocation7 + $0x58] sm:$0xff]
    %v320 = vld [vmem:[#allocation7 + $0x60] sm:$0xff]
    %v321 = vld [vmem:[#allocation7 + $0x68] sm:$0xff]
    %v322 = vld [vmem:[#allocation7 + $0x70] sm:$0xff]
    %v323 = vld [vmem:[#allocation7 + $0x78] sm:$0xff]
    %v324 = vld [vmem:[#allocation7 + $0x80] sm:$0xff]
    %v325 = vld [vmem:[#allocation7 + $0x88] sm:$0xff]
    %v326 = vld [vmem:[#allocation7 + $0x90] sm:$0xff]
    %v327 = vld [vmem:[#allocation7 + $0x98] sm:$0xff]
    %v328 = vld [vmem:[#allocation7 + $0xa0] sm:$0xff]
    %v329 = vld [vmem:[#allocation7 + $0xa8] sm:$0xff]
    %v330 = vld [vmem:[#allocation7 + $0xb0] sm:$0xff]
    %v331 = vld [vmem:[#allocation7 + $0xb8] sm:$0xff]
    %v332 = vld [vmem:[#allocation7 + $0xc0] sm:$0xff]
    %v333 = vld [vmem:[#allocation7 + $0xc8] sm:$0xff]
    %v334 = vld [vmem:[#allocation7 + $0xd0] sm:$0xff]
    %v335 = vld [vmem:[#allocation7 + $0xd8] sm:$0xff]
    %v336 = vld [vmem:[#allocation7 + $0xe0] sm:$0xff]
    %v337 = vld [vmem:[#allocation7 + $0xe8] sm:$0xff]
    %v338 = vld [vmem:[#allocation7 + $0xf0] sm:$0xff]
    %v339 = vld [vmem:[#allocation7 + $0xf8] sm:$0xff]
    %v340 = vld [vmem:[#allocation7 + $0x100] sm:$0xff]
    %v341 = vld [vmem:[#allocation7 + $0x108] sm:$0xff]
    %v342 = vld [vmem:[#allocation7 + $0x110] sm:$0xff]
    %v343 = vld [vmem:[#allocation7 + $0x118] sm:$0xff]
    %v344 = vld [vmem:[#allocation7 + $0x120] sm:$0xff]
    %v345 = vld [vmem:[#allocation7 + $0x128] sm:$0xff]
    %v346 = vld [vmem:[#allocation7 + $0x130] sm:$0xff]
    %v347 = vld [vmem:[#allocation7 + $0x138] sm:$0xff]
    %v348 = vld [vmem:[#allocation7 + $0x140] sm:$0xff]
    %v349 = vld [vmem:[#allocation7 + $0x148] sm:$0xff]
    %v350 = vld [vmem:[#allocation7 + $0x150] sm:$0xff]
    %v351 = vld [vmem:[#allocation7 + $0x158] sm:$0xff]
    %v352 = vld [vmem:[#allocation7 + $0x160] sm:$0xff]
    %v353 = vld [vmem:[#allocation7 + $0x168] sm:$0xff]
    %v354 = vld [vmem:[#allocation7 + $0x170] sm:$0xff]
    %v355 = vld [vmem:[#allocation7 + $0x178] sm:$0xff]
    %v356 = vld [vmem:[#allocation7 + $0x180] sm:$0xff]
    %v357 = vld [vmem:[#allocation7 + $0x188] sm:$0xff]
    %v358 = vld [vmem:[#allocation7 + $0x190] sm:$0xff]
    %v359 = vld [vmem:[#allocation7 + $0x198] sm:$0xff]
    %v360 = vld [vmem:[#allocation7 + $0x1a0] sm:$0xff]
    %v361 = vld [vmem:[#allocation7 + $0x1a8] sm:$0xff]
    %v362 = vld [vmem:[#allocation7 + $0x1b0] sm:$0xff]
    %v363 = vld [vmem:[#allocation7 + $0x1b8] sm:$0xff]
    %v364 = vld [vmem:[#allocation7 + $0x1c0] sm:$0xff]
    %v365 = vld [vmem:[#allocation7 + $0x1c8] sm:$0xff]
    %v366 = vld [vmem:[#allocation7 + $0x1d0] sm:$0xff]
    %v367 = vld [vmem:[#allocation7 + $0x1d8] sm:$0xff]
    %v368 = vld [vmem:[#allocation7 + $0x1e0] sm:$0xff]
    %v369 = vld [vmem:[#allocation7 + $0x1e8] sm:$0xff]
    %v370 = vld [vmem:[#allocation7 + $0x1f0] sm:$0xff]
    %v371 = vld [vmem:[#allocation7 + $0x1f8] sm:$0xff]
    %v372 = vld [vmem:[#allocation7 + $0x200] sm:$0xff]
    %v373 = vld [vmem:[#allocation7 + $0x208] sm:$0xff]
    %v374 = vld [vmem:[#allocation7 + $0x210] sm:$0xff]
    %v375 = vld [vmem:[#allocation7 + $0x218] sm:$0xff]
    %v376 = vld [vmem:[#allocation7 + $0x220] sm:$0xff]
    %v377 = vld [vmem:[#allocation7 + $0x228] sm:$0xff]
    %v378 = vld [vmem:[#allocation7 + $0x230] sm:$0xff]
    %v379 = vld [vmem:[#allocation7 + $0x238] sm:$0xff]
    %v380 = vld [vmem:[#allocation7 + $0x240] sm:$0xff]
    %v381 = vld [vmem:[#allocation7 + $0x248] sm:$0xff]
    %v382 = vld [vmem:[#allocation7 + $0x250] sm:$0xff]
    %v383 = vld [vmem:[#allocation7 + $0x258] sm:$0xff]
    %v384 = vld [vmem:[#allocation7 + $0x260] sm:$0xff]
    %v385 = vld [vmem:[#allocation7 + $0x268] sm:$0xff]
    %v386 = vld [vmem:[#allocation7 + $0x270] sm:$0xff]
    %v387 = vld [vmem:[#allocation7 + $0x278] sm:$0xff]
    %v388 = vld [vmem:[#allocation7 + $0x280] sm:$0xff]
    %v389 = vld [vmem:[#allocation7 + $0x288] sm:$0xff]
    %v390 = vld [vmem:[#allocation7 + $0x290] sm:$0xff]
    %v391 = vld [vmem:[#allocation7 + $0x298] sm:$0xff]
    %v392 = vld [vmem:[#allocation7 + $0x2a0] sm:$0xff]
    %v393 = vld [vmem:[#allocation7 + $0x2a8] sm:$0xff]
    %v394 = vld [vmem:[#allocation7 + $0x2b0] sm:$0xff]
    %v395 = vld [vmem:[#allocation7 + $0x2b8] sm:$0xff]
    %v396 = vld [vmem:[#allocation7 + $0x2c0] sm:$0xff]
    %v397 = vld [vmem:[#allocation7 + $0x2c8] sm:$0xff]
    %v398 = vld [vmem:[#allocation7 + $0x2d0] sm:$0xff]
    %v399 = vld [vmem:[#allocation7 + $0x2d8] sm:$0xff]
    %v400 = vld [vmem:[#allocation7 + $0x2e0] sm:$0xff]
    %v401 = vld [vmem:[#allocation7 + $0x2e8] sm:$0xff]
    %v402 = vld [vmem:[#allocation7 + $0x2f0] sm:$0xff]
    %v403 = vld [vmem:[#allocation7 + $0x2f8] sm:$0xff]
    %v404 = vld [vmem:[#allocation7 + $0x300] sm:$0xff]
    %v405 = vld [vmem:[#allocation7 + $0x308] sm:$0xff]
    %v406 = vld [vmem:[#allocation7 + $0x310] sm:$0xff]
    %v407 = vld [vmem:[#allocation7 + $0x318] sm:$0xff]
    %v408 = vpack.c.bf16 %v304, %v300
    %v409 = vpack.c.bf16 %v305, %v301
    %v410 = vpack.c.bf16 %v306, %v302
    %v411 = vpack.c.bf16 %v307, %v303
    %s412 = scalar_lea.vmem [#allocation13], 1
    %v413 = vld [vmem:[%s412] ss:$8 sm:$0xf]
    %v415 = vlaneseq
    %v416 = vshrl.u32 %v415, 7
    %v417 = vsub.s32 0, %v416
    %v418 = vrot.slane %v413, %v417
    %v419 = vlaneseq
    %v420 = vshrl.u32 %v419, 7
    %v421 = vsub.s32 1, %v420
    %v422 = vrot.slane %v413, %v421
    %v423 = vlaneseq
    %v424 = vshrl.u32 %v423, 7
    %v425 = vsub.s32 2, %v424
    %v426 = vrot.slane %v413, %v425
    %v427 = vlaneseq
    %v428 = vshrl.u32 %v427, 7
    %v429 = vsub.s32 3, %v428
    %v430 = vrot.slane %v413, %v429
    %v535 = vunpack.c.l.b16 %v308
    %v536 = vunpack.c.h.b16 %v308
    %v537 = vunpack.c.l.b16 %v309
    %v538 = vunpack.c.h.b16 %v309
    %v539 = vunpack.c.l.b16 %v310
    %v540 = vunpack.c.h.b16 %v310
    %v541 = vunpack.c.l.b16 %v311
    %v542 = vunpack.c.h.b16 %v311
    %v543 = vunpack.c.l.b16 %v312
    %v544 = vunpack.c.h.b16 %v312
    %v545 = vunpack.c.l.b16 %v313
    %v546 = vunpack.c.h.b16 %v313
    %v547 = vunpack.c.l.b16 %v314
    %v548 = vunpack.c.h.b16 %v314
    %v549 = vunpack.c.l.b16 %v315
    %v550 = vunpack.c.h.b16 %v315
    %v551 = vunpack.c.l.b16 %v316
    %v552 = vunpack.c.h.b16 %v316
    %v553 = vunpack.c.l.b16 %v317
    %v554 = vunpack.c.h.b16 %v317
    %v555 = vunpack.c.l.b16 %v318
    %v556 = vunpack.c.h.b16 %v318
    %v557 = vunpack.c.l.b16 %v319
    %v558 = vunpack.c.h.b16 %v319
    %v559 = vunpack.c.l.b16 %v320
    %v560 = vunpack.c.h.b16 %v320
    %v561 = vunpack.c.l.b16 %v321
    %v562 = vunpack.c.h.b16 %v321
    %v563 = vunpack.c.l.b16 %v322
    %v564 = vunpack.c.h.b16 %v322
    %v565 = vunpack.c.l.b16 %v323
    %v566 = vunpack.c.h.b16 %v323
    %v567 = vunpack.c.l.b16 %v324
    %v568 = vunpack.c.h.b16 %v324
    %v569 = vunpack.c.l.b16 %v325
    %v570 = vunpack.c.h.b16 %v325
    %v571 = vunpack.c.l.b16 %v326
    %v572 = vunpack.c.h.b16 %v326
    %v573 = vunpack.c.l.b16 %v327
    %v574 = vunpack.c.h.b16 %v327
    %v575 = vunpack.c.l.b16 %v328
    %v576 = vunpack.c.h.b16 %v328
    %v577 = vunpack.c.l.b16 %v329
    %v578 = vunpack.c.h.b16 %v329
    %v579 = vunpack.c.l.b16 %v330
    %v580 = vunpack.c.h.b16 %v330
    %v581 = vunpack.c.l.b16 %v331
    %v582 = vunpack.c.h.b16 %v331
    %v583 = vunpack.c.l.b16 %v332
    %v584 = vunpack.c.h.b16 %v332
    %v585 = vunpack.c.l.b16 %v333
    %v586 = vunpack.c.h.b16 %v333
    %v587 = vunpack.c.l.b16 %v334
    %v588 = vunpack.c.h.b16 %v334
    %v589 = vunpack.c.l.b16 %v335
    %v590 = vunpack.c.h.b16 %v335
    %v591 = vunpack.c.l.b16 %v336
    %v592 = vunpack.c.h.b16 %v336
    %v593 = vunpack.c.l.b16 %v337
    %v594 = vunpack.c.h.b16 %v337
    %v595 = vunpack.c.l.b16 %v338
    %v596 = vunpack.c.h.b16 %v338
    %v597 = vunpack.c.l.b16 %v339
    %v598 = vunpack.c.h.b16 %v339
    %v599 = vunpack.c.l.b16 %v340
    %v600 = vunpack.c.h.b16 %v340
    %v601 = vunpack.c.l.b16 %v341
    %v602 = vunpack.c.h.b16 %v341
    %v603 = vunpack.c.l.b16 %v342
    %v604 = vunpack.c.h.b16 %v342
    %v605 = vunpack.c.l.b16 %v343
    %v606 = vunpack.c.h.b16 %v343
    %v607 = vunpack.c.l.b16 %v344
    %v608 = vunpack.c.h.b16 %v344
    %v609 = vunpack.c.l.b16 %v345
    %v610 = vunpack.c.h.b16 %v345
    %v611 = vunpack.c.l.b16 %v346
    %v612 = vunpack.c.h.b16 %v346
    %v613 = vunpack.c.l.b16 %v347
    %v614 = vunpack.c.h.b16 %v347
    %v615 = vunpack.c.l.b16 %v348
    %v616 = vunpack.c.h.b16 %v348
    %v617 = vunpack.c.l.b16 %v349
    %v618 = vunpack.c.h.b16 %v349
    %v619 = vunpack.c.l.b16 %v350
    %v620 = vunpack.c.h.b16 %v350
    %v621 = vunpack.c.l.b16 %v351
    %v622 = vunpack.c.h.b16 %v351
    %v623 = vunpack.c.l.b16 %v352
    %v624 = vunpack.c.h.b16 %v352
    %v625 = vunpack.c.l.b16 %v353
    %v626 = vunpack.c.h.b16 %v353
    %v627 = vunpack.c.l.b16 %v354
    %v628 = vunpack.c.h.b16 %v354
    %v629 = vunpack.c.l.b16 %v355
    %v630 = vunpack.c.h.b16 %v355
    %v631 = vunpack.c.l.b16 %v356
    %v632 = vunpack.c.h.b16 %v356
    %v633 = vunpack.c.l.b16 %v357
    %v634 = vunpack.c.h.b16 %v357
    %v635 = vunpack.c.l.b16 %v358
    %v636 = vunpack.c.h.b16 %v358
    %v637 = vunpack.c.l.b16 %v359
    %v638 = vunpack.c.h.b16 %v359
    %v639 = vunpack.c.l.b16 %v360
    %v640 = vunpack.c.h.b16 %v360
    %v641 = vunpack.c.l.b16 %v361
    %v642 = vunpack.c.h.b16 %v361
    %v643 = vunpack.c.l.b16 %v362
    %v644 = vunpack.c.h.b16 %v362
    %v645 = vunpack.c.l.b16 %v363
    %v646 = vunpack.c.h.b16 %v363
    %v647 = vunpack.c.l.b16 %v364
    %v648 = vunpack.c.h.b16 %v364
    %v649 = vunpack.c.l.b16 %v365
    %v650 = vunpack.c.h.b16 %v365
    %v651 = vunpack.c.l.b16 %v366
    %v652 = vunpack.c.h.b16 %v366
    %v653 = vunpack.c.l.b16 %v367
    %v654 = vunpack.c.h.b16 %v367
    %v655 = vunpack.c.l.b16 %v368
    %v656 = vunpack.c.h.b16 %v368
    %v657 = vunpack.c.l.b16 %v369
    %v658 = vunpack.c.h.b16 %v369
    %v659 = vunpack.c.l.b16 %v370
    %v660 = vunpack.c.h.b16 %v370
    %v661 = vunpack.c.l.b16 %v371
    %v662 = vunpack.c.h.b16 %v371
    %v663 = vunpack.c.l.b16 %v372
    %v664 = vunpack.c.h.b16 %v372
    %v665 = vunpack.c.l.b16 %v373
    %v666 = vunpack.c.h.b16 %v373
    %v667 = vunpack.c.l.b16 %v374
    %v668 = vunpack.c.h.b16 %v374
    %v669 = vunpack.c.l.b16 %v375
    %v670 = vunpack.c.h.b16 %v375
    %v671 = vunpack.c.l.b16 %v376
    %v672 = vunpack.c.h.b16 %v376
    %v673 = vunpack.c.l.b16 %v377
    %v674 = vunpack.c.h.b16 %v377
    %v675 = vunpack.c.l.b16 %v378
    %v676 = vunpack.c.h.b16 %v378
    %v677 = vunpack.c.l.b16 %v379
    %v678 = vunpack.c.h.b16 %v379
    %v679 = vunpack.c.l.b16 %v380
    %v680 = vunpack.c.h.b16 %v380
    %v681 = vunpack.c.l.b16 %v381
    %v682 = vunpack.c.h.b16 %v381
    %v683 = vunpack.c.l.b16 %v382
    %v684 = vunpack.c.h.b16 %v382
    %v685 = vunpack.c.l.b16 %v383
    %v686 = vunpack.c.h.b16 %v383
    %v687 = vunpack.c.l.b16 %v384
    %v688 = vunpack.c.h.b16 %v384
    %v689 = vunpack.c.l.b16 %v385
    %v690 = vunpack.c.h.b16 %v385
    %v691 = vunpack.c.l.b16 %v386
    %v692 = vunpack.c.h.b16 %v386
    %v693 = vunpack.c.l.b16 %v387
    %v694 = vunpack.c.h.b16 %v387
    %v695 = vunpack.c.l.b16 %v388
    %v696 = vunpack.c.h.b16 %v388
    %v697 = vunpack.c.l.b16 %v389
    %v698 = vunpack.c.h.b16 %v389
    %v699 = vunpack.c.l.b16 %v390
    %v700 = vunpack.c.h.b16 %v390
    %v701 = vunpack.c.l.b16 %v391
    %v702 = vunpack.c.h.b16 %v391
    %v703 = vunpack.c.l.b16 %v392
    %v704 = vunpack.c.h.b16 %v392
    %v705 = vunpack.c.l.b16 %v393
    %v706 = vunpack.c.h.b16 %v393
    %v707 = vunpack.c.l.b16 %v394
    %v708 = vunpack.c.h.b16 %v394
    %v709 = vunpack.c.l.b16 %v395
    %v710 = vunpack.c.h.b16 %v395
    %v711 = vunpack.c.l.b16 %v396
    %v712 = vunpack.c.h.b16 %v396
    %v713 = vunpack.c.l.b16 %v397
    %v714 = vunpack.c.h.b16 %v397
    %v715 = vunpack.c.l.b16 %v398
    %v716 = vunpack.c.h.b16 %v398
    %v717 = vunpack.c.l.b16 %v399
    %v718 = vunpack.c.h.b16 %v399
    %v719 = vunpack.c.l.b16 %v400
    %v720 = vunpack.c.h.b16 %v400
    %v721 = vunpack.c.l.b16 %v401
    %v722 = vunpack.c.h.b16 %v401
    %v723 = vunpack.c.l.b16 %v402
    %v724 = vunpack.c.h.b16 %v402
    %v725 = vunpack.c.l.b16 %v403
    %v726 = vunpack.c.h.b16 %v403
    %v727 = vunpack.c.l.b16 %v404
    %v728 = vunpack.c.h.b16 %v404
    %v729 = vunpack.c.l.b16 %v405
    %v730 = vunpack.c.h.b16 %v405
    %v731 = vunpack.c.l.b16 %v406
    %v732 = vunpack.c.h.b16 %v406
    %v733 = vunpack.c.l.b16 %v407
    %v734 = vunpack.c.h.b16 %v407
    %v735 = vpack.c.b16 %v539, %v535
    %v736 = vpack.c.b16 %v540, %v536
    %v737 = vpack.c.b16 %v541, %v537
    %v738 = vpack.c.b16 %v542, %v538
    %v739 = vpack.c.b16 %v547, %v543
    %v740 = vpack.c.b16 %v548, %v544
    %v741 = vpack.c.b16 %v549, %v545
    %v742 = vpack.c.b16 %v550, %v546
    %v743 = vpack.c.b16 %v555, %v551
    %v744 = vpack.c.b16 %v556, %v552
    %v745 = vpack.c.b16 %v557, %v553
    %v746 = vpack.c.b16 %v558, %v554
    %v747 = vpack.c.b16 %v563, %v559
    %v748 = vpack.c.b16 %v564, %v560
    %v749 = vpack.c.b16 %v565, %v561
    %v750 = vpack.c.b16 %v566, %v562
    %v751 = vpack.c.b16 %v571, %v567
    %v752 = vpack.c.b16 %v572, %v568
    %v753 = vpack.c.b16 %v573, %v569
    %v754 = vpack.c.b16 %v574, %v570
    %v755 = vpack.c.b16 %v579, %v575
    %v756 = vpack.c.b16 %v580, %v576
    %v757 = vpack.c.b16 %v581, %v577
    %v758 = vpack.c.b16 %v582, %v578
    %v759 = vpack.c.b16 %v587, %v583
    %v760 = vpack.c.b16 %v588, %v584
    %v761 = vpack.c.b16 %v589, %v585
    %v762 = vpack.c.b16 %v590, %v586
    %v763 = vpack.c.b16 %v595, %v591
    %v764 = vpack.c.b16 %v596, %v592
    %v765 = vpack.c.b16 %v597, %v593
    %v766 = vpack.c.b16 %v598, %v594
    %v767 = vpack.c.b16 %v603, %v599
    %v768 = vpack.c.b16 %v604, %v600
    %v769 = vpack.c.b16 %v605, %v601
    %v770 = vpack.c.b16 %v606, %v602
    %v771 = vpack.c.b16 %v611, %v607
    %v772 = vpack.c.b16 %v612, %v608
    %v773 = vpack.c.b16 %v613, %v609
    %v774 = vpack.c.b16 %v614, %v610
    %v775 = vpack.c.b16 %v619, %v615
    %v776 = vpack.c.b16 %v620, %v616
    %v777 = vpack.c.b16 %v621, %v617
    %v778 = vpack.c.b16 %v622, %v618
    %v779 = vpack.c.b16 %v627, %v623
    %v780 = vpack.c.b16 %v628, %v624
    %v781 = vpack.c.b16 %v629, %v625
    %v782 = vpack.c.b16 %v630, %v626
    %v783 = vpack.c.b16 %v635, %v631
    %v784 = vpack.c.b16 %v636, %v632
    %v785 = vpack.c.b16 %v637, %v633
    %v786 = vpack.c.b16 %v638, %v634
    %v787 = vpack.c.b16 %v643, %v639
    %v788 = vpack.c.b16 %v644, %v640
    %v789 = vpack.c.b16 %v645, %v641
    %v790 = vpack.c.b16 %v646, %v642
    %v791 = vpack.c.b16 %v651, %v647
    %v792 = vpack.c.b16 %v652, %v648
    %v793 = vpack.c.b16 %v653, %v649
    %v794 = vpack.c.b16 %v654, %v650
    %v795 = vpack.c.b16 %v659, %v655
    %v796 = vpack.c.b16 %v660, %v656
    %v797 = vpack.c.b16 %v661, %v657
    %v798 = vpack.c.b16 %v662, %v658
    %v799 = vpack.c.b16 %v667, %v663
    %v800 = vpack.c.b16 %v668, %v664
    %v801 = vpack.c.b16 %v669, %v665
    %v802 = vpack.c.b16 %v670, %v666
    %v803 = vpack.c.b16 %v675, %v671
    %v804 = vpack.c.b16 %v676, %v672
    %v805 = vpack.c.b16 %v677, %v673
    %v806 = vpack.c.b16 %v678, %v674
    %v807 = vpack.c.b16 %v683, %v679
    %v808 = vpack.c.b16 %v684, %v680
    %v809 = vpack.c.b16 %v685, %v681
    %v810 = vpack.c.b16 %v686, %v682
    %v811 = vpack.c.b16 %v691, %v687
    %v812 = vpack.c.b16 %v692, %v688
    %v813 = vpack.c.b16 %v693, %v689
    %v814 = vpack.c.b16 %v694, %v690
    %v815 = vpack.c.b16 %v699, %v695
    %v816 = vpack.c.b16 %v700, %v696
    %v817 = vpack.c.b16 %v701, %v697
    %v818 = vpack.c.b16 %v702, %v698
    %v819 = vpack.c.b16 %v707, %v703
    %v820 = vpack.c.b16 %v708, %v704
    %v821 = vpack.c.b16 %v709, %v705
    %v822 = vpack.c.b16 %v710, %v706
    %v823 = vpack.c.b16 %v715, %v711
    %v824 = vpack.c.b16 %v716, %v712
    %v825 = vpack.c.b16 %v717, %v713
    %v826 = vpack.c.b16 %v718, %v714
    %v827 = vpack.c.b16 %v723, %v719
    %v828 = vpack.c.b16 %v724, %v720
    %v829 = vpack.c.b16 %v725, %v721
    %v830 = vpack.c.b16 %v726, %v722
    %v831 = vpack.c.b16 %v731, %v727
    %v832 = vpack.c.b16 %v732, %v728
    %v833 = vpack.c.b16 %v733, %v729
    %v834 = vpack.c.b16 %v734, %v730
    %vm935 = vcmask 130048
    %v937 = vsel %vm935, %v411, 0
    %939 = vmatprep.subr.bf16.mxu0 %v736
    %940 = vmatpush1.bf16.msra.mxu0 %v735
    %941 = vmatprep.subr.bf16.mxu0 %v740
    %942 = vmatpush1.bf16.msra.mxu0 %v739
    %943 = vmatprep.subr.bf16.mxu0 %v744
    %944 = vmatpush1.bf16.msra.mxu0 %v743
    %945 = vmatprep.subr.bf16.mxu0 %v748
    %946 = vmatpush1.bf16.msra.mxu0 %v747
    %947 = vmatprep.subr.bf16.mxu0 %v752
    %948 = vmatpush1.bf16.msra.mxu0 %v751
    %949 = vmatprep.subr.bf16.mxu0 %v756
    %950 = vmatpush1.bf16.msra.mxu0 %v755
    %951 = vmatprep.subr.bf16.mxu0 %v760
    %952 = vmatpush1.bf16.msra.mxu0 %v759
    %953 = vmatprep.subr.bf16.mxu0 %v764
    %954 = vmatpush1.bf16.msra.mxu0 %v763
    %955 = vmatprep.subr.bf16.mxu0 %v768
    %956 = vmatpush1.bf16.msra.mxu0 %v767
    %957 = vmatprep.subr.bf16.mxu0 %v772
    %958 = vmatpush1.bf16.msra.mxu0 %v771
    %959 = vmatprep.subr.bf16.mxu0 %v776
    %960 = vmatpush1.bf16.msra.mxu0 %v775
    %961 = vmatprep.subr.bf16.mxu0 %v780
    %962 = vmatpush1.bf16.msra.mxu0 %v779
    %963 = vmatprep.subr.bf16.mxu0 %v784
    %964 = vmatpush1.bf16.msra.mxu0 %v783
    %965 = vmatprep.subr.bf16.mxu0 %v788
    %966 = vmatpush1.bf16.msra.mxu0 %v787
    %967 = vmatprep.subr.bf16.mxu0 %v792
    %968 = vmatpush1.bf16.msra.mxu0 %v791
    %969 = vmatprep.subr.bf16.mxu0 %v796
    %970 = vmatpush1.bf16.msra.mxu0 %v795
    %971 = vmatprep.mubr.bf16.mxu0 %v409
    %972 = vmatmul.mubr.bf16.gmra.mrb[0].mxu0 %v408
    %v973 = vpop.f32.mrb[0].mxu0
    %v974 = vadd.f32 %v418, %v973
    %v975 = vpop.f32.mrb[0].mxu0
    %v976 = vadd.f32 %v422, %v975
    %v977 = vpop.f32.mrb[0].mxu0
    %v978 = vadd.f32 %v418, %v977
    %v979 = vpop.f32.mrb[0].mxu0
    %v980 = vadd.f32 %v422, %v979
    %981 = vdwg.mxu0
    %982 = vmatprep.subr.bf16.mxu0 %v800
    %983 = vmatpush1.bf16.msra.mxu0 %v799
    %984 = vmatprep.subr.bf16.mxu0 %v804
    %985 = vmatpush1.bf16.msra.mxu0 %v803
    %986 = vmatprep.subr.bf16.mxu0 %v808
    %987 = vmatpush1.bf16.msra.mxu0 %v807
    %988 = vmatprep.subr.bf16.mxu0 %v812
    %989 = vmatpush1.bf16.msra.mxu0 %v811
    %990 = vmatprep.subr.bf16.mxu0 %v816
    %991 = vmatpush1.bf16.msra.mxu0 %v815
    %992 = vmatprep.subr.bf16.mxu0 %v820
    %993 = vmatpush1.bf16.msra.mxu0 %v819
    %994 = vmatprep.subr.bf16.mxu0 %v824
    %995 = vmatpush1.bf16.msra.mxu0 %v823
    %996 = vmatprep.subr.bf16.mxu0 %v828
    %997 = vmatpush1.bf16.msra.mxu0 %v827
    %998 = vmatprep.subr.bf16.mxu0 %v832
    %999 = vmatpush1.bf16.msra.mxu0 %v831
    %1000 = vmatprep.subr.bf16.mxu0 0
    %1001 = vmatpush1.bf16.msra.mxu0 0
    %1002 = vmatprep.subr.bf16.mxu0 0
    %1003 = vmatpush1.bf16.msra.mxu0 0
    %1004 = vmatprep.subr.bf16.mxu0 0
    %1005 = vmatpush1.bf16.msra.mxu0 0
    %1006 = vmatprep.subr.bf16.mxu0 0
    %1007 = vmatpush1.bf16.msra.mxu0 0
    %1008 = vmatprep.subr.bf16.mxu0 0
    %1009 = vmatpush1.bf16.msra.mxu0 0
    %1010 = vmatprep.subr.bf16.mxu0 0
    %1011 = vmatpush1.bf16.msra.mxu0 0
    %1012 = vmatprep.subr.bf16.mxu0 0
    %1013 = vmatpush1.bf16.msra.mxu0 0
    %1014 = vmatprep.mubr.bf16.mxu0 %v937
    %1015 = vmatmul.mubr.bf16.gmra.mrb[0].mxu0 %v410
    %v1016 = vpop.f32.mrb[0].mxu0
    %v1017 = vadd.f32 %v974, %v1016
    %v1018 = vpop.f32.mrb[0].mxu0
    %v1019 = vadd.f32 %v976, %v1018
    %v1020 = vpop.f32.mrb[0].mxu0
    %v1021 = vadd.f32 %v978, %v1020
    %v1022 = vpop.f32.mrb[0].mxu0
    %v1023 = vadd.f32 %v980, %v1022
    %1024 = vdwg.mxu0
    %1025 = vmatprep.subr.bf16.mxu0 %v738
    %1026 = vmatpush1.bf16.msra.mxu0 %v737
    %1027 = vmatprep.subr.bf16.mxu0 %v742
    %1028 = vmatpush1.bf16.msra.mxu0 %v741
    %1029 = vmatprep.subr.bf16.mxu0 %v746
    %1030 = vmatpush1.bf16.msra.mxu0 %v745
    %1031 = vmatprep.subr.bf16.mxu0 %v750
    %1032 = vmatpush1.bf16.msra.mxu0 %v749
    %1033 = vmatprep.subr.bf16.mxu0 %v754
    %1034 = vmatpush1.bf16.msra.mxu0 %v753
    %1035 = vmatprep.subr.bf16.mxu0 %v758
    %1036 = vmatpush1.bf16.msra.mxu0 %v757
    %1037 = vmatprep.subr.bf16.mxu0 %v762
    %1038 = vmatpush1.bf16.msra.mxu0 %v761
    %1039 = vmatprep.subr.bf16.mxu0 %v766
    %1040 = vmatpush1.bf16.msra.mxu0 %v765
    %1041 = vmatprep.subr.bf16.mxu0 %v770
    %1042 = vmatpush1.bf16.msra.mxu0 %v769
    %1043 = vmatprep.subr.bf16.mxu0 %v774
    %1044 = vmatpush1.bf16.msra.mxu0 %v773
    %1045 = vmatprep.subr.bf16.mxu0 %v778
    %1046 = vmatpush1.bf16.msra.mxu0 %v777
    %1047 = vmatprep.subr.bf16.mxu0 %v782
    %1048 = vmatpush1.bf16.msra.mxu0 %v781
    %1049 = vmatprep.subr.bf16.mxu0 %v786
    %1050 = vmatpush1.bf16.msra.mxu0 %v785
    %1051 = vmatprep.subr.bf16.mxu0 %v790
    %1052 = vmatpush1.bf16.msra.mxu0 %v789
    %1053 = vmatprep.subr.bf16.mxu0 %v794
    %1054 = vmatpush1.bf16.msra.mxu0 %v793
    %1055 = vmatprep.subr.bf16.mxu0 %v798
    %1056 = vmatpush1.bf16.msra.mxu0 %v797
    %1057 = vmatprep.mubr.bf16.mxu0 %v409
    %1058 = vmatmul.mubr.bf16.gmra.mrb[0].mxu0 %v408
    %v1059 = vpop.f32.mrb[0].mxu0
    %v1060 = vadd.f32 %v426, %v1059
    %v1061 = vpop.f32.mrb[0].mxu0
    %v1062 = vadd.f32 %v430, %v1061
    %v1063 = vpop.f32.mrb[0].mxu0
    %v1064 = vadd.f32 %v426, %v1063
    %v1065 = vpop.f32.mrb[0].mxu0
    %v1066 = vadd.f32 %v430, %v1065
    %1067 = vdwg.mxu0
    %1068 = vmatprep.subr.bf16.mxu0 %v802
    %1069 = vmatpush1.bf16.msra.mxu0 %v801
    %1070 = vmatprep.subr.bf16.mxu0 %v806
    %1071 = vmatpush1.bf16.msra.mxu0 %v805
    %1072 = vmatprep.subr.bf16.mxu0 %v810
    %1073 = vmatpush1.bf16.msra.mxu0 %v809
    %1074 = vmatprep.subr.bf16.mxu0 %v814
    %1075 = vmatpush1.bf16.msra.mxu0 %v813
    %1076 = vmatprep.subr.bf16.mxu0 %v818
    %1077 = vmatpush1.bf16.msra.mxu0 %v817
    %1078 = vmatprep.subr.bf16.mxu0 %v822
    %1079 = vmatpush1.bf16.msra.mxu0 %v821
    %1080 = vmatprep.subr.bf16.mxu0 %v826
    %1081 = vmatpush1.bf16.msra.mxu0 %v825
    %1082 = vmatprep.subr.bf16.mxu0 %v830
    %1083 = vmatpush1.bf16.msra.mxu0 %v829
    %1084 = vmatprep.subr.bf16.mxu0 %v834
    %1085 = vmatpush1.bf16.msra.mxu0 %v833
    %1086 = vmatprep.subr.bf16.mxu0 0
    %1087 = vmatpush1.bf16.msra.mxu0 0
    %1088 = vmatprep.subr.bf16.mxu0 0
    %1089 = vmatpush1.bf16.msra.mxu0 0
    %1090 = vmatprep.subr.bf16.mxu0 0
    %1091 = vmatpush1.bf16.msra.mxu0 0
    %1092 = vmatprep.subr.bf16.mxu0 0
    %1093 = vmatpush1.bf16.msra.mxu0 0
    %1094 = vmatprep.subr.bf16.mxu0 0
    %1095 = vmatpush1.bf16.msra.mxu0 0
    %1096 = vmatprep.subr.bf16.mxu0 0
    %1097 = vmatpush1.bf16.msra.mxu0 0
    %1098 = vmatprep.subr.bf16.mxu0 0
    %1099 = vmatpush1.bf16.msra.mxu0 0
    %1100 = vmatprep.mubr.bf16.mxu0 %v937
    %1101 = vmatmul.mubr.bf16.gmra.mrb[0].mxu0 %v410
    %v1102 = vpop.f32.mrb[0].mxu0
    %v1103 = vadd.f32 %v1060, %v1102
    %v1104 = vpop.f32.mrb[0].mxu0
    %v1105 = vadd.f32 %v1062, %v1104
    %v1106 = vpop.f32.mrb[0].mxu0
    %v1107 = vadd.f32 %v1064, %v1106
    %v1108 = vpop.f32.mrb[0].mxu0
    %v1109 = vadd.f32 %v1066, %v1108
    %1110 = vdwg.mxu0
    %v1111 = vmax.f32 %v1017, 0.0
    %v1112 = vmax.f32 %v1019, 0.0
    %v1113 = vmax.f32 %v1103, 0.0
    %v1114 = vmax.f32 %v1105, 0.0
    %v1115 = vmax.f32 %v1021, 0.0
    %v1116 = vmax.f32 %v1023, 0.0
    %v1117 = vmax.f32 %v1107, 0.0
    %v1118 = vmax.f32 %v1109, 0.0
    %s1119 = scalar_lea.vmem [#allocation7], 800
    %v1120 = vld [vmem:[%s1119] sm:$0xff]
    %v1121 = vld [vmem:[%s1119 + $0x8] sm:$0xff]
    %v1122 = vld [vmem:[%s1119 + $0x10] sm:$0xff]
    %v1123 = vld [vmem:[%s1119 + $0x18] sm:$0xff]
    %v1124 = vld [vmem:[%s1119 + $0x20] sm:$0xff]
    %v1125 = vld [vmem:[%s1119 + $0x28] sm:$0xff]
    %v1126 = vld [vmem:[%s1119 + $0x30] sm:$0xff]
    %v1127 = vld [vmem:[%s1119 + $0x38] sm:$0xff]
    %v1128 = vld [vmem:[%s1119 + $0x40] sm:$0xff]
    %v1129 = vld [vmem:[%s1119 + $0x48] sm:$0xff]
    %v1130 = vld [vmem:[%s1119 + $0x50] sm:$0xff]
    %v1131 = vld [vmem:[%s1119 + $0x58] sm:$0xff]
    %v1132 = vld [vmem:[%s1119 + $0x60] sm:$0xff]
    %v1133 = vld [vmem:[%s1119 + $0x68] sm:$0xff]
    %v1134 = vld [vmem:[%s1119 + $0x70] sm:$0xff]
    %v1135 = vld [vmem:[%s1119 + $0x78] sm:$0xff]
    %v1136 = vld [vmem:[%s1119 + $0x80] sm:$0xff]
    %v1137 = vld [vmem:[%s1119 + $0x88] sm:$0xff]
    %v1138 = vld [vmem:[%s1119 + $0x90] sm:$0xff]
    %v1139 = vld [vmem:[%s1119 + $0x98] sm:$0xff]
    %v1140 = vld [vmem:[%s1119 + $0xa0] sm:$0xff]
    %v1141 = vld [vmem:[%s1119 + $0xa8] sm:$0xff]
    %v1142 = vld [vmem:[%s1119 + $0xb0] sm:$0xff]
    %v1143 = vld [vmem:[%s1119 + $0xb8] sm:$0xff]
    %v1144 = vld [vmem:[%s1119 + $0xc0] sm:$0xff]
    %v1145 = vld [vmem:[%s1119 + $0xc8] sm:$0xff]
    %v1146 = vld [vmem:[%s1119 + $0xd0] sm:$0xff]
    %v1147 = vld [vmem:[%s1119 + $0xd8] sm:$0xff]
    %v1148 = vld [vmem:[%s1119 + $0xe0] sm:$0xff]
    %v1149 = vld [vmem:[%s1119 + $0xe8] sm:$0xff]
    %v1150 = vld [vmem:[%s1119 + $0xf0] sm:$0xff]
    %v1151 = vld [vmem:[%s1119 + $0xf8] sm:$0xff]
    %v1152 = vld [vmem:[%s1119 + $0x100] sm:$0xff]
    %v1153 = vld [vmem:[%s1119 + $0x108] sm:$0xff]
    %v1154 = vld [vmem:[%s1119 + $0x110] sm:$0xff]
    %v1155 = vld [vmem:[%s1119 + $0x118] sm:$0xff]
    %v1156 = vld [vmem:[%s1119 + $0x120] sm:$0xff]
    %v1157 = vld [vmem:[%s1119 + $0x128] sm:$0xff]
    %v1158 = vld [vmem:[%s1119 + $0x130] sm:$0xff]
    %v1159 = vld [vmem:[%s1119 + $0x138] sm:$0xff]
    %v1160 = vld [vmem:[%s1119 + $0x140] sm:$0xff]
    %v1161 = vld [vmem:[%s1119 + $0x148] sm:$0xff]
    %v1162 = vld [vmem:[%s1119 + $0x150] sm:$0xff]
    %v1163 = vld [vmem:[%s1119 + $0x158] sm:$0xff]
    %v1164 = vld [vmem:[%s1119 + $0x160] sm:$0xff]
    %v1165 = vld [vmem:[%s1119 + $0x168] sm:$0xff]
    %v1166 = vld [vmem:[%s1119 + $0x170] sm:$0xff]
    %v1167 = vld [vmem:[%s1119 + $0x178] sm:$0xff]
    %v1168 = vld [vmem:[%s1119 + $0x180] sm:$0xff]
    %v1169 = vld [vmem:[%s1119 + $0x188] sm:$0xff]
    %v1170 = vld [vmem:[%s1119 + $0x190] sm:$0xff]
    %v1171 = vld [vmem:[%s1119 + $0x198] sm:$0xff]
    %v1172 = vld [vmem:[%s1119 + $0x1a0] sm:$0xff]
    %v1173 = vld [vmem:[%s1119 + $0x1a8] sm:$0xff]
    %v1174 = vld [vmem:[%s1119 + $0x1b0] sm:$0xff]
    %v1175 = vld [vmem:[%s1119 + $0x1b8] sm:$0xff]
    %v1176 = vld [vmem:[%s1119 + $0x1c0] sm:$0xff]
    %v1177 = vld [vmem:[%s1119 + $0x1c8] sm:$0xff]
    %v1178 = vld [vmem:[%s1119 + $0x1d0] sm:$0xff]
    %v1179 = vld [vmem:[%s1119 + $0x1d8] sm:$0xff]
    %v1180 = vld [vmem:[%s1119 + $0x1e0] sm:$0xff]
    %v1181 = vld [vmem:[%s1119 + $0x1e8] sm:$0xff]
    %v1182 = vld [vmem:[%s1119 + $0x1f0] sm:$0xff]
    %v1183 = vld [vmem:[%s1119 + $0x1f8] sm:$0xff]
    %v1184 = vld [vmem:[%s1119 + $0x200] sm:$0xff]
    %v1185 = vld [vmem:[%s1119 + $0x208] sm:$0xff]
    %v1186 = vld [vmem:[%s1119 + $0x210] sm:$0xff]
    %v1187 = vld [vmem:[%s1119 + $0x218] sm:$0xff]
    %v1188 = vld [vmem:[%s1119 + $0x220] sm:$0xff]
    %v1189 = vld [vmem:[%s1119 + $0x228] sm:$0xff]
    %v1190 = vld [vmem:[%s1119 + $0x230] sm:$0xff]
    %v1191 = vld [vmem:[%s1119 + $0x238] sm:$0xff]
    %v1192 = vld [vmem:[%s1119 + $0x240] sm:$0xff]
    %v1193 = vld [vmem:[%s1119 + $0x248] sm:$0xff]
    %v1194 = vld [vmem:[%s1119 + $0x250] sm:$0xff]
    %v1195 = vld [vmem:[%s1119 + $0x258] sm:$0xff]
    %v1196 = vld [vmem:[%s1119 + $0x260] sm:$0xff]
    %v1197 = vld [vmem:[%s1119 + $0x268] sm:$0xff]
    %v1198 = vld [vmem:[%s1119 + $0x270] sm:$0xff]
    %v1199 = vld [vmem:[%s1119 + $0x278] sm:$0xff]
    %v1200 = vld [vmem:[%s1119 + $0x280] sm:$0xff]
    %v1201 = vld [vmem:[%s1119 + $0x288] sm:$0xff]
    %v1202 = vld [vmem:[%s1119 + $0x290] sm:$0xff]
    %v1203 = vld [vmem:[%s1119 + $0x298] sm:$0xff]
    %v1204 = vld [vmem:[%s1119 + $0x2a0] sm:$0xff]
    %v1205 = vld [vmem:[%s1119 + $0x2a8] sm:$0xff]
    %v1206 = vld [vmem:[%s1119 + $0x2b0] sm:$0xff]
    %v1207 = vld [vmem:[%s1119 + $0x2b8] sm:$0xff]
    %v1208 = vld [vmem:[%s1119 + $0x2c0] sm:$0xff]
    %v1209 = vld [vmem:[%s1119 + $0x2c8] sm:$0xff]
    %v1210 = vld [vmem:[%s1119 + $0x2d0] sm:$0xff]
    %v1211 = vld [vmem:[%s1119 + $0x2d8] sm:$0xff]
    %v1212 = vld [vmem:[%s1119 + $0x2e0] sm:$0xff]
    %v1213 = vld [vmem:[%s1119 + $0x2e8] sm:$0xff]
    %v1214 = vld [vmem:[%s1119 + $0x2f0] sm:$0xff]
    %v1215 = vld [vmem:[%s1119 + $0x2f8] sm:$0xff]
    %v1216 = vld [vmem:[%s1119 + $0x300] sm:$0xff]
    %v1217 = vld [vmem:[%s1119 + $0x308] sm:$0xff]
    %v1218 = vld [vmem:[%s1119 + $0x310] sm:$0xff]
    %v1219 = vld [vmem:[%s1119 + $0x318] sm:$0xff]
    %v1220 = vpack.c.bf16 %v1115, %v1111
    %v1221 = vpack.c.bf16 %v1116, %v1112
    %v1222 = vpack.c.bf16 %v1117, %v1113
    %v1223 = vpack.c.bf16 %v1118, %v1114
    %s1224 = scalar_lea.vmem [#allocation13], 2
    %v1225 = vld [vmem:[%s1224] ss:$8 sm:$0xf]
    %v1227 = vlaneseq
    %v1228 = vshrl.u32 %v1227, 7
    %v1229 = vsub.s32 0, %v1228
    %v1230 = vrot.slane %v1225, %v1229
    %v1231 = vlaneseq
    %v1232 = vshrl.u32 %v1231, 7
    %v1233 = vsub.s32 1, %v1232
    %v1234 = vrot.slane %v1225, %v1233
    %v1235 = vlaneseq
    %v1236 = vshrl.u32 %v1235, 7
    %v1237 = vsub.s32 2, %v1236
    %v1238 = vrot.slane %v1225, %v1237
    %v1239 = vlaneseq
    %v1240 = vshrl.u32 %v1239, 7
    %v1241 = vsub.s32 3, %v1240
    %v1242 = vrot.slane %v1225, %v1241
    %v1347 = vunpack.c.l.b16 %v1120
    %v1348 = vunpack.c.h.b16 %v1120
    %v1349 = vunpack.c.l.b16 %v1121
    %v1350 = vunpack.c.h.b16 %v1121
    %v1351 = vunpack.c.l.b16 %v1122
    %v1352 = vunpack.c.h.b16 %v1122
    %v1353 = vunpack.c.l.b16 %v1123
    %v1354 = vunpack.c.h.b16 %v1123
    %v1355 = vunpack.c.l.b16 %v1124
    %v1356 = vunpack.c.h.b16 %v1124
    %v1357 = vunpack.c.l.b16 %v1125
    %v1358 = vunpack.c.h.b16 %v1125
    %v1359 = vunpack.c.l.b16 %v1126
    %v1360 = vunpack.c.h.b16 %v1126
    %v1361 = vunpack.c.l.b16 %v1127
    %v1362 = vunpack.c.h.b16 %v1127
    %v1363 = vunpack.c.l.b16 %v1128
    %v1364 = vunpack.c.h.b16 %v1128
    %v1365 = vunpack.c.l.b16 %v1129
    %v1366 = vunpack.c.h.b16 %v1129
    %v1367 = vunpack.c.l.b16 %v1130
    %v1368 = vunpack.c.h.b16 %v1130
    %v1369 = vunpack.c.l.b16 %v1131
    %v1370 = vunpack.c.h.b16 %v1131
    %v1371 = vunpack.c.l.b16 %v1132
    %v1372 = vunpack.c.h.b16 %v1132
    %v1373 = vunpack.c.l.b16 %v1133
    %v1374 = vunpack.c.h.b16 %v1133
    %v1375 = vunpack.c.l.b16 %v1134
    %v1376 = vunpack.c.h.b16 %v1134
    %v1377 = vunpack.c.l.b16 %v1135
    %v1378 = vunpack.c.h.b16 %v1135
    %v1379 = vunpack.c.l.b16 %v1136
    %v1380 = vunpack.c.h.b16 %v1136
    %v1381 = vunpack.c.l.b16 %v1137
    %v1382 = vunpack.c.h.b16 %v1137
    %v1383 = vunpack.c.l.b16 %v1138
    %v1384 = vunpack.c.h.b16 %v1138
    %v1385 = vunpack.c.l.b16 %v1139
    %v1386 = vunpack.c.h.b16 %v1139
    %v1387 = vunpack.c.l.b16 %v1140
    %v1388 = vunpack.c.h.b16 %v1140
    %v1389 = vunpack.c.l.b16 %v1141
    %v1390 = vunpack.c.h.b16 %v1141
    %v1391 = vunpack.c.l.b16 %v1142
    %v1392 = vunpack.c.h.b16 %v1142
    %v1393 = vunpack.c.l.b16 %v1143
    %v1394 = vunpack.c.h.b16 %v1143
    %v1395 = vunpack.c.l.b16 %v1144
    %v1396 = vunpack.c.h.b16 %v1144
    %v1397 = vunpack.c.l.b16 %v1145
    %v1398 = vunpack.c.h.b16 %v1145
    %v1399 = vunpack.c.l.b16 %v1146
    %v1400 = vunpack.c.h.b16 %v1146
    %v1401 = vunpack.c.l.b16 %v1147
    %v1402 = vunpack.c.h.b16 %v1147
    %v1403 = vunpack.c.l.b16 %v1148
    %v1404 = vunpack.c.h.b16 %v1148
    %v1405 = vunpack.c.l.b16 %v1149
    %v1406 = vunpack.c.h.b16 %v1149
    %v1407 = vunpack.c.l.b16 %v1150
    %v1408 = vunpack.c.h.b16 %v1150
    %v1409 = vunpack.c.l.b16 %v1151
    %v1410 = vunpack.c.h.b16 %v1151
    %v1411 = vunpack.c.l.b16 %v1152
    %v1412 = vunpack.c.h.b16 %v1152
    %v1413 = vunpack.c.l.b16 %v1153
    %v1414 = vunpack.c.h.b16 %v1153
    %v1415 = vunpack.c.l.b16 %v1154
    %v1416 = vunpack.c.h.b16 %v1154
    %v1417 = vunpack.c.l.b16 %v1155
    %v1418 = vunpack.c.h.b16 %v1155
    %v1419 = vunpack.c.l.b16 %v1156
    %v1420 = vunpack.c.h.b16 %v1156
    %v1421 = vunpack.c.l.b16 %v1157
    %v1422 = vunpack.c.h.b16 %v1157
    %v1423 = vunpack.c.l.b16 %v1158
    %v1424 = vunpack.c.h.b16 %v1158
    %v1425 = vunpack.c.l.b16 %v1159
    %v1426 = vunpack.c.h.b16 %v1159
    %v1427 = vunpack.c.l.b16 %v1160
    %v1428 = vunpack.c.h.b16 %v1160
    %v1429 = vunpack.c.l.b16 %v1161
    %v1430 = vunpack.c.h.b16 %v1161
    %v1431 = vunpack.c.l.b16 %v1162
    %v1432 = vunpack.c.h.b16 %v1162
    %v1433 = vunpack.c.l.b16 %v1163
    %v1434 = vunpack.c.h.b16 %v1163
    %v1435 = vunpack.c.l.b16 %v1164
    %v1436 = vunpack.c.h.b16 %v1164
    %v1437 = vunpack.c.l.b16 %v1165
    %v1438 = vunpack.c.h.b16 %v1165
    %v1439 = vunpack.c.l.b16 %v1166
    %v1440 = vunpack.c.h.b16 %v1166
    %v1441 = vunpack.c.l.b16 %v1167
    %v1442 = vunpack.c.h.b16 %v1167
    %v1443 = vunpack.c.l.b16 %v1168
    %v1444 = vunpack.c.h.b16 %v1168
    %v1445 = vunpack.c.l.b16 %v1169
    %v1446 = vunpack.c.h.b16 %v1169
    %v1447 = vunpack.c.l.b16 %v1170
    %v1448 = vunpack.c.h.b16 %v1170
    %v1449 = vunpack.c.l.b16 %v1171
    %v1450 = vunpack.c.h.b16 %v1171
    %v1451 = vunpack.c.l.b16 %v1172
    %v1452 = vunpack.c.h.b16 %v1172
    %v1453 = vunpack.c.l.b16 %v1173
    %v1454 = vunpack.c.h.b16 %v1173
    %v1455 = vunpack.c.l.b16 %v1174
    %v1456 = vunpack.c.h.b16 %v1174
    %v1457 = vunpack.c.l.b16 %v1175
    %v1458 = vunpack.c.h.b16 %v1175
    %v1459 = vunpack.c.l.b16 %v1176
    %v1460 = vunpack.c.h.b16 %v1176
    %v1461 = vunpack.c.l.b16 %v1177
    %v1462 = vunpack.c.h.b16 %v1177
    %v1463 = vunpack.c.l.b16 %v1178
    %v1464 = vunpack.c.h.b16 %v1178
    %v1465 = vunpack.c.l.b16 %v1179
    %v1466 = vunpack.c.h.b16 %v1179
    %v1467 = vunpack.c.l.b16 %v1180
    %v1468 = vunpack.c.h.b16 %v1180
    %v1469 = vunpack.c.l.b16 %v1181
    %v1470 = vunpack.c.h.b16 %v1181
    %v1471 = vunpack.c.l.b16 %v1182
    %v1472 = vunpack.c.h.b16 %v1182
    %v1473 = vunpack.c.l.b16 %v1183
    %v1474 = vunpack.c.h.b16 %v1183
    %v1475 = vunpack.c.l.b16 %v1184
    %v1476 = vunpack.c.h.b16 %v1184
    %v1477 = vunpack.c.l.b16 %v1185
    %v1478 = vunpack.c.h.b16 %v1185
    %v1479 = vunpack.c.l.b16 %v1186
    %v1480 = vunpack.c.h.b16 %v1186
    %v1481 = vunpack.c.l.b16 %v1187
    %v1482 = vunpack.c.h.b16 %v1187
    %v1483 = vunpack.c.l.b16 %v1188
    %v1484 = vunpack.c.h.b16 %v1188
    %v1485 = vunpack.c.l.b16 %v1189
    %v1486 = vunpack.c.h.b16 %v1189
    %v1487 = vunpack.c.l.b16 %v1190
    %v1488 = vunpack.c.h.b16 %v1190
    %v1489 = vunpack.c.l.b16 %v1191
    %v1490 = vunpack.c.h.b16 %v1191
    %v1491 = vunpack.c.l.b16 %v1192
    %v1492 = vunpack.c.h.b16 %v1192
    %v1493 = vunpack.c.l.b16 %v1193
    %v1494 = vunpack.c.h.b16 %v1193
    %v1495 = vunpack.c.l.b16 %v1194
    %v1496 = vunpack.c.h.b16 %v1194
    %v1497 = vunpack.c.l.b16 %v1195
    %v1498 = vunpack.c.h.b16 %v1195
    %v1499 = vunpack.c.l.b16 %v1196
    %v1500 = vunpack.c.h.b16 %v1196
    %v1501 = vunpack.c.l.b16 %v1197
    %v1502 = vunpack.c.h.b16 %v1197
    %v1503 = vunpack.c.l.b16 %v1198
    %v1504 = vunpack.c.h.b16 %v1198
    %v1505 = vunpack.c.l.b16 %v1199
    %v1506 = vunpack.c.h.b16 %v1199
    %v1507 = vunpack.c.l.b16 %v1200
    %v1508 = vunpack.c.h.b16 %v1200
    %v1509 = vunpack.c.l.b16 %v1201
    %v1510 = vunpack.c.h.b16 %v1201
    %v1511 = vunpack.c.l.b16 %v1202
    %v1512 = vunpack.c.h.b16 %v1202
    %v1513 = vunpack.c.l.b16 %v1203
    %v1514 = vunpack.c.h.b16 %v1203
    %v1515 = vunpack.c.l.b16 %v1204
    %v1516 = vunpack.c.h.b16 %v1204
    %v1517 = vunpack.c.l.b16 %v1205
    %v1518 = vunpack.c.h.b16 %v1205
    %v1519 = vunpack.c.l.b16 %v1206
    %v1520 = vunpack.c.h.b16 %v1206
    %v1521 = vunpack.c.l.b16 %v1207
    %v1522 = vunpack.c.h.b16 %v1207
    %v1523 = vunpack.c.l.b16 %v1208
    %v1524 = vunpack.c.h.b16 %v1208
    %v1525 = vunpack.c.l.b16 %v1209
    %v1526 = vunpack.c.h.b16 %v1209
    %v1527 = vunpack.c.l.b16 %v1210
    %v1528 = vunpack.c.h.b16 %v1210
    %v1529 = vunpack.c.l.b16 %v1211
    %v1530 = vunpack.c.h.b16 %v1211
    %v1531 = vunpack.c.l.b16 %v1212
    %v1532 = vunpack.c.h.b16 %v1212
    %v1533 = vunpack.c.l.b16 %v1213
    %v1534 = vunpack.c.h.b16 %v1213
    %v1535 = vunpack.c.l.b16 %v1214
    %v1536 = vunpack.c.h.b16 %v1214
    %v1537 = vunpack.c.l.b16 %v1215
    %v1538 = vunpack.c.h.b16 %v1215
    %v1539 = vunpack.c.l.b16 %v1216
    %v1540 = vunpack.c.h.b16 %v1216
    %v1541 = vunpack.c.l.b16 %v1217
    %v1542 = vunpack.c.h.b16 %v1217
    %v1543 = vunpack.c.l.b16 %v1218
    %v1544 = vunpack.c.h.b16 %v1218
    %v1545 = vunpack.c.l.b16 %v1219
    %v1546 = vunpack.c.h.b16 %v1219
    %v1547 = vpack.c.b16 %v1351, %v1347
    %v1548 = vpack.c.b16 %v1352, %v1348
    %v1549 = vpack.c.b16 %v1353, %v1349
    %v1550 = vpack.c.b16 %v1354, %v1350
    %v1551 = vpack.c.b16 %v1359, %v1355
    %v1552 = vpack.c.b16 %v1360, %v1356
    %v1553 = vpack.c.b16 %v1361, %v1357
    %v1554 = vpack.c.b16 %v1362, %v1358
    %v1555 = vpack.c.b16 %v1367, %v1363
    %v1556 = vpack.c.b16 %v1368, %v1364
    %v1557 = vpack.c.b16 %v1369, %v1365
    %v1558 = vpack.c.b16 %v1370, %v1366
    %v1559 = vpack.c.b16 %v1375, %v1371
    %v1560 = vpack.c.b16 %v1376, %v1372
    %v1561 = vpack.c.b16 %v1377, %v1373
    %v1562 = vpack.c.b16 %v1378, %v1374
    %v1563 = vpack.c.b16 %v1383, %v1379
    %v1564 = vpack.c.b16 %v1384, %v1380
    %v1565 = vpack.c.b16 %v1385, %v1381
    %v1566 = vpack.c.b16 %v1386, %v1382
    %v1567 = vpack.c.b16 %v1391, %v1387
    %v1568 = vpack.c.b16 %v1392, %v1388
    %v1569 = vpack.c.b16 %v1393, %v1389
    %v1570 = vpack.c.b16 %v1394, %v1390
    %v1571 = vpack.c.b16 %v1399, %v1395
    %v1572 = vpack.c.b16 %v1400, %v1396
    %v1573 = vpack.c.b16 %v1401, %v1397
    %v1574 = vpack.c.b16 %v1402, %v1398
    %v1575 = vpack.c.b16 %v1407, %v1403
    %v1576 = vpack.c.b16 %v1408, %v1404
    %v1577 = vpack.c.b16 %v1409, %v1405
    %v1578 = vpack.c.b16 %v1410, %v1406
    %v1579 = vpack.c.b16 %v1415, %v1411
    %v1580 = vpack.c.b16 %v1416, %v1412
    %v1581 = vpack.c.b16 %v1417, %v1413
    %v1582 = vpack.c.b16 %v1418, %v1414
    %v1583 = vpack.c.b16 %v1423, %v1419
    %v1584 = vpack.c.b16 %v1424, %v1420
    %v1585 = vpack.c.b16 %v1425, %v1421
    %v1586 = vpack.c.b16 %v1426, %v1422
    %v1587 = vpack.c.b16 %v1431, %v1427
    %v1588 = vpack.c.b16 %v1432, %v1428
    %v1589 = vpack.c.b16 %v1433, %v1429
    %v1590 = vpack.c.b16 %v1434, %v1430
    %v1591 = vpack.c.b16 %v1439, %v1435
    %v1592 = vpack.c.b16 %v1440, %v1436
    %v1593 = vpack.c.b16 %v1441, %v1437
    %v1594 = vpack.c.b16 %v1442, %v1438
    %v1595 = vpack.c.b16 %v1447, %v1443
    %v1596 = vpack.c.b16 %v1448, %v1444
    %v1597 = vpack.c.b16 %v1449, %v1445
    %v1598 = vpack.c.b16 %v1450, %v1446
    %v1599 = vpack.c.b16 %v1455, %v1451
    %v1600 = vpack.c.b16 %v1456, %v1452
    %v1601 = vpack.c.b16 %v1457, %v1453
    %v1602 = vpack.c.b16 %v1458, %v1454
    %v1603 = vpack.c.b16 %v1463, %v1459
    %v1604 = vpack.c.b16 %v1464, %v1460
    %v1605 = vpack.c.b16 %v1465, %v1461
    %v1606 = vpack.c.b16 %v1466, %v1462
    %v1607 = vpack.c.b16 %v1471, %v1467
    %v1608 = vpack.c.b16 %v1472, %v1468
    %v1609 = vpack.c.b16 %v1473, %v1469
    %v1610 = vpack.c.b16 %v1474, %v1470
    %v1611 = vpack.c.b16 %v1479, %v1475
    %v1612 = vpack.c.b16 %v1480, %v1476
    %v1613 = vpack.c.b16 %v1481, %v1477
    %v1614 = vpack.c.b16 %v1482, %v1478
    %v1615 = vpack.c.b16 %v1487, %v1483
    %v1616 = vpack.c.b16 %v1488, %v1484
    %v1617 = vpack.c.b16 %v1489, %v1485
    %v1618 = vpack.c.b16 %v1490, %v1486
    %v1619 = vpack.c.b16 %v1495, %v1491
    %v1620 = vpack.c.b16 %v1496, %v1492
    %v1621 = vpack.c.b16 %v1497, %v1493
    %v1622 = vpack.c.b16 %v1498, %v1494
    %v1623 = vpack.c.b16 %v1503, %v1499
    %v1624 = vpack.c.b16 %v1504, %v1500
    %v1625 = vpack.c.b16 %v1505, %v1501
    %v1626 = vpack.c.b16 %v1506, %v1502
    %v1627 = vpack.c.b16 %v1511, %v1507
    %v1628 = vpack.c.b16 %v1512, %v1508
    %v1629 = vpack.c.b16 %v1513, %v1509
    %v1630 = vpack.c.b16 %v1514, %v1510
    %v1631 = vpack.c.b16 %v1519, %v1515
    %v1632 = vpack.c.b16 %v1520, %v1516
    %v1633 = vpack.c.b16 %v1521, %v1517
    %v1634 = vpack.c.b16 %v1522, %v1518
    %v1635 = vpack.c.b16 %v1527, %v1523
    %v1636 = vpack.c.b16 %v1528, %v1524
    %v1637 = vpack.c.b16 %v1529, %v1525
    %v1638 = vpack.c.b16 %v1530, %v1526
    %v1639 = vpack.c.b16 %v1535, %v1531
    %v1640 = vpack.c.b16 %v1536, %v1532
    %v1641 = vpack.c.b16 %v1537, %v1533
    %v1642 = vpack.c.b16 %v1538, %v1534
    %v1643 = vpack.c.b16 %v1543, %v1539
    %v1644 = vpack.c.b16 %v1544, %v1540
    %v1645 = vpack.c.b16 %v1545, %v1541
    %v1646 = vpack.c.b16 %v1546, %v1542
    %v1748 = vsel %vm935, %v1223, 0
    %1750 = vmatprep.subr.bf16.mxu0 %v1548
    %1751 = vmatpush1.bf16.msra.mxu0 %v1547
    %1752 = vmatprep.subr.bf16.mxu0 %v1552
    %1753 = vmatpush1.bf16.msra.mxu0 %v1551
    %1754 = vmatprep.subr.bf16.mxu0 %v1556
    %1755 = vmatpush1.bf16.msra.mxu0 %v1555
    %1756 = vmatprep.subr.bf16.mxu0 %v1560
    %1757 = vmatpush1.bf16.msra.mxu0 %v1559
    %1758 = vmatprep.subr.bf16.mxu0 %v1564
    %1759 = vmatpush1.bf16.msra.mxu0 %v1563
    %1760 = vmatprep.subr.bf16.mxu0 %v1568
    %1761 = vmatpush1.bf16.msra.mxu0 %v1567
    %1762 = vmatprep.subr.bf16.mxu0 %v1572
    %1763 = vmatpush1.bf16.msra.mxu0 %v1571
    %1764 = vmatprep.subr.bf16.mxu0 %v1576
    %1765 = vmatpush1.bf16.msra.mxu0 %v1575
    %1766 = vmatprep.subr.bf16.mxu0 %v1580
    %1767 = vmatpush1.bf16.msra.mxu0 %v1579
    %1768 = vmatprep.subr.bf16.mxu0 %v1584
    %1769 = vmatpush1.bf16.msra.mxu0 %v1583
    %1770 = vmatprep.subr.bf16.mxu0 %v1588
    %1771 = vmatpush1.bf16.msra.mxu0 %v1587
    %1772 = vmatprep.subr.bf16.mxu0 %v1592
    %1773 = vmatpush1.bf16.msra.mxu0 %v1591
    %1774 = vmatprep.subr.bf16.mxu0 %v1596
    %1775 = vmatpush1.bf16.msra.mxu0 %v1595
    %1776 = vmatprep.subr.bf16.mxu0 %v1600
    %1777 = vmatpush1.bf16.msra.mxu0 %v1599
    %1778 = vmatprep.subr.bf16.mxu0 %v1604
    %1779 = vmatpush1.bf16.msra.mxu0 %v1603
    %1780 = vmatprep.subr.bf16.mxu0 %v1608
    %1781 = vmatpush1.bf16.msra.mxu0 %v1607
    %1782 = vmatprep.mubr.bf16.mxu0 %v1221
    %1783 = vmatmul.mubr.bf16.gmra.mrb[0].mxu0 %v1220
    %v1784 = vpop.f32.mrb[0].mxu0
    %v1785 = vadd.f32 %v1230, %v1784
    %v1786 = vpop.f32.mrb[0].mxu0
    %v1787 = vadd.f32 %v1234, %v1786
    %v1788 = vpop.f32.mrb[0].mxu0
    %v1789 = vadd.f32 %v1230, %v1788
    %v1790 = vpop.f32.mrb[0].mxu0
    %v1791 = vadd.f32 %v1234, %v1790
    %1792 = vdwg.mxu0
    %1793 = vmatprep.subr.bf16.mxu0 %v1612
    %1794 = vmatpush1.bf16.msra.mxu0 %v1611
    %1795 = vmatprep.subr.bf16.mxu0 %v1616
    %1796 = vmatpush1.bf16.msra.mxu0 %v1615
    %1797 = vmatprep.subr.bf16.mxu0 %v1620
    %1798 = vmatpush1.bf16.msra.mxu0 %v1619
    %1799 = vmatprep.subr.bf16.mxu0 %v1624
    %1800 = vmatpush1.bf16.msra.mxu0 %v1623
    %1801 = vmatprep.subr.bf16.mxu0 %v1628
    %1802 = vmatpush1.bf16.msra.mxu0 %v1627
    %1803 = vmatprep.subr.bf16.mxu0 %v1632
    %1804 = vmatpush1.bf16.msra.mxu0 %v1631
    %1805 = vmatprep.subr.bf16.mxu0 %v1636
    %1806 = vmatpush1.bf16.msra.mxu0 %v1635
    %1807 = vmatprep.subr.bf16.mxu0 %v1640
    %1808 = vmatpush1.bf16.msra.mxu0 %v1639
    %1809 = vmatprep.subr.bf16.mxu0 %v1644
    %1810 = vmatpush1.bf16.msra.mxu0 %v1643
    %1811 = vmatprep.subr.bf16.mxu0 0
    %1812 = vmatpush1.bf16.msra.mxu0 0
    %1813 = vmatprep.subr.bf16.mxu0 0
    %1814 = vmatpush1.bf16.msra.mxu0 0
    %1815 = vmatprep.subr.bf16.mxu0 0
    %1816 = vmatpush1.bf16.msra.mxu0 0
    %1817 = vmatprep.subr.bf16.mxu0 0
    %1818 = vmatpush1.bf16.msra.mxu0 0
    %1819 = vmatprep.subr.bf16.mxu0 0
    %1820 = vmatpush1.bf16.msra.mxu0 0
    %1821 = vmatprep.subr.bf16.mxu0 0
    %1822 = vmatpush1.bf16.msra.mxu0 0
    %1823 = vmatprep.subr.bf16.mxu0 0
    %1824 = vmatpush1.bf16.msra.mxu0 0
    %1825 = vmatprep.mubr.bf16.mxu0 %v1748
    %1826 = vmatmul.mubr.bf16.gmra.mrb[0].mxu0 %v1222
    %v1827 = vpop.f32.mrb[0].mxu0
    %v1828 = vadd.f32 %v1785, %v1827
    %v1829 = vpop.f32.mrb[0].mxu0
    %v1830 = vadd.f32 %v1787, %v1829
    %v1831 = vpop.f32.mrb[0].mxu0
    %v1832 = vadd.f32 %v1789, %v1831
    %v1833 = vpop.f32.mrb[0].mxu0
    %v1834 = vadd.f32 %v1791, %v1833
    %1835 = vdwg.mxu0
    %1836 = vmatprep.subr.bf16.mxu0 %v1550
    %1837 = vmatpush1.bf16.msra.mxu0 %v1549
    %1838 = vmatprep.subr.bf16.mxu0 %v1554
    %1839 = vmatpush1.bf16.msra.mxu0 %v1553
    %1840 = vmatprep.subr.bf16.mxu0 %v1558
    %1841 = vmatpush1.bf16.msra.mxu0 %v1557
    %1842 = vmatprep.subr.bf16.mxu0 %v1562
    %1843 = vmatpush1.bf16.msra.mxu0 %v1561
    %1844 = vmatprep.subr.bf16.mxu0 %v1566
    %1845 = vmatpush1.bf16.msra.mxu0 %v1565
    %1846 = vmatprep.subr.bf16.mxu0 %v1570
    %1847 = vmatpush1.bf16.msra.mxu0 %v1569
    %1848 = vmatprep.subr.bf16.mxu0 %v1574
    %1849 = vmatpush1.bf16.msra.mxu0 %v1573
    %1850 = vmatprep.subr.bf16.mxu0 %v1578
    %1851 = vmatpush1.bf16.msra.mxu0 %v1577
    %1852 = vmatprep.subr.bf16.mxu0 %v1582
    %1853 = vmatpush1.bf16.msra.mxu0 %v1581
    %1854 = vmatprep.subr.bf16.mxu0 %v1586
    %1855 = vmatpush1.bf16.msra.mxu0 %v1585
    %1856 = vmatprep.subr.bf16.mxu0 %v1590
    %1857 = vmatpush1.bf16.msra.mxu0 %v1589
    %1858 = vmatprep.subr.bf16.mxu0 %v1594
    %1859 = vmatpush1.bf16.msra.mxu0 %v1593
    %1860 = vmatprep.subr.bf16.mxu0 %v1598
    %1861 = vmatpush1.bf16.msra.mxu0 %v1597
    %1862 = vmatprep.subr.bf16.mxu0 %v1602
    %1863 = vmatpush1.bf16.msra.mxu0 %v1601
    %1864 = vmatprep.subr.bf16.mxu0 %v1606
    %1865 = vmatpush1.bf16.msra.mxu0 %v1605
    %1866 = vmatprep.subr.bf16.mxu0 %v1610
    %1867 = vmatpush1.bf16.msra.mxu0 %v1609
    %1868 = vmatprep.mubr.bf16.mxu0 %v1221
    %1869 = vmatmul.mubr.bf16.gmra.mrb[0].mxu0 %v1220
    %v1870 = vpop.f32.mrb[0].mxu0
    %v1871 = vadd.f32 %v1238, %v1870
    %v1872 = vpop.f32.mrb[0].mxu0
    %v1873 = vadd.f32 %v1242, %v1872
    %v1874 = vpop.f32.mrb[0].mxu0
    %v1875 = vadd.f32 %v1238, %v1874
    %v1876 = vpop.f32.mrb[0].mxu0
    %v1877 = vadd.f32 %v1242, %v1876
    %1878 = vdwg.mxu0
    %1879 = vmatprep.subr.bf16.mxu0 %v1614
    %1880 = vmatpush1.bf16.msra.mxu0 %v1613
    %1881 = vmatprep.subr.bf16.mxu0 %v1618
    %1882 = vmatpush1.bf16.msra.mxu0 %v1617
    %1883 = vmatprep.subr.bf16.mxu0 %v1622
    %1884 = vmatpush1.bf16.msra.mxu0 %v1621
    %1885 = vmatprep.subr.bf16.mxu0 %v1626
    %1886 = vmatpush1.bf16.msra.mxu0 %v1625
    %1887 = vmatprep.subr.bf16.mxu0 %v1630
    %1888 = vmatpush1.bf16.msra.mxu0 %v1629
    %1889 = vmatprep.subr.bf16.mxu0 %v1634
    %1890 = vmatpush1.bf16.msra.mxu0 %v1633
    %1891 = vmatprep.subr.bf16.mxu0 %v1638
    %1892 = vmatpush1.bf16.msra.mxu0 %v1637
    %1893 = vmatprep.subr.bf16.mxu0 %v1642
    %1894 = vmatpush1.bf16.msra.mxu0 %v1641
    %1895 = vmatprep.subr.bf16.mxu0 %v1646
    %1896 = vmatpush1.bf16.msra.mxu0 %v1645
    %1897 = vmatprep.subr.bf16.mxu0 0
    %1898 = vmatpush1.bf16.msra.mxu0 0
    %1899 = vmatprep.subr.bf16.mxu0 0
    %1900 = vmatpush1.bf16.msra.mxu0 0
    %1901 = vmatprep.subr.bf16.mxu0 0
    %1902 = vmatpush1.bf16.msra.mxu0 0
    %1903 = vmatprep.subr.bf16.mxu0 0
    %1904 = vmatpush1.bf16.msra.mxu0 0
    %1905 = vmatprep.subr.bf16.mxu0 0
    %1906 = vmatpush1.bf16.msra.mxu0 0
    %1907 = vmatprep.subr.bf16.mxu0 0
    %1908 = vmatpush1.bf16.msra.mxu0 0
    %1909 = vmatprep.subr.bf16.mxu0 0
    %1910 = vmatpush1.bf16.msra.mxu0 0
    %1911 = vmatprep.mubr.bf16.mxu0 %v1748
    %1912 = vmatmul.mubr.bf16.gmra.mrb[0].mxu0 %v1222
    %v1913 = vpop.f32.mrb[0].mxu0
    %v1914 = vadd.f32 %v1871, %v1913
    %v1915 = vpop.f32.mrb[0].mxu0
    %v1916 = vadd.f32 %v1873, %v1915
    %v1917 = vpop.f32.mrb[0].mxu0
    %v1918 = vadd.f32 %v1875, %v1917
    %v1919 = vpop.f32.mrb[0].mxu0
    %v1920 = vadd.f32 %v1877, %v1919
    %1921 = vdwg.mxu0
    %v1922 = vmax.f32 %v1828, 0.0
    %v1923 = vmax.f32 %v1830, 0.0
    %v1924 = vmax.f32 %v1914, 0.0
    %v1925 = vmax.f32 %v1916, 0.0
    %v1926 = vmax.f32 %v1832, 0.0
    %v1927 = vmax.f32 %v1834, 0.0
    %v1928 = vmax.f32 %v1918, 0.0
    %v1929 = vmax.f32 %v1920, 0.0
    %s1930 = scalar_lea.vmem [#allocation7], 1600
    %v1931 = vld [vmem:[%s1930] sm:$0xff]
    %v1932 = vld [vmem:[%s1930 + $0x8] sm:$0xff]
    %v1933 = vld [vmem:[%s1930 + $0x10] sm:$0xff]
    %v1934 = vld [vmem:[%s1930 + $0x18] sm:$0xff]
    %v1935 = vld [vmem:[%s1930 + $0x20] sm:$0xff]
    %v1936 = vld [vmem:[%s1930 + $0x28] sm:$0xff]
    %v1937 = vld [vmem:[%s1930 + $0x30] sm:$0xff]
    %v1938 = vld [vmem:[%s1930 + $0x38] sm:$0xff]
    %v1939 = vld [vmem:[%s1930 + $0x40] sm:$0xff]
    %v1940 = vld [vmem:[%s1930 + $0x48] sm:$0xff]
    %v1941 = vld [vmem:[%s1930 + $0x50] sm:$0xff]
    %v1942 = vld [vmem:[%s1930 + $0x58] sm:$0xff]
    %v1943 = vld [vmem:[%s1930 + $0x60] sm:$0xff]
    %v1944 = vld [vmem:[%s1930 + $0x68] sm:$0xff]
    %v1945 = vld [vmem:[%s1930 + $0x70] sm:$0xff]
    %v1946 = vld [vmem:[%s1930 + $0x78] sm:$0xff]
    %v1947 = vld [vmem:[%s1930 + $0x80] sm:$0xff]
    %v1948 = vld [vmem:[%s1930 + $0x88] sm:$0xff]
    %v1949 = vld [vmem:[%s1930 + $0x90] sm:$0xff]
    %v1950 = vld [vmem:[%s1930 + $0x98] sm:$0xff]
    %v1951 = vld [vmem:[%s1930 + $0xa0] sm:$0xff]
    %v1952 = vld [vmem:[%s1930 + $0xa8] sm:$0xff]
    %v1953 = vld [vmem:[%s1930 + $0xb0] sm:$0xff]
    %v1954 = vld [vmem:[%s1930 + $0xb8] sm:$0xff]
    %v1955 = vld [vmem:[%s1930 + $0xc0] sm:$0xff]
    %v1956 = vld [vmem:[%s1930 + $0xc8] sm:$0xff]
    %v1957 = vld [vmem:[%s1930 + $0xd0] sm:$0xff]
    %v1958 = vld [vmem:[%s1930 + $0xd8] sm:$0xff]
    %v1959 = vld [vmem:[%s1930 + $0xe0] sm:$0xff]
    %v1960 = vld [vmem:[%s1930 + $0xe8] sm:$0xff]
    %v1961 = vld [vmem:[%s1930 + $0xf0] sm:$0xff]
    %v1962 = vld [vmem:[%s1930 + $0xf8] sm:$0xff]
    %v1963 = vld [vmem:[%s1930 + $0x100] sm:$0xff]
    %v1964 = vld [vmem:[%s1930 + $0x108] sm:$0xff]
    %v1965 = vld [vmem:[%s1930 + $0x110] sm:$0xff]
    %v1966 = vld [vmem:[%s1930 + $0x118] sm:$0xff]
    %v1967 = vld [vmem:[%s1930 + $0x120] sm:$0xff]
    %v1968 = vld [vmem:[%s1930 + $0x128] sm:$0xff]
    %v1969 = vld [vmem:[%s1930 + $0x130] sm:$0xff]
    %v1970 = vld [vmem:[%s1930 + $0x138] sm:$0xff]
    %v1971 = vld [vmem:[%s1930 + $0x140] sm:$0xff]
    %v1972 = vld [vmem:[%s1930 + $0x148] sm:$0xff]
    %v1973 = vld [vmem:[%s1930 + $0x150] sm:$0xff]
    %v1974 = vld [vmem:[%s1930 + $0x158] sm:$0xff]
    %v1975 = vld [vmem:[%s1930 + $0x160] sm:$0xff]
    %v1976 = vld [vmem:[%s1930 + $0x168] sm:$0xff]
    %v1977 = vld [vmem:[%s1930 + $0x170] sm:$0xff]
    %v1978 = vld [vmem:[%s1930 + $0x178] sm:$0xff]
    %v1979 = vld [vmem:[%s1930 + $0x180] sm:$0xff]
    %v1980 = vld [vmem:[%s1930 + $0x188] sm:$0xff]
    %v1981 = vld [vmem:[%s1930 + $0x190] sm:$0xff]
    %v1982 = vld [vmem:[%s1930 + $0x198] sm:$0xff]
    %v1983 = vld [vmem:[%s1930 + $0x1a0] sm:$0xff]
    %v1984 = vld [vmem:[%s1930 + $0x1a8] sm:$0xff]
    %v1985 = vld [vmem:[%s1930 + $0x1b0] sm:$0xff]
    %v1986 = vld [vmem:[%s1930 + $0x1b8] sm:$0xff]
    %v1987 = vld [vmem:[%s1930 + $0x1c0] sm:$0xff]
    %v1988 = vld [vmem:[%s1930 + $0x1c8] sm:$0xff]
    %v1989 = vld [vmem:[%s1930 + $0x1d0] sm:$0xff]
    %v1990 = vld [vmem:[%s1930 + $0x1d8] sm:$0xff]
    %v1991 = vld [vmem:[%s1930 + $0x1e0] sm:$0xff]
    %v1992 = vld [vmem:[%s1930 + $0x1e8] sm:$0xff]
    %v1993 = vld [vmem:[%s1930 + $0x1f0] sm:$0xff]
    %v1994 = vld [vmem:[%s1930 + $0x1f8] sm:$0xff]
    %v1995 = vld [vmem:[%s1930 + $0x200] sm:$0xff]
    %v1996 = vld [vmem:[%s1930 + $0x208] sm:$0xff]
    %v1997 = vld [vmem:[%s1930 + $0x210] sm:$0xff]
    %v1998 = vld [vmem:[%s1930 + $0x218] sm:$0xff]
    %v1999 = vld [vmem:[%s1930 + $0x220] sm:$0xff]
    %v2000 = vld [vmem:[%s1930 + $0x228] sm:$0xff]
    %v2001 = vld [vmem:[%s1930 + $0x230] sm:$0xff]
    %v2002 = vld [vmem:[%s1930 + $0x238] sm:$0xff]
    %v2003 = vld [vmem:[%s1930 + $0x240] sm:$0xff]
    %v2004 = vld [vmem:[%s1930 + $0x248] sm:$0xff]
    %v2005 = vld [vmem:[%s1930 + $0x250] sm:$0xff]
    %v2006 = vld [vmem:[%s1930 + $0x258] sm:$0xff]
    %v2007 = vld [vmem:[%s1930 + $0x260] sm:$0xff]
    %v2008 = vld [vmem:[%s1930 + $0x268] sm:$0xff]
    %v2009 = vld [vmem:[%s1930 + $0x270] sm:$0xff]
    %v2010 = vld [vmem:[%s1930 + $0x278] sm:$0xff]
    %v2011 = vld [vmem:[%s1930 + $0x280] sm:$0xff]
    %v2012 = vld [vmem:[%s1930 + $0x288] sm:$0xff]
    %v2013 = vld [vmem:[%s1930 + $0x290] sm:$0xff]
    %v2014 = vld [vmem:[%s1930 + $0x298] sm:$0xff]
    %v2015 = vld [vmem:[%s1930 + $0x2a0] sm:$0xff]
    %v2016 = vld [vmem:[%s1930 + $0x2a8] sm:$0xff]
    %v2017 = vld [vmem:[%s1930 + $0x2b0] sm:$0xff]
    %v2018 = vld [vmem:[%s1930 + $0x2b8] sm:$0xff]
    %v2019 = vld [vmem:[%s1930 + $0x2c0] sm:$0xff]
    %v2020 = vld [vmem:[%s1930 + $0x2c8] sm:$0xff]
    %v2021 = vld [vmem:[%s1930 + $0x2d0] sm:$0xff]
    %v2022 = vld [vmem:[%s1930 + $0x2d8] sm:$0xff]
    %v2023 = vld [vmem:[%s1930 + $0x2e0] sm:$0xff]
    %v2024 = vld [vmem:[%s1930 + $0x2e8] sm:$0xff]
    %v2025 = vld [vmem:[%s1930 + $0x2f0] sm:$0xff]
    %v2026 = vld [vmem:[%s1930 + $0x2f8] sm:$0xff]
    %v2027 = vld [vmem:[%s1930 + $0x300] sm:$0xff]
    %v2028 = vld [vmem:[%s1930 + $0x308] sm:$0xff]
    %v2029 = vld [vmem:[%s1930 + $0x310] sm:$0xff]
    %v2030 = vld [vmem:[%s1930 + $0x318] sm:$0xff]
    %v2031 = vpack.c.bf16 %v1926, %v1922
    %v2032 = vpack.c.bf16 %v1927, %v1923
    %v2033 = vpack.c.bf16 %v1928, %v1924
    %v2034 = vpack.c.bf16 %v1929, %v1925
    %s2035 = scalar_lea.vmem [#allocation13], 3
    %v2036 = vld [vmem:[%s2035] ss:$8 sm:$0xf]
    %v2038 = vlaneseq
    %v2039 = vshrl.u32 %v2038, 7
    %v2040 = vsub.s32 0, %v2039
    %v2041 = vrot.slane %v2036, %v2040
    %v2042 = vlaneseq
    %v2043 = vshrl.u32 %v2042, 7
    %v2044 = vsub.s32 1, %v2043
    %v2045 = vrot.slane %v2036, %v2044
    %v2046 = vlaneseq
    %v2047 = vshrl.u32 %v2046, 7
    %v2048 = vsub.s32 2, %v2047
    %v2049 = vrot.slane %v2036, %v2048
    %v2050 = vlaneseq
    %v2051 = vshrl.u32 %v2050, 7
    %v2052 = vsub.s32 3, %v2051
    %v2053 = vrot.slane %v2036, %v2052
    %v2158 = vunpack.c.l.b16 %v1931
    %v2159 = vunpack.c.h.b16 %v1931
    %v2160 = vunpack.c.l.b16 %v1932
    %v2161 = vunpack.c.h.b16 %v1932
    %v2162 = vunpack.c.l.b16 %v1933
    %v2163 = vunpack.c.h.b16 %v1933
    %v2164 = vunpack.c.l.b16 %v1934
    %v2165 = vunpack.c.h.b16 %v1934
    %v2166 = vunpack.c.l.b16 %v1935
    %v2167 = vunpack.c.h.b16 %v1935
    %v2168 = vunpack.c.l.b16 %v1936
    %v2169 = vunpack.c.h.b16 %v1936
    %v2170 = vunpack.c.l.b16 %v1937
    %v2171 = vunpack.c.h.b16 %v1937
    %v2172 = vunpack.c.l.b16 %v1938
    %v2173 = vunpack.c.h.b16 %v1938
    %v2174 = vunpack.c.l.b16 %v1939
    %v2175 = vunpack.c.h.b16 %v1939
    %v2176 = vunpack.c.l.b16 %v1940
    %v2177 = vunpack.c.h.b16 %v1940
    %v2178 = vunpack.c.l.b16 %v1941
    %v2179 = vunpack.c.h.b16 %v1941
    %v2180 = vunpack.c.l.b16 %v1942
    %v2181 = vunpack.c.h.b16 %v1942
    %v2182 = vunpack.c.l.b16 %v1943
    %v2183 = vunpack.c.h.b16 %v1943
    %v2184 = vunpack.c.l.b16 %v1944
    %v2185 = vunpack.c.h.b16 %v1944
    %v2186 = vunpack.c.l.b16 %v1945
    %v2187 = vunpack.c.h.b16 %v1945
    %v2188 = vunpack.c.l.b16 %v1946
    %v2189 = vunpack.c.h.b16 %v1946
    %v2190 = vunpack.c.l.b16 %v1947
    %v2191 = vunpack.c.h.b16 %v1947
    %v2192 = vunpack.c.l.b16 %v1948
    %v2193 = vunpack.c.h.b16 %v1948
    %v2194 = vunpack.c.l.b16 %v1949
    %v2195 = vunpack.c.h.b16 %v1949
    %v2196 = vunpack.c.l.b16 %v1950
    %v2197 = vunpack.c.h.b16 %v1950
    %v2198 = vunpack.c.l.b16 %v1951
    %v2199 = vunpack.c.h.b16 %v1951
    %v2200 = vunpack.c.l.b16 %v1952
    %v2201 = vunpack.c.h.b16 %v1952
    %v2202 = vunpack.c.l.b16 %v1953
    %v2203 = vunpack.c.h.b16 %v1953
    %v2204 = vunpack.c.l.b16 %v1954
    %v2205 = vunpack.c.h.b16 %v1954
    %v2206 = vunpack.c.l.b16 %v1955
    %v2207 = vunpack.c.h.b16 %v1955
    %v2208 = vunpack.c.l.b16 %v1956
    %v2209 = vunpack.c.h.b16 %v1956
    %v2210 = vunpack.c.l.b16 %v1957
    %v2211 = vunpack.c.h.b16 %v1957
    %v2212 = vunpack.c.l.b16 %v1958
    %v2213 = vunpack.c.h.b16 %v1958
    %v2214 = vunpack.c.l.b16 %v1959
    %v2215 = vunpack.c.h.b16 %v1959
    %v2216 = vunpack.c.l.b16 %v1960
    %v2217 = vunpack.c.h.b16 %v1960
    %v2218 = vunpack.c.l.b16 %v1961
    %v2219 = vunpack.c.h.b16 %v1961
    %v2220 = vunpack.c.l.b16 %v1962
    %v2221 = vunpack.c.h.b16 %v1962
    %v2222 = vunpack.c.l.b16 %v1963
    %v2223 = vunpack.c.h.b16 %v1963
    %v2224 = vunpack.c.l.b16 %v1964
    %v2225 = vunpack.c.h.b16 %v1964
    %v2226 = vunpack.c.l.b16 %v1965
    %v2227 = vunpack.c.h.b16 %v1965
    %v2228 = vunpack.c.l.b16 %v1966
    %v2229 = vunpack.c.h.b16 %v1966
    %v2230 = vunpack.c.l.b16 %v1967
    %v2231 = vunpack.c.h.b16 %v1967
    %v2232 = vunpack.c.l.b16 %v1968
    %v2233 = vunpack.c.h.b16 %v1968
    %v2234 = vunpack.c.l.b16 %v1969
    %v2235 = vunpack.c.h.b16 %v1969
    %v2236 = vunpack.c.l.b16 %v1970
    %v2237 = vunpack.c.h.b16 %v1970
    %v2238 = vunpack.c.l.b16 %v1971
    %v2239 = vunpack.c.h.b16 %v1971
    %v2240 = vunpack.c.l.b16 %v1972
    %v2241 = vunpack.c.h.b16 %v1972
    %v2242 = vunpack.c.l.b16 %v1973
    %v2243 = vunpack.c.h.b16 %v1973
    %v2244 = vunpack.c.l.b16 %v1974
    %v2245 = vunpack.c.h.b16 %v1974
    %v2246 = vunpack.c.l.b16 %v1975
    %v2247 = vunpack.c.h.b16 %v1975
    %v2248 = vunpack.c.l.b16 %v1976
    %v2249 = vunpack.c.h.b16 %v1976
    %v2250 = vunpack.c.l.b16 %v1977
    %v2251 = vunpack.c.h.b16 %v1977
    %v2252 = vunpack.c.l.b16 %v1978
    %v2253 = vunpack.c.h.b16 %v1978
    %v2254 = vunpack.c.l.b16 %v1979
    %v2255 = vunpack.c.h.b16 %v1979
    %v2256 = vunpack.c.l.b16 %v1980
    %v2257 = vunpack.c.h.b16 %v1980
    %v2258 = vunpack.c.l.b16 %v1981
    %v2259 = vunpack.c.h.b16 %v1981
    %v2260 = vunpack.c.l.b16 %v1982
    %v2261 = vunpack.c.h.b16 %v1982
    %v2262 = vunpack.c.l.b16 %v1983
    %v2263 = vunpack.c.h.b16 %v1983
    %v2264 = vunpack.c.l.b16 %v1984
    %v2265 = vunpack.c.h.b16 %v1984
    %v2266 = vunpack.c.l.b16 %v1985
    %v2267 = vunpack.c.h.b16 %v1985
    %v2268 = vunpack.c.l.b16 %v1986
    %v2269 = vunpack.c.h.b16 %v1986
    %v2270 = vunpack.c.l.b16 %v1987
    %v2271 = vunpack.c.h.b16 %v1987
    %v2272 = vunpack.c.l.b16 %v1988
    %v2273 = vunpack.c.h.b16 %v1988
    %v2274 = vunpack.c.l.b16 %v1989
    %v2275 = vunpack.c.h.b16 %v1989
    %v2276 = vunpack.c.l.b16 %v1990
    %v2277 = vunpack.c.h.b16 %v1990
    %v2278 = vunpack.c.l.b16 %v1991
    %v2279 = vunpack.c.h.b16 %v1991
    %v2280 = vunpack.c.l.b16 %v1992
    %v2281 = vunpack.c.h.b16 %v1992
    %v2282 = vunpack.c.l.b16 %v1993
    %v2283 = vunpack.c.h.b16 %v1993
    %v2284 = vunpack.c.l.b16 %v1994
    %v2285 = vunpack.c.h.b16 %v1994
    %v2286 = vunpack.c.l.b16 %v1995
    %v2287 = vunpack.c.h.b16 %v1995
    %v2288 = vunpack.c.l.b16 %v1996
    %v2289 = vunpack.c.h.b16 %v1996
    %v2290 = vunpack.c.l.b16 %v1997
    %v2291 = vunpack.c.h.b16 %v1997
    %v2292 = vunpack.c.l.b16 %v1998
    %v2293 = vunpack.c.h.b16 %v1998
    %v2294 = vunpack.c.l.b16 %v1999
    %v2295 = vunpack.c.h.b16 %v1999
    %v2296 = vunpack.c.l.b16 %v2000
    %v2297 = vunpack.c.h.b16 %v2000
    %v2298 = vunpack.c.l.b16 %v2001
    %v2299 = vunpack.c.h.b16 %v2001
    %v2300 = vunpack.c.l.b16 %v2002
    %v2301 = vunpack.c.h.b16 %v2002
    %v2302 = vunpack.c.l.b16 %v2003
    %v2303 = vunpack.c.h.b16 %v2003
    %v2304 = vunpack.c.l.b16 %v2004
    %v2305 = vunpack.c.h.b16 %v2004
    %v2306 = vunpack.c.l.b16 %v2005
    %v2307 = vunpack.c.h.b16 %v2005
    %v2308 = vunpack.c.l.b16 %v2006
    %v2309 = vunpack.c.h.b16 %v2006
    %v2310 = vunpack.c.l.b16 %v2007
    %v2311 = vunpack.c.h.b16 %v2007
    %v2312 = vunpack.c.l.b16 %v2008
    %v2313 = vunpack.c.h.b16 %v2008
    %v2314 = vunpack.c.l.b16 %v2009
    %v2315 = vunpack.c.h.b16 %v2009
    %v2316 = vunpack.c.l.b16 %v2010
    %v2317 = vunpack.c.h.b16 %v2010
    %v2318 = vunpack.c.l.b16 %v2011
    %v2319 = vunpack.c.h.b16 %v2011
    %v2320 = vunpack.c.l.b16 %v2012
    %v2321 = vunpack.c.h.b16 %v2012
    %v2322 = vunpack.c.l.b16 %v2013
    %v2323 = vunpack.c.h.b16 %v2013
    %v2324 = vunpack.c.l.b16 %v2014
    %v2325 = vunpack.c.h.b16 %v2014
    %v2326 = vunpack.c.l.b16 %v2015
    %v2327 = vunpack.c.h.b16 %v2015
    %v2328 = vunpack.c.l.b16 %v2016
    %v2329 = vunpack.c.h.b16 %v2016
    %v2330 = vunpack.c.l.b16 %v2017
    %v2331 = vunpack.c.h.b16 %v2017
    %v2332 = vunpack.c.l.b16 %v2018
    %v2333 = vunpack.c.h.b16 %v2018
    %v2334 = vunpack.c.l.b16 %v2019
    %v2335 = vunpack.c.h.b16 %v2019
    %v2336 = vunpack.c.l.b16 %v2020
    %v2337 = vunpack.c.h.b16 %v2020
    %v2338 = vunpack.c.l.b16 %v2021
    %v2339 = vunpack.c.h.b16 %v2021
    %v2340 = vunpack.c.l.b16 %v2022
    %v2341 = vunpack.c.h.b16 %v2022
    %v2342 = vunpack.c.l.b16 %v2023
    %v2343 = vunpack.c.h.b16 %v2023
    %v2344 = vunpack.c.l.b16 %v2024
    %v2345 = vunpack.c.h.b16 %v2024
    %v2346 = vunpack.c.l.b16 %v2025
    %v2347 = vunpack.c.h.b16 %v2025
    %v2348 = vunpack.c.l.b16 %v2026
    %v2349 = vunpack.c.h.b16 %v2026
    %v2350 = vunpack.c.l.b16 %v2027
    %v2351 = vunpack.c.h.b16 %v2027
    %v2352 = vunpack.c.l.b16 %v2028
    %v2353 = vunpack.c.h.b16 %v2028
    %v2354 = vunpack.c.l.b16 %v2029
    %v2355 = vunpack.c.h.b16 %v2029
    %v2356 = vunpack.c.l.b16 %v2030
    %v2357 = vunpack.c.h.b16 %v2030
    %v2358 = vpack.c.b16 %v2162, %v2158
    %v2359 = vpack.c.b16 %v2163, %v2159
    %v2360 = vpack.c.b16 %v2164, %v2160
    %v2361 = vpack.c.b16 %v2165, %v2161
    %v2362 = vpack.c.b16 %v2170, %v2166
    %v2363 = vpack.c.b16 %v2171, %v2167
    %v2364 = vpack.c.b16 %v2172, %v2168
    %v2365 = vpack.c.b16 %v2173, %v2169
    %v2366 = vpack.c.b16 %v2178, %v2174
    %v2367 = vpack.c.b16 %v2179, %v2175
    %v2368 = vpack.c.b16 %v2180, %v2176
    %v2369 = vpack.c.b16 %v2181, %v2177
    %v2370 = vpack.c.b16 %v2186, %v2182
    %v2371 = vpack.c.b16 %v2187, %v2183
    %v2372 = vpack.c.b16 %v2188, %v2184
    %v2373 = vpack.c.b16 %v2189, %v2185
    %v2374 = vpack.c.b16 %v2194, %v2190
    %v2375 = vpack.c.b16 %v2195, %v2191
    %v2376 = vpack.c.b16 %v2196, %v2192
    %v2377 = vpack.c.b16 %v2197, %v2193
    %v2378 = vpack.c.b16 %v2202, %v2198
    %v2379 = vpack.c.b16 %v2203, %v2199
    %v2380 = vpack.c.b16 %v2204, %v2200
    %v2381 = vpack.c.b16 %v2205, %v2201
    %v2382 = vpack.c.b16 %v2210, %v2206
    %v2383 = vpack.c.b16 %v2211, %v2207
    %v2384 = vpack.c.b16 %v2212, %v2208
    %v2385 = vpack.c.b16 %v2213, %v2209
    %v2386 = vpack.c.b16 %v2218, %v2214
    %v2387 = vpack.c.b16 %v2219, %v2215
    %v2388 = vpack.c.b16 %v2220, %v2216
    %v2389 = vpack.c.b16 %v2221, %v2217
    %v2390 = vpack.c.b16 %v2226, %v2222
    %v2391 = vpack.c.b16 %v2227, %v2223
    %v2392 = vpack.c.b16 %v2228, %v2224
    %v2393 = vpack.c.b16 %v2229, %v2225
    %v2394 = vpack.c.b16 %v2234, %v2230
    %v2395 = vpack.c.b16 %v2235, %v2231
    %v2396 = vpack.c.b16 %v2236, %v2232
    %v2397 = vpack.c.b16 %v2237, %v2233
    %v2398 = vpack.c.b16 %v2242, %v2238
    %v2399 = vpack.c.b16 %v2243, %v2239
    %v2400 = vpack.c.b16 %v2244, %v2240
    %v2401 = vpack.c.b16 %v2245, %v2241
    %v2402 = vpack.c.b16 %v2250, %v2246
    %v2403 = vpack.c.b16 %v2251, %v2247
    %v2404 = vpack.c.b16 %v2252, %v2248
    %v2405 = vpack.c.b16 %v2253, %v2249
    %v2406 = vpack.c.b16 %v2258, %v2254
    %v2407 = vpack.c.b16 %v2259, %v2255
    %v2408 = vpack.c.b16 %v2260, %v2256
    %v2409 = vpack.c.b16 %v2261, %v2257
    %v2410 = vpack.c.b16 %v2266, %v2262
    %v2411 = vpack.c.b16 %v2267, %v2263
    %v2412 = vpack.c.b16 %v2268, %v2264
    %v2413 = vpack.c.b16 %v2269, %v2265
    %v2414 = vpack.c.b16 %v2274, %v2270
    %v2415 = vpack.c.b16 %v2275, %v2271
    %v2416 = vpack.c.b16 %v2276, %v2272
    %v2417 = vpack.c.b16 %v2277, %v2273
    %v2418 = vpack.c.b16 %v2282, %v2278
    %v2419 = vpack.c.b16 %v2283, %v2279
    %v2420 = vpack.c.b16 %v2284, %v2280
    %v2421 = vpack.c.b16 %v2285, %v2281
    %v2422 = vpack.c.b16 %v2290, %v2286
    %v2423 = vpack.c.b16 %v2291, %v2287
    %v2424 = vpack.c.b16 %v2292, %v2288
    %v2425 = vpack.c.b16 %v2293, %v2289
    %v2426 = vpack.c.b16 %v2298, %v2294
    %v2427 = vpack.c.b16 %v2299, %v2295
    %v2428 = vpack.c.b16 %v2300, %v2296
    %v2429 = vpack.c.b16 %v2301, %v2297
    %v2430 = vpack.c.b16 %v2306, %v2302
    %v2431 = vpack.c.b16 %v2307, %v2303
    %v2432 = vpack.c.b16 %v2308, %v2304
    %v2433 = vpack.c.b16 %v2309, %v2305
    %v2434 = vpack.c.b16 %v2314, %v2310
    %v2435 = vpack.c.b16 %v2315, %v2311
    %v2436 = vpack.c.b16 %v2316, %v2312
    %v2437 = vpack.c.b16 %v2317, %v2313
    %v2438 = vpack.c.b16 %v2322, %v2318
    %v2439 = vpack.c.b16 %v2323, %v2319
    %v2440 = vpack.c.b16 %v2324, %v2320
    %v2441 = vpack.c.b16 %v2325, %v2321
    %v2442 = vpack.c.b16 %v2330, %v2326
    %v2443 = vpack.c.b16 %v2331, %v2327
    %v2444 = vpack.c.b16 %v2332, %v2328
    %v2445 = vpack.c.b16 %v2333, %v2329
    %v2446 = vpack.c.b16 %v2338, %v2334
    %v2447 = vpack.c.b16 %v2339, %v2335
    %v2448 = vpack.c.b16 %v2340, %v2336
    %v2449 = vpack.c.b16 %v2341, %v2337
    %v2450 = vpack.c.b16 %v2346, %v2342
    %v2451 = vpack.c.b16 %v2347, %v2343
    %v2452 = vpack.c.b16 %v2348, %v2344
    %v2453 = vpack.c.b16 %v2349, %v2345
    %v2454 = vpack.c.b16 %v2354, %v2350
    %v2455 = vpack.c.b16 %v2355, %v2351
    %v2456 = vpack.c.b16 %v2356, %v2352
    %v2457 = vpack.c.b16 %v2357, %v2353
    %v2559 = vsel %vm935, %v2034, 0
    %2561 = vmatprep.subr.bf16.mxu0 %v2359
    %2562 = vmatpush1.bf16.msra.mxu0 %v2358
    %2563 = vmatprep.subr.bf16.mxu0 %v2363
    %2564 = vmatpush1.bf16.msra.mxu0 %v2362
    %2565 = vmatprep.subr.bf16.mxu0 %v2367
    %2566 = vmatpush1.bf16.msra.mxu0 %v2366
    %2567 = vmatprep.subr.bf16.mxu0 %v2371
    %2568 = vmatpush1.bf16.msra.mxu0 %v2370
    %2569 = vmatprep.subr.bf16.mxu0 %v2375
    %2570 = vmatpush1.bf16.msra.mxu0 %v2374
    %2571 = vmatprep.subr.bf16.mxu0 %v2379
    %2572 = vmatpush1.bf16.msra.mxu0 %v2378
    %2573 = vmatprep.subr.bf16.mxu0 %v2383
    %2574 = vmatpush1.bf16.msra.mxu0 %v2382
    %2575 = vmatprep.subr.bf16.mxu0 %v2387
    %2576 = vmatpush1.bf16.msra.mxu0 %v2386
    %2577 = vmatprep.subr.bf16.mxu0 %v2391
    %2578 = vmatpush1.bf16.msra.mxu0 %v2390
    %2579 = vmatprep.subr.bf16.mxu0 %v2395
    %2580 = vmatpush1.bf16.msra.mxu0 %v2394
    %2581 = vmatprep.subr.bf16.mxu0 %v2399
    %2582 = vmatpush1.bf16.msra.mxu0 %v2398
    %2583 = vmatprep.subr.bf16.mxu0 %v2403
    %2584 = vmatpush1.bf16.msra.mxu0 %v2402
    %2585 = vmatprep.subr.bf16.mxu0 %v2407
    %2586 = vmatpush1.bf16.msra.mxu0 %v2406
    %2587 = vmatprep.subr.bf16.mxu0 %v2411
    %2588 = vmatpush1.bf16.msra.mxu0 %v2410
    %2589 = vmatprep.subr.bf16.mxu0 %v2415
    %2590 = vmatpush1.bf16.msra.mxu0 %v2414
    %2591 = vmatprep.subr.bf16.mxu0 %v2419
    %2592 = vmatpush1.bf16.msra.mxu0 %v2418
    %2593 = vmatprep.mubr.bf16.mxu0 %v2032
    %2594 = vmatmul.mubr.bf16.gmra.mrb[0].mxu0 %v2031
    %v2595 = vpop.f32.mrb[0].mxu0
    %v2596 = vadd.f32 %v2041, %v2595
    %v2597 = vpop.f32.mrb[0].mxu0
    %v2598 = vadd.f32 %v2045, %v2597
    %v2599 = vpop.f32.mrb[0].mxu0
    %v2600 = vadd.f32 %v2041, %v2599
    %v2601 = vpop.f32.mrb[0].mxu0
    %v2602 = vadd.f32 %v2045, %v2601
    %2603 = vdwg.mxu0
    %2604 = vmatprep.subr.bf16.mxu0 %v2423
    %2605 = vmatpush1.bf16.msra.mxu0 %v2422
    %2606 = vmatprep.subr.bf16.mxu0 %v2427
    %2607 = vmatpush1.bf16.msra.mxu0 %v2426
    %2608 = vmatprep.subr.bf16.mxu0 %v2431
    %2609 = vmatpush1.bf16.msra.mxu0 %v2430
    %2610 = vmatprep.subr.bf16.mxu0 %v2435
    %2611 = vmatpush1.bf16.msra.mxu0 %v2434
    %2612 = vmatprep.subr.bf16.mxu0 %v2439
    %2613 = vmatpush1.bf16.msra.mxu0 %v2438
    %2614 = vmatprep.subr.bf16.mxu0 %v2443
    %2615 = vmatpush1.bf16.msra.mxu0 %v2442
    %2616 = vmatprep.subr.bf16.mxu0 %v2447
    %2617 = vmatpush1.bf16.msra.mxu0 %v2446
    %2618 = vmatprep.subr.bf16.mxu0 %v2451
    %2619 = vmatpush1.bf16.msra.mxu0 %v2450
    %2620 = vmatprep.subr.bf16.mxu0 %v2455
    %2621 = vmatpush1.bf16.msra.mxu0 %v2454
    %2622 = vmatprep.subr.bf16.mxu0 0
    %2623 = vmatpush1.bf16.msra.mxu0 0
    %2624 = vmatprep.subr.bf16.mxu0 0
    %2625 = vmatpush1.bf16.msra.mxu0 0
    %2626 = vmatprep.subr.bf16.mxu0 0
    %2627 = vmatpush1.bf16.msra.mxu0 0
    %2628 = vmatprep.subr.bf16.mxu0 0
    %2629 = vmatpush1.bf16.msra.mxu0 0
    %2630 = vmatprep.subr.bf16.mxu0 0
    %2631 = vmatpush1.bf16.msra.mxu0 0
    %2632 = vmatprep.subr.bf16.mxu0 0
    %2633 = vmatpush1.bf16.msra.mxu0 0
    %2634 = vmatprep.subr.bf16.mxu0 0
    %2635 = vmatpush1.bf16.msra.mxu0 0
    %2636 = vmatprep.mubr.bf16.mxu0 %v2559
    %2637 = vmatmul.mubr.bf16.gmra.mrb[0].mxu0 %v2033
    %v2638 = vpop.f32.mrb[0].mxu0
    %v2639 = vadd.f32 %v2596, %v2638
    %v2640 = vpop.f32.mrb[0].mxu0
    %v2641 = vadd.f32 %v2598, %v2640
    %v2642 = vpop.f32.mrb[0].mxu0
    %v2643 = vadd.f32 %v2600, %v2642
    %v2644 = vpop.f32.mrb[0].mxu0
    %v2645 = vadd.f32 %v2602, %v2644
    %2646 = vdwg.mxu0
    %2647 = vmatprep.subr.bf16.mxu0 %v2361
    %2648 = vmatpush1.bf16.msra.mxu0 %v2360
    %2649 = vmatprep.subr.bf16.mxu0 %v2365
    %2650 = vmatpush1.bf16.msra.mxu0 %v2364
    %2651 = vmatprep.subr.bf16.mxu0 %v2369
    %2652 = vmatpush1.bf16.msra.mxu0 %v2368
    %2653 = vmatprep.subr.bf16.mxu0 %v2373
    %2654 = vmatpush1.bf16.msra.mxu0 %v2372
    %2655 = vmatprep.subr.bf16.mxu0 %v2377
    %2656 = vmatpush1.bf16.msra.mxu0 %v2376
    %2657 = vmatprep.subr.bf16.mxu0 %v2381
    %2658 = vmatpush1.bf16.msra.mxu0 %v2380
    %2659 = vmatprep.subr.bf16.mxu0 %v2385
    %2660 = vmatpush1.bf16.msra.mxu0 %v2384
    %2661 = vmatprep.subr.bf16.mxu0 %v2389
    %2662 = vmatpush1.bf16.msra.mxu0 %v2388
    %2663 = vmatprep.subr.bf16.mxu0 %v2393
    %2664 = vmatpush1.bf16.msra.mxu0 %v2392
    %2665 = vmatprep.subr.bf16.mxu0 %v2397
    %2666 = vmatpush1.bf16.msra.mxu0 %v2396
    %2667 = vmatprep.subr.bf16.mxu0 %v2401
    %2668 = vmatpush1.bf16.msra.mxu0 %v2400
    %2669 = vmatprep.subr.bf16.mxu0 %v2405
    %2670 = vmatpush1.bf16.msra.mxu0 %v2404
    %2671 = vmatprep.subr.bf16.mxu0 %v2409
    %2672 = vmatpush1.bf16.msra.mxu0 %v2408
    %2673 = vmatprep.subr.bf16.mxu0 %v2413
    %2674 = vmatpush1.bf16.msra.mxu0 %v2412
    %2675 = vmatprep.subr.bf16.mxu0 %v2417
    %2676 = vmatpush1.bf16.msra.mxu0 %v2416
    %2677 = vmatprep.subr.bf16.mxu0 %v2421
    %2678 = vmatpush1.bf16.msra.mxu0 %v2420
    %2679 = vmatprep.mubr.bf16.mxu0 %v2032
    %2680 = vmatmul.mubr.bf16.gmra.mrb[0].mxu0 %v2031
    %v2681 = vpop.f32.mrb[0].mxu0
    %v2682 = vadd.f32 %v2049, %v2681
    %v2683 = vpop.f32.mrb[0].mxu0
    %v2684 = vadd.f32 %v2053, %v2683
    %v2685 = vpop.f32.mrb[0].mxu0
    %v2686 = vadd.f32 %v2049, %v2685
    %v2687 = vpop.f32.mrb[0].mxu0
    %v2688 = vadd.f32 %v2053, %v2687
    %2689 = vdwg.mxu0
    %2690 = vmatprep.subr.bf16.mxu0 %v2425
    %2691 = vmatpush1.bf16.msra.mxu0 %v2424
    %2692 = vmatprep.subr.bf16.mxu0 %v2429
    %2693 = vmatpush1.bf16.msra.mxu0 %v2428
    %2694 = vmatprep.subr.bf16.mxu0 %v2433
    %2695 = vmatpush1.bf16.msra.mxu0 %v2432
    %2696 = vmatprep.subr.bf16.mxu0 %v2437
    %2697 = vmatpush1.bf16.msra.mxu0 %v2436
    %2698 = vmatprep.subr.bf16.mxu0 %v2441
    %2699 = vmatpush1.bf16.msra.mxu0 %v2440
    %2700 = vmatprep.subr.bf16.mxu0 %v2445
    %2701 = vmatpush1.bf16.msra.mxu0 %v2444
    %2702 = vmatprep.subr.bf16.mxu0 %v2449
    %2703 = vmatpush1.bf16.msra.mxu0 %v2448
    %2704 = vmatprep.subr.bf16.mxu0 %v2453
    %2705 = vmatpush1.bf16.msra.mxu0 %v2452
    %2706 = vmatprep.subr.bf16.mxu0 %v2457
    %2707 = vmatpush1.bf16.msra.mxu0 %v2456
    %2708 = vmatprep.subr.bf16.mxu0 0
    %2709 = vmatpush1.bf16.msra.mxu0 0
    %2710 = vmatprep.subr.bf16.mxu0 0
    %2711 = vmatpush1.bf16.msra.mxu0 0
    %2712 = vmatprep.subr.bf16.mxu0 0
    %2713 = vmatpush1.bf16.msra.mxu0 0
    %2714 = vmatprep.subr.bf16.mxu0 0
    %2715 = vmatpush1.bf16.msra.mxu0 0
    %2716 = vmatprep.subr.bf16.mxu0 0
    %2717 = vmatpush1.bf16.msra.mxu0 0
    %2718 = vmatprep.subr.bf16.mxu0 0
    %2719 = vmatpush1.bf16.msra.mxu0 0
    %2720 = vmatprep.subr.bf16.mxu0 0
    %2721 = vmatpush1.bf16.msra.mxu0 0
    %2722 = vmatprep.mubr.bf16.mxu0 %v2559
    %2723 = vmatmul.mubr.bf16.gmra.mrb[0].mxu0 %v2033
    %v2724 = vpop.f32.mrb[0].mxu0
    %v2725 = vadd.f32 %v2682, %v2724
    %v2726 = vpop.f32.mrb[0].mxu0
    %v2727 = vadd.f32 %v2684, %v2726
    %v2728 = vpop.f32.mrb[0].mxu0
    %v2729 = vadd.f32 %v2686, %v2728
    %v2730 = vpop.f32.mrb[0].mxu0
    %v2731 = vadd.f32 %v2688, %v2730
    %2732 = vdwg.mxu0
    %v2733 = vmax.f32 %v2639, 0.0
    %v2734 = vmax.f32 %v2641, 0.0
    %v2735 = vmax.f32 %v2725, 0.0
    %v2736 = vmax.f32 %v2727, 0.0
    %v2737 = vmax.f32 %v2643, 0.0
    %v2738 = vmax.f32 %v2645, 0.0
    %v2739 = vmax.f32 %v2729, 0.0
    %v2740 = vmax.f32 %v2731, 0.0
    %v2741 = vld [vmem:[%s4] sm:$0xf]
    %v2742 = vld [vmem:[%s4 + $0x4] sm:$0xf]
    %v2743 = vld [vmem:[%s4 + $0x8] sm:$0xf]
    %v2744 = vld [vmem:[%s4 + $0xc] sm:$0xf]
    %v2745 = vld [vmem:[%s4 + $0x10] sm:$0xf]
    %v2746 = vld [vmem:[%s4 + $0x14] sm:$0xf]
    %v2747 = vld [vmem:[%s4 + $0x18] sm:$0xf]
    %v2748 = vld [vmem:[%s4 + $0x1c] sm:$0xf]
    %v2749 = vld [vmem:[%s4 + $0x20] sm:$0xf]
    %v2750 = vld [vmem:[%s4 + $0x24] sm:$0xf]
    %v2751 = vld [vmem:[%s4 + $0x28] sm:$0xf]
    %v2752 = vld [vmem:[%s4 + $0x2c] sm:$0xf]
    %v2753 = vld [vmem:[%s4 + $0x30] sm:$0xf]
    %v2754 = vld [vmem:[%s4 + $0x34] sm:$0xf]
    %v2755 = vld [vmem:[%s4 + $0x38] sm:$0xf]
    %v2756 = vld [vmem:[%s4 + $0x3c] sm:$0xf]
    %v2757 = vld [vmem:[%s4 + $0x40] sm:$0xf]
    %v2758 = vld [vmem:[%s4 + $0x44] sm:$0xf]
    %v2759 = vld [vmem:[%s4 + $0x48] sm:$0xf]
    %v2760 = vld [vmem:[%s4 + $0x4c] sm:$0xf]
    %v2761 = vld [vmem:[%s4 + $0x50] sm:$0xf]
    %v2762 = vld [vmem:[%s4 + $0x54] sm:$0xf]
    %v2763 = vld [vmem:[%s4 + $0x58] sm:$0xf]
    %v2764 = vld [vmem:[%s4 + $0x5c] sm:$0xf]
    %v2765 = vld [vmem:[%s4 + $0x60] sm:$0xf]
    %v2766 = vld [vmem:[%s4 + $0x64] sm:$0xf]
    %v2767 = vld [vmem:[%s4 + $0x68] sm:$0xf]
    %v2768 = vld [vmem:[%s4 + $0x6c] sm:$0xf]
    %v2769 = vld [vmem:[%s4 + $0x70] sm:$0xf]
    %v2770 = vld [vmem:[%s4 + $0x74] sm:$0xf]
    %v2771 = vld [vmem:[%s4 + $0x78] sm:$0xf]
    %v2772 = vld [vmem:[%s4 + $0x7c] sm:$0xf]
    %v2773 = vld [vmem:[%s4 + $0x80] sm:$0xf]
    %v2774 = vld [vmem:[%s4 + $0x84] sm:$0xf]
    %v2775 = vld [vmem:[%s4 + $0x88] sm:$0xf]
    %v2776 = vld [vmem:[%s4 + $0x8c] sm:$0xf]
    %v2777 = vld [vmem:[%s4 + $0x90] sm:$0xf]
    %v2778 = vld [vmem:[%s4 + $0x94] sm:$0xf]
    %v2779 = vld [vmem:[%s4 + $0x98] sm:$0xf]
    %v2780 = vld [vmem:[%s4 + $0x9c] sm:$0xf]
    %v2781 = vld [vmem:[%s4 + $0xa0] sm:$0xf]
    %v2782 = vld [vmem:[%s4 + $0xa4] sm:$0xf]
    %v2783 = vld [vmem:[%s4 + $0xa8] sm:$0xf]
    %v2784 = vld [vmem:[%s4 + $0xac] sm:$0xf]
    %v2785 = vld [vmem:[%s4 + $0xb0] sm:$0xf]
    %v2786 = vld [vmem:[%s4 + $0xb4] sm:$0xf]
    %v2787 = vld [vmem:[%s4 + $0xb8] sm:$0xf]
    %v2788 = vld [vmem:[%s4 + $0xbc] sm:$0xf]
    %v2789 = vld [vmem:[%s4 + $0xc0] sm:$0xf]
    %v2790 = vld [vmem:[%s4 + $0xc4] sm:$0xf]
    %v2791 = vpack.c.bf16 %v2737, %v2733
    %v2792 = vpack.c.bf16 %v2738, %v2734
    %v2793 = vpack.c.bf16 %v2739, %v2735
    %v2794 = vpack.c.bf16 %v2740, %v2736
    %v2795 = vld [vmem:[#allocation13 + $0x4] ss:$0 sm:$0xff]
    %v2846 = vunpack.c.l.b16 %v2741
    %v2847 = vunpack.c.l.b16 %v2742
    %v2848 = vunpack.c.l.b16 %v2743
    %v2849 = vunpack.c.l.b16 %v2744
    %v2850 = vunpack.c.l.b16 %v2745
    %v2851 = vunpack.c.l.b16 %v2746
    %v2852 = vunpack.c.l.b16 %v2747
    %v2853 = vunpack.c.l.b16 %v2748
    %v2854 = vunpack.c.l.b16 %v2749
    %v2855 = vunpack.c.l.b16 %v2750
    %v2856 = vunpack.c.l.b16 %v2751
    %v2857 = vunpack.c.l.b16 %v2752
    %v2858 = vunpack.c.l.b16 %v2753
    %v2859 = vunpack.c.l.b16 %v2754
    %v2860 = vunpack.c.l.b16 %v2755
    %v2861 = vunpack.c.l.b16 %v2756
    %v2862 = vunpack.c.l.b16 %v2757
    %v2863 = vunpack.c.l.b16 %v2758
    %v2864 = vunpack.c.l.b16 %v2759
    %v2865 = vunpack.c.l.b16 %v2760
    %v2866 = vunpack.c.l.b16 %v2761
    %v2867 = vunpack.c.l.b16 %v2762
    %v2868 = vunpack.c.l.b16 %v2763
    %v2869 = vunpack.c.l.b16 %v2764
    %v2870 = vunpack.c.l.b16 %v2765
    %v2871 = vunpack.c.l.b16 %v2766
    %v2872 = vunpack.c.l.b16 %v2767
    %v2873 = vunpack.c.l.b16 %v2768
    %v2874 = vunpack.c.l.b16 %v2769
    %v2875 = vunpack.c.l.b16 %v2770
    %v2876 = vunpack.c.l.b16 %v2771
    %v2877 = vunpack.c.l.b16 %v2772
    %v2878 = vunpack.c.l.b16 %v2773
    %v2879 = vunpack.c.l.b16 %v2774
    %v2880 = vunpack.c.l.b16 %v2775
    %v2881 = vunpack.c.l.b16 %v2776
    %v2882 = vunpack.c.l.b16 %v2777
    %v2883 = vunpack.c.l.b16 %v2778
    %v2884 = vunpack.c.l.b16 %v2779
    %v2885 = vunpack.c.l.b16 %v2780
    %v2886 = vunpack.c.l.b16 %v2781
    %v2887 = vunpack.c.l.b16 %v2782
    %v2888 = vunpack.c.l.b16 %v2783
    %v2889 = vunpack.c.l.b16 %v2784
    %v2890 = vunpack.c.l.b16 %v2785
    %v2891 = vunpack.c.l.b16 %v2786
    %v2892 = vunpack.c.l.b16 %v2787
    %v2893 = vunpack.c.l.b16 %v2788
    %v2894 = vunpack.c.l.b16 %v2789
    %v2895 = vunpack.c.l.b16 %v2790
    %v2896 = vpack.c.b16 %v2847, %v2846
    %v2897 = vpack.c.b16 %v2849, %v2848
    %v2898 = vpack.c.b16 %v2851, %v2850
    %v2899 = vpack.c.b16 %v2853, %v2852
    %v2900 = vpack.c.b16 %v2855, %v2854
    %v2901 = vpack.c.b16 %v2857, %v2856
    %v2902 = vpack.c.b16 %v2859, %v2858
    %v2903 = vpack.c.b16 %v2861, %v2860
    %v2904 = vpack.c.b16 %v2863, %v2862
    %v2905 = vpack.c.b16 %v2865, %v2864
    %v2906 = vpack.c.b16 %v2867, %v2866
    %v2907 = vpack.c.b16 %v2869, %v2868
    %v2908 = vpack.c.b16 %v2871, %v2870
    %v2909 = vpack.c.b16 %v2873, %v2872
    %v2910 = vpack.c.b16 %v2875, %v2874
    %v2911 = vpack.c.b16 %v2877, %v2876
    %v2912 = vpack.c.b16 %v2879, %v2878
    %v2913 = vpack.c.b16 %v2881, %v2880
    %v2914 = vpack.c.b16 %v2883, %v2882
    %v2915 = vpack.c.b16 %v2885, %v2884
    %v2916 = vpack.c.b16 %v2887, %v2886
    %v2917 = vpack.c.b16 %v2889, %v2888
    %v2918 = vpack.c.b16 %v2891, %v2890
    %v2919 = vpack.c.b16 %v2893, %v2892
    %v2920 = vpack.c.b16 %v2895, %v2894
    %v2947 = vsel %vm935, %v2794, 0
    %2949 = vmatprep.subr.bf16.mxu0 0
    %2950 = vmatpush1.bf16.msra.mxu0 %v2896
    %2951 = vmatprep.subr.bf16.mxu0 0
    %2952 = vmatpush1.bf16.msra.mxu0 %v2897
    %2953 = vmatprep.subr.bf16.mxu0 0
    %2954 = vmatpush1.bf16.msra.mxu0 %v2898
    %2955 = vmatprep.subr.bf16.mxu0 0
    %2956 = vmatpush1.bf16.msra.mxu0 %v2899
    %2957 = vmatprep.subr.bf16.mxu0 0
    %2958 = vmatpush1.bf16.msra.mxu0 %v2900
    %2959 = vmatprep.subr.bf16.mxu0 0
    %2960 = vmatpush1.bf16.msra.mxu0 %v2901
    %2961 = vmatprep.subr.bf16.mxu0 0
    %2962 = vmatpush1.bf16.msra.mxu0 %v2902
    %2963 = vmatprep.subr.bf16.mxu0 0
    %2964 = vmatpush1.bf16.msra.mxu0 %v2903
    %2965 = vmatprep.subr.bf16.mxu0 0
    %2966 = vmatpush1.bf16.msra.mxu0 %v2904
    %2967 = vmatprep.subr.bf16.mxu0 0
    %2968 = vmatpush1.bf16.msra.mxu0 %v2905
    %2969 = vmatprep.subr.bf16.mxu0 0
    %2970 = vmatpush1.bf16.msra.mxu0 %v2906
    %2971 = vmatprep.subr.bf16.mxu0 0
    %2972 = vmatpush1.bf16.msra.mxu0 %v2907
    %2973 = vmatprep.subr.bf16.mxu0 0
    %2974 = vmatpush1.bf16.msra.mxu0 %v2908
    %2975 = vmatprep.subr.bf16.mxu0 0
    %2976 = vmatpush1.bf16.msra.mxu0 %v2909
    %2977 = vmatprep.subr.bf16.mxu0 0
    %2978 = vmatpush1.bf16.msra.mxu0 %v2910
    %2979 = vmatprep.subr.bf16.mxu0 0
    %2980 = vmatpush1.bf16.msra.mxu0 %v2911
    %2981 = vmatprep.mubr.bf16.mxu0 %v2792
    %2982 = vmatmul.mubr.bf16.gmra.mrb[0].mxu0 %v2791
    %v2983 = vpop.f32.mrb[0].mxu0
    %v2984 = vadd.f32 %v2795, %v2983
    %v2985 = vpop.f32.mrb[0].mxu0
    %v2986 = vpop.f32.mrb[0].mxu0
    %v2987 = vadd.f32 %v2795, %v2986
    %v2988 = vpop.f32.mrb[0].mxu0
    %2989 = vdwg.mxu0
    %2990 = vmatprep.subr.bf16.mxu0 0
    %2991 = vmatpush1.bf16.msra.mxu0 %v2912
    %2992 = vmatprep.subr.bf16.mxu0 0
    %2993 = vmatpush1.bf16.msra.mxu0 %v2913
    %2994 = vmatprep.subr.bf16.mxu0 0
    %2995 = vmatpush1.bf16.msra.mxu0 %v2914
    %2996 = vmatprep.subr.bf16.mxu0 0
    %2997 = vmatpush1.bf16.msra.mxu0 %v2915
    %2998 = vmatprep.subr.bf16.mxu0 0
    %2999 = vmatpush1.bf16.msra.mxu0 %v2916
    %3000 = vmatprep.subr.bf16.mxu0 0
    %3001 = vmatpush1.bf16.msra.mxu0 %v2917
    %3002 = vmatprep.subr.bf16.mxu0 0
    %3003 = vmatpush1.bf16.msra.mxu0 %v2918
    %3004 = vmatprep.subr.bf16.mxu0 0
    %3005 = vmatpush1.bf16.msra.mxu0 %v2919
    %3006 = vmatprep.subr.bf16.mxu0 0
    %3007 = vmatpush1.bf16.msra.mxu0 %v2920
    %3008 = vmatprep.subr.bf16.mxu0 0
    %3009 = vmatpush1.bf16.msra.mxu0 0
    %3010 = vmatprep.subr.bf16.mxu0 0
    %3011 = vmatpush1.bf16.msra.mxu0 0
    %3012 = vmatprep.subr.bf16.mxu0 0
    %3013 = vmatpush1.bf16.msra.mxu0 0
    %3014 = vmatprep.subr.bf16.mxu0 0
    %3015 = vmatpush1.bf16.msra.mxu0 0
    %3016 = vmatprep.subr.bf16.mxu0 0
    %3017 = vmatpush1.bf16.msra.mxu0 0
    %3018 = vmatprep.subr.bf16.mxu0 0
    %3019 = vmatpush1.bf16.msra.mxu0 0
    %3020 = vmatprep.subr.bf16.mxu0 0
    %3021 = vmatpush1.bf16.msra.mxu0 0
    %3022 = vmatprep.mubr.bf16.mxu0 %v2947
    %3023 = vmatmul.mubr.bf16.gmra.mrb[0].mxu0 %v2793
    %v3024 = vpop.f32.mrb[0].mxu0
    %v3025 = vadd.f32 %v2984, %v3024
    %v3026 = vpop.f32.mrb[0].mxu0
    %v3027 = vpop.f32.mrb[0].mxu0
    %v3028 = vadd.f32 %v2987, %v3027
    %v3029 = vpop.f32.mrb[0].mxu0
    %3030 = vdwg.mxu0
    %v3031 = vpack.c.bf16 %v3028, %v3025
    %v3032 = vld [vmem:[#allocation8] sm:$0xff]
    %v3033 = vld [vmem:[#allocation8 + $0x8] sm:$0xff]
    %v3034 = vld [vmem:[#allocation8 + $0x10] sm:$0xff]
    %v3035 = vld [vmem:[#allocation8 + $0x18] sm:$0xff]
    %v3036 = vld [vmem:[#allocation10] sm:$0xff]
    %v3039 = vunpack.c.l.b16 %v132
    %v3040 = vunpack.c.l.b16 %v133
    %v3041 = vpack.c.b16 %v3040, %v3039
    %v3043 = vcombine.high %v3036, %v3036
    %v3045 = vunpack.c.l.s4 1983009808
    %v3046 = vunpack.c.0.s8 %v3045
    %v3047 = vlaneseq
    %v3048 = vshrl.u32 %v3047, 7
    %v3049 = vsub.s32 %v3046, %v3048
    %v3050 = vrot.slane %v3036, %v3049
    %v3052 = vunpack.c.l.s4 1983009808
    %v3053 = vunpack.c.0.s8 %v3052
    %v3054 = vlaneseq
    %v3055 = vshrl.u32 %v3054, 7
    %v3056 = vsub.s32 %v3053, %v3055
    %v3057 = vrot.slane %v3043, %v3056
    %v3058 = vcombine.high %v3050, %v3050
    %v3059 = vcombine.high %v3057, %v3057
    %vm3060 = vcmask 31744
    %v3062 = vsel %vm3060, %v3041, 0
    %v3065 = vsel %vm201, %v3050, 0
    %v3068 = vsel %vm201, %v3058, 0
    %v3071 = vsel %vm201, %v3057, 0
    %v3074 = vsel %vm201, %v3059, 0
    %3076 = vmatprep.subr.bf16.mxu0 %v3068
    %3077 = vmatpush1.bf16.msra.mxu0 %v3065
    %3078 = vmatprep.subr.bf16.mxu0 0
    %3079 = vmatpush1.bf16.msra.mxu0 0
    %3080 = vmatprep.subr.bf16.mxu0 0
    %3081 = vmatpush1.bf16.msra.mxu0 0
    %3082 = vmatprep.subr.bf16.mxu0 0
    %3083 = vmatpush1.bf16.msra.mxu0 0
    %3084 = vmatprep.subr.bf16.mxu0 0
    %3085 = vmatpush1.bf16.msra.mxu0 0
    %3086 = vmatprep.subr.bf16.mxu0 0
    %3087 = vmatpush1.bf16.msra.mxu0 0
    %3088 = vmatprep.subr.bf16.mxu0 0
    %3089 = vmatpush1.bf16.msra.mxu0 0
    %3090 = vmatprep.subr.bf16.mxu0 0
    %3091 = vmatpush1.bf16.msra.mxu0 0
    %3092 = vmatprep.subr.bf16.mxu0 0
    %3093 = vmatpush1.bf16.msra.mxu0 0
    %3094 = vmatprep.subr.bf16.mxu0 0
    %3095 = vmatpush1.bf16.msra.mxu0 0
    %3096 = vmatprep.subr.bf16.mxu0 0
    %3097 = vmatpush1.bf16.msra.mxu0 0
    %3098 = vmatprep.subr.bf16.mxu0 0
    %3099 = vmatpush1.bf16.msra.mxu0 0
    %3100 = vmatprep.subr.bf16.mxu0 0
    %3101 = vmatpush1.bf16.msra.mxu0 0
    %3102 = vmatprep.subr.bf16.mxu0 0
    %3103 = vmatpush1.bf16.msra.mxu0 0
    %3104 = vmatprep.subr.bf16.mxu0 0
    %3105 = vmatpush1.bf16.msra.mxu0 0
    %3106 = vmatprep.subr.bf16.mxu0 0
    %3107 = vmatpush1.bf16.msra.mxu0 0
    %3108 = vmatprep.mubr.bf16.mxu0 0
    %3109 = vmatmul.mubr.bf16.gmra.mrb[0].mxu0 %v3062
    %v3110 = vpop.f32.mrb[0].mxu0
    %v3111 = vadd.f32 0.0, %v3110
    %v3112 = vpop.f32.mrb[0].mxu0
    %v3113 = vadd.f32 0.0, %v3112
    %v3114 = vpop.f32.mrb[0].mxu0
    %v3115 = vadd.f32 0.0, %v3114
    %v3116 = vpop.f32.mrb[0].mxu0
    %v3117 = vadd.f32 0.0, %v3116
    %3118 = vdwg.mxu0
    %3119 = vmatprep.subr.bf16.mxu0 %v3074
    %3120 = vmatpush1.bf16.msra.mxu0 %v3071
    %3121 = vmatprep.subr.bf16.mxu0 0
    %3122 = vmatpush1.bf16.msra.mxu0 0
    %3123 = vmatprep.subr.bf16.mxu0 0
    %3124 = vmatpush1.bf16.msra.mxu0 0
    %3125 = vmatprep.subr.bf16.mxu0 0
    %3126 = vmatpush1.bf16.msra.mxu0 0
    %3127 = vmatprep.subr.bf16.mxu0 0
    %3128 = vmatpush1.bf16.msra.mxu0 0
    %3129 = vmatprep.subr.bf16.mxu0 0
    %3130 = vmatpush1.bf16.msra.mxu0 0
    %3131 = vmatprep.subr.bf16.mxu0 0
    %3132 = vmatpush1.bf16.msra.mxu0 0
    %3133 = vmatprep.subr.bf16.mxu0 0
    %3134 = vmatpush1.bf16.msra.mxu0 0
    %3135 = vmatprep.subr.bf16.mxu0 0
    %3136 = vmatpush1.bf16.msra.mxu0 0
    %3137 = vmatprep.subr.bf16.mxu0 0
    %3138 = vmatpush1.bf16.msra.mxu0 0
    %3139 = vmatprep.subr.bf16.mxu0 0
    %3140 = vmatpush1.bf16.msra.mxu0 0
    %3141 = vmatprep.subr.bf16.mxu0 0
    %3142 = vmatpush1.bf16.msra.mxu0 0
    %3143 = vmatprep.subr.bf16.mxu0 0
    %3144 = vmatpush1.bf16.msra.mxu0 0
    %3145 = vmatprep.subr.bf16.mxu0 0
    %3146 = vmatpush1.bf16.msra.mxu0 0
    %3147 = vmatprep.subr.bf16.mxu0 0
    %3148 = vmatpush1.bf16.msra.mxu0 0
    %3149 = vmatprep.subr.bf16.mxu0 0
    %3150 = vmatpush1.bf16.msra.mxu0 0
    %3151 = vmatprep.mubr.bf16.mxu0 0
    %3152 = vmatmul.mubr.bf16.gmra.mrb[0].mxu0 %v3062
    %v3153 = vpop.f32.mrb[0].mxu0
    %v3154 = vadd.f32 0.0, %v3153
    %v3155 = vpop.f32.mrb[0].mxu0
    %v3156 = vadd.f32 0.0, %v3155
    %v3157 = vpop.f32.mrb[0].mxu0
    %v3158 = vadd.f32 0.0, %v3157
    %v3159 = vpop.f32.mrb[0].mxu0
    %v3160 = vadd.f32 0.0, %v3159
    %3161 = vdwg.mxu0
    %v3166 = vunpack.c.l.b16 %v3032
    %v3167 = vunpack.c.h.b16 %v3032
    %v3168 = vunpack.c.l.b16 %v3033
    %v3169 = vunpack.c.h.b16 %v3033
    %v3170 = vunpack.c.l.b16 %v3034
    %v3171 = vunpack.c.h.b16 %v3034
    %v3172 = vunpack.c.l.b16 %v3035
    %v3173 = vunpack.c.h.b16 %v3035
    %v3174 = vpack.c.b16 %v3170, %v3166
    %v3175 = vpack.c.b16 %v3171, %v3167
    %v3176 = vpack.c.b16 %v3172, %v3168
    %v3177 = vpack.c.b16 %v3173, %v3169
    %v3183 = vsel %vm935, %v3031, 0
    %3185 = vmatprep.subr.bf16.mxu0 %v3175
    %3186 = vmatpush1.bf16.msra.mxu0 %v3174
    %3187 = vmatprep.subr.bf16.mxu0 0
    %3188 = vmatpush1.bf16.msra.mxu0 0
    %3189 = vmatprep.subr.bf16.mxu0 0
    %3190 = vmatpush1.bf16.msra.mxu0 0
    %3191 = vmatprep.subr.bf16.mxu0 0
    %3192 = vmatpush1.bf16.msra.mxu0 0
    %3193 = vmatprep.subr.bf16.mxu0 0
    %3194 = vmatpush1.bf16.msra.mxu0 0
    %3195 = vmatprep.subr.bf16.mxu0 0
    %3196 = vmatpush1.bf16.msra.mxu0 0
    %3197 = vmatprep.subr.bf16.mxu0 0
    %3198 = vmatpush1.bf16.msra.mxu0 0
    %3199 = vmatprep.subr.bf16.mxu0 0
    %3200 = vmatpush1.bf16.msra.mxu0 0
    %3201 = vmatprep.subr.bf16.mxu0 0
    %3202 = vmatpush1.bf16.msra.mxu0 0
    %3203 = vmatprep.subr.bf16.mxu0 0
    %3204 = vmatpush1.bf16.msra.mxu0 0
    %3205 = vmatprep.subr.bf16.mxu0 0
    %3206 = vmatpush1.bf16.msra.mxu0 0
    %3207 = vmatprep.subr.bf16.mxu0 0
    %3208 = vmatpush1.bf16.msra.mxu0 0
    %3209 = vmatprep.subr.bf16.mxu0 0
    %3210 = vmatpush1.bf16.msra.mxu0 0
    %3211 = vmatprep.subr.bf16.mxu0 0
    %3212 = vmatpush1.bf16.msra.mxu0 0
    %3213 = vmatprep.subr.bf16.mxu0 0
    %3214 = vmatpush1.bf16.msra.mxu0 0
    %3215 = vmatprep.subr.bf16.mxu0 0
    %3216 = vmatpush1.bf16.msra.mxu0 0
    %3217 = vmatprep.mubr.bf16.mxu0 0
    %3218 = vmatmul.mubr.bf16.gmra.mrb[0].mxu0 %v3183
    %v3219 = vpop.f32.mrb[0].mxu0
    %v3220 = vadd.f32 %v3111, %v3219
    %v3221 = vpop.f32.mrb[0].mxu0
    %v3222 = vadd.f32 %v3113, %v3221
    %v3223 = vpop.f32.mrb[0].mxu0
    %v3224 = vadd.f32 %v3115, %v3223
    %v3225 = vpop.f32.mrb[0].mxu0
    %v3226 = vadd.f32 %v3117, %v3225
    %3227 = vdwg.mxu0
    %3228 = vmatprep.subr.bf16.mxu0 %v3177
    %3229 = vmatpush1.bf16.msra.mxu0 %v3176
    %3230 = vmatprep.subr.bf16.mxu0 0
    %3231 = vmatpush1.bf16.msra.mxu0 0
    %3232 = vmatprep.subr.bf16.mxu0 0
    %3233 = vmatpush1.bf16.msra.mxu0 0
    %3234 = vmatprep.subr.bf16.mxu0 0
    %3235 = vmatpush1.bf16.msra.mxu0 0
    %3236 = vmatprep.subr.bf16.mxu0 0
    %3237 = vmatpush1.bf16.msra.mxu0 0
    %3238 = vmatprep.subr.bf16.mxu0 0
    %3239 = vmatpush1.bf16.msra.mxu0 0
    %3240 = vmatprep.subr.bf16.mxu0 0
    %3241 = vmatpush1.bf16.msra.mxu0 0
    %3242 = vmatprep.subr.bf16.mxu0 0
    %3243 = vmatpush1.bf16.msra.mxu0 0
    %3244 = vmatprep.subr.bf16.mxu0 0
    %3245 = vmatpush1.bf16.msra.mxu0 0
    %3246 = vmatprep.subr.bf16.mxu0 0
    %3247 = vmatpush1.bf16.msra.mxu0 0
    %3248 = vmatprep.subr.bf16.mxu0 0
    %3249 = vmatpush1.bf16.msra.mxu0 0
    %3250 = vmatprep.subr.bf16.mxu0 0
    %3251 = vmatpush1.bf16.msra.mxu0 0
    %3252 = vmatprep.subr.bf16.mxu0 0
    %3253 = vmatpush1.bf16.msra.mxu0 0
    %3254 = vmatprep.subr.bf16.mxu0 0
    %3255 = vmatpush1.bf16.msra.mxu0 0
    %3256 = vmatprep.subr.bf16.mxu0 0
    %3257 = vmatpush1.bf16.msra.mxu0 0
    %3258 = vmatprep.subr.bf16.mxu0 0
    %3259 = vmatpush1.bf16.msra.mxu0 0
    %3260 = vmatprep.mubr.bf16.mxu0 0
    %3261 = vmatmul.mubr.bf16.gmra.mrb[0].mxu0 %v3183
    %v3262 = vpop.f32.mrb[0].mxu0
    %v3263 = vadd.f32 %v3154, %v3262
    %v3264 = vpop.f32.mrb[0].mxu0
    %v3265 = vadd.f32 %v3156, %v3264
    %v3266 = vpop.f32.mrb[0].mxu0
    %v3267 = vadd.f32 %v3158, %v3266
    %v3268 = vpop.f32.mrb[0].mxu0
    %v3269 = vadd.f32 %v3160, %v3268
    %3270 = vdwg.mxu0
    %s3271 = scalar_lea.vmem [#allocation13], 5
    %v3272 = vld [vmem:[%s3271] ss:$8 sm:$0xf]
    %v3274 = vlaneseq
    %v3275 = vshrl.u32 %v3274, 7
    %v3276 = vsub.s32 0, %v3275
    %v3277 = vrot.slane %v3272, %v3276
    %v3278 = vlaneseq
    %v3279 = vshrl.u32 %v3278, 7
    %v3280 = vsub.s32 1, %v3279
    %v3281 = vrot.slane %v3272, %v3280
    %v3282 = vlaneseq
    %v3283 = vshrl.u32 %v3282, 7
    %v3284 = vsub.s32 2, %v3283
    %v3285 = vrot.slane %v3272, %v3284
    %v3286 = vlaneseq
    %v3287 = vshrl.u32 %v3286, 7
    %v3288 = vsub.s32 3, %v3287
    %v3289 = vrot.slane %v3272, %v3288
    %v3294 = vadd.f32 %v3220, %v3277
    %v3295 = vadd.f32 %v3222, %v3281
    %v3296 = vadd.f32 %v3263, %v3285
    %v3297 = vadd.f32 %v3265, %v3289
    %v3298 = vadd.f32 %v3224, %v3277
    %v3299 = vadd.f32 %v3226, %v3281
    %v3300 = vadd.f32 %v3267, %v3285
    %v3301 = vadd.f32 %v3269, %v3289
    %v3302 = vmax.f32 %v3294, 0.0
    %v3303 = vmax.f32 %v3295, 0.0
    %v3304 = vmax.f32 %v3296, 0.0
    %v3305 = vmax.f32 %v3297, 0.0
    %v3306 = vmax.f32 %v3298, 0.0
    %v3307 = vmax.f32 %v3299, 0.0
    %v3308 = vmax.f32 %v3300, 0.0
    %v3309 = vmax.f32 %v3301, 0.0
    %v3310 = vld [vmem:[#allocation11] sm:$0xff]
    %v3311 = vld [vmem:[#allocation11 + $0x8] sm:$0xff]
    %v3312 = vld [vmem:[#allocation11 + $0x10] sm:$0xff]
    %v3313 = vld [vmem:[#allocation11 + $0x18] sm:$0xff]
    %v3314 = vld [vmem:[#allocation11 + $0x20] sm:$0xff]
    %v3315 = vld [vmem:[#allocation11 + $0x28] sm:$0xff]
    %v3316 = vld [vmem:[#allocation11 + $0x30] sm:$0xff]
    %v3317 = vld [vmem:[#allocation11 + $0x38] sm:$0xff]
    %v3318 = vld [vmem:[#allocation11 + $0x40] sm:$0xff]
    %v3319 = vld [vmem:[#allocation11 + $0x48] sm:$0xff]
    %v3320 = vld [vmem:[#allocation11 + $0x50] sm:$0xff]
    %v3321 = vld [vmem:[#allocation11 + $0x58] sm:$0xff]
    %v3322 = vld [vmem:[#allocation11 + $0x60] sm:$0xff]
    %v3323 = vld [vmem:[#allocation11 + $0x68] sm:$0xff]
    %v3324 = vld [vmem:[#allocation11 + $0x70] sm:$0xff]
    %v3325 = vld [vmem:[#allocation11 + $0x78] sm:$0xff]
    %v3326 = vld [vmem:[#allocation11 + $0x80] sm:$0xff]
    %v3327 = vld [vmem:[#allocation11 + $0x88] sm:$0xff]
    %v3328 = vld [vmem:[#allocation11 + $0x90] sm:$0xff]
    %v3329 = vld [vmem:[#allocation11 + $0x98] sm:$0xff]
    %v3330 = vld [vmem:[#allocation11 + $0xa0] sm:$0xff]
    %v3331 = vld [vmem:[#allocation11 + $0xa8] sm:$0xff]
    %v3332 = vld [vmem:[#allocation11 + $0xb0] sm:$0xff]
    %v3333 = vld [vmem:[#allocation11 + $0xb8] sm:$0xff]
    %v3334 = vld [vmem:[#allocation11 + $0xc0] sm:$0xff]
    %v3335 = vld [vmem:[#allocation11 + $0xc8] sm:$0xff]
    %v3336 = vld [vmem:[#allocation11 + $0xd0] sm:$0xff]
    %v3337 = vld [vmem:[#allocation11 + $0xd8] sm:$0xff]
    %v3338 = vld [vmem:[#allocation11 + $0xe0] sm:$0xff]
    %v3339 = vld [vmem:[#allocation11 + $0xe8] sm:$0xff]
    %v3340 = vld [vmem:[#allocation11 + $0xf0] sm:$0xff]
    %v3341 = vld [vmem:[#allocation11 + $0xf8] sm:$0xff]
    %v3342 = vld [vmem:[#allocation11 + $0x100] sm:$0xff]
    %v3343 = vld [vmem:[#allocation11 + $0x108] sm:$0xff]
    %v3344 = vld [vmem:[#allocation11 + $0x110] sm:$0xff]
    %v3345 = vld [vmem:[#allocation11 + $0x118] sm:$0xff]
    %v3346 = vld [vmem:[#allocation11 + $0x120] sm:$0xff]
    %v3347 = vld [vmem:[#allocation11 + $0x128] sm:$0xff]
    %v3348 = vld [vmem:[#allocation11 + $0x130] sm:$0xff]
    %v3349 = vld [vmem:[#allocation11 + $0x138] sm:$0xff]
    %v3350 = vld [vmem:[#allocation11 + $0x140] sm:$0xff]
    %v3351 = vld [vmem:[#allocation11 + $0x148] sm:$0xff]
    %v3352 = vld [vmem:[#allocation11 + $0x150] sm:$0xff]
    %v3353 = vld [vmem:[#allocation11 + $0x158] sm:$0xff]
    %v3354 = vld [vmem:[#allocation11 + $0x160] sm:$0xff]
    %v3355 = vld [vmem:[#allocation11 + $0x168] sm:$0xff]
    %v3356 = vld [vmem:[#allocation11 + $0x170] sm:$0xff]
    %v3357 = vld [vmem:[#allocation11 + $0x178] sm:$0xff]
    %v3358 = vld [vmem:[#allocation11 + $0x180] sm:$0xff]
    %v3359 = vld [vmem:[#allocation11 + $0x188] sm:$0xff]
    %v3360 = vld [vmem:[#allocation11 + $0x190] sm:$0xff]
    %v3361 = vld [vmem:[#allocation11 + $0x198] sm:$0xff]
    %v3362 = vld [vmem:[#allocation11 + $0x1a0] sm:$0xff]
    %v3363 = vld [vmem:[#allocation11 + $0x1a8] sm:$0xff]
    %v3364 = vld [vmem:[#allocation11 + $0x1b0] sm:$0xff]
    %v3365 = vld [vmem:[#allocation11 + $0x1b8] sm:$0xff]
    %v3366 = vld [vmem:[#allocation11 + $0x1c0] sm:$0xff]
    %v3367 = vld [vmem:[#allocation11 + $0x1c8] sm:$0xff]
    %v3368 = vld [vmem:[#allocation11 + $0x1d0] sm:$0xff]
    %v3369 = vld [vmem:[#allocation11 + $0x1d8] sm:$0xff]
    %v3370 = vld [vmem:[#allocation11 + $0x1e0] sm:$0xff]
    %v3371 = vld [vmem:[#allocation11 + $0x1e8] sm:$0xff]
    %v3372 = vld [vmem:[#allocation11 + $0x1f0] sm:$0xff]
    %v3373 = vld [vmem:[#allocation11 + $0x1f8] sm:$0xff]
    %v3374 = vld [vmem:[#allocation11 + $0x200] sm:$0xff]
    %v3375 = vld [vmem:[#allocation11 + $0x208] sm:$0xff]
    %v3376 = vld [vmem:[#allocation11 + $0x210] sm:$0xff]
    %v3377 = vld [vmem:[#allocation11 + $0x218] sm:$0xff]
    %v3378 = vld [vmem:[#allocation11 + $0x220] sm:$0xff]
    %v3379 = vld [vmem:[#allocation11 + $0x228] sm:$0xff]
    %v3380 = vld [vmem:[#allocation11 + $0x230] sm:$0xff]
    %v3381 = vld [vmem:[#allocation11 + $0x238] sm:$0xff]
    %v3382 = vld [vmem:[#allocation11 + $0x240] sm:$0xff]
    %v3383 = vld [vmem:[#allocation11 + $0x248] sm:$0xff]
    %v3384 = vld [vmem:[#allocation11 + $0x250] sm:$0xff]
    %v3385 = vld [vmem:[#allocation11 + $0x258] sm:$0xff]
    %v3386 = vld [vmem:[#allocation11 + $0x260] sm:$0xff]
    %v3387 = vld [vmem:[#allocation11 + $0x268] sm:$0xff]
    %v3388 = vld [vmem:[#allocation11 + $0x270] sm:$0xff]
    %v3389 = vld [vmem:[#allocation11 + $0x278] sm:$0xff]
    %v3390 = vld [vmem:[#allocation11 + $0x280] sm:$0xff]
    %v3391 = vld [vmem:[#allocation11 + $0x288] sm:$0xff]
    %v3392 = vld [vmem:[#allocation11 + $0x290] sm:$0xff]
    %v3393 = vld [vmem:[#allocation11 + $0x298] sm:$0xff]
    %v3394 = vld [vmem:[#allocation11 + $0x2a0] sm:$0xff]
    %v3395 = vld [vmem:[#allocation11 + $0x2a8] sm:$0xff]
    %v3396 = vld [vmem:[#allocation11 + $0x2b0] sm:$0xff]
    %v3397 = vld [vmem:[#allocation11 + $0x2b8] sm:$0xff]
    %v3398 = vld [vmem:[#allocation11 + $0x2c0] sm:$0xff]
    %v3399 = vld [vmem:[#allocation11 + $0x2c8] sm:$0xff]
    %v3400 = vld [vmem:[#allocation11 + $0x2d0] sm:$0xff]
    %v3401 = vld [vmem:[#allocation11 + $0x2d8] sm:$0xff]
    %v3402 = vld [vmem:[#allocation11 + $0x2e0] sm:$0xff]
    %v3403 = vld [vmem:[#allocation11 + $0x2e8] sm:$0xff]
    %v3404 = vld [vmem:[#allocation11 + $0x2f0] sm:$0xff]
    %v3405 = vld [vmem:[#allocation11 + $0x2f8] sm:$0xff]
    %v3406 = vld [vmem:[#allocation11 + $0x300] sm:$0xff]
    %v3407 = vld [vmem:[#allocation11 + $0x308] sm:$0xff]
    %v3408 = vld [vmem:[#allocation11 + $0x310] sm:$0xff]
    %v3409 = vld [vmem:[#allocation11 + $0x318] sm:$0xff]
    %v3410 = vpack.c.bf16 %v3306, %v3302
    %v3411 = vpack.c.bf16 %v3307, %v3303
    %v3412 = vpack.c.bf16 %v3308, %v3304
    %v3413 = vpack.c.bf16 %v3309, %v3305
    %s3414 = scalar_lea.vmem [#allocation13], 6
    %v3415 = vld [vmem:[%s3414] ss:$8 sm:$0xf]
    %v3417 = vlaneseq
    %v3418 = vshrl.u32 %v3417, 7
    %v3419 = vsub.s32 0, %v3418
    %v3420 = vrot.slane %v3415, %v3419
    %v3421 = vlaneseq
    %v3422 = vshrl.u32 %v3421, 7
    %v3423 = vsub.s32 1, %v3422
    %v3424 = vrot.slane %v3415, %v3423
    %v3425 = vlaneseq
    %v3426 = vshrl.u32 %v3425, 7
    %v3427 = vsub.s32 2, %v3426
    %v3428 = vrot.slane %v3415, %v3427
    %v3429 = vlaneseq
    %v3430 = vshrl.u32 %v3429, 7
    %v3431 = vsub.s32 3, %v3430
    %v3432 = vrot.slane %v3415, %v3431
    %v3537 = vunpack.c.l.b16 %v3310
    %v3538 = vunpack.c.h.b16 %v3310
    %v3539 = vunpack.c.l.b16 %v3311
    %v3540 = vunpack.c.h.b16 %v3311
    %v3541 = vunpack.c.l.b16 %v3312
    %v3542 = vunpack.c.h.b16 %v3312
    %v3543 = vunpack.c.l.b16 %v3313
    %v3544 = vunpack.c.h.b16 %v3313
    %v3545 = vunpack.c.l.b16 %v3314
    %v3546 = vunpack.c.h.b16 %v3314
    %v3547 = vunpack.c.l.b16 %v3315
    %v3548 = vunpack.c.h.b16 %v3315
    %v3549 = vunpack.c.l.b16 %v3316
    %v3550 = vunpack.c.h.b16 %v3316
    %v3551 = vunpack.c.l.b16 %v3317
    %v3552 = vunpack.c.h.b16 %v3317
    %v3553 = vunpack.c.l.b16 %v3318
    %v3554 = vunpack.c.h.b16 %v3318
    %v3555 = vunpack.c.l.b16 %v3319
    %v3556 = vunpack.c.h.b16 %v3319
    %v3557 = vunpack.c.l.b16 %v3320
    %v3558 = vunpack.c.h.b16 %v3320
    %v3559 = vunpack.c.l.b16 %v3321
    %v3560 = vunpack.c.h.b16 %v3321
    %v3561 = vunpack.c.l.b16 %v3322
    %v3562 = vunpack.c.h.b16 %v3322
    %v3563 = vunpack.c.l.b16 %v3323
    %v3564 = vunpack.c.h.b16 %v3323
    %v3565 = vunpack.c.l.b16 %v3324
    %v3566 = vunpack.c.h.b16 %v3324
    %v3567 = vunpack.c.l.b16 %v3325
    %v3568 = vunpack.c.h.b16 %v3325
    %v3569 = vunpack.c.l.b16 %v3326
    %v3570 = vunpack.c.h.b16 %v3326
    %v3571 = vunpack.c.l.b16 %v3327
    %v3572 = vunpack.c.h.b16 %v3327
    %v3573 = vunpack.c.l.b16 %v3328
    %v3574 = vunpack.c.h.b16 %v3328
    %v3575 = vunpack.c.l.b16 %v3329
    %v3576 = vunpack.c.h.b16 %v3329
    %v3577 = vunpack.c.l.b16 %v3330
    %v3578 = vunpack.c.h.b16 %v3330
    %v3579 = vunpack.c.l.b16 %v3331
    %v3580 = vunpack.c.h.b16 %v3331
    %v3581 = vunpack.c.l.b16 %v3332
    %v3582 = vunpack.c.h.b16 %v3332
    %v3583 = vunpack.c.l.b16 %v3333
    %v3584 = vunpack.c.h.b16 %v3333
    %v3585 = vunpack.c.l.b16 %v3334
    %v3586 = vunpack.c.h.b16 %v3334
    %v3587 = vunpack.c.l.b16 %v3335
    %v3588 = vunpack.c.h.b16 %v3335
    %v3589 = vunpack.c.l.b16 %v3336
    %v3590 = vunpack.c.h.b16 %v3336
    %v3591 = vunpack.c.l.b16 %v3337
    %v3592 = vunpack.c.h.b16 %v3337
    %v3593 = vunpack.c.l.b16 %v3338
    %v3594 = vunpack.c.h.b16 %v3338
    %v3595 = vunpack.c.l.b16 %v3339
    %v3596 = vunpack.c.h.b16 %v3339
    %v3597 = vunpack.c.l.b16 %v3340
    %v3598 = vunpack.c.h.b16 %v3340
    %v3599 = vunpack.c.l.b16 %v3341
    %v3600 = vunpack.c.h.b16 %v3341
    %v3601 = vunpack.c.l.b16 %v3342
    %v3602 = vunpack.c.h.b16 %v3342
    %v3603 = vunpack.c.l.b16 %v3343
    %v3604 = vunpack.c.h.b16 %v3343
    %v3605 = vunpack.c.l.b16 %v3344
    %v3606 = vunpack.c.h.b16 %v3344
    %v3607 = vunpack.c.l.b16 %v3345
    %v3608 = vunpack.c.h.b16 %v3345
    %v3609 = vunpack.c.l.b16 %v3346
    %v3610 = vunpack.c.h.b16 %v3346
    %v3611 = vunpack.c.l.b16 %v3347
    %v3612 = vunpack.c.h.b16 %v3347
    %v3613 = vunpack.c.l.b16 %v3348
    %v3614 = vunpack.c.h.b16 %v3348
    %v3615 = vunpack.c.l.b16 %v3349
    %v3616 = vunpack.c.h.b16 %v3349
    %v3617 = vunpack.c.l.b16 %v3350
    %v3618 = vunpack.c.h.b16 %v3350
    %v3619 = vunpack.c.l.b16 %v3351
    %v3620 = vunpack.c.h.b16 %v3351
    %v3621 = vunpack.c.l.b16 %v3352
    %v3622 = vunpack.c.h.b16 %v3352
    %v3623 = vunpack.c.l.b16 %v3353
    %v3624 = vunpack.c.h.b16 %v3353
    %v3625 = vunpack.c.l.b16 %v3354
    %v3626 = vunpack.c.h.b16 %v3354
    %v3627 = vunpack.c.l.b16 %v3355
    %v3628 = vunpack.c.h.b16 %v3355
    %v3629 = vunpack.c.l.b16 %v3356
    %v3630 = vunpack.c.h.b16 %v3356
    %v3631 = vunpack.c.l.b16 %v3357
    %v3632 = vunpack.c.h.b16 %v3357
    %v3633 = vunpack.c.l.b16 %v3358
    %v3634 = vunpack.c.h.b16 %v3358
    %v3635 = vunpack.c.l.b16 %v3359
    %v3636 = vunpack.c.h.b16 %v3359
    %v3637 = vunpack.c.l.b16 %v3360
    %v3638 = vunpack.c.h.b16 %v3360
    %v3639 = vunpack.c.l.b16 %v3361
    %v3640 = vunpack.c.h.b16 %v3361
    %v3641 = vunpack.c.l.b16 %v3362
    %v3642 = vunpack.c.h.b16 %v3362
    %v3643 = vunpack.c.l.b16 %v3363
    %v3644 = vunpack.c.h.b16 %v3363
    %v3645 = vunpack.c.l.b16 %v3364
    %v3646 = vunpack.c.h.b16 %v3364
    %v3647 = vunpack.c.l.b16 %v3365
    %v3648 = vunpack.c.h.b16 %v3365
    %v3649 = vunpack.c.l.b16 %v3366
    %v3650 = vunpack.c.h.b16 %v3366
    %v3651 = vunpack.c.l.b16 %v3367
    %v3652 = vunpack.c.h.b16 %v3367
    %v3653 = vunpack.c.l.b16 %v3368
    %v3654 = vunpack.c.h.b16 %v3368
    %v3655 = vunpack.c.l.b16 %v3369
    %v3656 = vunpack.c.h.b16 %v3369
    %v3657 = vunpack.c.l.b16 %v3370
    %v3658 = vunpack.c.h.b16 %v3370
    %v3659 = vunpack.c.l.b16 %v3371
    %v3660 = vunpack.c.h.b16 %v3371
    %v3661 = vunpack.c.l.b16 %v3372
    %v3662 = vunpack.c.h.b16 %v3372
    %v3663 = vunpack.c.l.b16 %v3373
    %v3664 = vunpack.c.h.b16 %v3373
    %v3665 = vunpack.c.l.b16 %v3374
    %v3666 = vunpack.c.h.b16 %v3374
    %v3667 = vunpack.c.l.b16 %v3375
    %v3668 = vunpack.c.h.b16 %v3375
    %v3669 = vunpack.c.l.b16 %v3376
    %v3670 = vunpack.c.h.b16 %v3376
    %v3671 = vunpack.c.l.b16 %v3377
    %v3672 = vunpack.c.h.b16 %v3377
    %v3673 = vunpack.c.l.b16 %v3378
    %v3674 = vunpack.c.h.b16 %v3378
    %v3675 = vunpack.c.l.b16 %v3379
    %v3676 = vunpack.c.h.b16 %v3379
    %v3677 = vunpack.c.l.b16 %v3380
    %v3678 = vunpack.c.h.b16 %v3380
    %v3679 = vunpack.c.l.b16 %v3381
    %v3680 = vunpack.c.h.b16 %v3381
    %v3681 = vunpack.c.l.b16 %v3382
    %v3682 = vunpack.c.h.b16 %v3382
    %v3683 = vunpack.c.l.b16 %v3383
    %v3684 = vunpack.c.h.b16 %v3383
    %v3685 = vunpack.c.l.b16 %v3384
    %v3686 = vunpack.c.h.b16 %v3384
    %v3687 = vunpack.c.l.b16 %v3385
    %v3688 = vunpack.c.h.b16 %v3385
    %v3689 = vunpack.c.l.b16 %v3386
    %v3690 = vunpack.c.h.b16 %v3386
    %v3691 = vunpack.c.l.b16 %v3387
    %v3692 = vunpack.c.h.b16 %v3387
    %v3693 = vunpack.c.l.b16 %v3388
    %v3694 = vunpack.c.h.b16 %v3388
    %v3695 = vunpack.c.l.b16 %v3389
    %v3696 = vunpack.c.h.b16 %v3389
    %v3697 = vunpack.c.l.b16 %v3390
    %v3698 = vunpack.c.h.b16 %v3390
    %v3699 = vunpack.c.l.b16 %v3391
    %v3700 = vunpack.c.h.b16 %v3391
    %v3701 = vunpack.c.l.b16 %v3392
    %v3702 = vunpack.c.h.b16 %v3392
    %v3703 = vunpack.c.l.b16 %v3393
    %v3704 = vunpack.c.h.b16 %v3393
    %v3705 = vunpack.c.l.b16 %v3394
    %v3706 = vunpack.c.h.b16 %v3394
    %v3707 = vunpack.c.l.b16 %v3395
    %v3708 = vunpack.c.h.b16 %v3395
    %v3709 = vunpack.c.l.b16 %v3396
    %v3710 = vunpack.c.h.b16 %v3396
    %v3711 = vunpack.c.l.b16 %v3397
    %v3712 = vunpack.c.h.b16 %v3397
    %v3713 = vunpack.c.l.b16 %v3398
    %v3714 = vunpack.c.h.b16 %v3398
    %v3715 = vunpack.c.l.b16 %v3399
    %v3716 = vunpack.c.h.b16 %v3399
    %v3717 = vunpack.c.l.b16 %v3400
    %v3718 = vunpack.c.h.b16 %v3400
    %v3719 = vunpack.c.l.b16 %v3401
    %v3720 = vunpack.c.h.b16 %v3401
    %v3721 = vunpack.c.l.b16 %v3402
    %v3722 = vunpack.c.h.b16 %v3402
    %v3723 = vunpack.c.l.b16 %v3403
    %v3724 = vunpack.c.h.b16 %v3403
    %v3725 = vunpack.c.l.b16 %v3404
    %v3726 = vunpack.c.h.b16 %v3404
    %v3727 = vunpack.c.l.b16 %v3405
    %v3728 = vunpack.c.h.b16 %v3405
    %v3729 = vunpack.c.l.b16 %v3406
    %v3730 = vunpack.c.h.b16 %v3406
    %v3731 = vunpack.c.l.b16 %v3407
    %v3732 = vunpack.c.h.b16 %v3407
    %v3733 = vunpack.c.l.b16 %v3408
    %v3734 = vunpack.c.h.b16 %v3408
    %v3735 = vunpack.c.l.b16 %v3409
    %v3736 = vunpack.c.h.b16 %v3409
    %v3737 = vpack.c.b16 %v3541, %v3537
    %v3738 = vpack.c.b16 %v3542, %v3538
    %v3739 = vpack.c.b16 %v3543, %v3539
    %v3740 = vpack.c.b16 %v3544, %v3540
    %v3741 = vpack.c.b16 %v3549, %v3545
    %v3742 = vpack.c.b16 %v3550, %v3546
    %v3743 = vpack.c.b16 %v3551, %v3547
    %v3744 = vpack.c.b16 %v3552, %v3548
    %v3745 = vpack.c.b16 %v3557, %v3553
    %v3746 = vpack.c.b16 %v3558, %v3554
    %v3747 = vpack.c.b16 %v3559, %v3555
    %v3748 = vpack.c.b16 %v3560, %v3556
    %v3749 = vpack.c.b16 %v3565, %v3561
    %v3750 = vpack.c.b16 %v3566, %v3562
    %v3751 = vpack.c.b16 %v3567, %v3563
    %v3752 = vpack.c.b16 %v3568, %v3564
    %v3753 = vpack.c.b16 %v3573, %v3569
    %v3754 = vpack.c.b16 %v3574, %v3570
    %v3755 = vpack.c.b16 %v3575, %v3571
    %v3756 = vpack.c.b16 %v3576, %v3572
    %v3757 = vpack.c.b16 %v3581, %v3577
    %v3758 = vpack.c.b16 %v3582, %v3578
    %v3759 = vpack.c.b16 %v3583, %v3579
    %v3760 = vpack.c.b16 %v3584, %v3580
    %v3761 = vpack.c.b16 %v3589, %v3585
    %v3762 = vpack.c.b16 %v3590, %v3586
    %v3763 = vpack.c.b16 %v3591, %v3587
    %v3764 = vpack.c.b16 %v3592, %v3588
    %v3765 = vpack.c.b16 %v3597, %v3593
    %v3766 = vpack.c.b16 %v3598, %v3594
    %v3767 = vpack.c.b16 %v3599, %v3595
    %v3768 = vpack.c.b16 %v3600, %v3596
    %v3769 = vpack.c.b16 %v3605, %v3601
    %v3770 = vpack.c.b16 %v3606, %v3602
    %v3771 = vpack.c.b16 %v3607, %v3603
    %v3772 = vpack.c.b16 %v3608, %v3604
    %v3773 = vpack.c.b16 %v3613, %v3609
    %v3774 = vpack.c.b16 %v3614, %v3610
    %v3775 = vpack.c.b16 %v3615, %v3611
    %v3776 = vpack.c.b16 %v3616, %v3612
    %v3777 = vpack.c.b16 %v3621, %v3617
    %v3778 = vpack.c.b16 %v3622, %v3618
    %v3779 = vpack.c.b16 %v3623, %v3619
    %v3780 = vpack.c.b16 %v3624, %v3620
    %v3781 = vpack.c.b16 %v3629, %v3625
    %v3782 = vpack.c.b16 %v3630, %v3626
    %v3783 = vpack.c.b16 %v3631, %v3627
    %v3784 = vpack.c.b16 %v3632, %v3628
    %v3785 = vpack.c.b16 %v3637, %v3633
    %v3786 = vpack.c.b16 %v3638, %v3634
    %v3787 = vpack.c.b16 %v3639, %v3635
    %v3788 = vpack.c.b16 %v3640, %v3636
    %v3789 = vpack.c.b16 %v3645, %v3641
    %v3790 = vpack.c.b16 %v3646, %v3642
    %v3791 = vpack.c.b16 %v3647, %v3643
    %v3792 = vpack.c.b16 %v3648, %v3644
    %v3793 = vpack.c.b16 %v3653, %v3649
    %v3794 = vpack.c.b16 %v3654, %v3650
    %v3795 = vpack.c.b16 %v3655, %v3651
    %v3796 = vpack.c.b16 %v3656, %v3652
    %v3797 = vpack.c.b16 %v3661, %v3657
    %v3798 = vpack.c.b16 %v3662, %v3658
    %v3799 = vpack.c.b16 %v3663, %v3659
    %v3800 = vpack.c.b16 %v3664, %v3660
    %v3801 = vpack.c.b16 %v3669, %v3665
    %v3802 = vpack.c.b16 %v3670, %v3666
    %v3803 = vpack.c.b16 %v3671, %v3667
    %v3804 = vpack.c.b16 %v3672, %v3668
    %v3805 = vpack.c.b16 %v3677, %v3673
    %v3806 = vpack.c.b16 %v3678, %v3674
    %v3807 = vpack.c.b16 %v3679, %v3675
    %v3808 = vpack.c.b16 %v3680, %v3676
    %v3809 = vpack.c.b16 %v3685, %v3681
    %v3810 = vpack.c.b16 %v3686, %v3682
    %v3811 = vpack.c.b16 %v3687, %v3683
    %v3812 = vpack.c.b16 %v3688, %v3684
    %v3813 = vpack.c.b16 %v3693, %v3689
    %v3814 = vpack.c.b16 %v3694, %v3690
    %v3815 = vpack.c.b16 %v3695, %v3691
    %v3816 = vpack.c.b16 %v3696, %v3692
    %v3817 = vpack.c.b16 %v3701, %v3697
    %v3818 = vpack.c.b16 %v3702, %v3698
    %v3819 = vpack.c.b16 %v3703, %v3699
    %v3820 = vpack.c.b16 %v3704, %v3700
    %v3821 = vpack.c.b16 %v3709, %v3705
    %v3822 = vpack.c.b16 %v3710, %v3706
    %v3823 = vpack.c.b16 %v3711, %v3707
    %v3824 = vpack.c.b16 %v3712, %v3708
    %v3825 = vpack.c.b16 %v3717, %v3713
    %v3826 = vpack.c.b16 %v3718, %v3714
    %v3827 = vpack.c.b16 %v3719, %v3715
    %v3828 = vpack.c.b16 %v3720, %v3716
    %v3829 = vpack.c.b16 %v3725, %v3721
    %v3830 = vpack.c.b16 %v3726, %v3722
    %v3831 = vpack.c.b16 %v3727, %v3723
    %v3832 = vpack.c.b16 %v3728, %v3724
    %v3833 = vpack.c.b16 %v3733, %v3729
    %v3834 = vpack.c.b16 %v3734, %v3730
    %v3835 = vpack.c.b16 %v3735, %v3731
    %v3836 = vpack.c.b16 %v3736, %v3732
    %v3938 = vsel %vm935, %v3413, 0
    %3940 = vmatprep.subr.bf16.mxu0 %v3738
    %3941 = vmatpush1.bf16.msra.mxu0 %v3737
    %3942 = vmatprep.subr.bf16.mxu0 %v3742
    %3943 = vmatpush1.bf16.msra.mxu0 %v3741
    %3944 = vmatprep.subr.bf16.mxu0 %v3746
    %3945 = vmatpush1.bf16.msra.mxu0 %v3745
    %3946 = vmatprep.subr.bf16.mxu0 %v3750
    %3947 = vmatpush1.bf16.msra.mxu0 %v3749
    %3948 = vmatprep.subr.bf16.mxu0 %v3754
    %3949 = vmatpush1.bf16.msra.mxu0 %v3753
    %3950 = vmatprep.subr.bf16.mxu0 %v3758
    %3951 = vmatpush1.bf16.msra.mxu0 %v3757
    %3952 = vmatprep.subr.bf16.mxu0 %v3762
    %3953 = vmatpush1.bf16.msra.mxu0 %v3761
    %3954 = vmatprep.subr.bf16.mxu0 %v3766
    %3955 = vmatpush1.bf16.msra.mxu0 %v3765
    %3956 = vmatprep.subr.bf16.mxu0 %v3770
    %3957 = vmatpush1.bf16.msra.mxu0 %v3769
    %3958 = vmatprep.subr.bf16.mxu0 %v3774
    %3959 = vmatpush1.bf16.msra.mxu0 %v3773
    %3960 = vmatprep.subr.bf16.mxu0 %v3778
    %3961 = vmatpush1.bf16.msra.mxu0 %v3777
    %3962 = vmatprep.subr.bf16.mxu0 %v3782
    %3963 = vmatpush1.bf16.msra.mxu0 %v3781
    %3964 = vmatprep.subr.bf16.mxu0 %v3786
    %3965 = vmatpush1.bf16.msra.mxu0 %v3785
    %3966 = vmatprep.subr.bf16.mxu0 %v3790
    %3967 = vmatpush1.bf16.msra.mxu0 %v3789
    %3968 = vmatprep.subr.bf16.mxu0 %v3794
    %3969 = vmatpush1.bf16.msra.mxu0 %v3793
    %3970 = vmatprep.subr.bf16.mxu0 %v3798
    %3971 = vmatpush1.bf16.msra.mxu0 %v3797
    %3972 = vmatprep.mubr.bf16.mxu0 %v3411
    %3973 = vmatmul.mubr.bf16.gmra.mrb[0].mxu0 %v3410
    %v3974 = vpop.f32.mrb[0].mxu0
    %v3975 = vadd.f32 %v3420, %v3974
    %v3976 = vpop.f32.mrb[0].mxu0
    %v3977 = vadd.f32 %v3424, %v3976
    %v3978 = vpop.f32.mrb[0].mxu0
    %v3979 = vadd.f32 %v3420, %v3978
    %v3980 = vpop.f32.mrb[0].mxu0
    %v3981 = vadd.f32 %v3424, %v3980
    %3982 = vdwg.mxu0
    %3983 = vmatprep.subr.bf16.mxu0 %v3802
    %3984 = vmatpush1.bf16.msra.mxu0 %v3801
    %3985 = vmatprep.subr.bf16.mxu0 %v3806
    %3986 = vmatpush1.bf16.msra.mxu0 %v3805
    %3987 = vmatprep.subr.bf16.mxu0 %v3810
    %3988 = vmatpush1.bf16.msra.mxu0 %v3809
    %3989 = vmatprep.subr.bf16.mxu0 %v3814
    %3990 = vmatpush1.bf16.msra.mxu0 %v3813
    %3991 = vmatprep.subr.bf16.mxu0 %v3818
    %3992 = vmatpush1.bf16.msra.mxu0 %v3817
    %3993 = vmatprep.subr.bf16.mxu0 %v3822
    %3994 = vmatpush1.bf16.msra.mxu0 %v3821
    %3995 = vmatprep.subr.bf16.mxu0 %v3826
    %3996 = vmatpush1.bf16.msra.mxu0 %v3825
    %3997 = vmatprep.subr.bf16.mxu0 %v3830
    %3998 = vmatpush1.bf16.msra.mxu0 %v3829
    %3999 = vmatprep.subr.bf16.mxu0 %v3834
    %4000 = vmatpush1.bf16.msra.mxu0 %v3833
    %4001 = vmatprep.subr.bf16.mxu0 0
    %4002 = vmatpush1.bf16.msra.mxu0 0
    %4003 = vmatprep.subr.bf16.mxu0 0
    %4004 = vmatpush1.bf16.msra.mxu0 0
    %4005 = vmatprep.subr.bf16.mxu0 0
    %4006 = vmatpush1.bf16.msra.mxu0 0
    %4007 = vmatprep.subr.bf16.mxu0 0
    %4008 = vmatpush1.bf16.msra.mxu0 0
    %4009 = vmatprep.subr.bf16.mxu0 0
    %4010 = vmatpush1.bf16.msra.mxu0 0
    %4011 = vmatprep.subr.bf16.mxu0 0
    %4012 = vmatpush1.bf16.msra.mxu0 0
    %4013 = vmatprep.subr.bf16.mxu0 0
    %4014 = vmatpush1.bf16.msra.mxu0 0
    %4015 = vmatprep.mubr.bf16.mxu0 %v3938
    %4016 = vmatmul.mubr.bf16.gmra.mrb[0].mxu0 %v3412
    %v4017 = vpop.f32.mrb[0].mxu0
    %v4018 = vadd.f32 %v3975, %v4017
    %v4019 = vpop.f32.mrb[0].mxu0
    %v4020 = vadd.f32 %v3977, %v4019
    %v4021 = vpop.f32.mrb[0].mxu0
    %v4022 = vadd.f32 %v3979, %v4021
    %v4023 = vpop.f32.mrb[0].mxu0
    %v4024 = vadd.f32 %v3981, %v4023
    %4025 = vdwg.mxu0
    %4026 = vmatprep.subr.bf16.mxu0 %v3740
    %4027 = vmatpush1.bf16.msra.mxu0 %v3739
    %4028 = vmatprep.subr.bf16.mxu0 %v3744
    %4029 = vmatpush1.bf16.msra.mxu0 %v3743
    %4030 = vmatprep.subr.bf16.mxu0 %v3748
    %4031 = vmatpush1.bf16.msra.mxu0 %v3747
    %4032 = vmatprep.subr.bf16.mxu0 %v3752
    %4033 = vmatpush1.bf16.msra.mxu0 %v3751
    %4034 = vmatprep.subr.bf16.mxu0 %v3756
    %4035 = vmatpush1.bf16.msra.mxu0 %v3755
    %4036 = vmatprep.subr.bf16.mxu0 %v3760
    %4037 = vmatpush1.bf16.msra.mxu0 %v3759
    %4038 = vmatprep.subr.bf16.mxu0 %v3764
    %4039 = vmatpush1.bf16.msra.mxu0 %v3763
    %4040 = vmatprep.subr.bf16.mxu0 %v3768
    %4041 = vmatpush1.bf16.msra.mxu0 %v3767
    %4042 = vmatprep.subr.bf16.mxu0 %v3772
    %4043 = vmatpush1.bf16.msra.mxu0 %v3771
    %4044 = vmatprep.subr.bf16.mxu0 %v3776
    %4045 = vmatpush1.bf16.msra.mxu0 %v3775
    %4046 = vmatprep.subr.bf16.mxu0 %v3780
    %4047 = vmatpush1.bf16.msra.mxu0 %v3779
    %4048 = vmatprep.subr.bf16.mxu0 %v3784
    %4049 = vmatpush1.bf16.msra.mxu0 %v3783
    %4050 = vmatprep.subr.bf16.mxu0 %v3788
    %4051 = vmatpush1.bf16.msra.mxu0 %v3787
    %4052 = vmatprep.subr.bf16.mxu0 %v3792
    %4053 = vmatpush1.bf16.msra.mxu0 %v3791
    %4054 = vmatprep.subr.bf16.mxu0 %v3796
    %4055 = vmatpush1.bf16.msra.mxu0 %v3795
    %4056 = vmatprep.subr.bf16.mxu0 %v3800
    %4057 = vmatpush1.bf16.msra.mxu0 %v3799
    %4058 = vmatprep.mubr.bf16.mxu0 %v3411
    %4059 = vmatmul.mubr.bf16.gmra.mrb[0].mxu0 %v3410
    %v4060 = vpop.f32.mrb[0].mxu0
    %v4061 = vadd.f32 %v3428, %v4060
    %v4062 = vpop.f32.mrb[0].mxu0
    %v4063 = vadd.f32 %v3432, %v4062
    %v4064 = vpop.f32.mrb[0].mxu0
    %v4065 = vadd.f32 %v3428, %v4064
    %v4066 = vpop.f32.mrb[0].mxu0
    %v4067 = vadd.f32 %v3432, %v4066
    %4068 = vdwg.mxu0
    %4069 = vmatprep.subr.bf16.mxu0 %v3804
    %4070 = vmatpush1.bf16.msra.mxu0 %v3803
    %4071 = vmatprep.subr.bf16.mxu0 %v3808
    %4072 = vmatpush1.bf16.msra.mxu0 %v3807
    %4073 = vmatprep.subr.bf16.mxu0 %v3812
    %4074 = vmatpush1.bf16.msra.mxu0 %v3811
    %4075 = vmatprep.subr.bf16.mxu0 %v3816
    %4076 = vmatpush1.bf16.msra.mxu0 %v3815
    %4077 = vmatprep.subr.bf16.mxu0 %v3820
    %4078 = vmatpush1.bf16.msra.mxu0 %v3819
    %4079 = vmatprep.subr.bf16.mxu0 %v3824
    %4080 = vmatpush1.bf16.msra.mxu0 %v3823
    %4081 = vmatprep.subr.bf16.mxu0 %v3828
    %4082 = vmatpush1.bf16.msra.mxu0 %v3827
    %4083 = vmatprep.subr.bf16.mxu0 %v3832
    %4084 = vmatpush1.bf16.msra.mxu0 %v3831
    %4085 = vmatprep.subr.bf16.mxu0 %v3836
    %4086 = vmatpush1.bf16.msra.mxu0 %v3835
    %4087 = vmatprep.subr.bf16.mxu0 0
    %4088 = vmatpush1.bf16.msra.mxu0 0
    %4089 = vmatprep.subr.bf16.mxu0 0
    %4090 = vmatpush1.bf16.msra.mxu0 0
    %4091 = vmatprep.subr.bf16.mxu0 0
    %4092 = vmatpush1.bf16.msra.mxu0 0
    %4093 = vmatprep.subr.bf16.mxu0 0
    %4094 = vmatpush1.bf16.msra.mxu0 0
    %4095 = vmatprep.subr.bf16.mxu0 0
    %4096 = vmatpush1.bf16.msra.mxu0 0
    %4097 = vmatprep.subr.bf16.mxu0 0
    %4098 = vmatpush1.bf16.msra.mxu0 0
    %4099 = vmatprep.subr.bf16.mxu0 0
    %4100 = vmatpush1.bf16.msra.mxu0 0
    %4101 = vmatprep.mubr.bf16.mxu0 %v3938
    %4102 = vmatmul.mubr.bf16.gmra.mrb[0].mxu0 %v3412
    %v4103 = vpop.f32.mrb[0].mxu0
    %v4104 = vadd.f32 %v4061, %v4103
    %v4105 = vpop.f32.mrb[0].mxu0
    %v4106 = vadd.f32 %v4063, %v4105
    %v4107 = vpop.f32.mrb[0].mxu0
    %v4108 = vadd.f32 %v4065, %v4107
    %v4109 = vpop.f32.mrb[0].mxu0
    %v4110 = vadd.f32 %v4067, %v4109
    %4111 = vdwg.mxu0
    %v4112 = vmax.f32 %v4018, 0.0
    %v4113 = vmax.f32 %v4020, 0.0
    %v4114 = vmax.f32 %v4104, 0.0
    %v4115 = vmax.f32 %v4106, 0.0
    %v4116 = vmax.f32 %v4022, 0.0
    %v4117 = vmax.f32 %v4024, 0.0
    %v4118 = vmax.f32 %v4108, 0.0
    %v4119 = vmax.f32 %v4110, 0.0
    %s4120 = scalar_lea.vmem [#allocation11], 800
    %v4121 = vld [vmem:[%s4120] sm:$0xff]
    %v4122 = vld [vmem:[%s4120 + $0x8] sm:$0xff]
    %v4123 = vld [vmem:[%s4120 + $0x10] sm:$0xff]
    %v4124 = vld [vmem:[%s4120 + $0x18] sm:$0xff]
    %v4125 = vld [vmem:[%s4120 + $0x20] sm:$0xff]
    %v4126 = vld [vmem:[%s4120 + $0x28] sm:$0xff]
    %v4127 = vld [vmem:[%s4120 + $0x30] sm:$0xff]
    %v4128 = vld [vmem:[%s4120 + $0x38] sm:$0xff]
    %v4129 = vld [vmem:[%s4120 + $0x40] sm:$0xff]
    %v4130 = vld [vmem:[%s4120 + $0x48] sm:$0xff]
    %v4131 = vld [vmem:[%s4120 + $0x50] sm:$0xff]
    %v4132 = vld [vmem:[%s4120 + $0x58] sm:$0xff]
    %v4133 = vld [vmem:[%s4120 + $0x60] sm:$0xff]
    %v4134 = vld [vmem:[%s4120 + $0x68] sm:$0xff]
    %v4135 = vld [vmem:[%s4120 + $0x70] sm:$0xff]
    %v4136 = vld [vmem:[%s4120 + $0x78] sm:$0xff]
    %v4137 = vld [vmem:[%s4120 + $0x80] sm:$0xff]
    %v4138 = vld [vmem:[%s4120 + $0x88] sm:$0xff]
    %v4139 = vld [vmem:[%s4120 + $0x90] sm:$0xff]
    %v4140 = vld [vmem:[%s4120 + $0x98] sm:$0xff]
    %v4141 = vld [vmem:[%s4120 + $0xa0] sm:$0xff]
    %v4142 = vld [vmem:[%s4120 + $0xa8] sm:$0xff]
    %v4143 = vld [vmem:[%s4120 + $0xb0] sm:$0xff]
    %v4144 = vld [vmem:[%s4120 + $0xb8] sm:$0xff]
    %v4145 = vld [vmem:[%s4120 + $0xc0] sm:$0xff]
    %v4146 = vld [vmem:[%s4120 + $0xc8] sm:$0xff]
    %v4147 = vld [vmem:[%s4120 + $0xd0] sm:$0xff]
    %v4148 = vld [vmem:[%s4120 + $0xd8] sm:$0xff]
    %v4149 = vld [vmem:[%s4120 + $0xe0] sm:$0xff]
    %v4150 = vld [vmem:[%s4120 + $0xe8] sm:$0xff]
    %v4151 = vld [vmem:[%s4120 + $0xf0] sm:$0xff]
    %v4152 = vld [vmem:[%s4120 + $0xf8] sm:$0xff]
    %v4153 = vld [vmem:[%s4120 + $0x100] sm:$0xff]
    %v4154 = vld [vmem:[%s4120 + $0x108] sm:$0xff]
    %v4155 = vld [vmem:[%s4120 + $0x110] sm:$0xff]
    %v4156 = vld [vmem:[%s4120 + $0x118] sm:$0xff]
    %v4157 = vld [vmem:[%s4120 + $0x120] sm:$0xff]
    %v4158 = vld [vmem:[%s4120 + $0x128] sm:$0xff]
    %v4159 = vld [vmem:[%s4120 + $0x130] sm:$0xff]
    %v4160 = vld [vmem:[%s4120 + $0x138] sm:$0xff]
    %v4161 = vld [vmem:[%s4120 + $0x140] sm:$0xff]
    %v4162 = vld [vmem:[%s4120 + $0x148] sm:$0xff]
    %v4163 = vld [vmem:[%s4120 + $0x150] sm:$0xff]
    %v4164 = vld [vmem:[%s4120 + $0x158] sm:$0xff]
    %v4165 = vld [vmem:[%s4120 + $0x160] sm:$0xff]
    %v4166 = vld [vmem:[%s4120 + $0x168] sm:$0xff]
    %v4167 = vld [vmem:[%s4120 + $0x170] sm:$0xff]
    %v4168 = vld [vmem:[%s4120 + $0x178] sm:$0xff]
    %v4169 = vld [vmem:[%s4120 + $0x180] sm:$0xff]
    %v4170 = vld [vmem:[%s4120 + $0x188] sm:$0xff]
    %v4171 = vld [vmem:[%s4120 + $0x190] sm:$0xff]
    %v4172 = vld [vmem:[%s4120 + $0x198] sm:$0xff]
    %v4173 = vld [vmem:[%s4120 + $0x1a0] sm:$0xff]
    %v4174 = vld [vmem:[%s4120 + $0x1a8] sm:$0xff]
    %v4175 = vld [vmem:[%s4120 + $0x1b0] sm:$0xff]
    %v4176 = vld [vmem:[%s4120 + $0x1b8] sm:$0xff]
    %v4177 = vld [vmem:[%s4120 + $0x1c0] sm:$0xff]
    %v4178 = vld [vmem:[%s4120 + $0x1c8] sm:$0xff]
    %v4179 = vld [vmem:[%s4120 + $0x1d0] sm:$0xff]
    %v4180 = vld [vmem:[%s4120 + $0x1d8] sm:$0xff]
    %v4181 = vld [vmem:[%s4120 + $0x1e0] sm:$0xff]
    %v4182 = vld [vmem:[%s4120 + $0x1e8] sm:$0xff]
    %v4183 = vld [vmem:[%s4120 + $0x1f0] sm:$0xff]
    %v4184 = vld [vmem:[%s4120 + $0x1f8] sm:$0xff]
    %v4185 = vld [vmem:[%s4120 + $0x200] sm:$0xff]
    %v4186 = vld [vmem:[%s4120 + $0x208] sm:$0xff]
    %v4187 = vld [vmem:[%s4120 + $0x210] sm:$0xff]
    %v4188 = vld [vmem:[%s4120 + $0x218] sm:$0xff]
    %v4189 = vld [vmem:[%s4120 + $0x220] sm:$0xff]
    %v4190 = vld [vmem:[%s4120 + $0x228] sm:$0xff]
    %v4191 = vld [vmem:[%s4120 + $0x230] sm:$0xff]
    %v4192 = vld [vmem:[%s4120 + $0x238] sm:$0xff]
    %v4193 = vld [vmem:[%s4120 + $0x240] sm:$0xff]
    %v4194 = vld [vmem:[%s4120 + $0x248] sm:$0xff]
    %v4195 = vld [vmem:[%s4120 + $0x250] sm:$0xff]
    %v4196 = vld [vmem:[%s4120 + $0x258] sm:$0xff]
    %v4197 = vld [vmem:[%s4120 + $0x260] sm:$0xff]
    %v4198 = vld [vmem:[%s4120 + $0x268] sm:$0xff]
    %v4199 = vld [vmem:[%s4120 + $0x270] sm:$0xff]
    %v4200 = vld [vmem:[%s4120 + $0x278] sm:$0xff]
    %v4201 = vld [vmem:[%s4120 + $0x280] sm:$0xff]
    %v4202 = vld [vmem:[%s4120 + $0x288] sm:$0xff]
    %v4203 = vld [vmem:[%s4120 + $0x290] sm:$0xff]
    %v4204 = vld [vmem:[%s4120 + $0x298] sm:$0xff]
    %v4205 = vld [vmem:[%s4120 + $0x2a0] sm:$0xff]
    %v4206 = vld [vmem:[%s4120 + $0x2a8] sm:$0xff]
    %v4207 = vld [vmem:[%s4120 + $0x2b0] sm:$0xff]
    %v4208 = vld [vmem:[%s4120 + $0x2b8] sm:$0xff]
    %v4209 = vld [vmem:[%s4120 + $0x2c0] sm:$0xff]
    %v4210 = vld [vmem:[%s4120 + $0x2c8] sm:$0xff]
    %v4211 = vld [vmem:[%s4120 + $0x2d0] sm:$0xff]
    %v4212 = vld [vmem:[%s4120 + $0x2d8] sm:$0xff]
    %v4213 = vld [vmem:[%s4120 + $0x2e0] sm:$0xff]
    %v4214 = vld [vmem:[%s4120 + $0x2e8] sm:$0xff]
    %v4215 = vld [vmem:[%s4120 + $0x2f0] sm:$0xff]
    %v4216 = vld [vmem:[%s4120 + $0x2f8] sm:$0xff]
    %v4217 = vld [vmem:[%s4120 + $0x300] sm:$0xff]
    %v4218 = vld [vmem:[%s4120 + $0x308] sm:$0xff]
    %v4219 = vld [vmem:[%s4120 + $0x310] sm:$0xff]
    %v4220 = vld [vmem:[%s4120 + $0x318] sm:$0xff]
    %v4221 = vpack.c.bf16 %v4116, %v4112
    %v4222 = vpack.c.bf16 %v4117, %v4113
    %v4223 = vpack.c.bf16 %v4118, %v4114
    %v4224 = vpack.c.bf16 %v4119, %v4115
    %s4225 = scalar_lea.vmem [#allocation13], 7
    %v4226 = vld [vmem:[%s4225] ss:$8 sm:$0xf]
    %v4228 = vlaneseq
    %v4229 = vshrl.u32 %v4228, 7
    %v4230 = vsub.s32 0, %v4229
    %v4231 = vrot.slane %v4226, %v4230
    %v4232 = vlaneseq
    %v4233 = vshrl.u32 %v4232, 7
    %v4234 = vsub.s32 1, %v4233
    %v4235 = vrot.slane %v4226, %v4234
    %v4236 = vlaneseq
    %v4237 = vshrl.u32 %v4236, 7
    %v4238 = vsub.s32 2, %v4237
    %v4239 = vrot.slane %v4226, %v4238
    %v4240 = vlaneseq
    %v4241 = vshrl.u32 %v4240, 7
    %v4242 = vsub.s32 3, %v4241
    %v4243 = vrot.slane %v4226, %v4242
    %v4348 = vunpack.c.l.b16 %v4121
    %v4349 = vunpack.c.h.b16 %v4121
    %v4350 = vunpack.c.l.b16 %v4122
    %v4351 = vunpack.c.h.b16 %v4122
    %v4352 = vunpack.c.l.b16 %v4123
    %v4353 = vunpack.c.h.b16 %v4123
    %v4354 = vunpack.c.l.b16 %v4124
    %v4355 = vunpack.c.h.b16 %v4124
    %v4356 = vunpack.c.l.b16 %v4125
    %v4357 = vunpack.c.h.b16 %v4125
    %v4358 = vunpack.c.l.b16 %v4126
    %v4359 = vunpack.c.h.b16 %v4126
    %v4360 = vunpack.c.l.b16 %v4127
    %v4361 = vunpack.c.h.b16 %v4127
    %v4362 = vunpack.c.l.b16 %v4128
    %v4363 = vunpack.c.h.b16 %v4128
    %v4364 = vunpack.c.l.b16 %v4129
    %v4365 = vunpack.c.h.b16 %v4129
    %v4366 = vunpack.c.l.b16 %v4130
    %v4367 = vunpack.c.h.b16 %v4130
    %v4368 = vunpack.c.l.b16 %v4131
    %v4369 = vunpack.c.h.b16 %v4131
    %v4370 = vunpack.c.l.b16 %v4132
    %v4371 = vunpack.c.h.b16 %v4132
    %v4372 = vunpack.c.l.b16 %v4133
    %v4373 = vunpack.c.h.b16 %v4133
    %v4374 = vunpack.c.l.b16 %v4134
    %v4375 = vunpack.c.h.b16 %v4134
    %v4376 = vunpack.c.l.b16 %v4135
    %v4377 = vunpack.c.h.b16 %v4135
    %v4378 = vunpack.c.l.b16 %v4136
    %v4379 = vunpack.c.h.b16 %v4136
    %v4380 = vunpack.c.l.b16 %v4137
    %v4381 = vunpack.c.h.b16 %v4137
    %v4382 = vunpack.c.l.b16 %v4138
    %v4383 = vunpack.c.h.b16 %v4138
    %v4384 = vunpack.c.l.b16 %v4139
    %v4385 = vunpack.c.h.b16 %v4139
    %v4386 = vunpack.c.l.b16 %v4140
    %v4387 = vunpack.c.h.b16 %v4140
    %v4388 = vunpack.c.l.b16 %v4141
    %v4389 = vunpack.c.h.b16 %v4141
    %v4390 = vunpack.c.l.b16 %v4142
    %v4391 = vunpack.c.h.b16 %v4142
    %v4392 = vunpack.c.l.b16 %v4143
    %v4393 = vunpack.c.h.b16 %v4143
    %v4394 = vunpack.c.l.b16 %v4144
    %v4395 = vunpack.c.h.b16 %v4144
    %v4396 = vunpack.c.l.b16 %v4145
    %v4397 = vunpack.c.h.b16 %v4145
    %v4398 = vunpack.c.l.b16 %v4146
    %v4399 = vunpack.c.h.b16 %v4146
    %v4400 = vunpack.c.l.b16 %v4147
    %v4401 = vunpack.c.h.b16 %v4147
    %v4402 = vunpack.c.l.b16 %v4148
    %v4403 = vunpack.c.h.b16 %v4148
    %v4404 = vunpack.c.l.b16 %v4149
    %v4405 = vunpack.c.h.b16 %v4149
    %v4406 = vunpack.c.l.b16 %v4150
    %v4407 = vunpack.c.h.b16 %v4150
    %v4408 = vunpack.c.l.b16 %v4151
    %v4409 = vunpack.c.h.b16 %v4151
    %v4410 = vunpack.c.l.b16 %v4152
    %v4411 = vunpack.c.h.b16 %v4152
    %v4412 = vunpack.c.l.b16 %v4153
    %v4413 = vunpack.c.h.b16 %v4153
    %v4414 = vunpack.c.l.b16 %v4154
    %v4415 = vunpack.c.h.b16 %v4154
    %v4416 = vunpack.c.l.b16 %v4155
    %v4417 = vunpack.c.h.b16 %v4155
    %v4418 = vunpack.c.l.b16 %v4156
    %v4419 = vunpack.c.h.b16 %v4156
    %v4420 = vunpack.c.l.b16 %v4157
    %v4421 = vunpack.c.h.b16 %v4157
    %v4422 = vunpack.c.l.b16 %v4158
    %v4423 = vunpack.c.h.b16 %v4158
    %v4424 = vunpack.c.l.b16 %v4159
    %v4425 = vunpack.c.h.b16 %v4159
    %v4426 = vunpack.c.l.b16 %v4160
    %v4427 = vunpack.c.h.b16 %v4160
    %v4428 = vunpack.c.l.b16 %v4161
    %v4429 = vunpack.c.h.b16 %v4161
    %v4430 = vunpack.c.l.b16 %v4162
    %v4431 = vunpack.c.h.b16 %v4162
    %v4432 = vunpack.c.l.b16 %v4163
    %v4433 = vunpack.c.h.b16 %v4163
    %v4434 = vunpack.c.l.b16 %v4164
    %v4435 = vunpack.c.h.b16 %v4164
    %v4436 = vunpack.c.l.b16 %v4165
    %v4437 = vunpack.c.h.b16 %v4165
    %v4438 = vunpack.c.l.b16 %v4166
    %v4439 = vunpack.c.h.b16 %v4166
    %v4440 = vunpack.c.l.b16 %v4167
    %v4441 = vunpack.c.h.b16 %v4167
    %v4442 = vunpack.c.l.b16 %v4168
    %v4443 = vunpack.c.h.b16 %v4168
    %v4444 = vunpack.c.l.b16 %v4169
    %v4445 = vunpack.c.h.b16 %v4169
    %v4446 = vunpack.c.l.b16 %v4170
    %v4447 = vunpack.c.h.b16 %v4170
    %v4448 = vunpack.c.l.b16 %v4171
    %v4449 = vunpack.c.h.b16 %v4171
    %v4450 = vunpack.c.l.b16 %v4172
    %v4451 = vunpack.c.h.b16 %v4172
    %v4452 = vunpack.c.l.b16 %v4173
    %v4453 = vunpack.c.h.b16 %v4173
    %v4454 = vunpack.c.l.b16 %v4174
    %v4455 = vunpack.c.h.b16 %v4174
    %v4456 = vunpack.c.l.b16 %v4175
    %v4457 = vunpack.c.h.b16 %v4175
    %v4458 = vunpack.c.l.b16 %v4176
    %v4459 = vunpack.c.h.b16 %v4176
    %v4460 = vunpack.c.l.b16 %v4177
    %v4461 = vunpack.c.h.b16 %v4177
    %v4462 = vunpack.c.l.b16 %v4178
    %v4463 = vunpack.c.h.b16 %v4178
    %v4464 = vunpack.c.l.b16 %v4179
    %v4465 = vunpack.c.h.b16 %v4179
    %v4466 = vunpack.c.l.b16 %v4180
    %v4467 = vunpack.c.h.b16 %v4180
    %v4468 = vunpack.c.l.b16 %v4181
    %v4469 = vunpack.c.h.b16 %v4181
    %v4470 = vunpack.c.l.b16 %v4182
    %v4471 = vunpack.c.h.b16 %v4182
    %v4472 = vunpack.c.l.b16 %v4183
    %v4473 = vunpack.c.h.b16 %v4183
    %v4474 = vunpack.c.l.b16 %v4184
    %v4475 = vunpack.c.h.b16 %v4184
    %v4476 = vunpack.c.l.b16 %v4185
    %v4477 = vunpack.c.h.b16 %v4185
    %v4478 = vunpack.c.l.b16 %v4186
    %v4479 = vunpack.c.h.b16 %v4186
    %v4480 = vunpack.c.l.b16 %v4187
    %v4481 = vunpack.c.h.b16 %v4187
    %v4482 = vunpack.c.l.b16 %v4188
    %v4483 = vunpack.c.h.b16 %v4188
    %v4484 = vunpack.c.l.b16 %v4189
    %v4485 = vunpack.c.h.b16 %v4189
    %v4486 = vunpack.c.l.b16 %v4190
    %v4487 = vunpack.c.h.b16 %v4190
    %v4488 = vunpack.c.l.b16 %v4191
    %v4489 = vunpack.c.h.b16 %v4191
    %v4490 = vunpack.c.l.b16 %v4192
    %v4491 = vunpack.c.h.b16 %v4192
    %v4492 = vunpack.c.l.b16 %v4193
    %v4493 = vunpack.c.h.b16 %v4193
    %v4494 = vunpack.c.l.b16 %v4194
    %v4495 = vunpack.c.h.b16 %v4194
    %v4496 = vunpack.c.l.b16 %v4195
    %v4497 = vunpack.c.h.b16 %v4195
    %v4498 = vunpack.c.l.b16 %v4196
    %v4499 = vunpack.c.h.b16 %v4196
    %v4500 = vunpack.c.l.b16 %v4197
    %v4501 = vunpack.c.h.b16 %v4197
    %v4502 = vunpack.c.l.b16 %v4198
    %v4503 = vunpack.c.h.b16 %v4198
    %v4504 = vunpack.c.l.b16 %v4199
    %v4505 = vunpack.c.h.b16 %v4199
    %v4506 = vunpack.c.l.b16 %v4200
    %v4507 = vunpack.c.h.b16 %v4200
    %v4508 = vunpack.c.l.b16 %v4201
    %v4509 = vunpack.c.h.b16 %v4201
    %v4510 = vunpack.c.l.b16 %v4202
    %v4511 = vunpack.c.h.b16 %v4202
    %v4512 = vunpack.c.l.b16 %v4203
    %v4513 = vunpack.c.h.b16 %v4203
    %v4514 = vunpack.c.l.b16 %v4204
    %v4515 = vunpack.c.h.b16 %v4204
    %v4516 = vunpack.c.l.b16 %v4205
    %v4517 = vunpack.c.h.b16 %v4205
    %v4518 = vunpack.c.l.b16 %v4206
    %v4519 = vunpack.c.h.b16 %v4206
    %v4520 = vunpack.c.l.b16 %v4207
    %v4521 = vunpack.c.h.b16 %v4207
    %v4522 = vunpack.c.l.b16 %v4208
    %v4523 = vunpack.c.h.b16 %v4208
    %v4524 = vunpack.c.l.b16 %v4209
    %v4525 = vunpack.c.h.b16 %v4209
    %v4526 = vunpack.c.l.b16 %v4210
    %v4527 = vunpack.c.h.b16 %v4210
    %v4528 = vunpack.c.l.b16 %v4211
    %v4529 = vunpack.c.h.b16 %v4211
    %v4530 = vunpack.c.l.b16 %v4212
    %v4531 = vunpack.c.h.b16 %v4212
    %v4532 = vunpack.c.l.b16 %v4213
    %v4533 = vunpack.c.h.b16 %v4213
    %v4534 = vunpack.c.l.b16 %v4214
    %v4535 = vunpack.c.h.b16 %v4214
    %v4536 = vunpack.c.l.b16 %v4215
    %v4537 = vunpack.c.h.b16 %v4215
    %v4538 = vunpack.c.l.b16 %v4216
    %v4539 = vunpack.c.h.b16 %v4216
    %v4540 = vunpack.c.l.b16 %v4217
    %v4541 = vunpack.c.h.b16 %v4217
    %v4542 = vunpack.c.l.b16 %v4218
    %v4543 = vunpack.c.h.b16 %v4218
    %v4544 = vunpack.c.l.b16 %v4219
    %v4545 = vunpack.c.h.b16 %v4219
    %v4546 = vunpack.c.l.b16 %v4220
    %v4547 = vunpack.c.h.b16 %v4220
    %v4548 = vpack.c.b16 %v4352, %v4348
    %v4549 = vpack.c.b16 %v4353, %v4349
    %v4550 = vpack.c.b16 %v4354, %v4350
    %v4551 = vpack.c.b16 %v4355, %v4351
    %v4552 = vpack.c.b16 %v4360, %v4356
    %v4553 = vpack.c.b16 %v4361, %v4357
    %v4554 = vpack.c.b16 %v4362, %v4358
    %v4555 = vpack.c.b16 %v4363, %v4359
    %v4556 = vpack.c.b16 %v4368, %v4364
    %v4557 = vpack.c.b16 %v4369, %v4365
    %v4558 = vpack.c.b16 %v4370, %v4366
    %v4559 = vpack.c.b16 %v4371, %v4367
    %v4560 = vpack.c.b16 %v4376, %v4372
    %v4561 = vpack.c.b16 %v4377, %v4373
    %v4562 = vpack.c.b16 %v4378, %v4374
    %v4563 = vpack.c.b16 %v4379, %v4375
    %v4564 = vpack.c.b16 %v4384, %v4380
    %v4565 = vpack.c.b16 %v4385, %v4381
    %v4566 = vpack.c.b16 %v4386, %v4382
    %v4567 = vpack.c.b16 %v4387, %v4383
    %v4568 = vpack.c.b16 %v4392, %v4388
    %v4569 = vpack.c.b16 %v4393, %v4389
    %v4570 = vpack.c.b16 %v4394, %v4390
    %v4571 = vpack.c.b16 %v4395, %v4391
    %v4572 = vpack.c.b16 %v4400, %v4396
    %v4573 = vpack.c.b16 %v4401, %v4397
    %v4574 = vpack.c.b16 %v4402, %v4398
    %v4575 = vpack.c.b16 %v4403, %v4399
    %v4576 = vpack.c.b16 %v4408, %v4404
    %v4577 = vpack.c.b16 %v4409, %v4405
    %v4578 = vpack.c.b16 %v4410, %v4406
    %v4579 = vpack.c.b16 %v4411, %v4407
    %v4580 = vpack.c.b16 %v4416, %v4412
    %v4581 = vpack.c.b16 %v4417, %v4413
    %v4582 = vpack.c.b16 %v4418, %v4414
    %v4583 = vpack.c.b16 %v4419, %v4415
    %v4584 = vpack.c.b16 %v4424, %v4420
    %v4585 = vpack.c.b16 %v4425, %v4421
    %v4586 = vpack.c.b16 %v4426, %v4422
    %v4587 = vpack.c.b16 %v4427, %v4423
    %v4588 = vpack.c.b16 %v4432, %v4428
    %v4589 = vpack.c.b16 %v4433, %v4429
    %v4590 = vpack.c.b16 %v4434, %v4430
    %v4591 = vpack.c.b16 %v4435, %v4431
    %v4592 = vpack.c.b16 %v4440, %v4436
    %v4593 = vpack.c.b16 %v4441, %v4437
    %v4594 = vpack.c.b16 %v4442, %v4438
    %v4595 = vpack.c.b16 %v4443, %v4439
    %v4596 = vpack.c.b16 %v4448, %v4444
    %v4597 = vpack.c.b16 %v4449, %v4445
    %v4598 = vpack.c.b16 %v4450, %v4446
    %v4599 = vpack.c.b16 %v4451, %v4447
    %v4600 = vpack.c.b16 %v4456, %v4452
    %v4601 = vpack.c.b16 %v4457, %v4453
    %v4602 = vpack.c.b16 %v4458, %v4454
    %v4603 = vpack.c.b16 %v4459, %v4455
    %v4604 = vpack.c.b16 %v4464, %v4460
    %v4605 = vpack.c.b16 %v4465, %v4461
    %v4606 = vpack.c.b16 %v4466, %v4462
    %v4607 = vpack.c.b16 %v4467, %v4463
    %v4608 = vpack.c.b16 %v4472, %v4468
    %v4609 = vpack.c.b16 %v4473, %v4469
    %v4610 = vpack.c.b16 %v4474, %v4470
    %v4611 = vpack.c.b16 %v4475, %v4471
    %v4612 = vpack.c.b16 %v4480, %v4476
    %v4613 = vpack.c.b16 %v4481, %v4477
    %v4614 = vpack.c.b16 %v4482, %v4478
    %v4615 = vpack.c.b16 %v4483, %v4479
    %v4616 = vpack.c.b16 %v4488, %v4484
    %v4617 = vpack.c.b16 %v4489, %v4485
    %v4618 = vpack.c.b16 %v4490, %v4486
    %v4619 = vpack.c.b16 %v4491, %v4487
    %v4620 = vpack.c.b16 %v4496, %v4492
    %v4621 = vpack.c.b16 %v4497, %v4493
    %v4622 = vpack.c.b16 %v4498, %v4494
    %v4623 = vpack.c.b16 %v4499, %v4495
    %v4624 = vpack.c.b16 %v4504, %v4500
    %v4625 = vpack.c.b16 %v4505, %v4501
    %v4626 = vpack.c.b16 %v4506, %v4502
    %v4627 = vpack.c.b16 %v4507, %v4503
    %v4628 = vpack.c.b16 %v4512, %v4508
    %v4629 = vpack.c.b16 %v4513, %v4509
    %v4630 = vpack.c.b16 %v4514, %v4510
    %v4631 = vpack.c.b16 %v4515, %v4511
    %v4632 = vpack.c.b16 %v4520, %v4516
    %v4633 = vpack.c.b16 %v4521, %v4517
    %v4634 = vpack.c.b16 %v4522, %v4518
    %v4635 = vpack.c.b16 %v4523, %v4519
    %v4636 = vpack.c.b16 %v4528, %v4524
    %v4637 = vpack.c.b16 %v4529, %v4525
    %v4638 = vpack.c.b16 %v4530, %v4526
    %v4639 = vpack.c.b16 %v4531, %v4527
    %v4640 = vpack.c.b16 %v4536, %v4532
    %v4641 = vpack.c.b16 %v4537, %v4533
    %v4642 = vpack.c.b16 %v4538, %v4534
    %v4643 = vpack.c.b16 %v4539, %v4535
    %v4644 = vpack.c.b16 %v4544, %v4540
    %v4645 = vpack.c.b16 %v4545, %v4541
    %v4646 = vpack.c.b16 %v4546, %v4542
    %v4647 = vpack.c.b16 %v4547, %v4543
    %v4749 = vsel %vm935, %v4224, 0
    %4751 = vmatprep.subr.bf16.mxu0 %v4549
    %4752 = vmatpush1.bf16.msra.mxu0 %v4548
    %4753 = vmatprep.subr.bf16.mxu0 %v4553
    %4754 = vmatpush1.bf16.msra.mxu0 %v4552
    %4755 = vmatprep.subr.bf16.mxu0 %v4557
    %4756 = vmatpush1.bf16.msra.mxu0 %v4556
    %4757 = vmatprep.subr.bf16.mxu0 %v4561
    %4758 = vmatpush1.bf16.msra.mxu0 %v4560
    %4759 = vmatprep.subr.bf16.mxu0 %v4565
    %4760 = vmatpush1.bf16.msra.mxu0 %v4564
    %4761 = vmatprep.subr.bf16.mxu0 %v4569
    %4762 = vmatpush1.bf16.msra.mxu0 %v4568
    %4763 = vmatprep.subr.bf16.mxu0 %v4573
    %4764 = vmatpush1.bf16.msra.mxu0 %v4572
    %4765 = vmatprep.subr.bf16.mxu0 %v4577
    %4766 = vmatpush1.bf16.msra.mxu0 %v4576
    %4767 = vmatprep.subr.bf16.mxu0 %v4581
    %4768 = vmatpush1.bf16.msra.mxu0 %v4580
    %4769 = vmatprep.subr.bf16.mxu0 %v4585
    %4770 = vmatpush1.bf16.msra.mxu0 %v4584
    %4771 = vmatprep.subr.bf16.mxu0 %v4589
    %4772 = vmatpush1.bf16.msra.mxu0 %v4588
    %4773 = vmatprep.subr.bf16.mxu0 %v4593
    %4774 = vmatpush1.bf16.msra.mxu0 %v4592
    %4775 = vmatprep.subr.bf16.mxu0 %v4597
    %4776 = vmatpush1.bf16.msra.mxu0 %v4596
    %4777 = vmatprep.subr.bf16.mxu0 %v4601
    %4778 = vmatpush1.bf16.msra.mxu0 %v4600
    %4779 = vmatprep.subr.bf16.mxu0 %v4605
    %4780 = vmatpush1.bf16.msra.mxu0 %v4604
    %4781 = vmatprep.subr.bf16.mxu0 %v4609
    %4782 = vmatpush1.bf16.msra.mxu0 %v4608
    %4783 = vmatprep.mubr.bf16.mxu0 %v4222
    %4784 = vmatmul.mubr.bf16.gmra.mrb[0].mxu0 %v4221
    %v4785 = vpop.f32.mrb[0].mxu0
    %v4786 = vadd.f32 %v4231, %v4785
    %v4787 = vpop.f32.mrb[0].mxu0
    %v4788 = vadd.f32 %v4235, %v4787
    %v4789 = vpop.f32.mrb[0].mxu0
    %v4790 = vadd.f32 %v4231, %v4789
    %v4791 = vpop.f32.mrb[0].mxu0
    %v4792 = vadd.f32 %v4235, %v4791
    %4793 = vdwg.mxu0
    %4794 = vmatprep.subr.bf16.mxu0 %v4613
    %4795 = vmatpush1.bf16.msra.mxu0 %v4612
    %4796 = vmatprep.subr.bf16.mxu0 %v4617
    %4797 = vmatpush1.bf16.msra.mxu0 %v4616
    %4798 = vmatprep.subr.bf16.mxu0 %v4621
    %4799 = vmatpush1.bf16.msra.mxu0 %v4620
    %4800 = vmatprep.subr.bf16.mxu0 %v4625
    %4801 = vmatpush1.bf16.msra.mxu0 %v4624
    %4802 = vmatprep.subr.bf16.mxu0 %v4629
    %4803 = vmatpush1.bf16.msra.mxu0 %v4628
    %4804 = vmatprep.subr.bf16.mxu0 %v4633
    %4805 = vmatpush1.bf16.msra.mxu0 %v4632
    %4806 = vmatprep.subr.bf16.mxu0 %v4637
    %4807 = vmatpush1.bf16.msra.mxu0 %v4636
    %4808 = vmatprep.subr.bf16.mxu0 %v4641
    %4809 = vmatpush1.bf16.msra.mxu0 %v4640
    %4810 = vmatprep.subr.bf16.mxu0 %v4645
    %4811 = vmatpush1.bf16.msra.mxu0 %v4644
    %4812 = vmatprep.subr.bf16.mxu0 0
    %4813 = vmatpush1.bf16.msra.mxu0 0
    %4814 = vmatprep.subr.bf16.mxu0 0
    %4815 = vmatpush1.bf16.msra.mxu0 0
    %4816 = vmatprep.subr.bf16.mxu0 0
    %4817 = vmatpush1.bf16.msra.mxu0 0
    %4818 = vmatprep.subr.bf16.mxu0 0
    %4819 = vmatpush1.bf16.msra.mxu0 0
    %4820 = vmatprep.subr.bf16.mxu0 0
    %4821 = vmatpush1.bf16.msra.mxu0 0
    %4822 = vmatprep.subr.bf16.mxu0 0
    %4823 = vmatpush1.bf16.msra.mxu0 0
    %4824 = vmatprep.subr.bf16.mxu0 0
    %4825 = vmatpush1.bf16.msra.mxu0 0
    %4826 = vmatprep.mubr.bf16.mxu0 %v4749
    %4827 = vmatmul.mubr.bf16.gmra.mrb[0].mxu0 %v4223
    %v4828 = vpop.f32.mrb[0].mxu0
    %v4829 = vadd.f32 %v4786, %v4828
    %v4830 = vpop.f32.mrb[0].mxu0
    %v4831 = vadd.f32 %v4788, %v4830
    %v4832 = vpop.f32.mrb[0].mxu0
    %v4833 = vadd.f32 %v4790, %v4832
    %v4834 = vpop.f32.mrb[0].mxu0
    %v4835 = vadd.f32 %v4792, %v4834
    %4836 = vdwg.mxu0
    %4837 = vmatprep.subr.bf16.mxu0 %v4551
    %4838 = vmatpush1.bf16.msra.mxu0 %v4550
    %4839 = vmatprep.subr.bf16.mxu0 %v4555
    %4840 = vmatpush1.bf16.msra.mxu0 %v4554
    %4841 = vmatprep.subr.bf16.mxu0 %v4559
    %4842 = vmatpush1.bf16.msra.mxu0 %v4558
    %4843 = vmatprep.subr.bf16.mxu0 %v4563
    %4844 = vmatpush1.bf16.msra.mxu0 %v4562
    %4845 = vmatprep.subr.bf16.mxu0 %v4567
    %4846 = vmatpush1.bf16.msra.mxu0 %v4566
    %4847 = vmatprep.subr.bf16.mxu0 %v4571
    %4848 = vmatpush1.bf16.msra.mxu0 %v4570
    %4849 = vmatprep.subr.bf16.mxu0 %v4575
    %4850 = vmatpush1.bf16.msra.mxu0 %v4574
    %4851 = vmatprep.subr.bf16.mxu0 %v4579
    %4852 = vmatpush1.bf16.msra.mxu0 %v4578
    %4853 = vmatprep.subr.bf16.mxu0 %v4583
    %4854 = vmatpush1.bf16.msra.mxu0 %v4582
    %4855 = vmatprep.subr.bf16.mxu0 %v4587
    %4856 = vmatpush1.bf16.msra.mxu0 %v4586
    %4857 = vmatprep.subr.bf16.mxu0 %v4591
    %4858 = vmatpush1.bf16.msra.mxu0 %v4590
    %4859 = vmatprep.subr.bf16.mxu0 %v4595
    %4860 = vmatpush1.bf16.msra.mxu0 %v4594
    %4861 = vmatprep.subr.bf16.mxu0 %v4599
    %4862 = vmatpush1.bf16.msra.mxu0 %v4598
    %4863 = vmatprep.subr.bf16.mxu0 %v4603
    %4864 = vmatpush1.bf16.msra.mxu0 %v4602
    %4865 = vmatprep.subr.bf16.mxu0 %v4607
    %4866 = vmatpush1.bf16.msra.mxu0 %v4606
    %4867 = vmatprep.subr.bf16.mxu0 %v4611
    %4868 = vmatpush1.bf16.msra.mxu0 %v4610
    %4869 = vmatprep.mubr.bf16.mxu0 %v4222
    %4870 = vmatmul.mubr.bf16.gmra.mrb[0].mxu0 %v4221
    %v4871 = vpop.f32.mrb[0].mxu0
    %v4872 = vadd.f32 %v4239, %v4871
    %v4873 = vpop.f32.mrb[0].mxu0
    %v4874 = vadd.f32 %v4243, %v4873
    %v4875 = vpop.f32.mrb[0].mxu0
    %v4876 = vadd.f32 %v4239, %v4875
    %v4877 = vpop.f32.mrb[0].mxu0
    %v4878 = vadd.f32 %v4243, %v4877
    %4879 = vdwg.mxu0
    %4880 = vmatprep.subr.bf16.mxu0 %v4615
    %4881 = vmatpush1.bf16.msra.mxu0 %v4614
    %4882 = vmatprep.subr.bf16.mxu0 %v4619
    %4883 = vmatpush1.bf16.msra.mxu0 %v4618
    %4884 = vmatprep.subr.bf16.mxu0 %v4623
    %4885 = vmatpush1.bf16.msra.mxu0 %v4622
    %4886 = vmatprep.subr.bf16.mxu0 %v4627
    %4887 = vmatpush1.bf16.msra.mxu0 %v4626
    %4888 = vmatprep.subr.bf16.mxu0 %v4631
    %4889 = vmatpush1.bf16.msra.mxu0 %v4630
    %4890 = vmatprep.subr.bf16.mxu0 %v4635
    %4891 = vmatpush1.bf16.msra.mxu0 %v4634
    %4892 = vmatprep.subr.bf16.mxu0 %v4639
    %4893 = vmatpush1.bf16.msra.mxu0 %v4638
    %4894 = vmatprep.subr.bf16.mxu0 %v4643
    %4895 = vmatpush1.bf16.msra.mxu0 %v4642
    %4896 = vmatprep.subr.bf16.mxu0 %v4647
    %4897 = vmatpush1.bf16.msra.mxu0 %v4646
    %4898 = vmatprep.subr.bf16.mxu0 0
    %4899 = vmatpush1.bf16.msra.mxu0 0
    %4900 = vmatprep.subr.bf16.mxu0 0
    %4901 = vmatpush1.bf16.msra.mxu0 0
    %4902 = vmatprep.subr.bf16.mxu0 0
    %4903 = vmatpush1.bf16.msra.mxu0 0
    %4904 = vmatprep.subr.bf16.mxu0 0
    %4905 = vmatpush1.bf16.msra.mxu0 0
    %4906 = vmatprep.subr.bf16.mxu0 0
    %4907 = vmatpush1.bf16.msra.mxu0 0
    %4908 = vmatprep.subr.bf16.mxu0 0
    %4909 = vmatpush1.bf16.msra.mxu0 0
    %4910 = vmatprep.subr.bf16.mxu0 0
    %4911 = vmatpush1.bf16.msra.mxu0 0
    %4912 = vmatprep.mubr.bf16.mxu0 %v4749
    %4913 = vmatmul.mubr.bf16.gmra.mrb[0].mxu0 %v4223
    %v4914 = vpop.f32.mrb[0].mxu0
    %v4915 = vadd.f32 %v4872, %v4914
    %v4916 = vpop.f32.mrb[0].mxu0
    %v4917 = vadd.f32 %v4874, %v4916
    %v4918 = vpop.f32.mrb[0].mxu0
    %v4919 = vadd.f32 %v4876, %v4918
    %v4920 = vpop.f32.mrb[0].mxu0
    %v4921 = vadd.f32 %v4878, %v4920
    %4922 = vdwg.mxu0
    %v4923 = vmax.f32 %v4829, 0.0
    %v4924 = vmax.f32 %v4831, 0.0
    %v4925 = vmax.f32 %v4915, 0.0
    %v4926 = vmax.f32 %v4917, 0.0
    %v4927 = vmax.f32 %v4833, 0.0
    %v4928 = vmax.f32 %v4835, 0.0
    %v4929 = vmax.f32 %v4919, 0.0
    %v4930 = vmax.f32 %v4921, 0.0
    %s4931 = scalar_lea.vmem [#allocation11], 1600
    %v4932 = vld [vmem:[%s4931] sm:$0xff]
    %v4933 = vld [vmem:[%s4931 + $0x8] sm:$0xff]
    %v4934 = vld [vmem:[%s4931 + $0x10] sm:$0xff]
    %v4935 = vld [vmem:[%s4931 + $0x18] sm:$0xff]
    %v4936 = vld [vmem:[%s4931 + $0x20] sm:$0xff]
    %v4937 = vld [vmem:[%s4931 + $0x28] sm:$0xff]
    %v4938 = vld [vmem:[%s4931 + $0x30] sm:$0xff]
    %v4939 = vld [vmem:[%s4931 + $0x38] sm:$0xff]
    %v4940 = vld [vmem:[%s4931 + $0x40] sm:$0xff]
    %v4941 = vld [vmem:[%s4931 + $0x48] sm:$0xff]
    %v4942 = vld [vmem:[%s4931 + $0x50] sm:$0xff]
    %v4943 = vld [vmem:[%s4931 + $0x58] sm:$0xff]
    %v4944 = vld [vmem:[%s4931 + $0x60] sm:$0xff]
    %v4945 = vld [vmem:[%s4931 + $0x68] sm:$0xff]
    %v4946 = vld [vmem:[%s4931 + $0x70] sm:$0xff]
    %v4947 = vld [vmem:[%s4931 + $0x78] sm:$0xff]
    %v4948 = vld [vmem:[%s4931 + $0x80] sm:$0xff]
    %v4949 = vld [vmem:[%s4931 + $0x88] sm:$0xff]
    %v4950 = vld [vmem:[%s4931 + $0x90] sm:$0xff]
    %v4951 = vld [vmem:[%s4931 + $0x98] sm:$0xff]
    %v4952 = vld [vmem:[%s4931 + $0xa0] sm:$0xff]
    %v4953 = vld [vmem:[%s4931 + $0xa8] sm:$0xff]
    %v4954 = vld [vmem:[%s4931 + $0xb0] sm:$0xff]
    %v4955 = vld [vmem:[%s4931 + $0xb8] sm:$0xff]
    %v4956 = vld [vmem:[%s4931 + $0xc0] sm:$0xff]
    %v4957 = vld [vmem:[%s4931 + $0xc8] sm:$0xff]
    %v4958 = vld [vmem:[%s4931 + $0xd0] sm:$0xff]
    %v4959 = vld [vmem:[%s4931 + $0xd8] sm:$0xff]
    %v4960 = vld [vmem:[%s4931 + $0xe0] sm:$0xff]
    %v4961 = vld [vmem:[%s4931 + $0xe8] sm:$0xff]
    %v4962 = vld [vmem:[%s4931 + $0xf0] sm:$0xff]
    %v4963 = vld [vmem:[%s4931 + $0xf8] sm:$0xff]
    %v4964 = vld [vmem:[%s4931 + $0x100] sm:$0xff]
    %v4965 = vld [vmem:[%s4931 + $0x108] sm:$0xff]
    %v4966 = vld [vmem:[%s4931 + $0x110] sm:$0xff]
    %v4967 = vld [vmem:[%s4931 + $0x118] sm:$0xff]
    %v4968 = vld [vmem:[%s4931 + $0x120] sm:$0xff]
    %v4969 = vld [vmem:[%s4931 + $0x128] sm:$0xff]
    %v4970 = vld [vmem:[%s4931 + $0x130] sm:$0xff]
    %v4971 = vld [vmem:[%s4931 + $0x138] sm:$0xff]
    %v4972 = vld [vmem:[%s4931 + $0x140] sm:$0xff]
    %v4973 = vld [vmem:[%s4931 + $0x148] sm:$0xff]
    %v4974 = vld [vmem:[%s4931 + $0x150] sm:$0xff]
    %v4975 = vld [vmem:[%s4931 + $0x158] sm:$0xff]
    %v4976 = vld [vmem:[%s4931 + $0x160] sm:$0xff]
    %v4977 = vld [vmem:[%s4931 + $0x168] sm:$0xff]
    %v4978 = vld [vmem:[%s4931 + $0x170] sm:$0xff]
    %v4979 = vld [vmem:[%s4931 + $0x178] sm:$0xff]
    %v4980 = vld [vmem:[%s4931 + $0x180] sm:$0xff]
    %v4981 = vld [vmem:[%s4931 + $0x188] sm:$0xff]
    %v4982 = vld [vmem:[%s4931 + $0x190] sm:$0xff]
    %v4983 = vld [vmem:[%s4931 + $0x198] sm:$0xff]
    %v4984 = vld [vmem:[%s4931 + $0x1a0] sm:$0xff]
    %v4985 = vld [vmem:[%s4931 + $0x1a8] sm:$0xff]
    %v4986 = vld [vmem:[%s4931 + $0x1b0] sm:$0xff]
    %v4987 = vld [vmem:[%s4931 + $0x1b8] sm:$0xff]
    %v4988 = vld [vmem:[%s4931 + $0x1c0] sm:$0xff]
    %v4989 = vld [vmem:[%s4931 + $0x1c8] sm:$0xff]
    %v4990 = vld [vmem:[%s4931 + $0x1d0] sm:$0xff]
    %v4991 = vld [vmem:[%s4931 + $0x1d8] sm:$0xff]
    %v4992 = vld [vmem:[%s4931 + $0x1e0] sm:$0xff]
    %v4993 = vld [vmem:[%s4931 + $0x1e8] sm:$0xff]
    %v4994 = vld [vmem:[%s4931 + $0x1f0] sm:$0xff]
    %v4995 = vld [vmem:[%s4931 + $0x1f8] sm:$0xff]
    %v4996 = vld [vmem:[%s4931 + $0x200] sm:$0xff]
    %v4997 = vld [vmem:[%s4931 + $0x208] sm:$0xff]
    %v4998 = vld [vmem:[%s4931 + $0x210] sm:$0xff]
    %v4999 = vld [vmem:[%s4931 + $0x218] sm:$0xff]
    %v5000 = vld [vmem:[%s4931 + $0x220] sm:$0xff]
    %v5001 = vld [vmem:[%s4931 + $0x228] sm:$0xff]
    %v5002 = vld [vmem:[%s4931 + $0x230] sm:$0xff]
    %v5003 = vld [vmem:[%s4931 + $0x238] sm:$0xff]
    %v5004 = vld [vmem:[%s4931 + $0x240] sm:$0xff]
    %v5005 = vld [vmem:[%s4931 + $0x248] sm:$0xff]
    %v5006 = vld [vmem:[%s4931 + $0x250] sm:$0xff]
    %v5007 = vld [vmem:[%s4931 + $0x258] sm:$0xff]
    %v5008 = vld [vmem:[%s4931 + $0x260] sm:$0xff]
    %v5009 = vld [vmem:[%s4931 + $0x268] sm:$0xff]
    %v5010 = vld [vmem:[%s4931 + $0x270] sm:$0xff]
    %v5011 = vld [vmem:[%s4931 + $0x278] sm:$0xff]
    %v5012 = vld [vmem:[%s4931 + $0x280] sm:$0xff]
    %v5013 = vld [vmem:[%s4931 + $0x288] sm:$0xff]
    %v5014 = vld [vmem:[%s4931 + $0x290] sm:$0xff]
    %v5015 = vld [vmem:[%s4931 + $0x298] sm:$0xff]
    %v5016 = vld [vmem:[%s4931 + $0x2a0] sm:$0xff]
    %v5017 = vld [vmem:[%s4931 + $0x2a8] sm:$0xff]
    %v5018 = vld [vmem:[%s4931 + $0x2b0] sm:$0xff]
    %v5019 = vld [vmem:[%s4931 + $0x2b8] sm:$0xff]
    %v5020 = vld [vmem:[%s4931 + $0x2c0] sm:$0xff]
    %v5021 = vld [vmem:[%s4931 + $0x2c8] sm:$0xff]
    %v5022 = vld [vmem:[%s4931 + $0x2d0] sm:$0xff]
    %v5023 = vld [vmem:[%s4931 + $0x2d8] sm:$0xff]
    %v5024 = vld [vmem:[%s4931 + $0x2e0] sm:$0xff]
    %v5025 = vld [vmem:[%s4931 + $0x2e8] sm:$0xff]
    %v5026 = vld [vmem:[%s4931 + $0x2f0] sm:$0xff]
    %v5027 = vld [vmem:[%s4931 + $0x2f8] sm:$0xff]
    %v5028 = vld [vmem:[%s4931 + $0x300] sm:$0xff]
    %v5029 = vld [vmem:[%s4931 + $0x308] sm:$0xff]
    %v5030 = vld [vmem:[%s4931 + $0x310] sm:$0xff]
    %v5031 = vld [vmem:[%s4931 + $0x318] sm:$0xff]
    %v5032 = vpack.c.bf16 %v4927, %v4923
    %v5033 = vpack.c.bf16 %v4928, %v4924
    %v5034 = vpack.c.bf16 %v4929, %v4925
    %v5035 = vpack.c.bf16 %v4930, %v4926
    %s5036 = scalar_lea.vmem [#allocation13], 32
    %v5037 = vld [vmem:[%s5036] ss:$8 sm:$0xf]
    %v5039 = vlaneseq
    %v5040 = vshrl.u32 %v5039, 7
    %v5041 = vsub.s32 0, %v5040
    %v5042 = vrot.slane %v5037, %v5041
    %v5043 = vlaneseq
    %v5044 = vshrl.u32 %v5043, 7
    %v5045 = vsub.s32 1, %v5044
    %v5046 = vrot.slane %v5037, %v5045
    %v5047 = vlaneseq
    %v5048 = vshrl.u32 %v5047, 7
    %v5049 = vsub.s32 2, %v5048
    %v5050 = vrot.slane %v5037, %v5049
    %v5051 = vlaneseq
    %v5052 = vshrl.u32 %v5051, 7
    %v5053 = vsub.s32 3, %v5052
    %v5054 = vrot.slane %v5037, %v5053
    %v5159 = vunpack.c.l.b16 %v4932
    %v5160 = vunpack.c.h.b16 %v4932
    %v5161 = vunpack.c.l.b16 %v4933
    %v5162 = vunpack.c.h.b16 %v4933
    %v5163 = vunpack.c.l.b16 %v4934
    %v5164 = vunpack.c.h.b16 %v4934
    %v5165 = vunpack.c.l.b16 %v4935
    %v5166 = vunpack.c.h.b16 %v4935
    %v5167 = vunpack.c.l.b16 %v4936
    %v5168 = vunpack.c.h.b16 %v4936
    %v5169 = vunpack.c.l.b16 %v4937
    %v5170 = vunpack.c.h.b16 %v4937
    %v5171 = vunpack.c.l.b16 %v4938
    %v5172 = vunpack.c.h.b16 %v4938
    %v5173 = vunpack.c.l.b16 %v4939
    %v5174 = vunpack.c.h.b16 %v4939
    %v5175 = vunpack.c.l.b16 %v4940
    %v5176 = vunpack.c.h.b16 %v4940
    %v5177 = vunpack.c.l.b16 %v4941
    %v5178 = vunpack.c.h.b16 %v4941
    %v5179 = vunpack.c.l.b16 %v4942
    %v5180 = vunpack.c.h.b16 %v4942
    %v5181 = vunpack.c.l.b16 %v4943
    %v5182 = vunpack.c.h.b16 %v4943
    %v5183 = vunpack.c.l.b16 %v4944
    %v5184 = vunpack.c.h.b16 %v4944
    %v5185 = vunpack.c.l.b16 %v4945
    %v5186 = vunpack.c.h.b16 %v4945
    %v5187 = vunpack.c.l.b16 %v4946
    %v5188 = vunpack.c.h.b16 %v4946
    %v5189 = vunpack.c.l.b16 %v4947
    %v5190 = vunpack.c.h.b16 %v4947
    %v5191 = vunpack.c.l.b16 %v4948
    %v5192 = vunpack.c.h.b16 %v4948
    %v5193 = vunpack.c.l.b16 %v4949
    %v5194 = vunpack.c.h.b16 %v4949
    %v5195 = vunpack.c.l.b16 %v4950
    %v5196 = vunpack.c.h.b16 %v4950
    %v5197 = vunpack.c.l.b16 %v4951
    %v5198 = vunpack.c.h.b16 %v4951
    %v5199 = vunpack.c.l.b16 %v4952
    %v5200 = vunpack.c.h.b16 %v4952
    %v5201 = vunpack.c.l.b16 %v4953
    %v5202 = vunpack.c.h.b16 %v4953
    %v5203 = vunpack.c.l.b16 %v4954
    %v5204 = vunpack.c.h.b16 %v4954
    %v5205 = vunpack.c.l.b16 %v4955
    %v5206 = vunpack.c.h.b16 %v4955
    %v5207 = vunpack.c.l.b16 %v4956
    %v5208 = vunpack.c.h.b16 %v4956
    %v5209 = vunpack.c.l.b16 %v4957
    %v5210 = vunpack.c.h.b16 %v4957
    %v5211 = vunpack.c.l.b16 %v4958
    %v5212 = vunpack.c.h.b16 %v4958
    %v5213 = vunpack.c.l.b16 %v4959
    %v5214 = vunpack.c.h.b16 %v4959
    %v5215 = vunpack.c.l.b16 %v4960
    %v5216 = vunpack.c.h.b16 %v4960
    %v5217 = vunpack.c.l.b16 %v4961
    %v5218 = vunpack.c.h.b16 %v4961
    %v5219 = vunpack.c.l.b16 %v4962
    %v5220 = vunpack.c.h.b16 %v4962
    %v5221 = vunpack.c.l.b16 %v4963
    %v5222 = vunpack.c.h.b16 %v4963
    %v5223 = vunpack.c.l.b16 %v4964
    %v5224 = vunpack.c.h.b16 %v4964
    %v5225 = vunpack.c.l.b16 %v4965
    %v5226 = vunpack.c.h.b16 %v4965
    %v5227 = vunpack.c.l.b16 %v4966
    %v5228 = vunpack.c.h.b16 %v4966
    %v5229 = vunpack.c.l.b16 %v4967
    %v5230 = vunpack.c.h.b16 %v4967
    %v5231 = vunpack.c.l.b16 %v4968
    %v5232 = vunpack.c.h.b16 %v4968
    %v5233 = vunpack.c.l.b16 %v4969
    %v5234 = vunpack.c.h.b16 %v4969
    %v5235 = vunpack.c.l.b16 %v4970
    %v5236 = vunpack.c.h.b16 %v4970
    %v5237 = vunpack.c.l.b16 %v4971
    %v5238 = vunpack.c.h.b16 %v4971
    %v5239 = vunpack.c.l.b16 %v4972
    %v5240 = vunpack.c.h.b16 %v4972
    %v5241 = vunpack.c.l.b16 %v4973
    %v5242 = vunpack.c.h.b16 %v4973
    %v5243 = vunpack.c.l.b16 %v4974
    %v5244 = vunpack.c.h.b16 %v4974
    %v5245 = vunpack.c.l.b16 %v4975
    %v5246 = vunpack.c.h.b16 %v4975
    %v5247 = vunpack.c.l.b16 %v4976
    %v5248 = vunpack.c.h.b16 %v4976
    %v5249 = vunpack.c.l.b16 %v4977
    %v5250 = vunpack.c.h.b16 %v4977
    %v5251 = vunpack.c.l.b16 %v4978
    %v5252 = vunpack.c.h.b16 %v4978
    %v5253 = vunpack.c.l.b16 %v4979
    %v5254 = vunpack.c.h.b16 %v4979
    %v5255 = vunpack.c.l.b16 %v4980
    %v5256 = vunpack.c.h.b16 %v4980
    %v5257 = vunpack.c.l.b16 %v4981
    %v5258 = vunpack.c.h.b16 %v4981
    %v5259 = vunpack.c.l.b16 %v4982
    %v5260 = vunpack.c.h.b16 %v4982
    %v5261 = vunpack.c.l.b16 %v4983
    %v5262 = vunpack.c.h.b16 %v4983
    %v5263 = vunpack.c.l.b16 %v4984
    %v5264 = vunpack.c.h.b16 %v4984
    %v5265 = vunpack.c.l.b16 %v4985
    %v5266 = vunpack.c.h.b16 %v4985
    %v5267 = vunpack.c.l.b16 %v4986
    %v5268 = vunpack.c.h.b16 %v4986
    %v5269 = vunpack.c.l.b16 %v4987
    %v5270 = vunpack.c.h.b16 %v4987
    %v5271 = vunpack.c.l.b16 %v4988
    %v5272 = vunpack.c.h.b16 %v4988
    %v5273 = vunpack.c.l.b16 %v4989
    %v5274 = vunpack.c.h.b16 %v4989
    %v5275 = vunpack.c.l.b16 %v4990
    %v5276 = vunpack.c.h.b16 %v4990
    %v5277 = vunpack.c.l.b16 %v4991
    %v5278 = vunpack.c.h.b16 %v4991
    %v5279 = vunpack.c.l.b16 %v4992
    %v5280 = vunpack.c.h.b16 %v4992
    %v5281 = vunpack.c.l.b16 %v4993
    %v5282 = vunpack.c.h.b16 %v4993
    %v5283 = vunpack.c.l.b16 %v4994
    %v5284 = vunpack.c.h.b16 %v4994
    %v5285 = vunpack.c.l.b16 %v4995
    %v5286 = vunpack.c.h.b16 %v4995
    %v5287 = vunpack.c.l.b16 %v4996
    %v5288 = vunpack.c.h.b16 %v4996
    %v5289 = vunpack.c.l.b16 %v4997
    %v5290 = vunpack.c.h.b16 %v4997
    %v5291 = vunpack.c.l.b16 %v4998
    %v5292 = vunpack.c.h.b16 %v4998
    %v5293 = vunpack.c.l.b16 %v4999
    %v5294 = vunpack.c.h.b16 %v4999
    %v5295 = vunpack.c.l.b16 %v5000
    %v5296 = vunpack.c.h.b16 %v5000
    %v5297 = vunpack.c.l.b16 %v5001
    %v5298 = vunpack.c.h.b16 %v5001
    %v5299 = vunpack.c.l.b16 %v5002
    %v5300 = vunpack.c.h.b16 %v5002
    %v5301 = vunpack.c.l.b16 %v5003
    %v5302 = vunpack.c.h.b16 %v5003
    %v5303 = vunpack.c.l.b16 %v5004
    %v5304 = vunpack.c.h.b16 %v5004
    %v5305 = vunpack.c.l.b16 %v5005
    %v5306 = vunpack.c.h.b16 %v5005
    %v5307 = vunpack.c.l.b16 %v5006
    %v5308 = vunpack.c.h.b16 %v5006
    %v5309 = vunpack.c.l.b16 %v5007
    %v5310 = vunpack.c.h.b16 %v5007
    %v5311 = vunpack.c.l.b16 %v5008
    %v5312 = vunpack.c.h.b16 %v5008
    %v5313 = vunpack.c.l.b16 %v5009
    %v5314 = vunpack.c.h.b16 %v5009
    %v5315 = vunpack.c.l.b16 %v5010
    %v5316 = vunpack.c.h.b16 %v5010
    %v5317 = vunpack.c.l.b16 %v5011
    %v5318 = vunpack.c.h.b16 %v5011
    %v5319 = vunpack.c.l.b16 %v5012
    %v5320 = vunpack.c.h.b16 %v5012
    %v5321 = vunpack.c.l.b16 %v5013
    %v5322 = vunpack.c.h.b16 %v5013
    %v5323 = vunpack.c.l.b16 %v5014
    %v5324 = vunpack.c.h.b16 %v5014
    %v5325 = vunpack.c.l.b16 %v5015
    %v5326 = vunpack.c.h.b16 %v5015
    %v5327 = vunpack.c.l.b16 %v5016
    %v5328 = vunpack.c.h.b16 %v5016
    %v5329 = vunpack.c.l.b16 %v5017
    %v5330 = vunpack.c.h.b16 %v5017
    %v5331 = vunpack.c.l.b16 %v5018
    %v5332 = vunpack.c.h.b16 %v5018
    %v5333 = vunpack.c.l.b16 %v5019
    %v5334 = vunpack.c.h.b16 %v5019
    %v5335 = vunpack.c.l.b16 %v5020
    %v5336 = vunpack.c.h.b16 %v5020
    %v5337 = vunpack.c.l.b16 %v5021
    %v5338 = vunpack.c.h.b16 %v5021
    %v5339 = vunpack.c.l.b16 %v5022
    %v5340 = vunpack.c.h.b16 %v5022
    %v5341 = vunpack.c.l.b16 %v5023
    %v5342 = vunpack.c.h.b16 %v5023
    %v5343 = vunpack.c.l.b16 %v5024
    %v5344 = vunpack.c.h.b16 %v5024
    %v5345 = vunpack.c.l.b16 %v5025
    %v5346 = vunpack.c.h.b16 %v5025
    %v5347 = vunpack.c.l.b16 %v5026
    %v5348 = vunpack.c.h.b16 %v5026
    %v5349 = vunpack.c.l.b16 %v5027
    %v5350 = vunpack.c.h.b16 %v5027
    %v5351 = vunpack.c.l.b16 %v5028
    %v5352 = vunpack.c.h.b16 %v5028
    %v5353 = vunpack.c.l.b16 %v5029
    %v5354 = vunpack.c.h.b16 %v5029
    %v5355 = vunpack.c.l.b16 %v5030
    %v5356 = vunpack.c.h.b16 %v5030
    %v5357 = vunpack.c.l.b16 %v5031
    %v5358 = vunpack.c.h.b16 %v5031
    %v5359 = vpack.c.b16 %v5163, %v5159
    %v5360 = vpack.c.b16 %v5164, %v5160
    %v5361 = vpack.c.b16 %v5165, %v5161
    %v5362 = vpack.c.b16 %v5166, %v5162
    %v5363 = vpack.c.b16 %v5171, %v5167
    %v5364 = vpack.c.b16 %v5172, %v5168
    %v5365 = vpack.c.b16 %v5173, %v5169
    %v5366 = vpack.c.b16 %v5174, %v5170
    %v5367 = vpack.c.b16 %v5179, %v5175
    %v5368 = vpack.c.b16 %v5180, %v5176
    %v5369 = vpack.c.b16 %v5181, %v5177
    %v5370 = vpack.c.b16 %v5182, %v5178
    %v5371 = vpack.c.b16 %v5187, %v5183
    %v5372 = vpack.c.b16 %v5188, %v5184
    %v5373 = vpack.c.b16 %v5189, %v5185
    %v5374 = vpack.c.b16 %v5190, %v5186
    %v5375 = vpack.c.b16 %v5195, %v5191
    %v5376 = vpack.c.b16 %v5196, %v5192
    %v5377 = vpack.c.b16 %v5197, %v5193
    %v5378 = vpack.c.b16 %v5198, %v5194
    %v5379 = vpack.c.b16 %v5203, %v5199
    %v5380 = vpack.c.b16 %v5204, %v5200
    %v5381 = vpack.c.b16 %v5205, %v5201
    %v5382 = vpack.c.b16 %v5206, %v5202
    %v5383 = vpack.c.b16 %v5211, %v5207
    %v5384 = vpack.c.b16 %v5212, %v5208
    %v5385 = vpack.c.b16 %v5213, %v5209
    %v5386 = vpack.c.b16 %v5214, %v5210
    %v5387 = vpack.c.b16 %v5219, %v5215
    %v5388 = vpack.c.b16 %v5220, %v5216
    %v5389 = vpack.c.b16 %v5221, %v5217
    %v5390 = vpack.c.b16 %v5222, %v5218
    %v5391 = vpack.c.b16 %v5227, %v5223
    %v5392 = vpack.c.b16 %v5228, %v5224
    %v5393 = vpack.c.b16 %v5229, %v5225
    %v5394 = vpack.c.b16 %v5230, %v5226
    %v5395 = vpack.c.b16 %v5235, %v5231
    %v5396 = vpack.c.b16 %v5236, %v5232
    %v5397 = vpack.c.b16 %v5237, %v5233
    %v5398 = vpack.c.b16 %v5238, %v5234
    %v5399 = vpack.c.b16 %v5243, %v5239
    %v5400 = vpack.c.b16 %v5244, %v5240
    %v5401 = vpack.c.b16 %v5245, %v5241
    %v5402 = vpack.c.b16 %v5246, %v5242
    %v5403 = vpack.c.b16 %v5251, %v5247
    %v5404 = vpack.c.b16 %v5252, %v5248
    %v5405 = vpack.c.b16 %v5253, %v5249
    %v5406 = vpack.c.b16 %v5254, %v5250
    %v5407 = vpack.c.b16 %v5259, %v5255
    %v5408 = vpack.c.b16 %v5260, %v5256
    %v5409 = vpack.c.b16 %v5261, %v5257
    %v5410 = vpack.c.b16 %v5262, %v5258
    %v5411 = vpack.c.b16 %v5267, %v5263
    %v5412 = vpack.c.b16 %v5268, %v5264
    %v5413 = vpack.c.b16 %v5269, %v5265
    %v5414 = vpack.c.b16 %v5270, %v5266
    %v5415 = vpack.c.b16 %v5275, %v5271
    %v5416 = vpack.c.b16 %v5276, %v5272
    %v5417 = vpack.c.b16 %v5277, %v5273
    %v5418 = vpack.c.b16 %v5278, %v5274
    %v5419 = vpack.c.b16 %v5283, %v5279
    %v5420 = vpack.c.b16 %v5284, %v5280
    %v5421 = vpack.c.b16 %v5285, %v5281
    %v5422 = vpack.c.b16 %v5286, %v5282
    %v5423 = vpack.c.b16 %v5291, %v5287
    %v5424 = vpack.c.b16 %v5292, %v5288
    %v5425 = vpack.c.b16 %v5293, %v5289
    %v5426 = vpack.c.b16 %v5294, %v5290
    %v5427 = vpack.c.b16 %v5299, %v5295
    %v5428 = vpack.c.b16 %v5300, %v5296
    %v5429 = vpack.c.b16 %v5301, %v5297
    %v5430 = vpack.c.b16 %v5302, %v5298
    %v5431 = vpack.c.b16 %v5307, %v5303
    %v5432 = vpack.c.b16 %v5308, %v5304
    %v5433 = vpack.c.b16 %v5309, %v5305
    %v5434 = vpack.c.b16 %v5310, %v5306
    %v5435 = vpack.c.b16 %v5315, %v5311
    %v5436 = vpack.c.b16 %v5316, %v5312
    %v5437 = vpack.c.b16 %v5317, %v5313
    %v5438 = vpack.c.b16 %v5318, %v5314
    %v5439 = vpack.c.b16 %v5323, %v5319
    %v5440 = vpack.c.b16 %v5324, %v5320
    %v5441 = vpack.c.b16 %v5325, %v5321
    %v5442 = vpack.c.b16 %v5326, %v5322
    %v5443 = vpack.c.b16 %v5331, %v5327
    %v5444 = vpack.c.b16 %v5332, %v5328
    %v5445 = vpack.c.b16 %v5333, %v5329
    %v5446 = vpack.c.b16 %v5334, %v5330
    %v5447 = vpack.c.b16 %v5339, %v5335
    %v5448 = vpack.c.b16 %v5340, %v5336
    %v5449 = vpack.c.b16 %v5341, %v5337
    %v5450 = vpack.c.b16 %v5342, %v5338
    %v5451 = vpack.c.b16 %v5347, %v5343
    %v5452 = vpack.c.b16 %v5348, %v5344
    %v5453 = vpack.c.b16 %v5349, %v5345
    %v5454 = vpack.c.b16 %v5350, %v5346
    %v5455 = vpack.c.b16 %v5355, %v5351
    %v5456 = vpack.c.b16 %v5356, %v5352
    %v5457 = vpack.c.b16 %v5357, %v5353
    %v5458 = vpack.c.b16 %v5358, %v5354
    %v5560 = vsel %vm935, %v5035, 0
    %5562 = vmatprep.subr.bf16.mxu0 %v5360
    %5563 = vmatpush1.bf16.msra.mxu0 %v5359
    %5564 = vmatprep.subr.bf16.mxu0 %v5364
    %5565 = vmatpush1.bf16.msra.mxu0 %v5363
    %5566 = vmatprep.subr.bf16.mxu0 %v5368
    %5567 = vmatpush1.bf16.msra.mxu0 %v5367
    %5568 = vmatprep.subr.bf16.mxu0 %v5372
    %5569 = vmatpush1.bf16.msra.mxu0 %v5371
    %5570 = vmatprep.subr.bf16.mxu0 %v5376
    %5571 = vmatpush1.bf16.msra.mxu0 %v5375
    %5572 = vmatprep.subr.bf16.mxu0 %v5380
    %5573 = vmatpush1.bf16.msra.mxu0 %v5379
    %5574 = vmatprep.subr.bf16.mxu0 %v5384
    %5575 = vmatpush1.bf16.msra.mxu0 %v5383
    %5576 = vmatprep.subr.bf16.mxu0 %v5388
    %5577 = vmatpush1.bf16.msra.mxu0 %v5387
    %5578 = vmatprep.subr.bf16.mxu0 %v5392
    %5579 = vmatpush1.bf16.msra.mxu0 %v5391
    %5580 = vmatprep.subr.bf16.mxu0 %v5396
    %5581 = vmatpush1.bf16.msra.mxu0 %v5395
    %5582 = vmatprep.subr.bf16.mxu0 %v5400
    %5583 = vmatpush1.bf16.msra.mxu0 %v5399
    %5584 = vmatprep.subr.bf16.mxu0 %v5404
    %5585 = vmatpush1.bf16.msra.mxu0 %v5403
    %5586 = vmatprep.subr.bf16.mxu0 %v5408
    %5587 = vmatpush1.bf16.msra.mxu0 %v5407
    %5588 = vmatprep.subr.bf16.mxu0 %v5412
    %5589 = vmatpush1.bf16.msra.mxu0 %v5411
    %5590 = vmatprep.subr.bf16.mxu0 %v5416
    %5591 = vmatpush1.bf16.msra.mxu0 %v5415
    %5592 = vmatprep.subr.bf16.mxu0 %v5420
    %5593 = vmatpush1.bf16.msra.mxu0 %v5419
    %5594 = vmatprep.mubr.bf16.mxu0 %v5033
    %5595 = vmatmul.mubr.bf16.gmra.mrb[0].mxu0 %v5032
    %v5596 = vpop.f32.mrb[0].mxu0
    %v5597 = vadd.f32 %v5042, %v5596
    %v5598 = vpop.f32.mrb[0].mxu0
    %v5599 = vadd.f32 %v5046, %v5598
    %v5600 = vpop.f32.mrb[0].mxu0
    %v5601 = vadd.f32 %v5042, %v5600
    %v5602 = vpop.f32.mrb[0].mxu0
    %v5603 = vadd.f32 %v5046, %v5602
    %5604 = vdwg.mxu0
    %5605 = vmatprep.subr.bf16.mxu0 %v5424
    %5606 = vmatpush1.bf16.msra.mxu0 %v5423
    %5607 = vmatprep.subr.bf16.mxu0 %v5428
    %5608 = vmatpush1.bf16.msra.mxu0 %v5427
    %5609 = vmatprep.subr.bf16.mxu0 %v5432
    %5610 = vmatpush1.bf16.msra.mxu0 %v5431
    %5611 = vmatprep.subr.bf16.mxu0 %v5436
    %5612 = vmatpush1.bf16.msra.mxu0 %v5435
    %5613 = vmatprep.subr.bf16.mxu0 %v5440
    %5614 = vmatpush1.bf16.msra.mxu0 %v5439
    %5615 = vmatprep.subr.bf16.mxu0 %v5444
    %5616 = vmatpush1.bf16.msra.mxu0 %v5443
    %5617 = vmatprep.subr.bf16.mxu0 %v5448
    %5618 = vmatpush1.bf16.msra.mxu0 %v5447
    %5619 = vmatprep.subr.bf16.mxu0 %v5452
    %5620 = vmatpush1.bf16.msra.mxu0 %v5451
    %5621 = vmatprep.subr.bf16.mxu0 %v5456
    %5622 = vmatpush1.bf16.msra.mxu0 %v5455
    %5623 = vmatprep.subr.bf16.mxu0 0
    %5624 = vmatpush1.bf16.msra.mxu0 0
    %5625 = vmatprep.subr.bf16.mxu0 0
    %5626 = vmatpush1.bf16.msra.mxu0 0
    %5627 = vmatprep.subr.bf16.mxu0 0
    %5628 = vmatpush1.bf16.msra.mxu0 0
    %5629 = vmatprep.subr.bf16.mxu0 0
    %5630 = vmatpush1.bf16.msra.mxu0 0
    %5631 = vmatprep.subr.bf16.mxu0 0
    %5632 = vmatpush1.bf16.msra.mxu0 0
    %5633 = vmatprep.subr.bf16.mxu0 0
    %5634 = vmatpush1.bf16.msra.mxu0 0
    %5635 = vmatprep.subr.bf16.mxu0 0
    %5636 = vmatpush1.bf16.msra.mxu0 0
    %5637 = vmatprep.mubr.bf16.mxu0 %v5560
    %5638 = vmatmul.mubr.bf16.gmra.mrb[0].mxu0 %v5034
    %v5639 = vpop.f32.mrb[0].mxu0
    %v5640 = vadd.f32 %v5597, %v5639
    %v5641 = vpop.f32.mrb[0].mxu0
    %v5642 = vadd.f32 %v5599, %v5641
    %v5643 = vpop.f32.mrb[0].mxu0
    %v5644 = vadd.f32 %v5601, %v5643
    %v5645 = vpop.f32.mrb[0].mxu0
    %v5646 = vadd.f32 %v5603, %v5645
    %5647 = vdwg.mxu0
    %5648 = vmatprep.subr.bf16.mxu0 %v5362
    %5649 = vmatpush1.bf16.msra.mxu0 %v5361
    %5650 = vmatprep.subr.bf16.mxu0 %v5366
    %5651 = vmatpush1.bf16.msra.mxu0 %v5365
    %5652 = vmatprep.subr.bf16.mxu0 %v5370
    %5653 = vmatpush1.bf16.msra.mxu0 %v5369
    %5654 = vmatprep.subr.bf16.mxu0 %v5374
    %5655 = vmatpush1.bf16.msra.mxu0 %v5373
    %5656 = vmatprep.subr.bf16.mxu0 %v5378
    %5657 = vmatpush1.bf16.msra.mxu0 %v5377
    %5658 = vmatprep.subr.bf16.mxu0 %v5382
    %5659 = vmatpush1.bf16.msra.mxu0 %v5381
    %5660 = vmatprep.subr.bf16.mxu0 %v5386
    %5661 = vmatpush1.bf16.msra.mxu0 %v5385
    %5662 = vmatprep.subr.bf16.mxu0 %v5390
    %5663 = vmatpush1.bf16.msra.mxu0 %v5389
    %5664 = vmatprep.subr.bf16.mxu0 %v5394
    %5665 = vmatpush1.bf16.msra.mxu0 %v5393
    %5666 = vmatprep.subr.bf16.mxu0 %v5398
    %5667 = vmatpush1.bf16.msra.mxu0 %v5397
    %5668 = vmatprep.subr.bf16.mxu0 %v5402
    %5669 = vmatpush1.bf16.msra.mxu0 %v5401
    %5670 = vmatprep.subr.bf16.mxu0 %v5406
    %5671 = vmatpush1.bf16.msra.mxu0 %v5405
    %5672 = vmatprep.subr.bf16.mxu0 %v5410
    %5673 = vmatpush1.bf16.msra.mxu0 %v5409
    %5674 = vmatprep.subr.bf16.mxu0 %v5414
    %5675 = vmatpush1.bf16.msra.mxu0 %v5413
    %5676 = vmatprep.subr.bf16.mxu0 %v5418
    %5677 = vmatpush1.bf16.msra.mxu0 %v5417
    %5678 = vmatprep.subr.bf16.mxu0 %v5422
    %5679 = vmatpush1.bf16.msra.mxu0 %v5421
    %5680 = vmatprep.mubr.bf16.mxu0 %v5033
    %5681 = vmatmul.mubr.bf16.gmra.mrb[0].mxu0 %v5032
    %v5682 = vpop.f32.mrb[0].mxu0
    %v5683 = vadd.f32 %v5050, %v5682
    %v5684 = vpop.f32.mrb[0].mxu0
    %v5685 = vadd.f32 %v5054, %v5684
    %v5686 = vpop.f32.mrb[0].mxu0
    %v5687 = vadd.f32 %v5050, %v5686
    %v5688 = vpop.f32.mrb[0].mxu0
    %v5689 = vadd.f32 %v5054, %v5688
    %5690 = vdwg.mxu0
    %5691 = vmatprep.subr.bf16.mxu0 %v5426
    %5692 = vmatpush1.bf16.msra.mxu0 %v5425
    %5693 = vmatprep.subr.bf16.mxu0 %v5430
    %5694 = vmatpush1.bf16.msra.mxu0 %v5429
    %5695 = vmatprep.subr.bf16.mxu0 %v5434
    %5696 = vmatpush1.bf16.msra.mxu0 %v5433
    %5697 = vmatprep.subr.bf16.mxu0 %v5438
    %5698 = vmatpush1.bf16.msra.mxu0 %v5437
    %5699 = vmatprep.subr.bf16.mxu0 %v5442
    %5700 = vmatpush1.bf16.msra.mxu0 %v5441
    %5701 = vmatprep.subr.bf16.mxu0 %v5446
    %5702 = vmatpush1.bf16.msra.mxu0 %v5445
    %5703 = vmatprep.subr.bf16.mxu0 %v5450
    %5704 = vmatpush1.bf16.msra.mxu0 %v5449
    %5705 = vmatprep.subr.bf16.mxu0 %v5454
    %5706 = vmatpush1.bf16.msra.mxu0 %v5453
    %5707 = vmatprep.subr.bf16.mxu0 %v5458
    %5708 = vmatpush1.bf16.msra.mxu0 %v5457
    %5709 = vmatprep.subr.bf16.mxu0 0
    %5710 = vmatpush1.bf16.msra.mxu0 0
    %5711 = vmatprep.subr.bf16.mxu0 0
    %5712 = vmatpush1.bf16.msra.mxu0 0
    %5713 = vmatprep.subr.bf16.mxu0 0
    %5714 = vmatpush1.bf16.msra.mxu0 0
    %5715 = vmatprep.subr.bf16.mxu0 0
    %5716 = vmatpush1.bf16.msra.mxu0 0
    %5717 = vmatprep.subr.bf16.mxu0 0
    %5718 = vmatpush1.bf16.msra.mxu0 0
    %5719 = vmatprep.subr.bf16.mxu0 0
    %5720 = vmatpush1.bf16.msra.mxu0 0
    %5721 = vmatprep.subr.bf16.mxu0 0
    %5722 = vmatpush1.bf16.msra.mxu0 0
    %5723 = vmatprep.mubr.bf16.mxu0 %v5560
    %5724 = vmatmul.mubr.bf16.gmra.mrb[0].mxu0 %v5034
    %v5725 = vpop.f32.mrb[0].mxu0
    %v5726 = vadd.f32 %v5683, %v5725
    %v5727 = vpop.f32.mrb[0].mxu0
    %v5728 = vadd.f32 %v5685, %v5727
    %v5729 = vpop.f32.mrb[0].mxu0
    %v5730 = vadd.f32 %v5687, %v5729
    %v5731 = vpop.f32.mrb[0].mxu0
    %v5732 = vadd.f32 %v5689, %v5731
    %5733 = vdwg.mxu0
    %v5734 = vmax.f32 %v5640, 0.0
    %v5735 = vmax.f32 %v5642, 0.0
    %v5736 = vmax.f32 %v5726, 0.0
    %v5737 = vmax.f32 %v5728, 0.0
    %v5738 = vmax.f32 %v5644, 0.0
    %v5739 = vmax.f32 %v5646, 0.0
    %v5740 = vmax.f32 %v5730, 0.0
    %v5741 = vmax.f32 %v5732, 0.0
    %v5742 = vld [vmem:[%s8] sm:$0xf]
    %v5743 = vld [vmem:[%s8 + $0x4] sm:$0xf]
    %v5744 = vld [vmem:[%s8 + $0x8] sm:$0xf]
    %v5745 = vld [vmem:[%s8 + $0xc] sm:$0xf]
    %v5746 = vld [vmem:[%s8 + $0x10] sm:$0xf]
    %v5747 = vld [vmem:[%s8 + $0x14] sm:$0xf]
    %v5748 = vld [vmem:[%s8 + $0x18] sm:$0xf]
    %v5749 = vld [vmem:[%s8 + $0x1c] sm:$0xf]
    %v5750 = vld [vmem:[%s8 + $0x20] sm:$0xf]
    %v5751 = vld [vmem:[%s8 + $0x24] sm:$0xf]
    %v5752 = vld [vmem:[%s8 + $0x28] sm:$0xf]
    %v5753 = vld [vmem:[%s8 + $0x2c] sm:$0xf]
    %v5754 = vld [vmem:[%s8 + $0x30] sm:$0xf]
    %v5755 = vld [vmem:[%s8 + $0x34] sm:$0xf]
    %v5756 = vld [vmem:[%s8 + $0x38] sm:$0xf]
    %v5757 = vld [vmem:[%s8 + $0x3c] sm:$0xf]
    %v5758 = vld [vmem:[%s8 + $0x40] sm:$0xf]
    %v5759 = vld [vmem:[%s8 + $0x44] sm:$0xf]
    %v5760 = vld [vmem:[%s8 + $0x48] sm:$0xf]
    %v5761 = vld [vmem:[%s8 + $0x4c] sm:$0xf]
    %v5762 = vld [vmem:[%s8 + $0x50] sm:$0xf]
    %v5763 = vld [vmem:[%s8 + $0x54] sm:$0xf]
    %v5764 = vld [vmem:[%s8 + $0x58] sm:$0xf]
    %v5765 = vld [vmem:[%s8 + $0x5c] sm:$0xf]
    %v5766 = vld [vmem:[%s8 + $0x60] sm:$0xf]
    %v5767 = vld [vmem:[%s8 + $0x64] sm:$0xf]
    %v5768 = vld [vmem:[%s8 + $0x68] sm:$0xf]
    %v5769 = vld [vmem:[%s8 + $0x6c] sm:$0xf]
    %v5770 = vld [vmem:[%s8 + $0x70] sm:$0xf]
    %v5771 = vld [vmem:[%s8 + $0x74] sm:$0xf]
    %v5772 = vld [vmem:[%s8 + $0x78] sm:$0xf]
    %v5773 = vld [vmem:[%s8 + $0x7c] sm:$0xf]
    %v5774 = vld [vmem:[%s8 + $0x80] sm:$0xf]
    %v5775 = vld [vmem:[%s8 + $0x84] sm:$0xf]
    %v5776 = vld [vmem:[%s8 + $0x88] sm:$0xf]
    %v5777 = vld [vmem:[%s8 + $0x8c] sm:$0xf]
    %v5778 = vld [vmem:[%s8 + $0x90] sm:$0xf]
    %v5779 = vld [vmem:[%s8 + $0x94] sm:$0xf]
    %v5780 = vld [vmem:[%s8 + $0x98] sm:$0xf]
    %v5781 = vld [vmem:[%s8 + $0x9c] sm:$0xf]
    %v5782 = vld [vmem:[%s8 + $0xa0] sm:$0xf]
    %v5783 = vld [vmem:[%s8 + $0xa4] sm:$0xf]
    %v5784 = vld [vmem:[%s8 + $0xa8] sm:$0xf]
    %v5785 = vld [vmem:[%s8 + $0xac] sm:$0xf]
    %v5786 = vld [vmem:[%s8 + $0xb0] sm:$0xf]
    %v5787 = vld [vmem:[%s8 + $0xb4] sm:$0xf]
    %v5788 = vld [vmem:[%s8 + $0xb8] sm:$0xf]
    %v5789 = vld [vmem:[%s8 + $0xbc] sm:$0xf]
    %v5790 = vld [vmem:[%s8 + $0xc0] sm:$0xf]
    %v5791 = vld [vmem:[%s8 + $0xc4] sm:$0xf]
    %v5792 = vpack.c.bf16 %v5738, %v5734
    %v5793 = vpack.c.bf16 %v5739, %v5735
    %v5794 = vpack.c.bf16 %v5740, %v5736
    %v5795 = vpack.c.bf16 %v5741, %v5737
    %v5796 = vld [vmem:[#allocation13 + $0x21] ss:$0 sm:$0xff]
    %v5847 = vunpack.c.l.b16 %v5742
    %v5848 = vunpack.c.l.b16 %v5743
    %v5849 = vunpack.c.l.b16 %v5744
    %v5850 = vunpack.c.l.b16 %v5745
    %v5851 = vunpack.c.l.b16 %v5746
    %v5852 = vunpack.c.l.b16 %v5747
    %v5853 = vunpack.c.l.b16 %v5748
    %v5854 = vunpack.c.l.b16 %v5749
    %v5855 = vunpack.c.l.b16 %v5750
    %v5856 = vunpack.c.l.b16 %v5751
    %v5857 = vunpack.c.l.b16 %v5752
    %v5858 = vunpack.c.l.b16 %v5753
    %v5859 = vunpack.c.l.b16 %v5754
    %v5860 = vunpack.c.l.b16 %v5755
    %v5861 = vunpack.c.l.b16 %v5756
    %v5862 = vunpack.c.l.b16 %v5757
    %v5863 = vunpack.c.l.b16 %v5758
    %v5864 = vunpack.c.l.b16 %v5759
    %v5865 = vunpack.c.l.b16 %v5760
    %v5866 = vunpack.c.l.b16 %v5761
    %v5867 = vunpack.c.l.b16 %v5762
    %v5868 = vunpack.c.l.b16 %v5763
    %v5869 = vunpack.c.l.b16 %v5764
    %v5870 = vunpack.c.l.b16 %v5765
    %v5871 = vunpack.c.l.b16 %v5766
    %v5872 = vunpack.c.l.b16 %v5767
    %v5873 = vunpack.c.l.b16 %v5768
    %v5874 = vunpack.c.l.b16 %v5769
    %v5875 = vunpack.c.l.b16 %v5770
    %v5876 = vunpack.c.l.b16 %v5771
    %v5877 = vunpack.c.l.b16 %v5772
    %v5878 = vunpack.c.l.b16 %v5773
    %v5879 = vunpack.c.l.b16 %v5774
    %v5880 = vunpack.c.l.b16 %v5775
    %v5881 = vunpack.c.l.b16 %v5776
    %v5882 = vunpack.c.l.b16 %v5777
    %v5883 = vunpack.c.l.b16 %v5778
    %v5884 = vunpack.c.l.b16 %v5779
    %v5885 = vunpack.c.l.b16 %v5780
    %v5886 = vunpack.c.l.b16 %v5781
    %v5887 = vunpack.c.l.b16 %v5782
    %v5888 = vunpack.c.l.b16 %v5783
    %v5889 = vunpack.c.l.b16 %v5784
    %v5890 = vunpack.c.l.b16 %v5785
    %v5891 = vunpack.c.l.b16 %v5786
    %v5892 = vunpack.c.l.b16 %v5787
    %v5893 = vunpack.c.l.b16 %v5788
    %v5894 = vunpack.c.l.b16 %v5789
    %v5895 = vunpack.c.l.b16 %v5790
    %v5896 = vunpack.c.l.b16 %v5791
    %v5897 = vpack.c.b16 %v5848, %v5847
    %v5898 = vpack.c.b16 %v5850, %v5849
    %v5899 = vpack.c.b16 %v5852, %v5851
    %v5900 = vpack.c.b16 %v5854, %v5853
    %v5901 = vpack.c.b16 %v5856, %v5855
    %v5902 = vpack.c.b16 %v5858, %v5857
    %v5903 = vpack.c.b16 %v5860, %v5859
    %v5904 = vpack.c.b16 %v5862, %v5861
    %v5905 = vpack.c.b16 %v5864, %v5863
    %v5906 = vpack.c.b16 %v5866, %v5865
    %v5907 = vpack.c.b16 %v5868, %v5867
    %v5908 = vpack.c.b16 %v5870, %v5869
    %v5909 = vpack.c.b16 %v5872, %v5871
    %v5910 = vpack.c.b16 %v5874, %v5873
    %v5911 = vpack.c.b16 %v5876, %v5875
    %v5912 = vpack.c.b16 %v5878, %v5877
    %v5913 = vpack.c.b16 %v5880, %v5879
    %v5914 = vpack.c.b16 %v5882, %v5881
    %v5915 = vpack.c.b16 %v5884, %v5883
    %v5916 = vpack.c.b16 %v5886, %v5885
    %v5917 = vpack.c.b16 %v5888, %v5887
    %v5918 = vpack.c.b16 %v5890, %v5889
    %v5919 = vpack.c.b16 %v5892, %v5891
    %v5920 = vpack.c.b16 %v5894, %v5893
    %v5921 = vpack.c.b16 %v5896, %v5895
    %v5948 = vsel %vm935, %v5795, 0
    %5950 = vmatprep.subr.bf16.mxu0 0
    %5951 = vmatpush1.bf16.msra.mxu0 %v5897
    %5952 = vmatprep.subr.bf16.mxu0 0
    %5953 = vmatpush1.bf16.msra.mxu0 %v5898
    %5954 = vmatprep.subr.bf16.mxu0 0
    %5955 = vmatpush1.bf16.msra.mxu0 %v5899
    %5956 = vmatprep.subr.bf16.mxu0 0
    %5957 = vmatpush1.bf16.msra.mxu0 %v5900
    %5958 = vmatprep.subr.bf16.mxu0 0
    %5959 = vmatpush1.bf16.msra.mxu0 %v5901
    %5960 = vmatprep.subr.bf16.mxu0 0
    %5961 = vmatpush1.bf16.msra.mxu0 %v5902
    %5962 = vmatprep.subr.bf16.mxu0 0
    %5963 = vmatpush1.bf16.msra.mxu0 %v5903
    %5964 = vmatprep.subr.bf16.mxu0 0
    %5965 = vmatpush1.bf16.msra.mxu0 %v5904
    %5966 = vmatprep.subr.bf16.mxu0 0
    %5967 = vmatpush1.bf16.msra.mxu0 %v5905
    %5968 = vmatprep.subr.bf16.mxu0 0
    %5969 = vmatpush1.bf16.msra.mxu0 %v5906
    %5970 = vmatprep.subr.bf16.mxu0 0
    %5971 = vmatpush1.bf16.msra.mxu0 %v5907
    %5972 = vmatprep.subr.bf16.mxu0 0
    %5973 = vmatpush1.bf16.msra.mxu0 %v5908
    %5974 = vmatprep.subr.bf16.mxu0 0
    %5975 = vmatpush1.bf16.msra.mxu0 %v5909
    %5976 = vmatprep.subr.bf16.mxu0 0
    %5977 = vmatpush1.bf16.msra.mxu0 %v5910
    %5978 = vmatprep.subr.bf16.mxu0 0
    %5979 = vmatpush1.bf16.msra.mxu0 %v5911
    %5980 = vmatprep.subr.bf16.mxu0 0
    %5981 = vmatpush1.bf16.msra.mxu0 %v5912
    %5982 = vmatprep.mubr.bf16.mxu0 %v5793
    %5983 = vmatmul.mubr.bf16.gmra.mrb[0].mxu0 %v5792
    %v5984 = vpop.f32.mrb[0].mxu0
    %v5985 = vadd.f32 %v5796, %v5984
    %v5986 = vpop.f32.mrb[0].mxu0
    %v5987 = vpop.f32.mrb[0].mxu0
    %v5988 = vadd.f32 %v5796, %v5987
    %v5989 = vpop.f32.mrb[0].mxu0
    %5990 = vdwg.mxu0
    %5991 = vmatprep.subr.bf16.mxu0 0
    %5992 = vmatpush1.bf16.msra.mxu0 %v5913
    %5993 = vmatprep.subr.bf16.mxu0 0
    %5994 = vmatpush1.bf16.msra.mxu0 %v5914
    %5995 = vmatprep.subr.bf16.mxu0 0
    %5996 = vmatpush1.bf16.msra.mxu0 %v5915
    %5997 = vmatprep.subr.bf16.mxu0 0
    %5998 = vmatpush1.bf16.msra.mxu0 %v5916
    %5999 = vmatprep.subr.bf16.mxu0 0
    %6000 = vmatpush1.bf16.msra.mxu0 %v5917
    %6001 = vmatprep.subr.bf16.mxu0 0
    %6002 = vmatpush1.bf16.msra.mxu0 %v5918
    %6003 = vmatprep.subr.bf16.mxu0 0
    %6004 = vmatpush1.bf16.msra.mxu0 %v5919
    %6005 = vmatprep.subr.bf16.mxu0 0
    %6006 = vmatpush1.bf16.msra.mxu0 %v5920
    %6007 = vmatprep.subr.bf16.mxu0 0
    %6008 = vmatpush1.bf16.msra.mxu0 %v5921
    %6009 = vmatprep.subr.bf16.mxu0 0
    %6010 = vmatpush1.bf16.msra.mxu0 0
    %6011 = vmatprep.subr.bf16.mxu0 0
    %6012 = vmatpush1.bf16.msra.mxu0 0
    %6013 = vmatprep.subr.bf16.mxu0 0
    %6014 = vmatpush1.bf16.msra.mxu0 0
    %6015 = vmatprep.subr.bf16.mxu0 0
    %6016 = vmatpush1.bf16.msra.mxu0 0
    %6017 = vmatprep.subr.bf16.mxu0 0
    %6018 = vmatpush1.bf16.msra.mxu0 0
    %6019 = vmatprep.subr.bf16.mxu0 0
    %6020 = vmatpush1.bf16.msra.mxu0 0
    %6021 = vmatprep.subr.bf16.mxu0 0
    %6022 = vmatpush1.bf16.msra.mxu0 0
    %6023 = vmatprep.mubr.bf16.mxu0 %v5948
    %6024 = vmatmul.mubr.bf16.gmra.mrb[0].mxu0 %v5794
    %v6025 = vpop.f32.mrb[0].mxu0
    %v6026 = vadd.f32 %v5985, %v6025
    %v6027 = vpop.f32.mrb[0].mxu0
    %v6028 = vpop.f32.mrb[0].mxu0
    %v6029 = vadd.f32 %v5988, %v6028
    %v6030 = vpop.f32.mrb[0].mxu0
    %6031 = vdwg.mxu0
    %v6032 = vsel %vm3060, %v6026, -inf
    %6033 = vmax.xlane.f32.xlu0 %v6032
    %v6034 = vpop.xlane.xlu0 %6033
    %v6035 = vsel %vm3060, %v6029, -inf
    %6036 = vmax.xlane.f32.xlu0 %v6035
    %v6037 = vpop.xlane.xlu0 %6036
    %6040 = vrot.lane.b32.xlu0 %v6026, 16
    %v6041 = vpop.permute.xlu0 %6040
    %6042 = vrot.lane.b32.xlu0 %v6029, 16
    %v6043 = vpop.permute.xlu0 %6042
    %v6046 = vsel %vm935, %v3025, %v6041
    %v6047 = vsel %vm935, %v3028, %v6043
    %v6048 = vsel %vm197, %v6046, %v6034
    %v6049 = vsel %vm197, %v6047, %v6037
    %vm6050 = vcmask 171008
    %v6051 = vsel %vm6050, %v6048, 0.0
    %v6052 = vsel %vm6050, %v6049, 0.0
    %6053 = vst [vmem:[#allocation14] sm:$0xff] %v6051
    %6054 = vst [vmem:[#allocation14 + $0x8] sm:$0xff] %v6052
    // Predicated region
    $region70: #{tpu_custom_call.1} parent=1 // pred_check
      _
    $region71: #{tpu_custom_call.1} parent=1 // pred_check_branch
      %6056 = sbr.rel (0) target = $region73
    $region72: #{tpu_custom_call.1} parent=1 // pred_region
      %s6058 = ssub.s32 256, 256
      %6059 = vsyncadd [#allocation4], %s6058
      %s6060 = sshll.u32 [#allocation14], 4
      %s6061 = int_to_ptr.vmem [resolvable:$true] %s6060
      %6066 = dma.vmem_to_hbm [thread:$0]  %s6061, 256, %s10, [#allocation4], 128, 128, 8
    $region73: #{tpu_custom_call.1} parent=1 // pred_fallthru
      _
    // Predicated region
    $region74: #{tpu_custom_call.1} parent=1 // pred_check
      _
    $region75: #{tpu_custom_call.1} parent=1 // pred_check_branch
      %6068 = sbr.rel (0) target = $region77
    $region76: #{tpu_custom_call.1} parent=1 // pred_region
      %6069 = dma.done [#allocation4], 256
    $region77: #{tpu_custom_call.1} parent=1 // pred_fallthru
      _
    %6070 = vsyncpa [#allocation3], 1
    %6071 = vsyncpa [#allocation6], 1
    %6072 = vsyncpa [#allocation9], 1
    %6073 = vsyncpa [#allocation12], 1
    %6074 = vsyncpa [#allocation4], 1

// kernel: tpu_custom_call.1
$region0: #{tpu_custom_call.1}
  #allocation0 [shape = 'u32[]', space=smem, size = 0x4, offset = 0x4, fixed_abs, tag = 'smem constant byte address 0x4 - core index']
  #allocation1 [shape = 'u32[144,128]{1,0:T(1,128)}', space=vmem, size = 0x12000, scoped, tag = 'internal scratch']
  %s0 = inlined_call_operand.hbm [shape: bf16[16,20], index: 0, kind: input, shape index: {}]
  %s1 = inlined_call_operand.vmem [shape: bf16[16,4], index: 1, kind: input, shape index: {}]
  %s2 = inlined_call_operand.hbm [shape: bf16[20,400], index: 2, kind: input, shape index: {}]
  %s3 = inlined_call_operand.hbm [shape: bf16[3,400,400], index: 3, kind: input, shape index: {}]
  %s4 = inlined_call_operand.vmem [shape: bf16[400,16], index: 4, kind: input, shape index: {}]
  %s5 = inlined_call_operand.hbm [shape: bf16[16,400], index: 5, kind: input, shape index: {}]
  %s6 = inlined_call_operand.hbm [shape: bf16[4,400], index: 6, kind: input, shape index: {}]
  %s7 = inlined_call_operand.hbm [shape: bf16[3,400,400], index: 7, kind: input, shape index: {}]
  %s8 = inlined_call_operand.vmem [shape: bf16[400,4], index: 8, kind: input, shape index: {}]
  %s9 = inlined_call_operand.hbm [shape: f32[10,400], index: 9, kind: input, shape index: {}]
  %s10 = inlined_call_operand.hbm [shape: f32[16,128], index: 10, kind: output, shape index: {}]
  %s11 = sld [smem:[#allocation0]]
  $region78: #{tpu_custom_call.1} parent=0
    _
  %s13 = ssub.s32 1, %s11
  %s14 = scalar_select 0, %s13, %s11
  $region1: #{tpu_custom_call.1} parent=0
    #allocation2 [shape = 'u8[4096]{0}', space=vmem, size = 0x1000, scoped, tag = 'input window, operand 0, single buffered']
    #allocation3 [shape = 's32[1]{0}', space=sflag, size = 0x4, scoped, tag = 'scoped memory for tpu_custom_call.1']
    #allocation4 [shape = 's32[1]{0}', space=sflag, size = 0x4, scoped, tag = 'scoped memory for tpu_custom_call.1']
    #allocation5 [shape = 'u8[24576]{0}', space=vmem, size = 0x6000, scoped, tag = 'input window, operand 2, single buffered']
    #allocation6 [shape = 's32[1]{0}', space=sflag, size = 0x4, scoped, tag = 'scoped memory for tpu_custom_call.1']
    #allocation7 [shape = 'u8[1228800]{0}', space=vmem, size = 0x12c000, scoped, tag = 'input window, operand 3, single buffered']
    #allocation8 [shape = 'u8[16384]{0}', space=vmem, size = 0x4000, scoped, tag = 'input window, operand 5, single buffered']
    #allocation9 [shape = 's32[1]{0}', space=sflag, size = 0x4, scoped, tag = 'scoped memory for tpu_custom_call.1']
    #allocation10 [shape = 'u8[4096]{0}', space=vmem, size = 0x1000, scoped, tag = 'input window, operand 6, single buffered']
    #allocation11 [shape = 'u8[1228800]{0}', space=vmem, size = 0x12c000, scoped, tag = 'input window, operand 7, single buffered']
    #allocation12 [shape = 's32[1]{0}', space=sflag, size = 0x4, scoped, tag = 'scoped memory for tpu_custom_call.1']
    #allocation13 [shape = 'u8[32768]{0}', space=vmem, size = 0x8000, scoped, tag = 'input window, operand 9, single buffered']
    #allocation14 [shape = 'u8[8192]{0}', space=vmem, size = 0x2000, scoped, tag = 'output window, operand 0, single buffered']
    %15 = vsyncpa [#allocation3], 0
    %16 = vsyncpa [#allocation6], 0
    %17 = vsyncpa [#allocation9], 0
    %18 = vsyncpa [#allocation12], 0
    %19 = vsyncpa [#allocation4], 0
    // Predicated region
    $region2: #{tpu_custom_call.1} parent=1 // pred_check
      _
    $region3: #{tpu_custom_call.1} parent=1 // pred_check_branch
      %21 = sbr.rel (0) target = $region5
    $region4: #{tpu_custom_call.1} parent=1 // pred_region
      %s23 = ssub.s32 128, 128
      %24 = vsyncadd [#allocation3], %s23
      %s25 = sshll.u32 [#allocation2], 4
      %s26 = int_to_ptr.vmem [resolvable:$true] %s25
      %31 = dma.hbm_to_vmem [thread:$0]  %s0, 128, %s26, [#allocation3], 64, 64, 4
    $region5: #{tpu_custom_call.1} parent=1 // pred_fallthru
      _
    // Predicated region
    $region6: #{tpu_custom_call.1} parent=1 // pred_check
      _
    $region7: #{tpu_custom_call.1} parent=1 // pred_check_branch
      %33 = sbr.rel (0) target = $region9
    $region8: #{tpu_custom_call.1} parent=1 // pred_region
      _
    $region9: #{tpu_custom_call.1} parent=1 // pred_fallthru
      _
    // Predicated region
    $region10: #{tpu_custom_call.1} parent=1 // pred_check
      _
    $region11: #{tpu_custom_call.1} parent=1 // pred_check_branch
      %35 = sbr.rel (0) target = $region13
    $region12: #{tpu_custom_call.1} parent=1 // pred_region
      %s37 = ssub.s32 768, 768
      %38 = vsyncadd [#allocation6], %s37
      %s39 = sshll.u32 [#allocation5], 4
      %s40 = int_to_ptr.vmem [resolvable:$true] %s39
      %45 = dma.hbm_to_vmem [thread:$0]  %s2, 768, %s40, [#allocation6], 256, 256, 16
    $region13: #{tpu_custom_call.1} parent=1 // pred_fallthru
      _
    // Predicated region
    $region14: #{tpu_custom_call.1} parent=1 // pred_check
      _
    $region15: #{tpu_custom_call.1} parent=1 // pred_check_branch
      %47 = sbr.rel (0) target = $region17
    $region16: #{tpu_custom_call.1} parent=1 // pred_region
      %s49 = ssub.s32 38400, 38400
      %50 = vsyncadd [#allocation6], %s49
      %s51 = sshll.u32 [#allocation7], 4
      %s52 = int_to_ptr.vmem [resolvable:$true] %s51
      %57 = dma.hbm_to_vmem [thread:$0]  %s3, 38400, %s52, [#allocation6], 256, 256, 16
    $region17: #{tpu_custom_call.1} parent=1 // pred_fallthru
      _
    // Predicated region
    $region18: #{tpu_custom_call.1} parent=1 // pred_check
      _
    $region19: #{tpu_custom_call.1} parent=1 // pred_check_branch
      %59 = sbr.rel (0) target = $region21
    $region20: #{tpu_custom_call.1} parent=1 // pred_region
      _
    $region21: #{tpu_custom_call.1} parent=1 // pred_fallthru
      _
    // Predicated region
    $region22: #{tpu_custom_call.1} parent=1 // pred_check
      _
    $region23: #{tpu_custom_call.1} parent=1 // pred_check_branch
      %61 = sbr.rel (0) target = $region25
    $region24: #{tpu_custom_call.1} parent=1 // pred_region
      %s63 = ssub.s32 512, 512
      %64 = vsyncadd [#allocation9], %s63
      %s65 = sshll.u32 [#allocation8], 4
      %s66 = int_to_ptr.vmem [resolvable:$true] %s65
      %71 = dma.hbm_to_vmem [thread:$0]  %s5, 512, %s66, [#allocation9], 256, 256, 16
    $region25: #{tpu_custom_call.1} parent=1 // pred_fallthru
      _
    // Predicated region
    $region26: #{tpu_custom_call.1} parent=1 // pred_check
      _
    $region27: #{tpu_custom_call.1} parent=1 // pred_check_branch
      %73 = sbr.rel (0) target = $region29
    $region28: #{tpu_custom_call.1} parent=1 // pred_region
      %s75 = ssub.s32 128, 128
      %76 = vsyncadd [#allocation9], %s75
      %s78 = sshll.u32 [#allocation10], 4
      %s79 = int_to_ptr.vmem [resolvable:$true] %s78
      %81 = dma.hbm_to_vmem [thread:$0]  %s6, 128, %s79, [#allocation9]
    $region29: #{tpu_custom_call.1} parent=1 // pred_fallthru
      _
    // Predicated region
    $region30: #{tpu_custom_call.1} parent=1 // pred_check
      _
    $region31: #{tpu_custom_call.1} parent=1 // pred_check_branch
      %83 = sbr.rel (0) target = $region33
    $region32: #{tpu_custom_call.1} parent=1 // pred_region
      %s85 = ssub.s32 38400, 38400
      %86 = vsyncadd [#allocation12], %s85
      %s87 = sshll.u32 [#allocation11], 4
      %s88 = int_to_ptr.vmem [resolvable:$true] %s87
      %93 = dma.hbm_to_vmem [thread:$0]  %s7, 38400, %s88, [#allocation12], 256, 256, 16
    $region33: #{tpu_custom_call.1} parent=1 // pred_fallthru
      _
    // Predicated region
    $region34: #{tpu_custom_call.1} parent=1 // pred_check
      _
    $region35: #{tpu_custom_call.1} parent=1 // pred_check_branch
      %95 = sbr.rel (0) target = $region37
    $region36: #{tpu_custom_call.1} parent=1 // pred_region
      _
    $region37: #{tpu_custom_call.1} parent=1 // pred_fallthru
      _
    // Predicated region
    $region38: #{tpu_custom_call.1} parent=1 // pred_check
      _
    $region39: #{tpu_custom_call.1} parent=1 // pred_check_branch
      %97 = sbr.rel (0) target = $region41
    $region40: #{tpu_custom_call.1} parent=1 // pred_region
      %s99 = ssub.s32 1024, 1024
      %100 = vsyncadd [#allocation12], %s99
      %s101 = sshll.u32 [#allocation13], 4
      %s102 = int_to_ptr.vmem [resolvable:$true] %s101
      %107 = dma.hbm_to_vmem [thread:$0]  %s9, 1024, %s102, [#allocation12], 512, 512, 32
    $region41: #{tpu_custom_call.1} parent=1 // pred_fallthru
      _
    // Predicated region
    $region42: #{tpu_custom_call.1} parent=1 // pred_check
      _
    $region43: #{tpu_custom_call.1} parent=1 // pred_check_branch
      %109 = sbr.rel (0) target = $region45
    $region44: #{tpu_custom_call.1} parent=1 // pred_region
      %110 = dma.done [#allocation3], 128
    $region45: #{tpu_custom_call.1} parent=1 // pred_fallthru
      _
    // Predicated region
    $region46: #{tpu_custom_call.1} parent=1 // pred_check
      _
    $region47: #{tpu_custom_call.1} parent=1 // pred_check_branch
      %112 = sbr.rel (0) target = $region49
    $region48: #{tpu_custom_call.1} parent=1 // pred_region
      %113 = dma.done [#allocation6], 768
    $region49: #{tpu_custom_call.1} parent=1 // pred_fallthru
      _
    // Predicated region
    $region50: #{tpu_custom_call.1} parent=1 // pred_check
      _
    $region51: #{tpu_custom_call.1} parent=1 // pred_check_branch
      %115 = sbr.rel (0) target = $region53
    $region52: #{tpu_custom_call.1} parent=1 // pred_region
      %116 = dma.done [#allocation6], 38400
    $region53: #{tpu_custom_call.1} parent=1 // pred_fallthru
      _
    // Predicated region
    $region54: #{tpu_custom_call.1} parent=1 // pred_check
      _
    $region55: #{tpu_custom_call.1} parent=1 // pred_check_branch
      %118 = sbr.rel (0) target = $region57
    $region56: #{tpu_custom_call.1} parent=1 // pred_region
      %119 = dma.done [#allocation9], 512
    $region57: #{tpu_custom_call.1} parent=1 // pred_fallthru
      _
    // Predicated region
    $region58: #{tpu_custom_call.1} parent=1 // pred_check
      _
    $region59: #{tpu_custom_call.1} parent=1 // pred_check_branch
      %121 = sbr.rel (0) target = $region61
    $region60: #{tpu_custom_call.1} parent=1 // pred_region
      %122 = dma.done [#allocation9], 128
    $region61: #{tpu_custom_call.1} parent=1 // pred_fallthru
      _
    // Predicated region
    $region62: #{tpu_custom_call.1} parent=1 // pred_check
      _
    $region63: #{tpu_custom_call.1} parent=1 // pred_check_branch
      %124 = sbr.rel (0) target = $region65
    $region64: #{tpu_custom_call.1} parent=1 // pred_region
      %125 = dma.done [#allocation12], 38400
    $region65: #{tpu_custom_call.1} parent=1 // pred_fallthru
      _
    // Predicated region
    $region66: #{tpu_custom_call.1} parent=1 // pred_check
      _
    $region67: #{tpu_custom_call.1} parent=1 // pred_check_branch
      %127 = sbr.rel (0) target = $region69
    $region68: #{tpu_custom_call.1} parent=1 // pred_region
      %128 = dma.done [#allocation12], 1024
    $region69: #{tpu_custom_call.1} parent=1 // pred_fallthru
      _
    %v130 = vld [vmem:[#allocation2] sm:$0xf]
    %v131 = vld [vmem:[#allocation2 + $0x4] sm:$0xf]
    %v132 = vld [vmem:[%s1] sm:$0xf]
    %v133 = vld [vmem:[%s1 + $0x4] sm:$0xf]
    %v134 = vld [vmem:[#allocation5] sm:$0xff]
    %v135 = vld [vmem:[#allocation5 + $0x8] sm:$0xff]
    %v136 = vld [vmem:[#allocation5 + $0x10] sm:$0xff]
    %v137 = vld [vmem:[#allocation5 + $0x18] sm:$0xff]
    %v138 = vld [vmem:[#allocation5 + $0x20] sm:$0x33]
    %v139 = vld [vmem:[#allocation5 + $0x28] sm:$0x33]
    %v140 = vld [vmem:[#allocation13] ss:$8 sm:$0xf]
    %v142 = vlaneseq
    %v143 = vshrl.u32 %v142, 7
    %v144 = vsub.s32 0, %v143
    %v145 = vrot.slane %v140, %v144
    %v146 = vlaneseq
    %v147 = vshrl.u32 %v146, 7
    %v148 = vsub.s32 1, %v147
    %v149 = vrot.slane %v140, %v148
    %v150 = vlaneseq
    %v151 = vshrl.u32 %v150, 7
    %v152 = vsub.s32 2, %v151
    %v153 = vrot.slane %v140, %v152
    %v154 = vlaneseq
    %v155 = vshrl.u32 %v154, 7
    %v156 = vsub.s32 3, %v155
    %v157 = vrot.slane %v140, %v156
    %v164 = vunpack.c.l.b16 %v130
    %v165 = vunpack.c.l.b16 %v131
    %v166 = vpack.c.b16 %v165, %v164
    %v173 = vunpack.c.l.b16 %v134
    %v174 = vunpack.c.h.b16 %v134
    %v175 = vunpack.c.l.b16 %v135
    %v176 = vunpack.c.h.b16 %v135
    %v177 = vunpack.c.l.b16 %v136
    %v178 = vunpack.c.h.b16 %v136
    %v179 = vunpack.c.l.b16 %v137
    %v180 = vunpack.c.h.b16 %v137
    %v181 = vunpack.c.l.b16 %v138
    %v182 = vunpack.c.h.b16 %v138
    %v183 = vunpack.c.l.b16 %v139
    %v184 = vunpack.c.h.b16 %v139
    %v185 = vpack.c.b16 %v177, %v173
    %v186 = vpack.c.b16 %v178, %v174
    %v187 = vpack.c.b16 %v179, %v175
    %v188 = vpack.c.b16 %v180, %v176
    %v189 = vpack.c.b16 %v181, %v181
    %v190 = vpack.c.b16 %v182, %v182
    %v191 = vpack.c.b16 %v183, %v183
    %v192 = vpack.c.b16 %v184, %v184
    %vm197 = vcmask 162816
    %v199 = vsel %vm197, %v166, 0
    %vm201 = vcmask 1041408
    %v203 = vsel %vm201, %v189, 0
    %v206 = vsel %vm201, %v190, 0
    %v209 = vsel %vm201, %v191, 0
    %v212 = vsel %vm201, %v192, 0
    %214 = vmatprep.subr.bf16.mxu0 %v186
    %215 = vmatpush1.bf16.msra.mxu0 %v185
    %216 = vmatprep.subr.bf16.mxu0 %v206
    %217 = vmatpush1.bf16.msra.mxu0 %v203
    %218 = vmatprep.subr.bf16.mxu0 0
    %219 = vmatpush1.bf16.msra.mxu0 0
    %220 = vmatprep.subr.bf16.mxu0 0
    %221 = vmatpush1.bf16.msra.mxu0 0
    %222 = vmatprep.subr.bf16.mxu0 0
    %223 = vmatpush1.bf16.msra.mxu0 0
    %224 = vmatprep.subr.bf16.mxu0 0
    %225 = vmatpush1.bf16.msra.mxu0 0
    %226 = vmatprep.subr.bf16.mxu0 0
    %227 = vmatpush1.bf16.msra.mxu0 0
    %228 = vmatprep.subr.bf16.mxu0 0
    %229 = vmatpush1.bf16.msra.mxu0 0
    %230 = vmatprep.subr.bf16.mxu0 0
    %231 = vmatpush1.bf16.msra.mxu0 0
    %232 = vmatprep.subr.bf16.mxu0 0
    %233 = vmatpush1.bf16.msra.mxu0 0
    %234 = vmatprep.subr.bf16.mxu0 0
    %235 = vmatpush1.bf16.msra.mxu0 0
    %236 = vmatprep.subr.bf16.mxu0 0
    %237 = vmatpush1.bf16.msra.mxu0 0
    %238 = vmatprep.subr.bf16.mxu0 0
    %239 = vmatpush1.bf16.msra.mxu0 0
    %240 = vmatprep.subr.bf16.mxu0 0
    %241 = vmatpush1.bf16.msra.mxu0 0
    %242 = vmatprep.subr.bf16.mxu0 0
    %243 = vmatpush1.bf16.msra.mxu0 0
    %244 = vmatprep.subr.bf16.mxu0 0
    %245 = vmatpush1.bf16.msra.mxu0 0
    %246 = vmatprep.mubr.bf16.mxu0 0
    %247 = vmatmul.mubr.bf16.gmra.mrb[0].mxu0 %v199
    %v248 = vpop.f32.mrb[0].mxu0
    %v249 = vadd.f32 %v145, %v248
    %v250 = vpop.f32.mrb[0].mxu0
    %v251 = vadd.f32 %v149, %v250
    %v252 = vpop.f32.mrb[0].mxu0
    %v253 = vadd.f32 %v145, %v252
    %v254 = vpop.f32.mrb[0].mxu0
    %v255 = vadd.f32 %v149, %v254
    %256 = vdwg.mxu0
    %257 = vmatprep.subr.bf16.mxu0 %v188
    %258 = vmatpush1.bf16.msra.mxu0 %v187
    %259 = vmatprep.subr.bf16.mxu0 %v212
    %260 = vmatpush1.bf16.msra.mxu0 %v209
    %261 = vmatprep.subr.bf16.mxu0 0
    %262 = vmatpush1.bf16.msra.mxu0 0
    %263 = vmatprep.subr.bf16.mxu0 0
    %264 = vmatpush1.bf16.msra.mxu0 0
    %265 = vmatprep.subr.bf16.mxu0 0
    %266 = vmatpush1.bf16.msra.mxu0 0
    %267 = vmatprep.subr.bf16.mxu0 0
    %268 = vmatpush1.bf16.msra.mxu0 0
    %269 = vmatprep.subr.bf16.mxu0 0
    %270 = vmatpush1.bf16.msra.mxu0 0
    %271 = vmatprep.subr.bf16.mxu0 0
    %272 = vmatpush1.bf16.msra.mxu0 0
    %273 = vmatprep.subr.bf16.mxu0 0
    %274 = vmatpush1.bf16.msra.mxu0 0
    %275 = vmatprep.subr.bf16.mxu0 0
    %276 = vmatpush1.bf16.msra.mxu0 0
    %277 = vmatprep.subr.bf16.mxu0 0
    %278 = vmatpush1.bf16.msra.mxu0 0
    %279 = vmatprep.subr.bf16.mxu0 0
    %280 = vmatpush1.bf16.msra.mxu0 0
    %281 = vmatprep.subr.bf16.mxu0 0
    %282 = vmatpush1.bf16.msra.mxu0 0
    %283 = vmatprep.subr.bf16.mxu0 0
    %284 = vmatpush1.bf16.msra.mxu0 0
    %285 = vmatprep.subr.bf16.mxu0 0
    %286 = vmatpush1.bf16.msra.mxu0 0
    %287 = vmatprep.subr.bf16.mxu0 0
    %288 = vmatpush1.bf16.msra.mxu0 0
    %289 = vmatprep.mubr.bf16.mxu0 0
    %290 = vmatmul.mubr.bf16.gmra.mrb[0].mxu0 %v199
    %v291 = vpop.f32.mrb[0].mxu0
    %v292 = vadd.f32 %v153, %v291
    %v293 = vpop.f32.mrb[0].mxu0
    %v294 = vadd.f32 %v157, %v293
    %v295 = vpop.f32.mrb[0].mxu0
    %v296 = vadd.f32 %v153, %v295
    %v297 = vpop.f32.mrb[0].mxu0
    %v298 = vadd.f32 %v157, %v297
    %299 = vdwg.mxu0
    %v300 = vmax.f32 %v249, 0.0
    %v301 = vmax.f32 %v251, 0.0
    %v302 = vmax.f32 %v292, 0.0
    %v303 = vmax.f32 %v294, 0.0
    %v304 = vmax.f32 %v253, 0.0
    %v305 = vmax.f32 %v255, 0.0
    %v306 = vmax.f32 %v296, 0.0
    %v307 = vmax.f32 %v298, 0.0
    %v308 = vld [vmem:[#allocation7] sm:$0xff]
    %v309 = vld [vmem:[#allocation7 + $0x8] sm:$0xff]
    %v310 = vld [vmem:[#allocation7 + $0x10] sm:$0xff]
    %v311 = vld [vmem:[#allocation7 + $0x18] sm:$0xff]
    %v312 = vld [vmem:[#allocation7 + $0x20] sm:$0xff]
    %v313 = vld [vmem:[#allocation7 + $0x28] sm:$0xff]
    %v314 = vld [vmem:[#allocation7 + $0x30] sm:$0xff]
    %v315 = vld [vmem:[#allocation7 + $0x38] sm:$0xff]
    %v316 = vld [vmem:[#allocation7 + $0x40] sm:$0xff]
    %v317 = vld [vmem:[#allocation7 + $0x48] sm:$0xff]
    %v318 = vld [vmem:[#allocation7 + $0x50] sm:$0xff]
    %v319 = vld [vmem:[#allocation7 + $0x58] sm:$0xff]
    %v320 = vld [vmem:[#allocation7 + $0x60] sm:$0xff]
    %v321 = vld [vmem:[#allocation7 + $0x68] sm:$0xff]
    %v322 = vld [vmem:[#allocation7 + $0x70] sm:$0xff]
    %v323 = vld [vmem:[#allocation7 + $0x78] sm:$0xff]
    %v324 = vld [vmem:[#allocation7 + $0x80] sm:$0xff]
    %v325 = vld [vmem:[#allocation7 + $0x88] sm:$0xff]
    %v326 = vld [vmem:[#allocation7 + $0x90] sm:$0xff]
    %v327 = vld [vmem:[#allocation7 + $0x98] sm:$0xff]
    %v328 = vld [vmem:[#allocation7 + $0xa0] sm:$0xff]
    %v329 = vld [vmem:[#allocation7 + $0xa8] sm:$0xff]
    %v330 = vld [vmem:[#allocation7 + $0xb0] sm:$0xff]
    %v331 = vld [vmem:[#allocation7 + $0xb8] sm:$0xff]
    %v332 = vld [vmem:[#allocation7 + $0xc0] sm:$0xff]
    %v333 = vld [vmem:[#allocation7 + $0xc8] sm:$0xff]
    %v334 = vld [vmem:[#allocation7 + $0xd0] sm:$0xff]
    %v335 = vld [vmem:[#allocation7 + $0xd8] sm:$0xff]
    %v336 = vld [vmem:[#allocation7 + $0xe0] sm:$0xff]
    %v337 = vld [vmem:[#allocation7 + $0xe8] sm:$0xff]
    %v338 = vld [vmem:[#allocation7 + $0xf0] sm:$0xff]
    %v339 = vld [vmem:[#allocation7 + $0xf8] sm:$0xff]
    %v340 = vld [vmem:[#allocation7 + $0x100] sm:$0xff]
    %v341 = vld [vmem:[#allocation7 + $0x108] sm:$0xff]
    %v342 = vld [vmem:[#allocation7 + $0x110] sm:$0xff]
    %v343 = vld [vmem:[#allocation7 + $0x118] sm:$0xff]
    %v344 = vld [vmem:[#allocation7 + $0x120] sm:$0xff]
    %v345 = vld [vmem:[#allocation7 + $0x128] sm:$0xff]
    %v346 = vld [vmem:[#allocation7 + $0x130] sm:$0xff]
    %v347 = vld [vmem:[#allocation7 + $0x138] sm:$0xff]
    %v348 = vld [vmem:[#allocation7 + $0x140] sm:$0xff]
    %v349 = vld [vmem:[#allocation7 + $0x148] sm:$0xff]
    %v350 = vld [vmem:[#allocation7 + $0x150] sm:$0xff]
    %v351 = vld [vmem:[#allocation7 + $0x158] sm:$0xff]
    %v352 = vld [vmem:[#allocation7 + $0x160] sm:$0xff]
    %v353 = vld [vmem:[#allocation7 + $0x168] sm:$0xff]
    %v354 = vld [vmem:[#allocation7 + $0x170] sm:$0xff]
    %v355 = vld [vmem:[#allocation7 + $0x178] sm:$0xff]
    %v356 = vld [vmem:[#allocation7 + $0x180] sm:$0xff]
    %v357 = vld [vmem:[#allocation7 + $0x188] sm:$0xff]
    %v358 = vld [vmem:[#allocation7 + $0x190] sm:$0xff]
    %v359 = vld [vmem:[#allocation7 + $0x198] sm:$0xff]
    %v360 = vld [vmem:[#allocation7 + $0x1a0] sm:$0xff]
    %v361 = vld [vmem:[#allocation7 + $0x1a8] sm:$0xff]
    %v362 = vld [vmem:[#allocation7 + $0x1b0] sm:$0xff]
    %v363 = vld [vmem:[#allocation7 + $0x1b8] sm:$0xff]
    %v364 = vld [vmem:[#allocation7 + $0x1c0] sm:$0xff]
    %v365 = vld [vmem:[#allocation7 + $0x1c8] sm:$0xff]
    %v366 = vld [vmem:[#allocation7 + $0x1d0] sm:$0xff]
    %v367 = vld [vmem:[#allocation7 + $0x1d8] sm:$0xff]
    %v368 = vld [vmem:[#allocation7 + $0x1e0] sm:$0xff]
    %v369 = vld [vmem:[#allocation7 + $0x1e8] sm:$0xff]
    %v370 = vld [vmem:[#allocation7 + $0x1f0] sm:$0xff]
    %v371 = vld [vmem:[#allocation7 + $0x1f8] sm:$0xff]
    %v372 = vld [vmem:[#allocation7 + $0x200] sm:$0xff]
    %v373 = vld [vmem:[#allocation7 + $0x208] sm:$0xff]
    %v374 = vld [vmem:[#allocation7 + $0x210] sm:$0xff]
    %v375 = vld [vmem:[#allocation7 + $0x218] sm:$0xff]
    %v376 = vld [vmem:[#allocation7 + $0x220] sm:$0xff]
    %v377 = vld [vmem:[#allocation7 + $0x228] sm:$0xff]
    %v378 = vld [vmem:[#allocation7 + $0x230] sm:$0xff]
    %v379 = vld [vmem:[#allocation7 + $0x238] sm:$0xff]
    %v380 = vld [vmem:[#allocation7 + $0x240] sm:$0xff]
    %v381 = vld [vmem:[#allocation7 + $0x248] sm:$0xff]
    %v382 = vld [vmem:[#allocation7 + $0x250] sm:$0xff]
    %v383 = vld [vmem:[#allocation7 + $0x258] sm:$0xff]
    %v384 = vld [vmem:[#allocation7 + $0x260] sm:$0xff]
    %v385 = vld [vmem:[#allocation7 + $0x268] sm:$0xff]
    %v386 = vld [vmem:[#allocation7 + $0x270] sm:$0xff]
    %v387 = vld [vmem:[#allocation7 + $0x278] sm:$0xff]
    %v388 = vld [vmem:[#allocation7 + $0x280] sm:$0xff]
    %v389 = vld [vmem:[#allocation7 + $0x288] sm:$0xff]
    %v390 = vld [vmem:[#allocation7 + $0x290] sm:$0xff]
    %v391 = vld [vmem:[#allocation7 + $0x298] sm:$0xff]
    %v392 = vld [vmem:[#allocation7 + $0x2a0] sm:$0xff]
    %v393 = vld [vmem:[#allocation7 + $0x2a8] sm:$0xff]
    %v394 = vld [vmem:[#allocation7 + $0x2b0] sm:$0xff]
    %v395 = vld [vmem:[#allocation7 + $0x2b8] sm:$0xff]
    %v396 = vld [vmem:[#allocation7 + $0x2c0] sm:$0xff]
    %v397 = vld [vmem:[#allocation7 + $0x2c8] sm:$0xff]
    %v398 = vld [vmem:[#allocation7 + $0x2d0] sm:$0xff]
    %v399 = vld [vmem:[#allocation7 + $0x2d8] sm:$0xff]
    %v400 = vld [vmem:[#allocation7 + $0x2e0] sm:$0xff]
    %v401 = vld [vmem:[#allocation7 + $0x2e8] sm:$0xff]
    %v402 = vld [vmem:[#allocation7 + $0x2f0] sm:$0xff]
    %v403 = vld [vmem:[#allocation7 + $0x2f8] sm:$0xff]
    %v404 = vld [vmem:[#allocation7 + $0x300] sm:$0xff]
    %v405 = vld [vmem:[#allocation7 + $0x308] sm:$0xff]
    %v406 = vld [vmem:[#allocation7 + $0x310] sm:$0xff]
    %v407 = vld [vmem:[#allocation7 + $0x318] sm:$0xff]
    %v408 = vpack.c.bf16 %v304, %v300
    %v409 = vpack.c.bf16 %v305, %v301
    %v410 = vpack.c.bf16 %v306, %v302
    %v411 = vpack.c.bf16 %v307, %v303
    %s412 = scalar_lea.vmem [#allocation13], 1
    %v413 = vld [vmem:[%s412] ss:$8 sm:$0xf]
    %v415 = vlaneseq
    %v416 = vshrl.u32 %v415, 7
    %v417 = vsub.s32 0, %v416
    %v418 = vrot.slane %v413, %v417
    %v419 = vlaneseq
    %v420 = vshrl.u32 %v419, 7
    %v421 = vsub.s32 1, %v420
    %v422 = vrot.slane %v413, %v421
    %v423 = vlaneseq
    %v424 = vshrl.u32 %v423, 7
    %v425 = vsub.s32 2, %v424
    %v426 = vrot.slane %v413, %v425
    %v427 = vlaneseq
    %v428 = vshrl.u32 %v427, 7
    %v429 = vsub.s32 3, %v428
    %v430 = vrot.slane %v413, %v429
    %v535 = vunpack.c.l.b16 %v308
    %v536 = vunpack.c.h.b16 %v308
    %v537 = vunpack.c.l.b16 %v309
    %v538 = vunpack.c.h.b16 %v309
    %v539 = vunpack.c.l.b16 %v310
    %v540 = vunpack.c.h.b16 %v310
    %v541 = vunpack.c.l.b16 %v311
    %v542 = vunpack.c.h.b16 %v311
    %v543 = vunpack.c.l.b16 %v312
    %v544 = vunpack.c.h.b16 %v312
    %v545 = vunpack.c.l.b16 %v313
    %v546 = vunpack.c.h.b16 %v313
    %v547 = vunpack.c.l.b16 %v314
    %v548 = vunpack.c.h.b16 %v314
    %v549 = vunpack.c.l.b16 %v315
    %v550 = vunpack.c.h.b16 %v315
    %v551 = vunpack.c.l.b16 %v316
    %v552 = vunpack.c.h.b16 %v316
    %v553 = vunpack.c.l.b16 %v317
    %v554 = vunpack.c.h.b16 %v317
    %v555 = vunpack.c.l.b16 %v318
    %v556 = vunpack.c.h.b16 %v318
    %v557 = vunpack.c.l.b16 %v319
    %v558 = vunpack.c.h.b16 %v319
    %v559 = vunpack.c.l.b16 %v320
    %v560 = vunpack.c.h.b16 %v320
    %v561 = vunpack.c.l.b16 %v321
    %v562 = vunpack.c.h.b16 %v321
    %v563 = vunpack.c.l.b16 %v322
    %v564 = vunpack.c.h.b16 %v322
    %v565 = vunpack.c.l.b16 %v323
    %v566 = vunpack.c.h.b16 %v323
    %v567 = vunpack.c.l.b16 %v324
    %v568 = vunpack.c.h.b16 %v324
    %v569 = vunpack.c.l.b16 %v325
    %v570 = vunpack.c.h.b16 %v325
    %v571 = vunpack.c.l.b16 %v326
    %v572 = vunpack.c.h.b16 %v326
    %v573 = vunpack.c.l.b16 %v327
    %v574 = vunpack.c.h.b16 %v327
    %v575 = vunpack.c.l.b16 %v328
    %v576 = vunpack.c.h.b16 %v328
    %v577 = vunpack.c.l.b16 %v329
    %v578 = vunpack.c.h.b16 %v329
    %v579 = vunpack.c.l.b16 %v330
    %v580 = vunpack.c.h.b16 %v330
    %v581 = vunpack.c.l.b16 %v331
    %v582 = vunpack.c.h.b16 %v331
    %v583 = vunpack.c.l.b16 %v332
    %v584 = vunpack.c.h.b16 %v332
    %v585 = vunpack.c.l.b16 %v333
    %v586 = vunpack.c.h.b16 %v333
    %v587 = vunpack.c.l.b16 %v334
    %v588 = vunpack.c.h.b16 %v334
    %v589 = vunpack.c.l.b16 %v335
    %v590 = vunpack.c.h.b16 %v335
    %v591 = vunpack.c.l.b16 %v336
    %v592 = vunpack.c.h.b16 %v336
    %v593 = vunpack.c.l.b16 %v337
    %v594 = vunpack.c.h.b16 %v337
    %v595 = vunpack.c.l.b16 %v338
    %v596 = vunpack.c.h.b16 %v338
    %v597 = vunpack.c.l.b16 %v339
    %v598 = vunpack.c.h.b16 %v339
    %v599 = vunpack.c.l.b16 %v340
    %v600 = vunpack.c.h.b16 %v340
    %v601 = vunpack.c.l.b16 %v341
    %v602 = vunpack.c.h.b16 %v341
    %v603 = vunpack.c.l.b16 %v342
    %v604 = vunpack.c.h.b16 %v342
    %v605 = vunpack.c.l.b16 %v343
    %v606 = vunpack.c.h.b16 %v343
    %v607 = vunpack.c.l.b16 %v344
    %v608 = vunpack.c.h.b16 %v344
    %v609 = vunpack.c.l.b16 %v345
    %v610 = vunpack.c.h.b16 %v345
    %v611 = vunpack.c.l.b16 %v346
    %v612 = vunpack.c.h.b16 %v346
    %v613 = vunpack.c.l.b16 %v347
    %v614 = vunpack.c.h.b16 %v347
    %v615 = vunpack.c.l.b16 %v348
    %v616 = vunpack.c.h.b16 %v348
    %v617 = vunpack.c.l.b16 %v349
    %v618 = vunpack.c.h.b16 %v349
    %v619 = vunpack.c.l.b16 %v350
    %v620 = vunpack.c.h.b16 %v350
    %v621 = vunpack.c.l.b16 %v351
    %v622 = vunpack.c.h.b16 %v351
    %v623 = vunpack.c.l.b16 %v352
    %v624 = vunpack.c.h.b16 %v352
    %v625 = vunpack.c.l.b16 %v353
    %v626 = vunpack.c.h.b16 %v353
    %v627 = vunpack.c.l.b16 %v354
    %v628 = vunpack.c.h.b16 %v354
    %v629 = vunpack.c.l.b16 %v355
    %v630 = vunpack.c.h.b16 %v355
    %v631 = vunpack.c.l.b16 %v356
    %v632 = vunpack.c.h.b16 %v356
    %v633 = vunpack.c.l.b16 %v357
    %v634 = vunpack.c.h.b16 %v357
    %v635 = vunpack.c.l.b16 %v358
    %v636 = vunpack.c.h.b16 %v358
    %v637 = vunpack.c.l.b16 %v359
    %v638 = vunpack.c.h.b16 %v359
    %v639 = vunpack.c.l.b16 %v360
    %v640 = vunpack.c.h.b16 %v360
    %v641 = vunpack.c.l.b16 %v361
    %v642 = vunpack.c.h.b16 %v361
    %v643 = vunpack.c.l.b16 %v362
    %v644 = vunpack.c.h.b16 %v362
    %v645 = vunpack.c.l.b16 %v363
    %v646 = vunpack.c.h.b16 %v363
    %v647 = vunpack.c.l.b16 %v364
    %v648 = vunpack.c.h.b16 %v364
    %v649 = vunpack.c.l.b16 %v365
    %v650 = vunpack.c.h.b16 %v365
    %v651 = vunpack.c.l.b16 %v366
    %v652 = vunpack.c.h.b16 %v366
    %v653 = vunpack.c.l.b16 %v367
    %v654 = vunpack.c.h.b16 %v367
    %v655 = vunpack.c.l.b16 %v368
    %v656 = vunpack.c.h.b16 %v368
    %v657 = vunpack.c.l.b16 %v369
    %v658 = vunpack.c.h.b16 %v369
    %v659 = vunpack.c.l.b16 %v370
    %v660 = vunpack.c.h.b16 %v370
    %v661 = vunpack.c.l.b16 %v371
    %v662 = vunpack.c.h.b16 %v371
    %v663 = vunpack.c.l.b16 %v372
    %v664 = vunpack.c.h.b16 %v372
    %v665 = vunpack.c.l.b16 %v373
    %v666 = vunpack.c.h.b16 %v373
    %v667 = vunpack.c.l.b16 %v374
    %v668 = vunpack.c.h.b16 %v374
    %v669 = vunpack.c.l.b16 %v375
    %v670 = vunpack.c.h.b16 %v375
    %v671 = vunpack.c.l.b16 %v376
    %v672 = vunpack.c.h.b16 %v376
    %v673 = vunpack.c.l.b16 %v377
    %v674 = vunpack.c.h.b16 %v377
    %v675 = vunpack.c.l.b16 %v378
    %v676 = vunpack.c.h.b16 %v378
    %v677 = vunpack.c.l.b16 %v379
    %v678 = vunpack.c.h.b16 %v379
    %v679 = vunpack.c.l.b16 %v380
    %v680 = vunpack.c.h.b16 %v380
    %v681 = vunpack.c.l.b16 %v381
    %v682 = vunpack.c.h.b16 %v381
    %v683 = vunpack.c.l.b16 %v382
    %v684 = vunpack.c.h.b16 %v382
    %v685 = vunpack.c.l.b16 %v383
    %v686 = vunpack.c.h.b16 %v383
    %v687 = vunpack.c.l.b16 %v384
    %v688 = vunpack.c.h.b16 %v384
    %v689 = vunpack.c.l.b16 %v385
    %v690 = vunpack.c.h.b16 %v385
    %v691 = vunpack.c.l.b16 %v386
    %v692 = vunpack.c.h.b16 %v386
    %v693 = vunpack.c.l.b16 %v387
    %v694 = vunpack.c.h.b16 %v387
    %v695 = vunpack.c.l.b16 %v388
    %v696 = vunpack.c.h.b16 %v388
    %v697 = vunpack.c.l.b16 %v389
    %v698 = vunpack.c.h.b16 %v389
    %v699 = vunpack.c.l.b16 %v390
    %v700 = vunpack.c.h.b16 %v390
    %v701 = vunpack.c.l.b16 %v391
    %v702 = vunpack.c.h.b16 %v391
    %v703 = vunpack.c.l.b16 %v392
    %v704 = vunpack.c.h.b16 %v392
    %v705 = vunpack.c.l.b16 %v393
    %v706 = vunpack.c.h.b16 %v393
    %v707 = vunpack.c.l.b16 %v394
    %v708 = vunpack.c.h.b16 %v394
    %v709 = vunpack.c.l.b16 %v395
    %v710 = vunpack.c.h.b16 %v395
    %v711 = vunpack.c.l.b16 %v396
    %v712 = vunpack.c.h.b16 %v396
    %v713 = vunpack.c.l.b16 %v397
    %v714 = vunpack.c.h.b16 %v397
    %v715 = vunpack.c.l.b16 %v398
    %v716 = vunpack.c.h.b16 %v398
    %v717 = vunpack.c.l.b16 %v399
    %v718 = vunpack.c.h.b16 %v399
    %v719 = vunpack.c.l.b16 %v400
    %v720 = vunpack.c.h.b16 %v400
    %v721 = vunpack.c.l.b16 %v401
    %v722 = vunpack.c.h.b16 %v401
    %v723 = vunpack.c.l.b16 %v402
    %v724 = vunpack.c.h.b16 %v402
    %v725 = vunpack.c.l.b16 %v403
    %v726 = vunpack.c.h.b16 %v403
    %v727 = vunpack.c.l.b16 %v404
    %v728 = vunpack.c.h.b16 %v404
    %v729 = vunpack.c.l.b16 %v405
    %v730 = vunpack.c.h.b16 %v405
    %v731 = vunpack.c.l.b16 %v406
    %v732 = vunpack.c.h.b16 %v406
    %v733 = vunpack.c.l.b16 %v407
    %v734 = vunpack.c.h.b16 %v407
    %v735 = vpack.c.b16 %v539, %v535
    %v736 = vpack.c.b16 %v540, %v536
    %v737 = vpack.c.b16 %v541, %v537
    %v738 = vpack.c.b16 %v542, %v538
    %v739 = vpack.c.b16 %v547, %v543
    %v740 = vpack.c.b16 %v548, %v544
    %v741 = vpack.c.b16 %v549, %v545
    %v742 = vpack.c.b16 %v550, %v546
    %v743 = vpack.c.b16 %v555, %v551
    %v744 = vpack.c.b16 %v556, %v552
    %v745 = vpack.c.b16 %v557, %v553
    %v746 = vpack.c.b16 %v558, %v554
    %v747 = vpack.c.b16 %v563, %v559
    %v748 = vpack.c.b16 %v564, %v560
    %v749 = vpack.c.b16 %v565, %v561
    %v750 = vpack.c.b16 %v566, %v562
    %v751 = vpack.c.b16 %v571, %v567
    %v752 = vpack.c.b16 %v572, %v568
    %v753 = vpack.c.b16 %v573, %v569
    %v754 = vpack.c.b16 %v574, %v570
    %v755 = vpack.c.b16 %v579, %v575
    %v756 = vpack.c.b16 %v580, %v576
    %v757 = vpack.c.b16 %v581, %v577
    %v758 = vpack.c.b16 %v582, %v578
    %v759 = vpack.c.b16 %v587, %v583
    %v760 = vpack.c.b16 %v588, %v584
    %v761 = vpack.c.b16 %v589, %v585
    %v762 = vpack.c.b16 %v590, %v586
    %v763 = vpack.c.b16 %v595, %v591
    %v764 = vpack.c.b16 %v596, %v592
    %v765 = vpack.c.b16 %v597, %v593
    %v766 = vpack.c.b16 %v598, %v594
    %v767 = vpack.c.b16 %v603, %v599
    %v768 = vpack.c.b16 %v604, %v600
    %v769 = vpack.c.b16 %v605, %v601
    %v770 = vpack.c.b16 %v606, %v602
    %v771 = vpack.c.b16 %v611, %v607
    %v772 = vpack.c.b16 %v612, %v608
    %v773 = vpack.c.b16 %v613, %v609
    %v774 = vpack.c.b16 %v614, %v610
    %v775 = vpack.c.b16 %v619, %v615
    %v776 = vpack.c.b16 %v620, %v616
    %v777 = vpack.c.b16 %v621, %v617
    %v778 = vpack.c.b16 %v622, %v618
    %v779 = vpack.c.b16 %v627, %v623
    %v780 = vpack.c.b16 %v628, %v624
    %v781 = vpack.c.b16 %v629, %v625
    %v782 = vpack.c.b16 %v630, %v626
    %v783 = vpack.c.b16 %v635, %v631
    %v784 = vpack.c.b16 %v636, %v632
    %v785 = vpack.c.b16 %v637, %v633
    %v786 = vpack.c.b16 %v638, %v634
    %v787 = vpack.c.b16 %v643, %v639
    %v788 = vpack.c.b16 %v644, %v640
    %v789 = vpack.c.b16 %v645, %v641
    %v790 = vpack.c.b16 %v646, %v642
    %v791 = vpack.c.b16 %v651, %v647
    %v792 = vpack.c.b16 %v652, %v648
    %v793 = vpack.c.b16 %v653, %v649
    %v794 = vpack.c.b16 %v654, %v650
    %v795 = vpack.c.b16 %v659, %v655
    %v796 = vpack.c.b16 %v660, %v656
    %v797 = vpack.c.b16 %v661, %v657
    %v798 = vpack.c.b16 %v662, %v658
    %v799 = vpack.c.b16 %v667, %v663
    %v800 = vpack.c.b16 %v668, %v664
    %v801 = vpack.c.b16 %v669, %v665
    %v802 = vpack.c.b16 %v670, %v666
    %v803 = vpack.c.b16 %v675, %v671
    %v804 = vpack.c.b16 %v676, %v672
    %v805 = vpack.c.b16 %v677, %v673
    %v806 = vpack.c.b16 %v678, %v674
    %v807 = vpack.c.b16 %v683, %v679
    %v808 = vpack.c.b16 %v684, %v680
    %v809 = vpack.c.b16 %v685, %v681
    %v810 = vpack.c.b16 %v686, %v682
    %v811 = vpack.c.b16 %v691, %v687
    %v812 = vpack.c.b16 %v692, %v688
    %v813 = vpack.c.b16 %v693, %v689
    %v814 = vpack.c.b16 %v694, %v690
    %v815 = vpack.c.b16 %v699, %v695
    %v816 = vpack.c.b16 %v700, %v696
    %v817 = vpack.c.b16 %v701, %v697
    %v818 = vpack.c.b16 %v702, %v698
    %v819 = vpack.c.b16 %v707, %v703
    %v820 = vpack.c.b16 %v708, %v704
    %v821 = vpack.c.b16 %v709, %v705
    %v822 = vpack.c.b16 %v710, %v706
    %v823 = vpack.c.b16 %v715, %v711
    %v824 = vpack.c.b16 %v716, %v712
    %v825 = vpack.c.b16 %v717, %v713
    %v826 = vpack.c.b16 %v718, %v714
    %v827 = vpack.c.b16 %v723, %v719
    %v828 = vpack.c.b16 %v724, %v720
    %v829 = vpack.c.b16 %v725, %v721
    %v830 = vpack.c.b16 %v726, %v722
    %v831 = vpack.c.b16 %v731, %v727
    %v832 = vpack.c.b16 %v732, %v728
    %v833 = vpack.c.b16 %v733, %v729
    %v834 = vpack.c.b16 %v734, %v730
    %vm935 = vcmask 130048
    %v937 = vsel %vm935, %v411, 0
    %939 = vmatprep.subr.bf16.mxu0 %v736
    %940 = vmatpush1.bf16.msra.mxu0 %v735
    %941 = vmatprep.subr.bf16.mxu0 %v740
    %942 = vmatpush1.bf16.msra.mxu0 %v739
    %943 = vmatprep.subr.bf16.mxu0 %v744
    %944 = vmatpush1.bf16.msra.mxu0 %v743
    %945 = vmatprep.subr.bf16.mxu0 %v748
    %946 = vmatpush1.bf16.msra.mxu0 %v747
    %947 = vmatprep.subr.bf16.mxu0 %v752
    %948 = vmatpush1.bf16.msra.mxu0 %v751
    %949 = vmatprep.subr.bf16.mxu0 %v756
    %950 = vmatpush1.bf16.msra.mxu0 %v755
    %951 = vmatprep.subr.bf16.mxu0 %v760
    %952 = vmatpush1.bf16.msra.mxu0 %v759
    %953 = vmatprep.subr.bf16.mxu0 %v764
    %954 = vmatpush1.bf16.msra.mxu0 %v763
    %955 = vmatprep.subr.bf16.mxu0 %v768
    %956 = vmatpush1.bf16.msra.mxu0 %v767
    %957 = vmatprep.subr.bf16.mxu0 %v772
    %958 = vmatpush1.bf16.msra.mxu0 %v771
    %959 = vmatprep.subr.bf16.mxu0 %v776
    %960 = vmatpush1.bf16.msra.mxu0 %v775
    %961 = vmatprep.subr.bf16.mxu0 %v780
    %962 = vmatpush1.bf16.msra.mxu0 %v779
    %963 = vmatprep.subr.bf16.mxu0 %v784
    %964 = vmatpush1.bf16.msra.mxu0 %v783
    %965 = vmatprep.subr.bf16.mxu0 %v788
    %966 = vmatpush1.bf16.msra.mxu0 %v787
    %967 = vmatprep.subr.bf16.mxu0 %v792
    %968 = vmatpush1.bf16.msra.mxu0 %v791
    %969 = vmatprep.subr.bf16.mxu0 %v796
    %970 = vmatpush1.bf16.msra.mxu0 %v795
    %971 = vmatprep.mubr.bf16.mxu0 %v409
    %972 = vmatmul.mubr.bf16.gmra.mrb[0].mxu0 %v408
    %v973 = vpop.f32.mrb[0].mxu0
    %v974 = vadd.f32 %v418, %v973
    %v975 = vpop.f32.mrb[0].mxu0
    %v976 = vadd.f32 %v422, %v975
    %v977 = vpop.f32.mrb[0].mxu0
    %v978 = vadd.f32 %v418, %v977
    %v979 = vpop.f32.mrb[0].mxu0
    %v980 = vadd.f32 %v422, %v979
    %981 = vdwg.mxu0
    %982 = vmatprep.subr.bf16.mxu0 %v800
    %983 = vmatpush1.bf16.msra.mxu0 %v799
    %984 = vmatprep.subr.bf16.mxu0 %v804
    %985 = vmatpush1.bf16.msra.mxu0 %v803
    %986 = vmatprep.subr.bf16.mxu0 %v808
    %987 = vmatpush1.bf16.msra.mxu0 %v807
    %988 = vmatprep.subr.bf16.mxu0 %v812
    %989 = vmatpush1.bf16.msra.mxu0 %v811
    %990 = vmatprep.subr.bf16.mxu0 %v816
    %991 = vmatpush1.bf16.msra.mxu0 %v815
    %992 = vmatprep.subr.bf16.mxu0 %v820
    %993 = vmatpush1.bf16.msra.mxu0 %v819
    %994 = vmatprep.subr.bf16.mxu0 %v824
    %995 = vmatpush1.bf16.msra.mxu0 %v823
    %996 = vmatprep.subr.bf16.mxu0 %v828
    %997 = vmatpush1.bf16.msra.mxu0 %v827
    %998 = vmatprep.subr.bf16.mxu0 %v832
    %999 = vmatpush1.bf16.msra.mxu0 %v831
    %1000 = vmatprep.subr.bf16.mxu0 0
    %1001 = vmatpush1.bf16.msra.mxu0 0
    %1002 = vmatprep.subr.bf16.mxu0 0
    %1003 = vmatpush1.bf16.msra.mxu0 0
    %1004 = vmatprep.subr.bf16.mxu0 0
    %1005 = vmatpush1.bf16.msra.mxu0 0
    %1006 = vmatprep.subr.bf16.mxu0 0
    %1007 = vmatpush1.bf16.msra.mxu0 0
    %1008 = vmatprep.subr.bf16.mxu0 0
    %1009 = vmatpush1.bf16.msra.mxu0 0
    %1010 = vmatprep.subr.bf16.mxu0 0
    %1011 = vmatpush1.bf16.msra.mxu0 0
    %1012 = vmatprep.subr.bf16.mxu0 0
    %1013 = vmatpush1.bf16.msra.mxu0 0
    %1014 = vmatprep.mubr.bf16.mxu0 %v937
    %1015 = vmatmul.mubr.bf16.gmra.mrb[0].mxu0 %v410
    %v1016 = vpop.f32.mrb[0].mxu0
    %v1017 = vadd.f32 %v974, %v1016
    %v1018 = vpop.f32.mrb[0].mxu0
    %v1019 = vadd.f32 %v976, %v1018
    %v1020 = vpop.f32.mrb[0].mxu0
    %v1021 = vadd.f32 %v978, %v1020
    %v1022 = vpop.f32.mrb[0].mxu0
    %v1023 = vadd.f32 %v980, %v1022
    %1024 = vdwg.mxu0
    %1025 = vmatprep.subr.bf16.mxu0 %v738
    %1026 = vmatpush1.bf16.msra.mxu0 %v737
    %1027 = vmatprep.subr.bf16.mxu0 %v742
    %1028 = vmatpush1.bf16.msra.mxu0 %v741
    %1029 = vmatprep.subr.bf16.mxu0 %v746
    %1030 = vmatpush1.bf16.msra.mxu0 %v745
    %1031 = vmatprep.subr.bf16.mxu0 %v750
    %1032 = vmatpush1.bf16.msra.mxu0 %v749
    %1033 = vmatprep.subr.bf16.mxu0 %v754
    %1034 = vmatpush1.bf16.msra.mxu0 %v753
    %1035 = vmatprep.subr.bf16.mxu0 %v758
    %1036 = vmatpush1.bf16.msra.mxu0 %v757
    %1037 = vmatprep.subr.bf16.mxu0 %v762
    %1038 = vmatpush1.bf16.msra.mxu0 %v761
    %1039 = vmatprep.subr.bf16.mxu0 %v766
    %1040 = vmatpush1.bf16.msra.mxu0 %v765
    %1041 = vmatprep.subr.bf16.mxu0 %v770
    %1042 = vmatpush1.bf16.msra.mxu0 %v769
    %1043 = vmatprep.subr.bf16.mxu0 %v774
    %1044 = vmatpush1.bf16.msra.mxu0 %v773
    %1045 = vmatprep.subr.bf16.mxu0 %v778
    %1046 = vmatpush1.bf16.msra.mxu0 %v777
    %1047 = vmatprep.subr.bf16.mxu0 %v782
    %1048 = vmatpush1.bf16.msra.mxu0 %v781
    %1049 = vmatprep.subr.bf16.mxu0 %v786
    %1050 = vmatpush1.bf16.msra.mxu0 %v785
    %1051 = vmatprep.subr.bf16.mxu0 %v790
    %1052 = vmatpush1.bf16.msra.mxu0 %v789
    %1053 = vmatprep.subr.bf16.mxu0 %v794
    %1054 = vmatpush1.bf16.msra.mxu0 %v793
    %1055 = vmatprep.subr.bf16.mxu0 %v798
    %1056 = vmatpush1.bf16.msra.mxu0 %v797
    %1057 = vmatprep.mubr.bf16.mxu0 %v409
    %1058 = vmatmul.mubr.bf16.gmra.mrb[0].mxu0 %v408
    %v1059 = vpop.f32.mrb[0].mxu0
    %v1060 = vadd.f32 %v426, %v1059
    %v1061 = vpop.f32.mrb[0].mxu0
    %v1062 = vadd.f32 %v430, %v1061
    %v1063 = vpop.f32.mrb[0].mxu0
    %v1064 = vadd.f32 %v426, %v1063
    %v1065 = vpop.f32.mrb[0].mxu0
    %v1066 = vadd.f32 %v430, %v1065
    %1067 = vdwg.mxu0
    %1068 = vmatprep.subr.bf16.mxu0 %v802
    %1069 = vmatpush1.bf16.msra.mxu0 %v801
    %1070 = vmatprep.subr.bf16.mxu0 %v806
    %1071 = vmatpush1.bf16.msra.mxu0 %v805
    %1072 = vmatprep.subr.bf16.mxu0 %v810
    %1073 = vmatpush1.bf16.msra.mxu0 %v809
    %1074 = vmatprep.subr.bf16.mxu0 %v814
    %1075 = vmatpush1.bf16.msra.mxu0 %v813
    %1076 = vmatprep.subr.bf16.mxu0 %v818
    %1077 = vmatpush1.bf16.msra.mxu0 %v817
    %1078 = vmatprep.subr.bf16.mxu0 %v822
    %1079 = vmatpush1.bf16.msra.mxu0 %v821
    %1080 = vmatprep.subr.bf16.mxu0 %v826
    %1081 = vmatpush1.bf16.msra.mxu0 %v825
    %1082 = vmatprep.subr.bf16.mxu0 %v830
    %1083 = vmatpush1.bf16.msra.mxu0 %v829
    %1084 = vmatprep.subr.bf16.mxu0 %v834
    %1085 = vmatpush1.bf16.msra.mxu0 %v833
    %1086 = vmatprep.subr.bf16.mxu0 0
    %1087 = vmatpush1.bf16.msra.mxu0 0
    %1088 = vmatprep.subr.bf16.mxu0 0
    %1089 = vmatpush1.bf16.msra.mxu0 0
    %1090 = vmatprep.subr.bf16.mxu0 0
    %1091 = vmatpush1.bf16.msra.mxu0 0
    %1092 = vmatprep.subr.bf16.mxu0 0
    %1093 = vmatpush1.bf16.msra.mxu0 0
    %1094 = vmatprep.subr.bf16.mxu0 0
    %1095 = vmatpush1.bf16.msra.mxu0 0
    %1096 = vmatprep.subr.bf16.mxu0 0
    %1097 = vmatpush1.bf16.msra.mxu0 0
    %1098 = vmatprep.subr.bf16.mxu0 0
    %1099 = vmatpush1.bf16.msra.mxu0 0
    %1100 = vmatprep.mubr.bf16.mxu0 %v937
    %1101 = vmatmul.mubr.bf16.gmra.mrb[0].mxu0 %v410
    %v1102 = vpop.f32.mrb[0].mxu0
    %v1103 = vadd.f32 %v1060, %v1102
    %v1104 = vpop.f32.mrb[0].mxu0
    %v1105 = vadd.f32 %v1062, %v1104
    %v1106 = vpop.f32.mrb[0].mxu0
    %v1107 = vadd.f32 %v1064, %v1106
    %v1108 = vpop.f32.mrb[0].mxu0
    %v1109 = vadd.f32 %v1066, %v1108
    %1110 = vdwg.mxu0
    %v1111 = vmax.f32 %v1017, 0.0
    %v1112 = vmax.f32 %v1019, 0.0
    %v1113 = vmax.f32 %v1103, 0.0
    %v1114 = vmax.f32 %v1105, 0.0
    %v1115 = vmax.f32 %v1021, 0.0
    %v1116 = vmax.f32 %v1023, 0.0
    %v1117 = vmax.f32 %v1107, 0.0
    %v1118 = vmax.f32 %v1109, 0.0
    %s1119 = scalar_lea.vmem [#allocation7], 800
    %v1120 = vld [vmem:[%s1119] sm:$0xff]
    %v1121 = vld [vmem:[%s1119 + $0x8] sm:$0xff]
    %v1122 = vld [vmem:[%s1119 + $0x10] sm:$0xff]
    %v1123 = vld [vmem:[%s1119 + $0x18] sm:$0xff]
    %v1124 = vld [vmem:[%s1119 + $0x20] sm:$0xff]
    %v1125 = vld [vmem:[%s1119 + $0x28] sm:$0xff]
    %v1126 = vld [vmem:[%s1119 + $0x30] sm:$0xff]
    %v1127 = vld [vmem:[%s1119 + $0x38] sm:$0xff]
    %v1128 = vld [vmem:[%s1119 + $0x40] sm:$0xff]
    %v1129 = vld [vmem:[%s1119 + $0x48] sm:$0xff]
    %v1130 = vld [vmem:[%s1119 + $0x50] sm:$0xff]
    %v1131 = vld [vmem:[%s1119 + $0x58] sm:$0xff]
    %v1132 = vld [vmem:[%s1119 + $0x60] sm:$0xff]
    %v1133 = vld [vmem:[%s1119 + $0x68] sm:$0xff]
    %v1134 = vld [vmem:[%s1119 + $0x70] sm:$0xff]
    %v1135 = vld [vmem:[%s1119 + $0x78] sm:$0xff]
    %v1136 = vld [vmem:[%s1119 + $0x80] sm:$0xff]
    %v1137 = vld [vmem:[%s1119 + $0x88] sm:$0xff]
    %v1138 = vld [vmem:[%s1119 + $0x90] sm:$0xff]
    %v1139 = vld [vmem:[%s1119 + $0x98] sm:$0xff]
    %v1140 = vld [vmem:[%s1119 + $0xa0] sm:$0xff]
    %v1141 = vld [vmem:[%s1119 + $0xa8] sm:$0xff]
    %v1142 = vld [vmem:[%s1119 + $0xb0] sm:$0xff]
    %v1143 = vld [vmem:[%s1119 + $0xb8] sm:$0xff]
    %v1144 = vld [vmem:[%s1119 + $0xc0] sm:$0xff]
    %v1145 = vld [vmem:[%s1119 + $0xc8] sm:$0xff]
    %v1146 = vld [vmem:[%s1119 + $0xd0] sm:$0xff]
    %v1147 = vld [vmem:[%s1119 + $0xd8] sm:$0xff]
    %v1148 = vld [vmem:[%s1119 + $0xe0] sm:$0xff]
    %v1149 = vld [vmem:[%s1119 + $0xe8] sm:$0xff]
    %v1150 = vld [vmem:[%s1119 + $0xf0] sm:$0xff]
    %v1151 = vld [vmem:[%s1119 + $0xf8] sm:$0xff]
    %v1152 = vld [vmem:[%s1119 + $0x100] sm:$0xff]
    %v1153 = vld [vmem:[%s1119 + $0x108] sm:$0xff]
    %v1154 = vld [vmem:[%s1119 + $0x110] sm:$0xff]
    %v1155 = vld [vmem:[%s1119 + $0x118] sm:$0xff]
    %v1156 = vld [vmem:[%s1119 + $0x120] sm:$0xff]
    %v1157 = vld [vmem:[%s1119 + $0x128] sm:$0xff]
    %v1158 = vld [vmem:[%s1119 + $0x130] sm:$0xff]
    %v1159 = vld [vmem:[%s1119 + $0x138] sm:$0xff]
    %v1160 = vld [vmem:[%s1119 + $0x140] sm:$0xff]
    %v1161 = vld [vmem:[%s1119 + $0x148] sm:$0xff]
    %v1162 = vld [vmem:[%s1119 + $0x150] sm:$0xff]
    %v1163 = vld [vmem:[%s1119 + $0x158] sm:$0xff]
    %v1164 = vld [vmem:[%s1119 + $0x160] sm:$0xff]
    %v1165 = vld [vmem:[%s1119 + $0x168] sm:$0xff]
    %v1166 = vld [vmem:[%s1119 + $0x170] sm:$0xff]
    %v1167 = vld [vmem:[%s1119 + $0x178] sm:$0xff]
    %v1168 = vld [vmem:[%s1119 + $0x180] sm:$0xff]
    %v1169 = vld [vmem:[%s1119 + $0x188] sm:$0xff]
    %v1170 = vld [vmem:[%s1119 + $0x190] sm:$0xff]
    %v1171 = vld [vmem:[%s1119 + $0x198] sm:$0xff]
    %v1172 = vld [vmem:[%s1119 + $0x1a0] sm:$0xff]
    %v1173 = vld [vmem:[%s1119 + $0x1a8] sm:$0xff]
    %v1174 = vld [vmem:[%s1119 + $0x1b0] sm:$0xff]
    %v1175 = vld [vmem:[%s1119 + $0x1b8] sm:$0xff]
    %v1176 = vld [vmem:[%s1119 + $0x1c0] sm:$0xff]
    %v1177 = vld [vmem:[%s1119 + $0x1c8] sm:$0xff]
    %v1178 = vld [vmem:[%s1119 + $0x1d0] sm:$0xff]
    %v1179 = vld [vmem:[%s1119 + $0x1d8] sm:$0xff]
    %v1180 = vld [vmem:[%s1119 + $0x1e0] sm:$0xff]
    %v1181 = vld [vmem:[%s1119 + $0x1e8] sm:$0xff]
    %v1182 = vld [vmem:[%s1119 + $0x1f0] sm:$0xff]
    %v1183 = vld [vmem:[%s1119 + $0x1f8] sm:$0xff]
    %v1184 = vld [vmem:[%s1119 + $0x200] sm:$0xff]
    %v1185 = vld [vmem:[%s1119 + $0x208] sm:$0xff]
    %v1186 = vld [vmem:[%s1119 + $0x210] sm:$0xff]
    %v1187 = vld [vmem:[%s1119 + $0x218] sm:$0xff]
    %v1188 = vld [vmem:[%s1119 + $0x220] sm:$0xff]
    %v1189 = vld [vmem:[%s1119 + $0x228] sm:$0xff]
    %v1190 = vld [vmem:[%s1119 + $0x230] sm:$0xff]
    %v1191 = vld [vmem:[%s1119 + $0x238] sm:$0xff]
    %v1192 = vld [vmem:[%s1119 + $0x240] sm:$0xff]
    %v1193 = vld [vmem:[%s1119 + $0x248] sm:$0xff]
    %v1194 = vld [vmem:[%s1119 + $0x250] sm:$0xff]
    %v1195 = vld [vmem:[%s1119 + $0x258] sm:$0xff]
    %v1196 = vld [vmem:[%s1119 + $0x260] sm:$0xff]
    %v1197 = vld [vmem:[%s1119 + $0x268] sm:$0xff]
    %v1198 = vld [vmem:[%s1119 + $0x270] sm:$0xff]
    %v1199 = vld [vmem:[%s1119 + $0x278] sm:$0xff]
    %v1200 = vld [vmem:[%s1119 + $0x280] sm:$0xff]
    %v1201 = vld [vmem:[%s1119 + $0x288] sm:$0xff]
    %v1202 = vld [vmem:[%s1119 + $0x290] sm:$0xff]
    %v1203 = vld [vmem:[%s1119 + $0x298] sm:$0xff]
    %v1204 = vld [vmem:[%s1119 + $0x2a0] sm:$0xff]
    %v1205 = vld [vmem:[%s1119 + $0x2a8] sm:$0xff]
    %v1206 = vld [vmem:[%s1119 + $0x2b0] sm:$0xff]
    %v1207 = vld [vmem:[%s1119 + $0x2b8] sm:$0xff]
    %v1208 = vld [vmem:[%s1119 + $0x2c0] sm:$0xff]
    %v1209 = vld [vmem:[%s1119 + $0x2c8] sm:$0xff]
    %v1210 = vld [vmem:[%s1119 + $0x2d0] sm:$0xff]
    %v1211 = vld [vmem:[%s1119 + $0x2d8] sm:$0xff]
    %v1212 = vld [vmem:[%s1119 + $0x2e0] sm:$0xff]
    %v1213 = vld [vmem:[%s1119 + $0x2e8] sm:$0xff]
    %v1214 = vld [vmem:[%s1119 + $0x2f0] sm:$0xff]
    %v1215 = vld [vmem:[%s1119 + $0x2f8] sm:$0xff]
    %v1216 = vld [vmem:[%s1119 + $0x300] sm:$0xff]
    %v1217 = vld [vmem:[%s1119 + $0x308] sm:$0xff]
    %v1218 = vld [vmem:[%s1119 + $0x310] sm:$0xff]
    %v1219 = vld [vmem:[%s1119 + $0x318] sm:$0xff]
    %v1220 = vpack.c.bf16 %v1115, %v1111
    %v1221 = vpack.c.bf16 %v1116, %v1112
    %v1222 = vpack.c.bf16 %v1117, %v1113
    %v1223 = vpack.c.bf16 %v1118, %v1114
    %s1224 = scalar_lea.vmem [#allocation13], 2
    %v1225 = vld [vmem:[%s1224] ss:$8 sm:$0xf]
    %v1227 = vlaneseq
    %v1228 = vshrl.u32 %v1227, 7
    %v1229 = vsub.s32 0, %v1228
    %v1230 = vrot.slane %v1225, %v1229
    %v1231 = vlaneseq
    %v1232 = vshrl.u32 %v1231, 7
    %v1233 = vsub.s32 1, %v1232
    %v1234 = vrot.slane %v1225, %v1233
    %v1235 = vlaneseq
    %v1236 = vshrl.u32 %v1235, 7
    %v1237 = vsub.s32 2, %v1236
    %v1238 = vrot.slane %v1225, %v1237
    %v1239 = vlaneseq
    %v1240 = vshrl.u32 %v1239, 7
    %v1241 = vsub.s32 3, %v1240
    %v1242 = vrot.slane %v1225, %v1241
    %v1347 = vunpack.c.l.b16 %v1120
    %v1348 = vunpack.c.h.b16 %v1120
    %v1349 = vunpack.c.l.b16 %v1121
    %v1350 = vunpack.c.h.b16 %v1121
    %v1351 = vunpack.c.l.b16 %v1122
    %v1352 = vunpack.c.h.b16 %v1122
    %v1353 = vunpack.c.l.b16 %v1123
    %v1354 = vunpack.c.h.b16 %v1123
    %v1355 = vunpack.c.l.b16 %v1124
    %v1356 = vunpack.c.h.b16 %v1124
    %v1357 = vunpack.c.l.b16 %v1125
    %v1358 = vunpack.c.h.b16 %v1125
    %v1359 = vunpack.c.l.b16 %v1126
    %v1360 = vunpack.c.h.b16 %v1126
    %v1361 = vunpack.c.l.b16 %v1127
    %v1362 = vunpack.c.h.b16 %v1127
    %v1363 = vunpack.c.l.b16 %v1128
    %v1364 = vunpack.c.h.b16 %v1128
    %v1365 = vunpack.c.l.b16 %v1129
    %v1366 = vunpack.c.h.b16 %v1129
    %v1367 = vunpack.c.l.b16 %v1130
    %v1368 = vunpack.c.h.b16 %v1130
    %v1369 = vunpack.c.l.b16 %v1131
    %v1370 = vunpack.c.h.b16 %v1131
    %v1371 = vunpack.c.l.b16 %v1132
    %v1372 = vunpack.c.h.b16 %v1132
    %v1373 = vunpack.c.l.b16 %v1133
    %v1374 = vunpack.c.h.b16 %v1133
    %v1375 = vunpack.c.l.b16 %v1134
    %v1376 = vunpack.c.h.b16 %v1134
    %v1377 = vunpack.c.l.b16 %v1135
    %v1378 = vunpack.c.h.b16 %v1135
    %v1379 = vunpack.c.l.b16 %v1136
    %v1380 = vunpack.c.h.b16 %v1136
    %v1381 = vunpack.c.l.b16 %v1137
    %v1382 = vunpack.c.h.b16 %v1137
    %v1383 = vunpack.c.l.b16 %v1138
    %v1384 = vunpack.c.h.b16 %v1138
    %v1385 = vunpack.c.l.b16 %v1139
    %v1386 = vunpack.c.h.b16 %v1139
    %v1387 = vunpack.c.l.b16 %v1140
    %v1388 = vunpack.c.h.b16 %v1140
    %v1389 = vunpack.c.l.b16 %v1141
    %v1390 = vunpack.c.h.b16 %v1141
    %v1391 = vunpack.c.l.b16 %v1142
    %v1392 = vunpack.c.h.b16 %v1142
    %v1393 = vunpack.c.l.b16 %v1143
    %v1394 = vunpack.c.h.b16 %v1143
    %v1395 = vunpack.c.l.b16 %v1144
    %v1396 = vunpack.c.h.b16 %v1144
    %v1397 = vunpack.c.l.b16 %v1145
    %v1398 = vunpack.c.h.b16 %v1145
    %v1399 = vunpack.c.l.b16 %v1146
    %v1400 = vunpack.c.h.b16 %v1146
    %v1401 = vunpack.c.l.b16 %v1147
    %v1402 = vunpack.c.h.b16 %v1147
    %v1403 = vunpack.c.l.b16 %v1148
    %v1404 = vunpack.c.h.b16 %v1148
    %v1405 = vunpack.c.l.b16 %v1149
    %v1406 = vunpack.c.h.b16 %v1149
    %v1407 = vunpack.c.l.b16 %v1150
    %v1408 = vunpack.c.h.b16 %v1150
    %v1409 = vunpack.c.l.b16 %v1151
    %v1410 = vunpack.c.h.b16 %v1151
    %v1411 = vunpack.c.l.b16 %v1152
    %v1412 = vunpack.c.h.b16 %v1152
    %v1413 = vunpack.c.l.b16 %v1153
    %v1414 = vunpack.c.h.b16 %v1153
    %v1415 = vunpack.c.l.b16 %v1154
    %v1416 = vunpack.c.h.b16 %v1154
    %v1417 = vunpack.c.l.b16 %v1155
    %v1418 = vunpack.c.h.b16 %v1155
    %v1419 = vunpack.c.l.b16 %v1156
    %v1420 = vunpack.c.h.b16 %v1156
    %v1421 = vunpack.c.l.b16 %v1157
    %v1422 = vunpack.c.h.b16 %v1157
    %v1423 = vunpack.c.l.b16 %v1158
    %v1424 = vunpack.c.h.b16 %v1158
    %v1425 = vunpack.c.l.b16 %v1159
    %v1426 = vunpack.c.h.b16 %v1159
    %v1427 = vunpack.c.l.b16 %v1160
    %v1428 = vunpack.c.h.b16 %v1160
    %v1429 = vunpack.c.l.b16 %v1161
    %v1430 = vunpack.c.h.b16 %v1161
    %v1431 = vunpack.c.l.b16 %v1162
    %v1432 = vunpack.c.h.b16 %v1162
    %v1433 = vunpack.c.l.b16 %v1163
    %v1434 = vunpack.c.h.b16 %v1163
    %v1435 = vunpack.c.l.b16 %v1164
    %v1436 = vunpack.c.h.b16 %v1164
    %v1437 = vunpack.c.l.b16 %v1165
    %v1438 = vunpack.c.h.b16 %v1165
    %v1439 = vunpack.c.l.b16 %v1166
    %v1440 = vunpack.c.h.b16 %v1166
    %v1441 = vunpack.c.l.b16 %v1167
    %v1442 = vunpack.c.h.b16 %v1167
    %v1443 = vunpack.c.l.b16 %v1168
    %v1444 = vunpack.c.h.b16 %v1168
    %v1445 = vunpack.c.l.b16 %v1169
    %v1446 = vunpack.c.h.b16 %v1169
    %v1447 = vunpack.c.l.b16 %v1170
    %v1448 = vunpack.c.h.b16 %v1170
    %v1449 = vunpack.c.l.b16 %v1171
    %v1450 = vunpack.c.h.b16 %v1171
    %v1451 = vunpack.c.l.b16 %v1172
    %v1452 = vunpack.c.h.b16 %v1172
    %v1453 = vunpack.c.l.b16 %v1173
    %v1454 = vunpack.c.h.b16 %v1173
    %v1455 = vunpack.c.l.b16 %v1174
    %v1456 = vunpack.c.h.b16 %v1174
    %v1457 = vunpack.c.l.b16 %v1175
    %v1458 = vunpack.c.h.b16 %v1175
    %v1459 = vunpack.c.l.b16 %v1176
    %v1460 = vunpack.c.h.b16 %v1176
    %v1461 = vunpack.c.l.b16 %v1177
    %v1462 = vunpack.c.h.b16 %v1177
    %v1463 = vunpack.c.l.b16 %v1178
    %v1464 = vunpack.c.h.b16 %v1178
    %v1465 = vunpack.c.l.b16 %v1179
    %v1466 = vunpack.c.h.b16 %v1179
    %v1467 = vunpack.c.l.b16 %v1180
    %v1468 = vunpack.c.h.b16 %v1180
    %v1469 = vunpack.c.l.b16 %v1181
    %v1470 = vunpack.c.h.b16 %v1181
    %v1471 = vunpack.c.l.b16 %v1182
    %v1472 = vunpack.c.h.b16 %v1182
    %v1473 = vunpack.c.l.b16 %v1183
    %v1474 = vunpack.c.h.b16 %v1183
    %v1475 = vunpack.c.l.b16 %v1184
    %v1476 = vunpack.c.h.b16 %v1184
    %v1477 = vunpack.c.l.b16 %v1185
    %v1478 = vunpack.c.h.b16 %v1185
    %v1479 = vunpack.c.l.b16 %v1186
    %v1480 = vunpack.c.h.b16 %v1186
    %v1481 = vunpack.c.l.b16 %v1187
    %v1482 = vunpack.c.h.b16 %v1187
    %v1483 = vunpack.c.l.b16 %v1188
    %v1484 = vunpack.c.h.b16 %v1188
    %v1485 = vunpack.c.l.b16 %v1189
    %v1486 = vunpack.c.h.b16 %v1189
    %v1487 = vunpack.c.l.b16 %v1190
    %v1488 = vunpack.c.h.b16 %v1190
    %v1489 = vunpack.c.l.b16 %v1191
    %v1490 = vunpack.c.h.b16 %v1191
    %v1491 = vunpack.c.l.b16 %v1192
    %v1492 = vunpack.c.h.b16 %v1192
    %v1493 = vunpack.c.l.b16 %v1193
    %v1494 = vunpack.c.h.b16 %v1193
    %v1495 = vunpack.c.l.b16 %v1194
    %v1496 = vunpack.c.h.b16 %v1194
    %v1497 = vunpack.c.l.b16 %v1195
    %v1498 = vunpack.c.h.b16 %v1195
    %v1499 = vunpack.c.l.b16 %v1196
    %v1500 = vunpack.c.h.b16 %v1196
    %v1501 = vunpack.c.l.b16 %v1197
    %v1502 = vunpack.c.h.b16 %v1197
    %v1503 = vunpack.c.l.b16 %v1198
    %v1504 = vunpack.c.h.b16 %v1198
    %v1505 = vunpack.c.l.b16 %v1199
    %v1506 = vunpack.c.h.b16 %v1199
    %v1507 = vunpack.c.l.b16 %v1200
    %v1508 = vunpack.c.h.b16 %v1200
    %v1509 = vunpack.c.l.b16 %v1201
    %v1510 = vunpack.c.h.b16 %v1201
    %v1511 = vunpack.c.l.b16 %v1202
    %v1512 = vunpack.c.h.b16 %v1202
    %v1513 = vunpack.c.l.b16 %v1203
    %v1514 = vunpack.c.h.b16 %v1203
    %v1515 = vunpack.c.l.b16 %v1204
    %v1516 = vunpack.c.h.b16 %v1204
    %v1517 = vunpack.c.l.b16 %v1205
    %v1518 = vunpack.c.h.b16 %v1205
    %v1519 = vunpack.c.l.b16 %v1206
    %v1520 = vunpack.c.h.b16 %v1206
    %v1521 = vunpack.c.l.b16 %v1207
    %v1522 = vunpack.c.h.b16 %v1207
    %v1523 = vunpack.c.l.b16 %v1208
    %v1524 = vunpack.c.h.b16 %v1208
    %v1525 = vunpack.c.l.b16 %v1209
    %v1526 = vunpack.c.h.b16 %v1209
    %v1527 = vunpack.c.l.b16 %v1210
    %v1528 = vunpack.c.h.b16 %v1210
    %v1529 = vunpack.c.l.b16 %v1211
    %v1530 = vunpack.c.h.b16 %v1211
    %v1531 = vunpack.c.l.b16 %v1212
    %v1532 = vunpack.c.h.b16 %v1212
    %v1533 = vunpack.c.l.b16 %v1213
    %v1534 = vunpack.c.h.b16 %v1213
    %v1535 = vunpack.c.l.b16 %v1214
    %v1536 = vunpack.c.h.b16 %v1214
    %v1537 = vunpack.c.l.b16 %v1215
    %v1538 = vunpack.c.h.b16 %v1215
    %v1539 = vunpack.c.l.b16 %v1216
    %v1540 = vunpack.c.h.b16 %v1216
    %v1541 = vunpack.c.l.b16 %v1217
    %v1542 = vunpack.c.h.b16 %v1217
    %v1543 = vunpack.c.l.b16 %v1218
    %v1544 = vunpack.c.h.b16 %v1218
    %v1545 = vunpack.c.l.b16 %v1219
    %v1546 = vunpack.c.h.b16 %v1219
    %v1547 = vpack.c.b16 %v1351, %v1347
    %v1548 = vpack.c.b16 %v1352, %v1348
    %v1549 = vpack.c.b16 %v1353, %v1349
    %v1550 = vpack.c.b16 %v1354, %v1350
    %v1551 = vpack.c.b16 %v1359, %v1355
    %v1552 = vpack.c.b16 %v1360, %v1356
    %v1553 = vpack.c.b16 %v1361, %v1357
    %v1554 = vpack.c.b16 %v1362, %v1358
    %v1555 = vpack.c.b16 %v1367, %v1363
    %v1556 = vpack.c.b16 %v1368, %v1364
    %v1557 = vpack.c.b16 %v1369, %v1365
    %v1558 = vpack.c.b16 %v1370, %v1366
    %v1559 = vpack.c.b16 %v1375, %v1371
    %v1560 = vpack.c.b16 %v1376, %v1372
    %v1561 = vpack.c.b16 %v1377, %v1373
    %v1562 = vpack.c.b16 %v1378, %v1374
    %v1563 = vpack.c.b16 %v1383, %v1379
    %v1564 = vpack.c.b16 %v1384, %v1380
    %v1565 = vpack.c.b16 %v1385, %v1381
    %v1566 = vpack.c.b16 %v1386, %v1382
    %v1567 = vpack.c.b16 %v1391, %v1387
    %v1568 = vpack.c.b16 %v1392, %v1388
    %v1569 = vpack.c.b16 %v1393, %v1389
    %v1570 = vpack.c.b16 %v1394, %v1390
    %v1571 = vpack.c.b16 %v1399, %v1395
    %v1572 = vpack.c.b16 %v1400, %v1396
    %v1573 = vpack.c.b16 %v1401, %v1397
    %v1574 = vpack.c.b16 %v1402, %v1398
    %v1575 = vpack.c.b16 %v1407, %v1403
    %v1576 = vpack.c.b16 %v1408, %v1404
    %v1577 = vpack.c.b16 %v1409, %v1405
    %v1578 = vpack.c.b16 %v1410, %v1406
    %v1579 = vpack.c.b16 %v1415, %v1411
    %v1580 = vpack.c.b16 %v1416, %v1412
    %v1581 = vpack.c.b16 %v1417, %v1413
    %v1582 = vpack.c.b16 %v1418, %v1414
    %v1583 = vpack.c.b16 %v1423, %v1419
    %v1584 = vpack.c.b16 %v1424, %v1420
    %v1585 = vpack.c.b16 %v1425, %v1421
    %v1586 = vpack.c.b16 %v1426, %v1422
    %v1587 = vpack.c.b16 %v1431, %v1427
    %v1588 = vpack.c.b16 %v1432, %v1428
    %v1589 = vpack.c.b16 %v1433, %v1429
    %v1590 = vpack.c.b16 %v1434, %v1430
    %v1591 = vpack.c.b16 %v1439, %v1435
    %v1592 = vpack.c.b16 %v1440, %v1436
    %v1593 = vpack.c.b16 %v1441, %v1437
    %v1594 = vpack.c.b16 %v1442, %v1438
    %v1595 = vpack.c.b16 %v1447, %v1443
    %v1596 = vpack.c.b16 %v1448, %v1444
    %v1597 = vpack.c.b16 %v1449, %v1445
    %v1598 = vpack.c.b16 %v1450, %v1446
    %v1599 = vpack.c.b16 %v1455, %v1451
    %v1600 = vpack.c.b16 %v1456, %v1452
    %v1601 = vpack.c.b16 %v1457, %v1453
    %v1602 = vpack.c.b16 %v1458, %v1454
    %v1603 = vpack.c.b16 %v1463, %v1459
    %v1604 = vpack.c.b16 %v1464, %v1460
    %v1605 = vpack.c.b16 %v1465, %v1461
    %v1606 = vpack.c.b16 %v1466, %v1462
    %v1607 = vpack.c.b16 %v1471, %v1467
    %v1608 = vpack.c.b16 %v1472, %v1468
    %v1609 = vpack.c.b16 %v1473, %v1469
    %v1610 = vpack.c.b16 %v1474, %v1470
    %v1611 = vpack.c.b16 %v1479, %v1475
    %v1612 = vpack.c.b16 %v1480, %v1476
    %v1613 = vpack.c.b16 %v1481, %v1477
    %v1614 = vpack.c.b16 %v1482, %v1478
    %v1615 = vpack.c.b16 %v1487, %v1483
    %v1616 = vpack.c.b16 %v1488, %v1484
    %v1617 = vpack.c.b16 %v1489, %v1485
    %v1618 = vpack.c.b16 %v1490, %v1486
    %v1619 = vpack.c.b16 %v1495, %v1491
    %v1620 = vpack.c.b16 %v1496, %v1492
    %v1621 = vpack.c.b16 %v1497, %v1493
    %v1622 = vpack.c.b16 %v1498, %v1494
    %v1623 = vpack.c.b16 %v1503, %v1499
    %v1624 = vpack.c.b16 %v1504, %v1500
    %v1625 = vpack.c.b16 %v1505, %v1501
    %v1626 = vpack.c.b16 %v1506, %v1502
    %v1627 = vpack.c.b16 %v1511, %v1507
    %v1628 = vpack.c.b16 %v1512, %v1508
    %v1629 = vpack.c.b16 %v1513, %v1509
    %v1630 = vpack.c.b16 %v1514, %v1510
    %v1631 = vpack.c.b16 %v1519, %v1515
    %v1632 = vpack.c.b16 %v1520, %v1516
    %v1633 = vpack.c.b16 %v1521, %v1517
    %v1634 = vpack.c.b16 %v1522, %v1518
    %v1635 = vpack.c.b16 %v1527, %v1523
    %v1636 = vpack.c.b16 %v1528, %v1524
    %v1637 = vpack.c.b16 %v1529, %v1525
    %v1638 = vpack.c.b16 %v1530, %v1526
    %v1639 = vpack.c.b16 %v1535, %v1531
    %v1640 = vpack.c.b16 %v1536, %v1532
    %v1641 = vpack.c.b16 %v1537, %v1533
    %v1642 = vpack.c.b16 %v1538, %v1534
    %v1643 = vpack.c.b16 %v1543, %v1539
    %v1644 = vpack.c.b16 %v1544, %v1540
    %v1645 = vpack.c.b16 %v1545, %v1541
    %v1646 = vpack.c.b16 %v1546, %v1542
    %v1748 = vsel %vm935, %v1223, 0
    %1750 = vmatprep.subr.bf16.mxu0 %v1548
    %1751 = vmatpush1.bf16.msra.mxu0 %v1547
    %1752 = vmatprep.subr.bf16.mxu0 %v1552
    %1753 = vmatpush1.bf16.msra.mxu0 %v1551
    %1754 = vmatprep.subr.bf16.mxu0 %v1556
    %1755 = vmatpush1.bf16.msra.mxu0 %v1555
    %1756 = vmatprep.subr.bf16.mxu0 %v1560
    %1757 = vmatpush1.bf16.msra.mxu0 %v1559
    %1758 = vmatprep.subr.bf16.mxu0 %v1564
    %1759 = vmatpush1.bf16.msra.mxu0 %v1563
    %1760 = vmatprep.subr.bf16.mxu0 %v1568
    %1761 = vmatpush1.bf16.msra.mxu0 %v1567
    %1762 = vmatprep.subr.bf16.mxu0 %v1572
    %1763 = vmatpush1.bf16.msra.mxu0 %v1571
    %1764 = vmatprep.subr.bf16.mxu0 %v1576
    %1765 = vmatpush1.bf16.msra.mxu0 %v1575
    %1766 = vmatprep.subr.bf16.mxu0 %v1580
    %1767 = vmatpush1.bf16.msra.mxu0 %v1579
    %1768 = vmatprep.subr.bf16.mxu0 %v1584
    %1769 = vmatpush1.bf16.msra.mxu0 %v1583
    %1770 = vmatprep.subr.bf16.mxu0 %v1588
    %1771 = vmatpush1.bf16.msra.mxu0 %v1587
    %1772 = vmatprep.subr.bf16.mxu0 %v1592
    %1773 = vmatpush1.bf16.msra.mxu0 %v1591
    %1774 = vmatprep.subr.bf16.mxu0 %v1596
    %1775 = vmatpush1.bf16.msra.mxu0 %v1595
    %1776 = vmatprep.subr.bf16.mxu0 %v1600
    %1777 = vmatpush1.bf16.msra.mxu0 %v1599
    %1778 = vmatprep.subr.bf16.mxu0 %v1604
    %1779 = vmatpush1.bf16.msra.mxu0 %v1603
    %1780 = vmatprep.subr.bf16.mxu0 %v1608
    %1781 = vmatpush1.bf16.msra.mxu0 %v1607
    %1782 = vmatprep.mubr.bf16.mxu0 %v1221
    %1783 = vmatmul.mubr.bf16.gmra.mrb[0].mxu0 %v1220
    %v1784 = vpop.f32.mrb[0].mxu0
    %v1785 = vadd.f32 %v1230, %v1784
    %v1786 = vpop.f32.mrb[0].mxu0
    %v1787 = vadd.f32 %v1234, %v1786
    %v1788 = vpop.f32.mrb[0].mxu0
    %v1789 = vadd.f32 %v1230, %v1788
    %v1790 = vpop.f32.mrb[0].mxu0
    %v1791 = vadd.f32 %v1234, %v1790
    %1792 = vdwg.mxu0
    %1793 = vmatprep.subr.bf16.mxu0 %v1612
    %1794 = vmatpush1.bf16.msra.mxu0 %v1611
    %1795 = vmatprep.subr.bf16.mxu0 %v1616
    %1796 = vmatpush1.bf16.msra.mxu0 %v1615
    %1797 = vmatprep.subr.bf16.mxu0 %v1620
    %1798 = vmatpush1.bf16.msra.mxu0 %v1619
    %1799 = vmatprep.subr.bf16.mxu0 %v1624
    %1800 = vmatpush1.bf16.msra.mxu0 %v1623
    %1801 = vmatprep.subr.bf16.mxu0 %v1628
    %1802 = vmatpush1.bf16.msra.mxu0 %v1627
    %1803 = vmatprep.subr.bf16.mxu0 %v1632
    %1804 = vmatpush1.bf16.msra.mxu0 %v1631
    %1805 = vmatprep.subr.bf16.mxu0 %v1636
    %1806 = vmatpush1.bf16.msra.mxu0 %v1635
    %1807 = vmatprep.subr.bf16.mxu0 %v1640
    %1808 = vmatpush1.bf16.msra.mxu0 %v1639
    %1809 = vmatprep.subr.bf16.mxu0 %v1644
    %1810 = vmatpush1.bf16.msra.mxu0 %v1643
    %1811 = vmatprep.subr.bf16.mxu0 0
    %1812 = vmatpush1.bf16.msra.mxu0 0
    %1813 = vmatprep.subr.bf16.mxu0 0
    %1814 = vmatpush1.bf16.msra.mxu0 0
    %1815 = vmatprep.subr.bf16.mxu0 0
    %1816 = vmatpush1.bf16.msra.mxu0 0
    %1817 = vmatprep.subr.bf16.mxu0 0
    %1818 = vmatpush1.bf16.msra.mxu0 0
    %1819 = vmatprep.subr.bf16.mxu0 0
    %1820 = vmatpush1.bf16.msra.mxu0 0
    %1821 = vmatprep.subr.bf16.mxu0 0
    %1822 = vmatpush1.bf16.msra.mxu0 0
    %1823 = vmatprep.subr.bf16.mxu0 0
    %1824 = vmatpush1.bf16.msra.mxu0 0
    %1825 = vmatprep.mubr.bf16.mxu0 %v1748
    %1826 = vmatmul.mubr.bf16.gmra.mrb[0].mxu0 %v1222
    %v1827 = vpop.f32.mrb[0].mxu0
    %v1828 = vadd.f32 %v1785, %v1827
    %v1829 = vpop.f32.mrb[0].mxu0
    %v1830 = vadd.f32 %v1787, %v1829
    %v1831 = vpop.f32.mrb[0].mxu0
    %v1832 = vadd.f32 %v1789, %v1831
    %v1833 = vpop.f32.mrb[0].mxu0
    %v1834 = vadd.f32 %v1791, %v1833
    %1835 = vdwg.mxu0
    %1836 = vmatprep.subr.bf16.mxu0 %v1550
    %1837 = vmatpush1.bf16.msra.mxu0 %v1549
    %1838 = vmatprep.subr.bf16.mxu0 %v1554
    %1839 = vmatpush1.bf16.msra.mxu0 %v1553
    %1840 = vmatprep.subr.bf16.mxu0 %v1558
    %1841 = vmatpush1.bf16.msra.mxu0 %v1557
    %1842 = vmatprep.subr.bf16.mxu0 %v1562
    %1843 = vmatpush1.bf16.msra.mxu0 %v1561
    %1844 = vmatprep.subr.bf16.mxu0 %v1566
    %1845 = vmatpush1.bf16.msra.mxu0 %v1565
    %1846 = vmatprep.subr.bf16.mxu0 %v1570
    %1847 = vmatpush1.bf16.msra.mxu0 %v1569
    %1848 = vmatprep.subr.bf16.mxu0 %v1574
    %1849 = vmatpush1.bf16.msra.mxu0 %v1573
    %1850 = vmatprep.subr.bf16.mxu0 %v1578
    %1851 = vmatpush1.bf16.msra.mxu0 %v1577
    %1852 = vmatprep.subr.bf16.mxu0 %v1582
    %1853 = vmatpush1.bf16.msra.mxu0 %v1581
    %1854 = vmatprep.subr.bf16.mxu0 %v1586
    %1855 = vmatpush1.bf16.msra.mxu0 %v1585
    %1856 = vmatprep.subr.bf16.mxu0 %v1590
    %1857 = vmatpush1.bf16.msra.mxu0 %v1589
    %1858 = vmatprep.subr.bf16.mxu0 %v1594
    %1859 = vmatpush1.bf16.msra.mxu0 %v1593
    %1860 = vmatprep.subr.bf16.mxu0 %v1598
    %1861 = vmatpush1.bf16.msra.mxu0 %v1597
    %1862 = vmatprep.subr.bf16.mxu0 %v1602
    %1863 = vmatpush1.bf16.msra.mxu0 %v1601
    %1864 = vmatprep.subr.bf16.mxu0 %v1606
    %1865 = vmatpush1.bf16.msra.mxu0 %v1605
    %1866 = vmatprep.subr.bf16.mxu0 %v1610
    %1867 = vmatpush1.bf16.msra.mxu0 %v1609
    %1868 = vmatprep.mubr.bf16.mxu0 %v1221
    %1869 = vmatmul.mubr.bf16.gmra.mrb[0].mxu0 %v1220
    %v1870 = vpop.f32.mrb[0].mxu0
    %v1871 = vadd.f32 %v1238, %v1870
    %v1872 = vpop.f32.mrb[0].mxu0
    %v1873 = vadd.f32 %v1242, %v1872
    %v1874 = vpop.f32.mrb[0].mxu0
    %v1875 = vadd.f32 %v1238, %v1874
    %v1876 = vpop.f32.mrb[0].mxu0
    %v1877 = vadd.f32 %v1242, %v1876
    %1878 = vdwg.mxu0
    %1879 = vmatprep.subr.bf16.mxu0 %v1614
    %1880 = vmatpush1.bf16.msra.mxu0 %v1613
    %1881 = vmatprep.subr.bf16.mxu0 %v1618
    %1882 = vmatpush1.bf16.msra.mxu0 %v1617
    %1883 = vmatprep.subr.bf16.mxu0 %v1622
    %1884 = vmatpush1.bf16.msra.mxu0 %v1621
    %1885 = vmatprep.subr.bf16.mxu0 %v1626
    %1886 = vmatpush1.bf16.msra.mxu0 %v1625
    %1887 = vmatprep.subr.bf16.mxu0 %v1630
    %1888 = vmatpush1.bf16.msra.mxu0 %v1629
    %1889 = vmatprep.subr.bf16.mxu0 %v1634
    %1890 = vmatpush1.bf16.msra.mxu0 %v1633
    %1891 = vmatprep.subr.bf16.mxu0 %v1638
    %1892 = vmatpush1.bf16.msra.mxu0 %v1637
    %1893 = vmatprep.subr.bf16.mxu0 %v1642
    %1894 = vmatpush1.bf16.msra.mxu0 %v1641
    %1895 = vmatprep.subr.bf16.mxu0 %v1646
    %1896 = vmatpush1.bf16.msra.mxu0 %v1645
    %1897 = vmatprep.subr.bf16.mxu0 0
    %1898 = vmatpush1.bf16.msra.mxu0 0
    %1899 = vmatprep.subr.bf16.mxu0 0
    %1900 = vmatpush1.bf16.msra.mxu0 0
    %1901 = vmatprep.subr.bf16.mxu0 0
    %1902 = vmatpush1.bf16.msra.mxu0 0
    %1903 = vmatprep.subr.bf16.mxu0 0
    %1904 = vmatpush1.bf16.msra.mxu0 0
    %1905 = vmatprep.subr.bf16.mxu0 0
    %1906 = vmatpush1.bf16.msra.mxu0 0
    %1907 = vmatprep.subr.bf16.mxu0 0
    %1908 = vmatpush1.bf16.msra.mxu0 0
    %1909 = vmatprep.subr.bf16.mxu0 0
    %1910 = vmatpush1.bf16.msra.mxu0 0
    %1911 = vmatprep.mubr.bf16.mxu0 %v1748
    %1912 = vmatmul.mubr.bf16.gmra.mrb[0].mxu0 %v1222
    %v1913 = vpop.f32.mrb[0].mxu0
    %v1914 = vadd.f32 %v1871, %v1913
    %v1915 = vpop.f32.mrb[0].mxu0
    %v1916 = vadd.f32 %v1873, %v1915
    %v1917 = vpop.f32.mrb[0].mxu0
    %v1918 = vadd.f32 %v1875, %v1917
    %v1919 = vpop.f32.mrb[0].mxu0
    %v1920 = vadd.f32 %v1877, %v1919
    %1921 = vdwg.mxu0
    %v1922 = vmax.f32 %v1828, 0.0
    %v1923 = vmax.f32 %v1830, 0.0
    %v1924 = vmax.f32 %v1914, 0.0
    %v1925 = vmax.f32 %v1916, 0.0
    %v1926 = vmax.f32 %v1832, 0.0
    %v1927 = vmax.f32 %v1834, 0.0
    %v1928 = vmax.f32 %v1918, 0.0
    %v1929 = vmax.f32 %v1920, 0.0
    %s1930 = scalar_lea.vmem [#allocation7], 1600
    %v1931 = vld [vmem:[%s1930] sm:$0xff]
    %v1932 = vld [vmem:[%s1930 + $0x8] sm:$0xff]
    %v1933 = vld [vmem:[%s1930 + $0x10] sm:$0xff]
    %v1934 = vld [vmem:[%s1930 + $0x18] sm:$0xff]
    %v1935 = vld [vmem:[%s1930 + $0x20] sm:$0xff]
    %v1936 = vld [vmem:[%s1930 + $0x28] sm:$0xff]
    %v1937 = vld [vmem:[%s1930 + $0x30] sm:$0xff]
    %v1938 = vld [vmem:[%s1930 + $0x38] sm:$0xff]
    %v1939 = vld [vmem:[%s1930 + $0x40] sm:$0xff]
    %v1940 = vld [vmem:[%s1930 + $0x48] sm:$0xff]
    %v1941 = vld [vmem:[%s1930 + $0x50] sm:$0xff]
    %v1942 = vld [vmem:[%s1930 + $0x58] sm:$0xff]
    %v1943 = vld [vmem:[%s1930 + $0x60] sm:$0xff]
    %v1944 = vld [vmem:[%s1930 + $0x68] sm:$0xff]
    %v1945 = vld [vmem:[%s1930 + $0x70] sm:$0xff]
    %v1946 = vld [vmem:[%s1930 + $0x78] sm:$0xff]
    %v1947 = vld [vmem:[%s1930 + $0x80] sm:$0xff]
    %v1948 = vld [vmem:[%s1930 + $0x88] sm:$0xff]
    %v1949 = vld [vmem:[%s1930 + $0x90] sm:$0xff]
    %v1950 = vld [vmem:[%s1930 + $0x98] sm:$0xff]
    %v1951 = vld [vmem:[%s1930 + $0xa0] sm:$0xff]
    %v1952 = vld [vmem:[%s1930 + $0xa8] sm:$0xff]
    %v1953 = vld [vmem:[%s1930 + $0xb0] sm:$0xff]
    %v1954 = vld [vmem:[%s1930 + $0xb8] sm:$0xff]
    %v1955 = vld [vmem:[%s1930 + $0xc0] sm:$0xff]
    %v1956 = vld [vmem:[%s1930 + $0xc8] sm:$0xff]
    %v1957 = vld [vmem:[%s1930 + $0xd0] sm:$0xff]
    %v1958 = vld [vmem:[%s1930 + $0xd8] sm:$0xff]
    %v1959 = vld [vmem:[%s1930 + $0xe0] sm:$0xff]
    %v1960 = vld [vmem:[%s1930 + $0xe8] sm:$0xff]
    %v1961 = vld [vmem:[%s1930 + $0xf0] sm:$0xff]
    %v1962 = vld [vmem:[%s1930 + $0xf8] sm:$0xff]
    %v1963 = vld [vmem:[%s1930 + $0x100] sm:$0xff]
    %v1964 = vld [vmem:[%s1930 + $0x108] sm:$0xff]
    %v1965 = vld [vmem:[%s1930 + $0x110] sm:$0xff]
    %v1966 = vld [vmem:[%s1930 + $0x118] sm:$0xff]
    %v1967 = vld [vmem:[%s1930 + $0x120] sm:$0xff]
    %v1968 = vld [vmem:[%s1930 + $0x128] sm:$0xff]
    %v1969 = vld [vmem:[%s1930 + $0x130] sm:$0xff]
    %v1970 = vld [vmem:[%s1930 + $0x138] sm:$0xff]
    %v1971 = vld [vmem:[%s1930 + $0x140] sm:$0xff]
    %v1972 = vld [vmem:[%s1930 + $0x148] sm:$0xff]
    %v1973 = vld [vmem:[%s1930 + $0x150] sm:$0xff]
    %v1974 = vld [vmem:[%s1930 + $0x158] sm:$0xff]
    %v1975 = vld [vmem:[%s1930 + $0x160] sm:$0xff]
    %v1976 = vld [vmem:[%s1930 + $0x168] sm:$0xff]
    %v1977 = vld [vmem:[%s1930 + $0x170] sm:$0xff]
    %v1978 = vld [vmem:[%s1930 + $0x178] sm:$0xff]
    %v1979 = vld [vmem:[%s1930 + $0x180] sm:$0xff]
    %v1980 = vld [vmem:[%s1930 + $0x188] sm:$0xff]
    %v1981 = vld [vmem:[%s1930 + $0x190] sm:$0xff]
    %v1982 = vld [vmem:[%s1930 + $0x198] sm:$0xff]
    %v1983 = vld [vmem:[%s1930 + $0x1a0] sm:$0xff]
    %v1984 = vld [vmem:[%s1930 + $0x1a8] sm:$0xff]
    %v1985 = vld [vmem:[%s1930 + $0x1b0] sm:$0xff]
    %v1986 = vld [vmem:[%s1930 + $0x1b8] sm:$0xff]
    %v1987 = vld [vmem:[%s1930 + $0x1c0] sm:$0xff]
    %v1988 = vld [vmem:[%s1930 + $0x1c8] sm:$0xff]
    %v1989 = vld [vmem:[%s1930 + $0x1d0] sm:$0xff]
    %v1990 = vld [vmem:[%s1930 + $0x1d8] sm:$0xff]
    %v1991 = vld [vmem:[%s1930 + $0x1e0] sm:$0xff]
    %v1992 = vld [vmem:[%s1930 + $0x1e8] sm:$0xff]
    %v1993 = vld [vmem:[%s1930 + $0x1f0] sm:$0xff]
    %v1994 = vld [vmem:[%s1930 + $0x1f8] sm:$0xff]
    %v1995 = vld [vmem:[%s1930 + $0x200] sm:$0xff]
    %v1996 = vld [vmem:[%s1930 + $0x208] sm:$0xff]
    %v1997 = vld [vmem:[%s1930 + $0x210] sm:$0xff]
    %v1998 = vld [vmem:[%s1930 + $0x218] sm:$0xff]
    %v1999 = vld [vmem:[%s1930 + $0x220] sm:$0xff]
    %v2000 = vld [vmem:[%s1930 + $0x228] sm:$0xff]
    %v2001 = vld [vmem:[%s1930 + $0x230] sm:$0xff]
    %v2002 = vld [vmem:[%s1930 + $0x238] sm:$0xff]
    %v2003 = vld [vmem:[%s1930 + $0x240] sm:$0xff]
    %v2004 = vld [vmem:[%s1930 + $0x248] sm:$0xff]
    %v2005 = vld [vmem:[%s1930 + $0x250] sm:$0xff]
    %v2006 = vld [vmem:[%s1930 + $0x258] sm:$0xff]
    %v2007 = vld [vmem:[%s1930 + $0x260] sm:$0xff]
    %v2008 = vld [vmem:[%s1930 + $0x268] sm:$0xff]
    %v2009 = vld [vmem:[%s1930 + $0x270] sm:$0xff]
    %v2010 = vld [vmem:[%s1930 + $0x278] sm:$0xff]
    %v2011 = vld [vmem:[%s1930 + $0x280] sm:$0xff]
    %v2012 = vld [vmem:[%s1930 + $0x288] sm:$0xff]
    %v2013 = vld [vmem:[%s1930 + $0x290] sm:$0xff]
    %v2014 = vld [vmem:[%s1930 + $0x298] sm:$0xff]
    %v2015 = vld [vmem:[%s1930 + $0x2a0] sm:$0xff]
    %v2016 = vld [vmem:[%s1930 + $0x2a8] sm:$0xff]
    %v2017 = vld [vmem:[%s1930 + $0x2b0] sm:$0xff]
    %v2018 = vld [vmem:[%s1930 + $0x2b8] sm:$0xff]
    %v2019 = vld [vmem:[%s1930 + $0x2c0] sm:$0xff]
    %v2020 = vld [vmem:[%s1930 + $0x2c8] sm:$0xff]
    %v2021 = vld [vmem:[%s1930 + $0x2d0] sm:$0xff]
    %v2022 = vld [vmem:[%s1930 + $0x2d8] sm:$0xff]
    %v2023 = vld [vmem:[%s1930 + $0x2e0] sm:$0xff]
    %v2024 = vld [vmem:[%s1930 + $0x2e8] sm:$0xff]
    %v2025 = vld [vmem:[%s1930 + $0x2f0] sm:$0xff]
    %v2026 = vld [vmem:[%s1930 + $0x2f8] sm:$0xff]
    %v2027 = vld [vmem:[%s1930 + $0x300] sm:$0xff]
    %v2028 = vld [vmem:[%s1930 + $0x308] sm:$0xff]
    %v2029 = vld [vmem:[%s1930 + $0x310] sm:$0xff]
    %v2030 = vld [vmem:[%s1930 + $0x318] sm:$0xff]
    %v2031 = vpack.c.bf16 %v1926, %v1922
    %v2032 = vpack.c.bf16 %v1927, %v1923
    %v2033 = vpack.c.bf16 %v1928, %v1924
    %v2034 = vpack.c.bf16 %v1929, %v1925
    %s2035 = scalar_lea.vmem [#allocation13], 3
    %v2036 = vld [vmem:[%s2035] ss:$8 sm:$0xf]
    %v2038 = vlaneseq
    %v2039 = vshrl.u32 %v2038, 7
    %v2040 = vsub.s32 0, %v2039
    %v2041 = vrot.slane %v2036, %v2040
    %v2042 = vlaneseq
    %v2043 = vshrl.u32 %v2042, 7
    %v2044 = vsub.s32 1, %v2043
    %v2045 = vrot.slane %v2036, %v2044
    %v2046 = vlaneseq
    %v2047 = vshrl.u32 %v2046, 7
    %v2048 = vsub.s32 2, %v2047
    %v2049 = vrot.slane %v2036, %v2048
    %v2050 = vlaneseq
    %v2051 = vshrl.u32 %v2050, 7
    %v2052 = vsub.s32 3, %v2051
    %v2053 = vrot.slane %v2036, %v2052
    %v2158 = vunpack.c.l.b16 %v1931
    %v2159 = vunpack.c.h.b16 %v1931
    %v2160 = vunpack.c.l.b16 %v1932
    %v2161 = vunpack.c.h.b16 %v1932
    %v2162 = vunpack.c.l.b16 %v1933
    %v2163 = vunpack.c.h.b16 %v1933
    %v2164 = vunpack.c.l.b16 %v1934
    %v2165 = vunpack.c.h.b16 %v1934
    %v2166 = vunpack.c.l.b16 %v1935
    %v2167 = vunpack.c.h.b16 %v1935
    %v2168 = vunpack.c.l.b16 %v1936
    %v2169 = vunpack.c.h.b16 %v1936
    %v2170 = vunpack.c.l.b16 %v1937
    %v2171 = vunpack.c.h.b16 %v1937
    %v2172 = vunpack.c.l.b16 %v1938
    %v2173 = vunpack.c.h.b16 %v1938
    %v2174 = vunpack.c.l.b16 %v1939
    %v2175 = vunpack.c.h.b16 %v1939
    %v2176 = vunpack.c.l.b16 %v1940
    %v2177 = vunpack.c.h.b16 %v1940
    %v2178 = vunpack.c.l.b16 %v1941
    %v2179 = vunpack.c.h.b16 %v1941
    %v2180 = vunpack.c.l.b16 %v1942
    %v2181 = vunpack.c.h.b16 %v1942
    %v2182 = vunpack.c.l.b16 %v1943
    %v2183 = vunpack.c.h.b16 %v1943
    %v2184 = vunpack.c.l.b16 %v1944
    %v2185 = vunpack.c.h.b16 %v1944
    %v2186 = vunpack.c.l.b16 %v1945
    %v2187 = vunpack.c.h.b16 %v1945
    %v2188 = vunpack.c.l.b16 %v1946
    %v2189 = vunpack.c.h.b16 %v1946
    %v2190 = vunpack.c.l.b16 %v1947
    %v2191 = vunpack.c.h.b16 %v1947
    %v2192 = vunpack.c.l.b16 %v1948
    %v2193 = vunpack.c.h.b16 %v1948
    %v2194 = vunpack.c.l.b16 %v1949
    %v2195 = vunpack.c.h.b16 %v1949
    %v2196 = vunpack.c.l.b16 %v1950
    %v2197 = vunpack.c.h.b16 %v1950
    %v2198 = vunpack.c.l.b16 %v1951
    %v2199 = vunpack.c.h.b16 %v1951
    %v2200 = vunpack.c.l.b16 %v1952
    %v2201 = vunpack.c.h.b16 %v1952
    %v2202 = vunpack.c.l.b16 %v1953
    %v2203 = vunpack.c.h.b16 %v1953
    %v2204 = vunpack.c.l.b16 %v1954
    %v2205 = vunpack.c.h.b16 %v1954
    %v2206 = vunpack.c.l.b16 %v1955
    %v2207 = vunpack.c.h.b16 %v1955
    %v2208 = vunpack.c.l.b16 %v1956
    %v2209 = vunpack.c.h.b16 %v1956
    %v2210 = vunpack.c.l.b16 %v1957
    %v2211 = vunpack.c.h.b16 %v1957
    %v2212 = vunpack.c.l.b16 %v1958
    %v2213 = vunpack.c.h.b16 %v1958
    %v2214 = vunpack.c.l.b16 %v1959
    %v2215 = vunpack.c.h.b16 %v1959
    %v2216 = vunpack.c.l.b16 %v1960
    %v2217 = vunpack.c.h.b16 %v1960
    %v2218 = vunpack.c.l.b16 %v1961
    %v2219 = vunpack.c.h.b16 %v1961
    %v2220 = vunpack.c.l.b16 %v1962
    %v2221 = vunpack.c.h.b16 %v1962
    %v2222 = vunpack.c.l.b16 %v1963
    %v2223 = vunpack.c.h.b16 %v1963
    %v2224 = vunpack.c.l.b16 %v1964
    %v2225 = vunpack.c.h.b16 %v1964
    %v2226 = vunpack.c.l.b16 %v1965
    %v2227 = vunpack.c.h.b16 %v1965
    %v2228 = vunpack.c.l.b16 %v1966
    %v2229 = vunpack.c.h.b16 %v1966
    %v2230 = vunpack.c.l.b16 %v1967
    %v2231 = vunpack.c.h.b16 %v1967
    %v2232 = vunpack.c.l.b16 %v1968
    %v2233 = vunpack.c.h.b16 %v1968
    %v2234 = vunpack.c.l.b16 %v1969
    %v2235 = vunpack.c.h.b16 %v1969
    %v2236 = vunpack.c.l.b16 %v1970
    %v2237 = vunpack.c.h.b16 %v1970
    %v2238 = vunpack.c.l.b16 %v1971
    %v2239 = vunpack.c.h.b16 %v1971
    %v2240 = vunpack.c.l.b16 %v1972
    %v2241 = vunpack.c.h.b16 %v1972
    %v2242 = vunpack.c.l.b16 %v1973
    %v2243 = vunpack.c.h.b16 %v1973
    %v2244 = vunpack.c.l.b16 %v1974
    %v2245 = vunpack.c.h.b16 %v1974
    %v2246 = vunpack.c.l.b16 %v1975
    %v2247 = vunpack.c.h.b16 %v1975
    %v2248 = vunpack.c.l.b16 %v1976
    %v2249 = vunpack.c.h.b16 %v1976
    %v2250 = vunpack.c.l.b16 %v1977
    %v2251 = vunpack.c.h.b16 %v1977
    %v2252 = vunpack.c.l.b16 %v1978
    %v2253 = vunpack.c.h.b16 %v1978
    %v2254 = vunpack.c.l.b16 %v1979
    %v2255 = vunpack.c.h.b16 %v1979
    %v2256 = vunpack.c.l.b16 %v1980
    %v2257 = vunpack.c.h.b16 %v1980
    %v2258 = vunpack.c.l.b16 %v1981
    %v2259 = vunpack.c.h.b16 %v1981
    %v2260 = vunpack.c.l.b16 %v1982
    %v2261 = vunpack.c.h.b16 %v1982
    %v2262 = vunpack.c.l.b16 %v1983
    %v2263 = vunpack.c.h.b16 %v1983
    %v2264 = vunpack.c.l.b16 %v1984
    %v2265 = vunpack.c.h.b16 %v1984
    %v2266 = vunpack.c.l.b16 %v1985
    %v2267 = vunpack.c.h.b16 %v1985
    %v2268 = vunpack.c.l.b16 %v1986
    %v2269 = vunpack.c.h.b16 %v1986
    %v2270 = vunpack.c.l.b16 %v1987
    %v2271 = vunpack.c.h.b16 %v1987
    %v2272 = vunpack.c.l.b16 %v1988
    %v2273 = vunpack.c.h.b16 %v1988
    %v2274 = vunpack.c.l.b16 %v1989
    %v2275 = vunpack.c.h.b16 %v1989
    %v2276 = vunpack.c.l.b16 %v1990
    %v2277 = vunpack.c.h.b16 %v1990
    %v2278 = vunpack.c.l.b16 %v1991
    %v2279 = vunpack.c.h.b16 %v1991
    %v2280 = vunpack.c.l.b16 %v1992
    %v2281 = vunpack.c.h.b16 %v1992
    %v2282 = vunpack.c.l.b16 %v1993
    %v2283 = vunpack.c.h.b16 %v1993
    %v2284 = vunpack.c.l.b16 %v1994
    %v2285 = vunpack.c.h.b16 %v1994
    %v2286 = vunpack.c.l.b16 %v1995
    %v2287 = vunpack.c.h.b16 %v1995
    %v2288 = vunpack.c.l.b16 %v1996
    %v2289 = vunpack.c.h.b16 %v1996
    %v2290 = vunpack.c.l.b16 %v1997
    %v2291 = vunpack.c.h.b16 %v1997
    %v2292 = vunpack.c.l.b16 %v1998
    %v2293 = vunpack.c.h.b16 %v1998
    %v2294 = vunpack.c.l.b16 %v1999
    %v2295 = vunpack.c.h.b16 %v1999
    %v2296 = vunpack.c.l.b16 %v2000
    %v2297 = vunpack.c.h.b16 %v2000
    %v2298 = vunpack.c.l.b16 %v2001
    %v2299 = vunpack.c.h.b16 %v2001
    %v2300 = vunpack.c.l.b16 %v2002
    %v2301 = vunpack.c.h.b16 %v2002
    %v2302 = vunpack.c.l.b16 %v2003
    %v2303 = vunpack.c.h.b16 %v2003
    %v2304 = vunpack.c.l.b16 %v2004
    %v2305 = vunpack.c.h.b16 %v2004
    %v2306 = vunpack.c.l.b16 %v2005
    %v2307 = vunpack.c.h.b16 %v2005
    %v2308 = vunpack.c.l.b16 %v2006
    %v2309 = vunpack.c.h.b16 %v2006
    %v2310 = vunpack.c.l.b16 %v2007
    %v2311 = vunpack.c.h.b16 %v2007
    %v2312 = vunpack.c.l.b16 %v2008
    %v2313 = vunpack.c.h.b16 %v2008
    %v2314 = vunpack.c.l.b16 %v2009
    %v2315 = vunpack.c.h.b16 %v2009
    %v2316 = vunpack.c.l.b16 %v2010
    %v2317 = vunpack.c.h.b16 %v2010
    %v2318 = vunpack.c.l.b16 %v2011
    %v2319 = vunpack.c.h.b16 %v2011
    %v2320 = vunpack.c.l.b16 %v2012
    %v2321 = vunpack.c.h.b16 %v2012
    %v2322 = vunpack.c.l.b16 %v2013
    %v2323 = vunpack.c.h.b16 %v2013
    %v2324 = vunpack.c.l.b16 %v2014
    %v2325 = vunpack.c.h.b16 %v2014
    %v2326 = vunpack.c.l.b16 %v2015
    %v2327 = vunpack.c.h.b16 %v2015
    %v2328 = vunpack.c.l.b16 %v2016
    %v2329 = vunpack.c.h.b16 %v2016
    %v2330 = vunpack.c.l.b16 %v2017
    %v2331 = vunpack.c.h.b16 %v2017
    %v2332 = vunpack.c.l.b16 %v2018
    %v2333 = vunpack.c.h.b16 %v2018
    %v2334 = vunpack.c.l.b16 %v2019
    %v2335 = vunpack.c.h.b16 %v2019
    %v2336 = vunpack.c.l.b16 %v2020
    %v2337 = vunpack.c.h.b16 %v2020
    %v2338 = vunpack.c.l.b16 %v2021
    %v2339 = vunpack.c.h.b16 %v2021
    %v2340 = vunpack.c.l.b16 %v2022
    %v2341 = vunpack.c.h.b16 %v2022
    %v2342 = vunpack.c.l.b16 %v2023
    %v2343 = vunpack.c.h.b16 %v2023
    %v2344 = vunpack.c.l.b16 %v2024
    %v2345 = vunpack.c.h.b16 %v2024
    %v2346 = vunpack.c.l.b16 %v2025
    %v2347 = vunpack.c.h.b16 %v2025
    %v2348 = vunpack.c.l.b16 %v2026
    %v2349 = vunpack.c.h.b16 %v2026
    %v2350 = vunpack.c.l.b16 %v2027
    %v2351 = vunpack.c.h.b16 %v2027
    %v2352 = vunpack.c.l.b16 %v2028
    %v2353 = vunpack.c.h.b16 %v2028
    %v2354 = vunpack.c.l.b16 %v2029
    %v2355 = vunpack.c.h.b16 %v2029
    %v2356 = vunpack.c.l.b16 %v2030
    %v2357 = vunpack.c.h.b16 %v2030
    %v2358 = vpack.c.b16 %v2162, %v2158
    %v2359 = vpack.c.b16 %v2163, %v2159
    %v2360 = vpack.c.b16 %v2164, %v2160
    %v2361 = vpack.c.b16 %v2165, %v2161
    %v2362 = vpack.c.b16 %v2170, %v2166
    %v2363 = vpack.c.b16 %v2171, %v2167
    %v2364 = vpack.c.b16 %v2172, %v2168
    %v2365 = vpack.c.b16 %v2173, %v2169
    %v2366 = vpack.c.b16 %v2178, %v2174
    %v2367 = vpack.c.b16 %v2179, %v2175
    %v2368 = vpack.c.b16 %v2180, %v2176
    %v2369 = vpack.c.b16 %v2181, %v2177
    %v2370 = vpack.c.b16 %v2186, %v2182
    %v2371 = vpack.c.b16 %v2187, %v2183
    %v2372 = vpack.c.b16 %v2188, %v2184
    %v2373 = vpack.c.b16 %v2189, %v2185
    %v2374 = vpack.c.b16 %v2194, %v2190
    %v2375 = vpack.c.b16 %v2195, %v2191
    %v2376 = vpack.c.b16 %v2196, %v2192
    %v2377 = vpack.c.b16 %v2197, %v2193
    %v2378 = vpack.c.b16 %v2202, %v2198
    %v2379 = vpack.c.b16 %v2203, %v2199
    %v2380 = vpack.c.b16 %v2204, %v2200
    %v2381 = vpack.c.b16 %v2205, %v2201
    %v2382 = vpack.c.b16 %v2210, %v2206
    %v2383 = vpack.c.b16 %v2211, %v2207
    %v2384 = vpack.c.b16 %v2212, %v2208
    %v2385 = vpack.c.b16 %v2213, %v2209
    %v2386 = vpack.c.b16 %v2218, %v2214
    %v2387 = vpack.c.b16 %v2219, %v2215
    %v2388 = vpack.c.b16 %v2220, %v2216
    %v2389 = vpack.c.b16 %v2221, %v2217
    %v2390 = vpack.c.b16 %v2226, %v2222
    %v2391 = vpack.c.b16 %v2227, %v2223
    %v2392 = vpack.c.b16 %v2228, %v2224
    %v2393 = vpack.c.b16 %v2229, %v2225
    %v2394 = vpack.c.b16 %v2234, %v2230
    %v2395 = vpack.c.b16 %v2235, %v2231
    %v2396 = vpack.c.b16 %v2236, %v2232
    %v2397 = vpack.c.b16 %v2237, %v2233
    %v2398 = vpack.c.b16 %v2242, %v2238
    %v2399 = vpack.c.b16 %v2243, %v2239
    %v2400 = vpack.c.b16 %v2244, %v2240
    %v2401 = vpack.c.b16 %v2245, %v2241
    %v2402 = vpack.c.b16 %v2250, %v2246
    %v2403 = vpack.c.b16 %v2251, %v2247
    %v2404 = vpack.c.b16 %v2252, %v2248
    %v2405 = vpack.c.b16 %v2253, %v2249
    %v2406 = vpack.c.b16 %v2258, %v2254
    %v2407 = vpack.c.b16 %v2259, %v2255
    %v2408 = vpack.c.b16 %v2260, %v2256
    %v2409 = vpack.c.b16 %v2261, %v2257
    %v2410 = vpack.c.b16 %v2266, %v2262
    %v2411 = vpack.c.b16 %v2267, %v2263
    %v2412 = vpack.c.b16 %v2268, %v2264
    %v2413 = vpack.c.b16 %v2269, %v2265
    %v2414 = vpack.c.b16 %v2274, %v2270
    %v2415 = vpack.c.b16 %v2275, %v2271
    %v2416 = vpack.c.b16 %v2276, %v2272
    %v2417 = vpack.c.b16 %v2277, %v2273
    %v2418 = vpack.c.b16 %v2282, %v2278
    %v2419 = vpack.c.b16 %v2283, %v2279
    %v2420 = vpack.c.b16 %v2284, %v2280
    %v2421 = vpack.c.b16 %v2285, %v2281
    %v2422 = vpack.c.b16 %v2290, %v2286
    %v2423 = vpack.c.b16 %v2291, %v2287
    %v2424 = vpack.c.b16 %v2292, %v2288
    %v2425 = vpack.c.b16 %v2293, %v2289
    %v2426 = vpack.c.b16 %v2298, %v2294
    %v2427 = vpack.c.b16 %v2299, %v2295
    %v2428 = vpack.c.b16 %v2300, %v2296
    %v2429 = vpack.c.b16 %v2301, %v2297
    %v2430 = vpack.c.b16 %v2306, %v2302
    %v2431 = vpack.c.b16 %v2307, %v2303
    %v2432 = vpack.c.b16 %v2308, %v2304
    %v2433 = vpack.c.b16 %v2309, %v2305
    %v2434 = vpack.c.b16 %v2314, %v2310
    %v2435 = vpack.c.b16 %v2315, %v2311
    %v2436 = vpack.c.b16 %v2316, %v2312
    %v2437 = vpack.c.b16 %v2317, %v2313
    %v2438 = vpack.c.b16 %v2322, %v2318
    %v2439 = vpack.c.b16 %v2323, %v2319
    %v2440 = vpack.c.b16 %v2324, %v2320
    %v2441 = vpack.c.b16 %v2325, %v2321
    %v2442 = vpack.c.b16 %v2330, %v2326
    %v2443 = vpack.c.b16 %v2331, %v2327
    %v2444 = vpack.c.b16 %v2332, %v2328
    %v2445 = vpack.c.b16 %v2333, %v2329
    %v2446 = vpack.c.b16 %v2338, %v2334
    %v2447 = vpack.c.b16 %v2339, %v2335
    %v2448 = vpack.c.b16 %v2340, %v2336
    %v2449 = vpack.c.b16 %v2341, %v2337
    %v2450 = vpack.c.b16 %v2346, %v2342
    %v2451 = vpack.c.b16 %v2347, %v2343
    %v2452 = vpack.c.b16 %v2348, %v2344
    %v2453 = vpack.c.b16 %v2349, %v2345
    %v2454 = vpack.c.b16 %v2354, %v2350
    %v2455 = vpack.c.b16 %v2355, %v2351
    %v2456 = vpack.c.b16 %v2356, %v2352
    %v2457 = vpack.c.b16 %v2357, %v2353
    %v2559 = vsel %vm935, %v2034, 0
    %2561 = vmatprep.subr.bf16.mxu0 %v2359
    %2562 = vmatpush1.bf16.msra.mxu0 %v2358
    %2563 = vmatprep.subr.bf16.mxu0 %v2363
    %2564 = vmatpush1.bf16.msra.mxu0 %v2362
    %2565 = vmatprep.subr.bf16.mxu0 %v2367
    %2566 = vmatpush1.bf16.msra.mxu0 %v2366
    %2567 = vmatprep.subr.bf16.mxu0 %v2371
    %2568 = vmatpush1.bf16.msra.mxu0 %v2370
    %2569 = vmatprep.subr.bf16.mxu0 %v2375
    %2570 = vmatpush1.bf16.msra.mxu0 %v2374
    %2571 = vmatprep.subr.bf16.mxu0 %v2379
    %2572 = vmatpush1.bf16.msra.mxu0 %v2378
    %2573 = vmatprep.subr.bf16.mxu0 %v2383
    %2574 = vmatpush1.bf16.msra.mxu0 %v2382
    %2575 = vmatprep.subr.bf16.mxu0 %v2387
    %2576 = vmatpush1.bf16.msra.mxu0 %v2386
    %2577 = vmatprep.subr.bf16.mxu0 %v2391
    %2578 = vmatpush1.bf16.msra.mxu0 %v2390
    %2579 = vmatprep.subr.bf16.mxu0 %v2395
    %2580 = vmatpush1.bf16.msra.mxu0 %v2394
    %2581 = vmatprep.subr.bf16.mxu0 %v2399
    %2582 = vmatpush1.bf16.msra.mxu0 %v2398
    %2583 = vmatprep.subr.bf16.mxu0 %v2403
    %2584 = vmatpush1.bf16.msra.mxu0 %v2402
    %2585 = vmatprep.subr.bf16.mxu0 %v2407
    %2586 = vmatpush1.bf16.msra.mxu0 %v2406
    %2587 = vmatprep.subr.bf16.mxu0 %v2411
    %2588 = vmatpush1.bf16.msra.mxu0 %v2410
    %2589 = vmatprep.subr.bf16.mxu0 %v2415
    %2590 = vmatpush1.bf16.msra.mxu0 %v2414
    %2591 = vmatprep.subr.bf16.mxu0 %v2419
    %2592 = vmatpush1.bf16.msra.mxu0 %v2418
    %2593 = vmatprep.mubr.bf16.mxu0 %v2032
    %2594 = vmatmul.mubr.bf16.gmra.mrb[0].mxu0 %v2031
    %v2595 = vpop.f32.mrb[0].mxu0
    %v2596 = vadd.f32 %v2041, %v2595
    %v2597 = vpop.f32.mrb[0].mxu0
    %v2598 = vadd.f32 %v2045, %v2597
    %v2599 = vpop.f32.mrb[0].mxu0
    %v2600 = vadd.f32 %v2041, %v2599
    %v2601 = vpop.f32.mrb[0].mxu0
    %v2602 = vadd.f32 %v2045, %v2601
    %2603 = vdwg.mxu0
    %2604 = vmatprep.subr.bf16.mxu0 %v2423
    %2605 = vmatpush1.bf16.msra.mxu0 %v2422
    %2606 = vmatprep.subr.bf16.mxu0 %v2427
    %2607 = vmatpush1.bf16.msra.mxu0 %v2426
    %2608 = vmatprep.subr.bf16.mxu0 %v2431
    %2609 = vmatpush1.bf16.msra.mxu0 %v2430
    %2610 = vmatprep.subr.bf16.mxu0 %v2435
    %2611 = vmatpush1.bf16.msra.mxu0 %v2434
    %2612 = vmatprep.subr.bf16.mxu0 %v2439
    %2613 = vmatpush1.bf16.msra.mxu0 %v2438
    %2614 = vmatprep.subr.bf16.mxu0 %v2443
    %2615 = vmatpush1.bf16.msra.mxu0 %v2442
    %2616 = vmatprep.subr.bf16.mxu0 %v2447
    %2617 = vmatpush1.bf16.msra.mxu0 %v2446
    %2618 = vmatprep.subr.bf16.mxu0 %v2451
    %2619 = vmatpush1.bf16.msra.mxu0 %v2450
    %2620 = vmatprep.subr.bf16.mxu0 %v2455
    %2621 = vmatpush1.bf16.msra.mxu0 %v2454
    %2622 = vmatprep.subr.bf16.mxu0 0
    %2623 = vmatpush1.bf16.msra.mxu0 0
    %2624 = vmatprep.subr.bf16.mxu0 0
    %2625 = vmatpush1.bf16.msra.mxu0 0
    %2626 = vmatprep.subr.bf16.mxu0 0
    %2627 = vmatpush1.bf16.msra.mxu0 0
    %2628 = vmatprep.subr.bf16.mxu0 0
    %2629 = vmatpush1.bf16.msra.mxu0 0
    %2630 = vmatprep.subr.bf16.mxu0 0
    %2631 = vmatpush1.bf16.msra.mxu0 0
    %2632 = vmatprep.subr.bf16.mxu0 0
    %2633 = vmatpush1.bf16.msra.mxu0 0
    %2634 = vmatprep.subr.bf16.mxu0 0
    %2635 = vmatpush1.bf16.msra.mxu0 0
    %2636 = vmatprep.mubr.bf16.mxu0 %v2559
    %2637 = vmatmul.mubr.bf16.gmra.mrb[0].mxu0 %v2033
    %v2638 = vpop.f32.mrb[0].mxu0
    %v2639 = vadd.f32 %v2596, %v2638
    %v2640 = vpop.f32.mrb[0].mxu0
    %v2641 = vadd.f32 %v2598, %v2640
    %v2642 = vpop.f32.mrb[0].mxu0
    %v2643 = vadd.f32 %v2600, %v2642
    %v2644 = vpop.f32.mrb[0].mxu0
    %v2645 = vadd.f32 %v2602, %v2644
    %2646 = vdwg.mxu0
    %2647 = vmatprep.subr.bf16.mxu0 %v2361
    %2648 = vmatpush1.bf16.msra.mxu0 %v2360
    %2649 = vmatprep.subr.bf16.mxu0 %v2365
    %2650 = vmatpush1.bf16.msra.mxu0 %v2364
    %2651 = vmatprep.subr.bf16.mxu0 %v2369
    %2652 = vmatpush1.bf16.msra.mxu0 %v2368
    %2653 = vmatprep.subr.bf16.mxu0 %v2373
    %2654 = vmatpush1.bf16.msra.mxu0 %v2372
    %2655 = vmatprep.subr.bf16.mxu0 %v2377
    %2656 = vmatpush1.bf16.msra.mxu0 %v2376
    %2657 = vmatprep.subr.bf16.mxu0 %v2381
    %2658 = vmatpush1.bf16.msra.mxu0 %v2380
    %2659 = vmatprep.subr.bf16.mxu0 %v2385
    %2660 = vmatpush1.bf16.msra.mxu0 %v2384
    %2661 = vmatprep.subr.bf16.mxu0 %v2389
    %2662 = vmatpush1.bf16.msra.mxu0 %v2388
    %2663 = vmatprep.subr.bf16.mxu0 %v2393
    %2664 = vmatpush1.bf16.msra.mxu0 %v2392
    %2665 = vmatprep.subr.bf16.mxu0 %v2397
    %2666 = vmatpush1.bf16.msra.mxu0 %v2396
    %2667 = vmatprep.subr.bf16.mxu0 %v2401
    %2668 = vmatpush1.bf16.msra.mxu0 %v2400
    %2669 = vmatprep.subr.bf16.mxu0 %v2405
    %2670 = vmatpush1.bf16.msra.mxu0 %v2404
    %2671 = vmatprep.subr.bf16.mxu0 %v2409
    %2672 = vmatpush1.bf16.msra.mxu0 %v2408
    %2673 = vmatprep.subr.bf16.mxu0 %v2413
    %2674 = vmatpush1.bf16.msra.mxu0 %v2412
    %2675 = vmatprep.subr.bf16.mxu0 %v2417
    %2676 = vmatpush1.bf16.msra.mxu0 %v2416
    %2677 = vmatprep.subr.bf16.mxu0 %v2421
    %2678 = vmatpush1.bf16.msra.mxu0 %v2420
    %2679 = vmatprep.mubr.bf16.mxu0 %v2032
    %2680 = vmatmul.mubr.bf16.gmra.mrb[0].mxu0 %v2031
    %v2681 = vpop.f32.mrb[0].mxu0
    %v2682 = vadd.f32 %v2049, %v2681
    %v2683 = vpop.f32.mrb[0].mxu0
    %v2684 = vadd.f32 %v2053, %v2683
    %v2685 = vpop.f32.mrb[0].mxu0
    %v2686 = vadd.f32 %v2049, %v2685
    %v2687 = vpop.f32.mrb[0].mxu0
    %v2688 = vadd.f32 %v2053, %v2687
    %2689 = vdwg.mxu0
    %2690 = vmatprep.subr.bf16.mxu0 %v2425
    %2691 = vmatpush1.bf16.msra.mxu0 %v2424
    %2692 = vmatprep.subr.bf16.mxu0 %v2429
    %2693 = vmatpush1.bf16.msra.mxu0 %v2428
    %2694 = vmatprep.subr.bf16.mxu0 %v2433
    %2695 = vmatpush1.bf16.msra.mxu0 %v2432
    %2696 = vmatprep.subr.bf16.mxu0 %v2437
    %2697 = vmatpush1.bf16.msra.mxu0 %v2436
    %2698 = vmatprep.subr.bf16.mxu0 %v2441
    %2699 = vmatpush1.bf16.msra.mxu0 %v2440
    %2700 = vmatprep.subr.bf16.mxu0 %v2445
    %2701 = vmatpush1.bf16.msra.mxu0 %v2444
    %2702 = vmatprep.subr.bf16.mxu0 %v2449
    %2703 = vmatpush1.bf16.msra.mxu0 %v2448
    %2704 = vmatprep.subr.bf16.mxu0 %v2453
    %2705 = vmatpush1.bf16.msra.mxu0 %v2452
    %2706 = vmatprep.subr.bf16.mxu0 %v2457
    %2707 = vmatpush1.bf16.msra.mxu0 %v2456
    %2708 = vmatprep.subr.bf16.mxu0 0
    %2709 = vmatpush1.bf16.msra.mxu0 0
    %2710 = vmatprep.subr.bf16.mxu0 0
    %2711 = vmatpush1.bf16.msra.mxu0 0
    %2712 = vmatprep.subr.bf16.mxu0 0
    %2713 = vmatpush1.bf16.msra.mxu0 0
    %2714 = vmatprep.subr.bf16.mxu0 0
    %2715 = vmatpush1.bf16.msra.mxu0 0
    %2716 = vmatprep.subr.bf16.mxu0 0
    %2717 = vmatpush1.bf16.msra.mxu0 0
    %2718 = vmatprep.subr.bf16.mxu0 0
    %2719 = vmatpush1.bf16.msra.mxu0 0
    %2720 = vmatprep.subr.bf16.mxu0 0
    %2721 = vmatpush1.bf16.msra.mxu0 0
    %2722 = vmatprep.mubr.bf16.mxu0 %v2559
    %2723 = vmatmul.mubr.bf16.gmra.mrb[0].mxu0 %v2033
    %v2724 = vpop.f32.mrb[0].mxu0
    %v2725 = vadd.f32 %v2682, %v2724
    %v2726 = vpop.f32.mrb[0].mxu0
    %v2727 = vadd.f32 %v2684, %v2726
    %v2728 = vpop.f32.mrb[0].mxu0
    %v2729 = vadd.f32 %v2686, %v2728
    %v2730 = vpop.f32.mrb[0].mxu0
    %v2731 = vadd.f32 %v2688, %v2730
    %2732 = vdwg.mxu0
    %v2733 = vmax.f32 %v2639, 0.0
    %v2734 = vmax.f32 %v2641, 0.0
    %v2735 = vmax.f32 %v2725, 0.0
    %v2736 = vmax.f32 %v2727, 0.0
    %v2737 = vmax.f32 %v2643, 0.0
    %v2738 = vmax.f32 %v2645, 0.0
    %v2739 = vmax.f32 %v2729, 0.0
    %v2740 = vmax.f32 %v2731, 0.0
    %v2741 = vld [vmem:[%s4] sm:$0xf]
    %v2742 = vld [vmem:[%s4 + $0x4] sm:$0xf]
    %v2743 = vld [vmem:[%s4 + $0x8] sm:$0xf]
    %v2744 = vld [vmem:[%s4 + $0xc] sm:$0xf]
    %v2745 = vld [vmem:[%s4 + $0x10] sm:$0xf]
    %v2746 = vld [vmem:[%s4 + $0x14] sm:$0xf]
    %v2747 = vld [vmem:[%s4 + $0x18] sm:$0xf]
    %v2748 = vld [vmem:[%s4 + $0x1c] sm:$0xf]
    %v2749 = vld [vmem:[%s4 + $0x20] sm:$0xf]
    %v2750 = vld [vmem:[%s4 + $0x24] sm:$0xf]
    %v2751 = vld [vmem:[%s4 + $0x28] sm:$0xf]
    %v2752 = vld [vmem:[%s4 + $0x2c] sm:$0xf]
    %v2753 = vld [vmem:[%s4 + $0x30] sm:$0xf]
    %v2754 = vld [vmem:[%s4 + $0x34] sm:$0xf]
    %v2755 = vld [vmem:[%s4 + $0x38] sm:$0xf]
    %v2756 = vld [vmem:[%s4 + $0x3c] sm:$0xf]
    %v2757 = vld [vmem:[%s4 + $0x40] sm:$0xf]
    %v2758 = vld [vmem:[%s4 + $0x44] sm:$0xf]
    %v2759 = vld [vmem:[%s4 + $0x48] sm:$0xf]
    %v2760 = vld [vmem:[%s4 + $0x4c] sm:$0xf]
    %v2761 = vld [vmem:[%s4 + $0x50] sm:$0xf]
    %v2762 = vld [vmem:[%s4 + $0x54] sm:$0xf]
    %v2763 = vld [vmem:[%s4 + $0x58] sm:$0xf]
    %v2764 = vld [vmem:[%s4 + $0x5c] sm:$0xf]
    %v2765 = vld [vmem:[%s4 + $0x60] sm:$0xf]
    %v2766 = vld [vmem:[%s4 + $0x64] sm:$0xf]
    %v2767 = vld [vmem:[%s4 + $0x68] sm:$0xf]
    %v2768 = vld [vmem:[%s4 + $0x6c] sm:$0xf]
    %v2769 = vld [vmem:[%s4 + $0x70] sm:$0xf]
    %v2770 = vld [vmem:[%s4 + $0x74] sm:$0xf]
    %v2771 = vld [vmem:[%s4 + $0x78] sm:$0xf]
    %v2772 = vld [vmem:[%s4 + $0x7c] sm:$0xf]
    %v2773 = vld [vmem:[%s4 + $0x80] sm:$0xf]
    %v2774 = vld [vmem:[%s4 + $0x84] sm:$0xf]
    %v2775 = vld [vmem:[%s4 + $0x88] sm:$0xf]
    %v2776 = vld [vmem:[%s4 + $0x8c] sm:$0xf]
    %v2777 = vld [vmem:[%s4 + $0x90] sm:$0xf]
    %v2778 = vld [vmem:[%s4 + $0x94] sm:$0xf]
    %v2779 = vld [vmem:[%s4 + $0x98] sm:$0xf]
    %v2780 = vld [vmem:[%s4 + $0x9c] sm:$0xf]
    %v2781 = vld [vmem:[%s4 + $0xa0] sm:$0xf]
    %v2782 = vld [vmem:[%s4 + $0xa4] sm:$0xf]
    %v2783 = vld [vmem:[%s4 + $0xa8] sm:$0xf]
    %v2784 = vld [vmem:[%s4 + $0xac] sm:$0xf]
    %v2785 = vld [vmem:[%s4 + $0xb0] sm:$0xf]
    %v2786 = vld [vmem:[%s4 + $0xb4] sm:$0xf]
    %v2787 = vld [vmem:[%s4 + $0xb8] sm:$0xf]
    %v2788 = vld [vmem:[%s4 + $0xbc] sm:$0xf]
    %v2789 = vld [vmem:[%s4 + $0xc0] sm:$0xf]
    %v2790 = vld [vmem:[%s4 + $0xc4] sm:$0xf]
    %v2791 = vpack.c.bf16 %v2737, %v2733
    %v2792 = vpack.c.bf16 %v2738, %v2734
    %v2793 = vpack.c.bf16 %v2739, %v2735
    %v2794 = vpack.c.bf16 %v2740, %v2736
    %v2795 = vld [vmem:[#allocation13 + $0x4] ss:$0 sm:$0xff]
    %v2846 = vunpack.c.l.b16 %v2741
    %v2847 = vunpack.c.l.b16 %v2742
    %v2848 = vunpack.c.l.b16 %v2743
    %v2849 = vunpack.c.l.b16 %v2744
    %v2850 = vunpack.c.l.b16 %v2745
    %v2851 = vunpack.c.l.b16 %v2746
    %v2852 = vunpack.c.l.b16 %v2747
    %v2853 = vunpack.c.l.b16 %v2748
    %v2854 = vunpack.c.l.b16 %v2749
    %v2855 = vunpack.c.l.b16 %v2750
    %v2856 = vunpack.c.l.b16 %v2751
    %v2857 = vunpack.c.l.b16 %v2752
    %v2858 = vunpack.c.l.b16 %v2753
    %v2859 = vunpack.c.l.b16 %v2754
    %v2860 = vunpack.c.l.b16 %v2755
    %v2861 = vunpack.c.l.b16 %v2756
    %v2862 = vunpack.c.l.b16 %v2757
    %v2863 = vunpack.c.l.b16 %v2758
    %v2864 = vunpack.c.l.b16 %v2759
    %v2865 = vunpack.c.l.b16 %v2760
    %v2866 = vunpack.c.l.b16 %v2761
    %v2867 = vunpack.c.l.b16 %v2762
    %v2868 = vunpack.c.l.b16 %v2763
    %v2869 = vunpack.c.l.b16 %v2764
    %v2870 = vunpack.c.l.b16 %v2765
    %v2871 = vunpack.c.l.b16 %v2766
    %v2872 = vunpack.c.l.b16 %v2767
    %v2873 = vunpack.c.l.b16 %v2768
    %v2874 = vunpack.c.l.b16 %v2769
    %v2875 = vunpack.c.l.b16 %v2770
    %v2876 = vunpack.c.l.b16 %v2771
    %v2877 = vunpack.c.l.b16 %v2772
    %v2878 = vunpack.c.l.b16 %v2773
    %v2879 = vunpack.c.l.b16 %v2774
    %v2880 = vunpack.c.l.b16 %v2775
    %v2881 = vunpack.c.l.b16 %v2776
    %v2882 = vunpack.c.l.b16 %v2777
    %v2883 = vunpack.c.l.b16 %v2778
    %v2884 = vunpack.c.l.b16 %v2779
    %v2885 = vunpack.c.l.b16 %v2780
    %v2886 = vunpack.c.l.b16 %v2781
    %v2887 = vunpack.c.l.b16 %v2782
    %v2888 = vunpack.c.l.b16 %v2783
    %v2889 = vunpack.c.l.b16 %v2784
    %v2890 = vunpack.c.l.b16 %v2785
    %v2891 = vunpack.c.l.b16 %v2786
    %v2892 = vunpack.c.l.b16 %v2787
    %v2893 = vunpack.c.l.b16 %v2788
    %v2894 = vunpack.c.l.b16 %v2789
    %v2895 = vunpack.c.l.b16 %v2790
    %v2896 = vpack.c.b16 %v2847, %v2846
    %v2897 = vpack.c.b16 %v2849, %v2848
    %v2898 = vpack.c.b16 %v2851, %v2850
    %v2899 = vpack.c.b16 %v2853, %v2852
    %v2900 = vpack.c.b16 %v2855, %v2854
    %v2901 = vpack.c.b16 %v2857, %v2856
    %v2902 = vpack.c.b16 %v2859, %v2858
    %v2903 = vpack.c.b16 %v2861, %v2860
    %v2904 = vpack.c.b16 %v2863, %v2862
    %v2905 = vpack.c.b16 %v2865, %v2864
    %v2906 = vpack.c.b16 %v2867, %v2866
    %v2907 = vpack.c.b16 %v2869, %v2868
    %v2908 = vpack.c.b16 %v2871, %v2870
    %v2909 = vpack.c.b16 %v2873, %v2872
    %v2910 = vpack.c.b16 %v2875, %v2874
    %v2911 = vpack.c.b16 %v2877, %v2876
    %v2912 = vpack.c.b16 %v2879, %v2878
    %v2913 = vpack.c.b16 %v2881, %v2880
    %v2914 = vpack.c.b16 %v2883, %v2882
    %v2915 = vpack.c.b16 %v2885, %v2884
    %v2916 = vpack.c.b16 %v2887, %v2886
    %v2917 = vpack.c.b16 %v2889, %v2888
    %v2918 = vpack.c.b16 %v2891, %v2890
    %v2919 = vpack.c.b16 %v2893, %v2892
    %v2920 = vpack.c.b16 %v2895, %v2894
    %v2947 = vsel %vm935, %v2794, 0
    %2949 = vmatprep.subr.bf16.mxu0 0
    %2950 = vmatpush1.bf16.msra.mxu0 %v2896
    %2951 = vmatprep.subr.bf16.mxu0 0
    %2952 = vmatpush1.bf16.msra.mxu0 %v2897
    %2953 = vmatprep.subr.bf16.mxu0 0
    %2954 = vmatpush1.bf16.msra.mxu0 %v2898
    %2955 = vmatprep.subr.bf16.mxu0 0
    %2956 = vmatpush1.bf16.msra.mxu0 %v2899
    %2957 = vmatprep.subr.bf16.mxu0 0
    %2958 = vmatpush1.bf16.msra.mxu0 %v2900
    %2959 = vmatprep.subr.bf16.mxu0 0
    %2960 = vmatpush1.bf16.msra.mxu0 %v2901
    %2961 = vmatprep.subr.bf16.mxu0 0
    %2962 = vmatpush1.bf16.msra.mxu0 %v2902
    %2963 = vmatprep.subr.bf16.mxu0 0
    %2964 = vmatpush1.bf16.msra.mxu0 %v2903
    %2965 = vmatprep.subr.bf16.mxu0 0
    %2966 = vmatpush1.bf16.msra.mxu0 %v2904
    %2967 = vmatprep.subr.bf16.mxu0 0
    %2968 = vmatpush1.bf16.msra.mxu0 %v2905
    %2969 = vmatprep.subr.bf16.mxu0 0
    %2970 = vmatpush1.bf16.msra.mxu0 %v2906
    %2971 = vmatprep.subr.bf16.mxu0 0
    %2972 = vmatpush1.bf16.msra.mxu0 %v2907
    %2973 = vmatprep.subr.bf16.mxu0 0
    %2974 = vmatpush1.bf16.msra.mxu0 %v2908
    %2975 = vmatprep.subr.bf16.mxu0 0
    %2976 = vmatpush1.bf16.msra.mxu0 %v2909
    %2977 = vmatprep.subr.bf16.mxu0 0
    %2978 = vmatpush1.bf16.msra.mxu0 %v2910
    %2979 = vmatprep.subr.bf16.mxu0 0
    %2980 = vmatpush1.bf16.msra.mxu0 %v2911
    %2981 = vmatprep.mubr.bf16.mxu0 %v2792
    %2982 = vmatmul.mubr.bf16.gmra.mrb[0].mxu0 %v2791
    %v2983 = vpop.f32.mrb[0].mxu0
    %v2984 = vadd.f32 %v2795, %v2983
    %v2985 = vpop.f32.mrb[0].mxu0
    %v2986 = vpop.f32.mrb[0].mxu0
    %v2987 = vadd.f32 %v2795, %v2986
    %v2988 = vpop.f32.mrb[0].mxu0
    %2989 = vdwg.mxu0
    %2990 = vmatprep.subr.bf16.mxu0 0
    %2991 = vmatpush1.bf16.msra.mxu0 %v2912
    %2992 = vmatprep.subr.bf16.mxu0 0
    %2993 = vmatpush1.bf16.msra.mxu0 %v2913
    %2994 = vmatprep.subr.bf16.mxu0 0
    %2995 = vmatpush1.bf16.msra.mxu0 %v2914
    %2996 = vmatprep.subr.bf16.mxu0 0
    %2997 = vmatpush1.bf16.msra.mxu0 %v2915
    %2998 = vmatprep.subr.bf16.mxu0 0
    %2999 = vmatpush1.bf16.msra.mxu0 %v2916
    %3000 = vmatprep.subr.bf16.mxu0 0
    %3001 = vmatpush1.bf16.msra.mxu0 %v2917
    %3002 = vmatprep.subr.bf16.mxu0 0
    %3003 = vmatpush1.bf16.msra.mxu0 %v2918
    %3004 = vmatprep.subr.bf16.mxu0 0
    %3005 = vmatpush1.bf16.msra.mxu0 %v2919
    %3006 = vmatprep.subr.bf16.mxu0 0
    %3007 = vmatpush1.bf16.msra.mxu0 %v2920
    %3008 = vmatprep.subr.bf16.mxu0 0
    %3009 = vmatpush1.bf16.msra.mxu0 0
    %3010 = vmatprep.subr.bf16.mxu0 0
    %3011 = vmatpush1.bf16.msra.mxu0 0
    %3012 = vmatprep.subr.bf16.mxu0 0
    %3013 = vmatpush1.bf16.msra.mxu0 0
    %3014 = vmatprep.subr.bf16.mxu0 0
    %3015 = vmatpush1.bf16.msra.mxu0 0
    %3016 = vmatprep.subr.bf16.mxu0 0
    %3017 = vmatpush1.bf16.msra.mxu0 0
    %3018 = vmatprep.subr.bf16.mxu0 0
    %3019 = vmatpush1.bf16.msra.mxu0 0
    %3020 = vmatprep.subr.bf16.mxu0 0
    %3021 = vmatpush1.bf16.msra.mxu0 0
    %3022 = vmatprep.mubr.bf16.mxu0 %v2947
    %3023 = vmatmul.mubr.bf16.gmra.mrb[0].mxu0 %v2793
    %v3024 = vpop.f32.mrb[0].mxu0
    %v3025 = vadd.f32 %v2984, %v3024
    %v3026 = vpop.f32.mrb[0].mxu0
    %v3027 = vpop.f32.mrb[0].mxu0
    %v3028 = vadd.f32 %v2987, %v3027
    %v3029 = vpop.f32.mrb[0].mxu0
    %3030 = vdwg.mxu0
    %v3031 = vpack.c.bf16 %v3028, %v3025
    %v3032 = vld [vmem:[#allocation8] sm:$0xff]
    %v3033 = vld [vmem:[#allocation8 + $0x8] sm:$0xff]
    %v3034 = vld [vmem:[#allocation8 + $0x10] sm:$0xff]
    %v3035 = vld [vmem:[#allocation8 + $0x18] sm:$0xff]
    %v3036 = vld [vmem:[#allocation10] sm:$0xff]
    %v3039 = vunpack.c.l.b16 %v132
    %v3040 = vunpack.c.l.b16 %v133
    %v3041 = vpack.c.b16 %v3040, %v3039
    %v3043 = vcombine.high %v3036, %v3036
    %v3045 = vunpack.c.l.s4 1983009808
    %v3046 = vunpack.c.0.s8 %v3045
    %v3047 = vlaneseq
    %v3048 = vshrl.u32 %v3047, 7
    %v3049 = vsub.s32 %v3046, %v3048
    %v3050 = vrot.slane %v3036, %v3049
    %v3052 = vunpack.c.l.s4 1983009808
    %v3053 = vunpack.c.0.s8 %v3052
    %v3054 = vlaneseq
    %v3055 = vshrl.u32 %v3054, 7
    %v3056 = vsub.s32 %v3053, %v3055
    %v3057 = vrot.slane %v3043, %v3056
    %v3058 = vcombine.high %v3050, %v3050
    %v3059 = vcombine.high %v3057, %v3057
    %vm3060 = vcmask 31744
    %v3062 = vsel %vm3060, %v3041, 0
    %v3065 = vsel %vm201, %v3050, 0
    %v3068 = vsel %vm201, %v3058, 0
    %v3071 = vsel %vm201, %v3057, 0
    %v3074 = vsel %vm201, %v3059, 0
    %3076 = vmatprep.subr.bf16.mxu0 %v3068
    %3077 = vmatpush1.bf16.msra.mxu0 %v3065
    %3078 = vmatprep.subr.bf16.mxu0 0
    %3079 = vmatpush1.bf16.msra.mxu0 0
    %3080 = vmatprep.subr.bf16.mxu0 0
    %3081 = vmatpush1.bf16.msra.mxu0 0
    %3082 = vmatprep.subr.bf16.mxu0 0
    %3083 = vmatpush1.bf16.msra.mxu0 0
    %3084 = vmatprep.subr.bf16.mxu0 0
    %3085 = vmatpush1.bf16.msra.mxu0 0
    %3086 = vmatprep.subr.bf16.mxu0 0
    %3087 = vmatpush1.bf16.msra.mxu0 0
    %3088 = vmatprep.subr.bf16.mxu0 0
    %3089 = vmatpush1.bf16.msra.mxu0 0
    %3090 = vmatprep.subr.bf16.mxu0 0
    %3091 = vmatpush1.bf16.msra.mxu0 0
    %3092 = vmatprep.subr.bf16.mxu0 0
    %3093 = vmatpush1.bf16.msra.mxu0 0
    %3094 = vmatprep.subr.bf16.mxu0 0
    %3095 = vmatpush1.bf16.msra.mxu0 0
    %3096 = vmatprep.subr.bf16.mxu0 0
    %3097 = vmatpush1.bf16.msra.mxu0 0
    %3098 = vmatprep.subr.bf16.mxu0 0
    %3099 = vmatpush1.bf16.msra.mxu0 0
    %3100 = vmatprep.subr.bf16.mxu0 0
    %3101 = vmatpush1.bf16.msra.mxu0 0
    %3102 = vmatprep.subr.bf16.mxu0 0
    %3103 = vmatpush1.bf16.msra.mxu0 0
    %3104 = vmatprep.subr.bf16.mxu0 0
    %3105 = vmatpush1.bf16.msra.mxu0 0
    %3106 = vmatprep.subr.bf16.mxu0 0
    %3107 = vmatpush1.bf16.msra.mxu0 0
    %3108 = vmatprep.mubr.bf16.mxu0 0
    %3109 = vmatmul.mubr.bf16.gmra.mrb[0].mxu0 %v3062
    %v3110 = vpop.f32.mrb[0].mxu0
    %v3111 = vadd.f32 0.0, %v3110
    %v3112 = vpop.f32.mrb[0].mxu0
    %v3113 = vadd.f32 0.0, %v3112
    %v3114 = vpop.f32.mrb[0].mxu0
    %v3115 = vadd.f32 0.0, %v3114
    %v3116 = vpop.f32.mrb[0].mxu0
    %v3117 = vadd.f32 0.0, %v3116
    %3118 = vdwg.mxu0
    %3119 = vmatprep.subr.bf16.mxu0 %v3074
    %3120 = vmatpush1.bf16.msra.mxu0 %v3071
    %3121 = vmatprep.subr.bf16.mxu0 0
    %3122 = vmatpush1.bf16.msra.mxu0 0
    %3123 = vmatprep.subr.bf16.mxu0 0
    %3124 = vmatpush1.bf16.msra.mxu0 0
    %3125 = vmatprep.subr.bf16.mxu0 0
    %3126 = vmatpush1.bf16.msra.mxu0 0
    %3127 = vmatprep.subr.bf16.mxu0 0
    %3128 = vmatpush1.bf16.msra.mxu0 0
    %3129 = vmatprep.subr.bf16.mxu0 0
    %3130 = vmatpush1.bf16.msra.mxu0 0
    %3131 = vmatprep.subr.bf16.mxu0 0
    %3132 = vmatpush1.bf16.msra.mxu0 0
    %3133 = vmatprep.subr.bf16.mxu0 0
    %3134 = vmatpush1.bf16.msra.mxu0 0
    %3135 = vmatprep.subr.bf16.mxu0 0
    %3136 = vmatpush1.bf16.msra.mxu0 0
    %3137 = vmatprep.subr.bf16.mxu0 0
    %3138 = vmatpush1.bf16.msra.mxu0 0
    %3139 = vmatprep.subr.bf16.mxu0 0
    %3140 = vmatpush1.bf16.msra.mxu0 0
    %3141 = vmatprep.subr.bf16.mxu0 0
    %3142 = vmatpush1.bf16.msra.mxu0 0
    %3143 = vmatprep.subr.bf16.mxu0 0
    %3144 = vmatpush1.bf16.msra.mxu0 0
    %3145 = vmatprep.subr.bf16.mxu0 0
    %3146 = vmatpush1.bf16.msra.mxu0 0
    %3147 = vmatprep.subr.bf16.mxu0 0
    %3148 = vmatpush1.bf16.msra.mxu0 0
    %3149 = vmatprep.subr.bf16.mxu0 0
    %3150 = vmatpush1.bf16.msra.mxu0 0
    %3151 = vmatprep.mubr.bf16.mxu0 0
    %3152 = vmatmul.mubr.bf16.gmra.mrb[0].mxu0 %v3062
    %v3153 = vpop.f32.mrb[0].mxu0
    %v3154 = vadd.f32 0.0, %v3153
    %v3155 = vpop.f32.mrb[0].mxu0
    %v3156 = vadd.f32 0.0, %v3155
    %v3157 = vpop.f32.mrb[0].mxu0
    %v3158 = vadd.f32 0.0, %v3157
    %v3159 = vpop.f32.mrb[0].mxu0
    %v3160 = vadd.f32 0.0, %v3159
    %3161 = vdwg.mxu0
    %v3166 = vunpack.c.l.b16 %v3032
    %v3167 = vunpack.c.h.b16 %v3032
    %v3168 = vunpack.c.l.b16 %v3033
    %v3169 = vunpack.c.h.b16 %v3033
    %v3170 = vunpack.c.l.b16 %v3034
    %v3171 = vunpack.c.h.b16 %v3034
    %v3172 = vunpack.c.l.b16 %v3035
    %v3173 = vunpack.c.h.b16 %v3035
    %v3174 = vpack.c.b16 %v3170, %v3166
    %v3175 = vpack.c.b16 %v3171, %v3167
    %v3176 = vpack.c.b16 %v3172, %v3168
    %v3177 = vpack.c.b16 %v3173, %v3169
    %v3183 = vsel %vm935, %v3031, 0
    %3185 = vmatprep.subr.bf16.mxu0 %v3175
    %3186 = vmatpush1.bf16.msra.mxu0 %v3174
    %3187 = vmatprep.subr.bf16.mxu0 0
    %3188 = vmatpush1.bf16.msra.mxu0 0
    %3189 = vmatprep.subr.bf16.mxu0 0
    %3190 = vmatpush1.bf16.msra.mxu0 0
    %3191 = vmatprep.subr.bf16.mxu0 0
    %3192 = vmatpush1.bf16.msra.mxu0 0
    %3193 = vmatprep.subr.bf16.mxu0 0
    %3194 = vmatpush1.bf16.msra.mxu0 0
    %3195 = vmatprep.subr.bf16.mxu0 0
    %3196 = vmatpush1.bf16.msra.mxu0 0
    %3197 = vmatprep.subr.bf16.mxu0 0
    %3198 = vmatpush1.bf16.msra.mxu0 0
    %3199 = vmatprep.subr.bf16.mxu0 0
    %3200 = vmatpush1.bf16.msra.mxu0 0
    %3201 = vmatprep.subr.bf16.mxu0 0
    %3202 = vmatpush1.bf16.msra.mxu0 0
    %3203 = vmatprep.subr.bf16.mxu0 0
    %3204 = vmatpush1.bf16.msra.mxu0 0
    %3205 = vmatprep.subr.bf16.mxu0 0
    %3206 = vmatpush1.bf16.msra.mxu0 0
    %3207 = vmatprep.subr.bf16.mxu0 0
    %3208 = vmatpush1.bf16.msra.mxu0 0
    %3209 = vmatprep.subr.bf16.mxu0 0
    %3210 = vmatpush1.bf16.msra.mxu0 0
    %3211 = vmatprep.subr.bf16.mxu0 0
    %3212 = vmatpush1.bf16.msra.mxu0 0
    %3213 = vmatprep.subr.bf16.mxu0 0
    %3214 = vmatpush1.bf16.msra.mxu0 0
    %3215 = vmatprep.subr.bf16.mxu0 0
    %3216 = vmatpush1.bf16.msra.mxu0 0
    %3217 = vmatprep.mubr.bf16.mxu0 0
    %3218 = vmatmul.mubr.bf16.gmra.mrb[0].mxu0 %v3183
    %v3219 = vpop.f32.mrb[0].mxu0
    %v3220 = vadd.f32 %v3111, %v3219
    %v3221 = vpop.f32.mrb[0].mxu0
    %v3222 = vadd.f32 %v3113, %v3221
    %v3223 = vpop.f32.mrb[0].mxu0
    %v3224 = vadd.f32 %v3115, %v3223
    %v3225 = vpop.f32.mrb[0].mxu0
    %v3226 = vadd.f32 %v3117, %v3225
    %3227 = vdwg.mxu0
    %3228 = vmatprep.subr.bf16.mxu0 %v3177
    %3229 = vmatpush1.bf16.msra.mxu0 %v3176
    %3230 = vmatprep.subr.bf16.mxu0 0
    %3231 = vmatpush1.bf16.msra.mxu0 0
    %3232 = vmatprep.subr.bf16.mxu0 0
    %3233 = vmatpush1.bf16.msra.mxu0 0
    %3234 = vmatprep.subr.bf16.mxu0 0
    %3235 = vmatpush1.bf16.msra.mxu0 0
    %3236 = vmatprep.subr.bf16.mxu0 0
    %3237 = vmatpush1.bf16.msra.mxu0 0
    %3238 = vmatprep.subr.bf16.mxu0 0
    %3239 = vmatpush1.bf16.msra.mxu0 0
    %3240 = vmatprep.subr.bf16.mxu0 0
    %3241 = vmatpush1.bf16.msra.mxu0 0
    %3242 = vmatprep.subr.bf16.mxu0 0
    %3243 = vmatpush1.bf16.msra.mxu0 0
    %3244 = vmatprep.subr.bf16.mxu0 0
    %3245 = vmatpush1.bf16.msra.mxu0 0
    %3246 = vmatprep.subr.bf16.mxu0 0
    %3247 = vmatpush1.bf16.msra.mxu0 0
    %3248 = vmatprep.subr.bf16.mxu0 0
    %3249 = vmatpush1.bf16.msra.mxu0 0
    %3250 = vmatprep.subr.bf16.mxu0 0
    %3251 = vmatpush1.bf16.msra.mxu0 0
    %3252 = vmatprep.subr.bf16.mxu0 0
    %3253 = vmatpush1.bf16.msra.mxu0 0
    %3254 = vmatprep.subr.bf16.mxu0 0
    %3255 = vmatpush1.bf16.msra.mxu0 0
    %3256 = vmatprep.subr.bf16.mxu0 0
    %3257 = vmatpush1.bf16.msra.mxu0 0
    %3258 = vmatprep.subr.bf16.mxu0 0
    %3259 = vmatpush1.bf16.msra.mxu0 0
    %3260 = vmatprep.mubr.bf16.mxu0 0
    %3261 = vmatmul.mubr.bf16.gmra.mrb[0].mxu0 %v3183
    %v3262 = vpop.f32.mrb[0].mxu0
    %v3263 = vadd.f32 %v3154, %v3262
    %v3264 = vpop.f32.mrb[0].mxu0
    %v3265 = vadd.f32 %v3156, %v3264
    %v3266 = vpop.f32.mrb[0].mxu0
    %v3267 = vadd.f32 %v3158, %v3266
    %v3268 = vpop.f32.mrb[0].mxu0
    %v3269 = vadd.f32 %v3160, %v3268
    %3270 = vdwg.mxu0
    %s3271 = scalar_lea.vmem [#allocation13], 5
    %v3272 = vld [vmem:[%s3271] ss:$8 sm:$0xf]
    %v3274 = vlaneseq
    %v3275 = vshrl.u32 %v3274, 7
    %v3276 = vsub.s32 0, %v3275
    %v3277 = vrot.slane %v3272, %v3276
    %v3278 = vlaneseq
    %v3279 = vshrl.u32 %v3278, 7
    %v3280 = vsub.s32 1, %v3279
    %v3281 = vrot.slane %v3272, %v3280
    %v3282 = vlaneseq
    %v3283 = vshrl.u32 %v3282, 7
    %v3284 = vsub.s32 2, %v3283
    %v3285 = vrot.slane %v3272, %v3284
    %v3286 = vlaneseq
    %v3287 = vshrl.u32 %v3286, 7
    %v3288 = vsub.s32 3, %v3287
    %v3289 = vrot.slane %v3272, %v3288
    %v3294 = vadd.f32 %v3220, %v3277
    %v3295 = vadd.f32 %v3222, %v3281
    %v3296 = vadd.f32 %v3263, %v3285
    %v3297 = vadd.f32 %v3265, %v3289
    %v3298 = vadd.f32 %v3224, %v3277
    %v3299 = vadd.f32 %v3226, %v3281
    %v3300 = vadd.f32 %v3267, %v3285
    %v3301 = vadd.f32 %v3269, %v3289
    %v3302 = vmax.f32 %v3294, 0.0
    %v3303 = vmax.f32 %v3295, 0.0
    %v3304 = vmax.f32 %v3296, 0.0
    %v3305 = vmax.f32 %v3297, 0.0
    %v3306 = vmax.f32 %v3298, 0.0
    %v3307 = vmax.f32 %v3299, 0.0
    %v3308 = vmax.f32 %v3300, 0.0
    %v3309 = vmax.f32 %v3301, 0.0
    %v3310 = vld [vmem:[#allocation11] sm:$0xff]
    %v3311 = vld [vmem:[#allocation11 + $0x8] sm:$0xff]
    %v3312 = vld [vmem:[#allocation11 + $0x10] sm:$0xff]
    %v3313 = vld [vmem:[#allocation11 + $0x18] sm:$0xff]
    %v3314 = vld [vmem:[#allocation11 + $0x20] sm:$0xff]
    %v3315 = vld [vmem:[#allocation11 + $0x28] sm:$0xff]
    %v3316 = vld [vmem:[#allocation11 + $0x30] sm:$0xff]
    %v3317 = vld [vmem:[#allocation11 + $0x38] sm:$0xff]
    %v3318 = vld [vmem:[#allocation11 + $0x40] sm:$0xff]
    %v3319 = vld [vmem:[#allocation11 + $0x48] sm:$0xff]
    %v3320 = vld [vmem:[#allocation11 + $0x50] sm:$0xff]
    %v3321 = vld [vmem:[#allocation11 + $0x58] sm:$0xff]
    %v3322 = vld [vmem:[#allocation11 + $0x60] sm:$0xff]
    %v3323 = vld [vmem:[#allocation11 + $0x68] sm:$0xff]
    %v3324 = vld [vmem:[#allocation11 + $0x70] sm:$0xff]
    %v3325 = vld [vmem:[#allocation11 + $0x78] sm:$0xff]
    %v3326 = vld [vmem:[#allocation11 + $0x80] sm:$0xff]
    %v3327 = vld [vmem:[#allocation11 + $0x88] sm:$0xff]
    %v3328 = vld [vmem:[#allocation11 + $0x90] sm:$0xff]
    %v3329 = vld [vmem:[#allocation11 + $0x98] sm:$0xff]
    %v3330 = vld [vmem:[#allocation11 + $0xa0] sm:$0xff]
    %v3331 = vld [vmem:[#allocation11 + $0xa8] sm:$0xff]
    %v3332 = vld [vmem:[#allocation11 + $0xb0] sm:$0xff]
    %v3333 = vld [vmem:[#allocation11 + $0xb8] sm:$0xff]
    %v3334 = vld [vmem:[#allocation11 + $0xc0] sm:$0xff]
    %v3335 = vld [vmem:[#allocation11 + $0xc8] sm:$0xff]
    %v3336 = vld [vmem:[#allocation11 + $0xd0] sm:$0xff]
    %v3337 = vld [vmem:[#allocation11 + $0xd8] sm:$0xff]
    %v3338 = vld [vmem:[#allocation11 + $0xe0] sm:$0xff]
    %v3339 = vld [vmem:[#allocation11 + $0xe8] sm:$0xff]
    %v3340 = vld [vmem:[#allocation11 + $0xf0] sm:$0xff]
    %v3341 = vld [vmem:[#allocation11 + $0xf8] sm:$0xff]
    %v3342 = vld [vmem:[#allocation11 + $0x100] sm:$0xff]
    %v3343 = vld [vmem:[#allocation11 + $0x108] sm:$0xff]
    %v3344 = vld [vmem:[#allocation11 + $0x110] sm:$0xff]
    %v3345 = vld [vmem:[#allocation11 + $0x118] sm:$0xff]
    %v3346 = vld [vmem:[#allocation11 + $0x120] sm:$0xff]
    %v3347 = vld [vmem:[#allocation11 + $0x128] sm:$0xff]
    %v3348 = vld [vmem:[#allocation11 + $0x130] sm:$0xff]
    %v3349 = vld [vmem:[#allocation11 + $0x138] sm:$0xff]
    %v3350 = vld [vmem:[#allocation11 + $0x140] sm:$0xff]
    %v3351 = vld [vmem:[#allocation11 + $0x148] sm:$0xff]
    %v3352 = vld [vmem:[#allocation11 + $0x150] sm:$0xff]
    %v3353 = vld [vmem:[#allocation11 + $0x158] sm:$0xff]
    %v3354 = vld [vmem:[#allocation11 + $0x160] sm:$0xff]
    %v3355 = vld [vmem:[#allocation11 + $0x168] sm:$0xff]
    %v3356 = vld [vmem:[#allocation11 + $0x170] sm:$0xff]
    %v3357 = vld [vmem:[#allocation11 + $0x178] sm:$0xff]
    %v3358 = vld [vmem:[#allocation11 + $0x180] sm:$0xff]
    %v3359 = vld [vmem:[#allocation11 + $0x188] sm:$0xff]
    %v3360 = vld [vmem:[#allocation11 + $0x190] sm:$0xff]
    %v3361 = vld [vmem:[#allocation11 + $0x198] sm:$0xff]
    %v3362 = vld [vmem:[#allocation11 + $0x1a0] sm:$0xff]
    %v3363 = vld [vmem:[#allocation11 + $0x1a8] sm:$0xff]
    %v3364 = vld [vmem:[#allocation11 + $0x1b0] sm:$0xff]
    %v3365 = vld [vmem:[#allocation11 + $0x1b8] sm:$0xff]
    %v3366 = vld [vmem:[#allocation11 + $0x1c0] sm:$0xff]
    %v3367 = vld [vmem:[#allocation11 + $0x1c8] sm:$0xff]
    %v3368 = vld [vmem:[#allocation11 + $0x1d0] sm:$0xff]
    %v3369 = vld [vmem:[#allocation11 + $0x1d8] sm:$0xff]
    %v3370 = vld [vmem:[#allocation11 + $0x1e0] sm:$0xff]
    %v3371 = vld [vmem:[#allocation11 + $0x1e8] sm:$0xff]
    %v3372 = vld [vmem:[#allocation11 + $0x1f0] sm:$0xff]
    %v3373 = vld [vmem:[#allocation11 + $0x1f8] sm:$0xff]
    %v3374 = vld [vmem:[#allocation11 + $0x200] sm:$0xff]
    %v3375 = vld [vmem:[#allocation11 + $0x208] sm:$0xff]
    %v3376 = vld [vmem:[#allocation11 + $0x210] sm:$0xff]
    %v3377 = vld [vmem:[#allocation11 + $0x218] sm:$0xff]
    %v3378 = vld [vmem:[#allocation11 + $0x220] sm:$0xff]
    %v3379 = vld [vmem:[#allocation11 + $0x228] sm:$0xff]
    %v3380 = vld [vmem:[#allocation11 + $0x230] sm:$0xff]
    %v3381 = vld [vmem:[#allocation11 + $0x238] sm:$0xff]
    %v3382 = vld [vmem:[#allocation11 + $0x240] sm:$0xff]
    %v3383 = vld [vmem:[#allocation11 + $0x248] sm:$0xff]
    %v3384 = vld [vmem:[#allocation11 + $0x250] sm:$0xff]
    %v3385 = vld [vmem:[#allocation11 + $0x258] sm:$0xff]
    %v3386 = vld [vmem:[#allocation11 + $0x260] sm:$0xff]
    %v3387 = vld [vmem:[#allocation11 + $0x268] sm:$0xff]
    %v3388 = vld [vmem:[#allocation11 + $0x270] sm:$0xff]
    %v3389 = vld [vmem:[#allocation11 + $0x278] sm:$0xff]
    %v3390 = vld [vmem:[#allocation11 + $0x280] sm:$0xff]
    %v3391 = vld [vmem:[#allocation11 + $0x288] sm:$0xff]
    %v3392 = vld [vmem:[#allocation11 + $0x290] sm:$0xff]
    %v3393 = vld [vmem:[#allocation11 + $0x298] sm:$0xff]
    %v3394 = vld [vmem:[#allocation11 + $0x2a0] sm:$0xff]
    %v3395 = vld [vmem:[#allocation11 + $0x2a8] sm:$0xff]
    %v3396 = vld [vmem:[#allocation11 + $0x2b0] sm:$0xff]
    %v3397 = vld [vmem:[#allocation11 + $0x2b8] sm:$0xff]
    %v3398 = vld [vmem:[#allocation11 + $0x2c0] sm:$0xff]
    %v3399 = vld [vmem:[#allocation11 + $0x2c8] sm:$0xff]
    %v3400 = vld [vmem:[#allocation11 + $0x2d0] sm:$0xff]
    %v3401 = vld [vmem:[#allocation11 + $0x2d8] sm:$0xff]
    %v3402 = vld [vmem:[#allocation11 + $0x2e0] sm:$0xff]
    %v3403 = vld [vmem:[#allocation11 + $0x2e8] sm:$0xff]
    %v3404 = vld [vmem:[#allocation11 + $0x2f0] sm:$0xff]
    %v3405 = vld [vmem:[#allocation11 + $0x2f8] sm:$0xff]
    %v3406 = vld [vmem:[#allocation11 + $0x300] sm:$0xff]
    %v3407 = vld [vmem:[#allocation11 + $0x308] sm:$0xff]
    %v3408 = vld [vmem:[#allocation11 + $0x310] sm:$0xff]
    %v3409 = vld [vmem:[#allocation11 + $0x318] sm:$0xff]
    %v3410 = vpack.c.bf16 %v3306, %v3302
    %v3411 = vpack.c.bf16 %v3307, %v3303
    %v3412 = vpack.c.bf16 %v3308, %v3304
    %v3413 = vpack.c.bf16 %v3309, %v3305
    %s3414 = scalar_lea.vmem [#allocation13], 6
    %v3415 = vld [vmem:[%s3414] ss:$8 sm:$0xf]
    %v3417 = vlaneseq
    %v3418 = vshrl.u32 %v3417, 7
    %v3419 = vsub.s32 0, %v3418
    %v3420 = vrot.slane %v3415, %v3419
    %v3421 = vlaneseq
    %v3422 = vshrl.u32 %v3421, 7
    %v3423 = vsub.s32 1, %v3422
    %v3424 = vrot.slane %v3415, %v3423
    %v3425 = vlaneseq
    %v3426 = vshrl.u32 %v3425, 7
    %v3427 = vsub.s32 2, %v3426
    %v3428 = vrot.slane %v3415, %v3427
    %v3429 = vlaneseq
    %v3430 = vshrl.u32 %v3429, 7
    %v3431 = vsub.s32 3, %v3430
    %v3432 = vrot.slane %v3415, %v3431
    %v3537 = vunpack.c.l.b16 %v3310
    %v3538 = vunpack.c.h.b16 %v3310
    %v3539 = vunpack.c.l.b16 %v3311
    %v3540 = vunpack.c.h.b16 %v3311
    %v3541 = vunpack.c.l.b16 %v3312
    %v3542 = vunpack.c.h.b16 %v3312
    %v3543 = vunpack.c.l.b16 %v3313
    %v3544 = vunpack.c.h.b16 %v3313
    %v3545 = vunpack.c.l.b16 %v3314
    %v3546 = vunpack.c.h.b16 %v3314
    %v3547 = vunpack.c.l.b16 %v3315
    %v3548 = vunpack.c.h.b16 %v3315
    %v3549 = vunpack.c.l.b16 %v3316
    %v3550 = vunpack.c.h.b16 %v3316
    %v3551 = vunpack.c.l.b16 %v3317
    %v3552 = vunpack.c.h.b16 %v3317
    %v3553 = vunpack.c.l.b16 %v3318
    %v3554 = vunpack.c.h.b16 %v3318
    %v3555 = vunpack.c.l.b16 %v3319
    %v3556 = vunpack.c.h.b16 %v3319
    %v3557 = vunpack.c.l.b16 %v3320
    %v3558 = vunpack.c.h.b16 %v3320
    %v3559 = vunpack.c.l.b16 %v3321
    %v3560 = vunpack.c.h.b16 %v3321
    %v3561 = vunpack.c.l.b16 %v3322
    %v3562 = vunpack.c.h.b16 %v3322
    %v3563 = vunpack.c.l.b16 %v3323
    %v3564 = vunpack.c.h.b16 %v3323
    %v3565 = vunpack.c.l.b16 %v3324
    %v3566 = vunpack.c.h.b16 %v3324
    %v3567 = vunpack.c.l.b16 %v3325
    %v3568 = vunpack.c.h.b16 %v3325
    %v3569 = vunpack.c.l.b16 %v3326
    %v3570 = vunpack.c.h.b16 %v3326
    %v3571 = vunpack.c.l.b16 %v3327
    %v3572 = vunpack.c.h.b16 %v3327
    %v3573 = vunpack.c.l.b16 %v3328
    %v3574 = vunpack.c.h.b16 %v3328
    %v3575 = vunpack.c.l.b16 %v3329
    %v3576 = vunpack.c.h.b16 %v3329
    %v3577 = vunpack.c.l.b16 %v3330
    %v3578 = vunpack.c.h.b16 %v3330
    %v3579 = vunpack.c.l.b16 %v3331
    %v3580 = vunpack.c.h.b16 %v3331
    %v3581 = vunpack.c.l.b16 %v3332
    %v3582 = vunpack.c.h.b16 %v3332
    %v3583 = vunpack.c.l.b16 %v3333
    %v3584 = vunpack.c.h.b16 %v3333
    %v3585 = vunpack.c.l.b16 %v3334
    %v3586 = vunpack.c.h.b16 %v3334
    %v3587 = vunpack.c.l.b16 %v3335
    %v3588 = vunpack.c.h.b16 %v3335
    %v3589 = vunpack.c.l.b16 %v3336
    %v3590 = vunpack.c.h.b16 %v3336
    %v3591 = vunpack.c.l.b16 %v3337
    %v3592 = vunpack.c.h.b16 %v3337
    %v3593 = vunpack.c.l.b16 %v3338
    %v3594 = vunpack.c.h.b16 %v3338
    %v3595 = vunpack.c.l.b16 %v3339
    %v3596 = vunpack.c.h.b16 %v3339
    %v3597 = vunpack.c.l.b16 %v3340
    %v3598 = vunpack.c.h.b16 %v3340
    %v3599 = vunpack.c.l.b16 %v3341
    %v3600 = vunpack.c.h.b16 %v3341
    %v3601 = vunpack.c.l.b16 %v3342
    %v3602 = vunpack.c.h.b16 %v3342
    %v3603 = vunpack.c.l.b16 %v3343
    %v3604 = vunpack.c.h.b16 %v3343
    %v3605 = vunpack.c.l.b16 %v3344
    %v3606 = vunpack.c.h.b16 %v3344
    %v3607 = vunpack.c.l.b16 %v3345
    %v3608 = vunpack.c.h.b16 %v3345
    %v3609 = vunpack.c.l.b16 %v3346
    %v3610 = vunpack.c.h.b16 %v3346
    %v3611 = vunpack.c.l.b16 %v3347
    %v3612 = vunpack.c.h.b16 %v3347
    %v3613 = vunpack.c.l.b16 %v3348
    %v3614 = vunpack.c.h.b16 %v3348
    %v3615 = vunpack.c.l.b16 %v3349
    %v3616 = vunpack.c.h.b16 %v3349
    %v3617 = vunpack.c.l.b16 %v3350
    %v3618 = vunpack.c.h.b16 %v3350
    %v3619 = vunpack.c.l.b16 %v3351
    %v3620 = vunpack.c.h.b16 %v3351
    %v3621 = vunpack.c.l.b16 %v3352
    %v3622 = vunpack.c.h.b16 %v3352
    %v3623 = vunpack.c.l.b16 %v3353
    %v3624 = vunpack.c.h.b16 %v3353
    %v3625 = vunpack.c.l.b16 %v3354
    %v3626 = vunpack.c.h.b16 %v3354
    %v3627 = vunpack.c.l.b16 %v3355
    %v3628 = vunpack.c.h.b16 %v3355
    %v3629 = vunpack.c.l.b16 %v3356
    %v3630 = vunpack.c.h.b16 %v3356
    %v3631 = vunpack.c.l.b16 %v3357
    %v3632 = vunpack.c.h.b16 %v3357
    %v3633 = vunpack.c.l.b16 %v3358
    %v3634 = vunpack.c.h.b16 %v3358
    %v3635 = vunpack.c.l.b16 %v3359
    %v3636 = vunpack.c.h.b16 %v3359
    %v3637 = vunpack.c.l.b16 %v3360
    %v3638 = vunpack.c.h.b16 %v3360
    %v3639 = vunpack.c.l.b16 %v3361
    %v3640 = vunpack.c.h.b16 %v3361
    %v3641 = vunpack.c.l.b16 %v3362
    %v3642 = vunpack.c.h.b16 %v3362
    %v3643 = vunpack.c.l.b16 %v3363
    %v3644 = vunpack.c.h.b16 %v3363
    %v3645 = vunpack.c.l.b16 %v3364
    %v3646 = vunpack.c.h.b16 %v3364
    %v3647 = vunpack.c.l.b16 %v3365
    %v3648 = vunpack.c.h.b16 %v3365
    %v3649 = vunpack.c.l.b16 %v3366
    %v3650 = vunpack.c.h.b16 %v3366
    %v3651 = vunpack.c.l.b16 %v3367
    %v3652 = vunpack.c.h.b16 %v3367
    %v3653 = vunpack.c.l.b16 %v3368
    %v3654 = vunpack.c.h.b16 %v3368
    %v3655 = vunpack.c.l.b16 %v3369
    %v3656 = vunpack.c.h.b16 %v3369
    %v3657 = vunpack.c.l.b16 %v3370
    %v3658 = vunpack.c.h.b16 %v3370
    %v3659 = vunpack.c.l.b16 %v3371
    %v3660 = vunpack.c.h.b16 %v3371
    %v3661 = vunpack.c.l.b16 %v3372
    %v3662 = vunpack.c.h.b16 %v3372
    %v3663 = vunpack.c.l.b16 %v3373
    %v3664 = vunpack.c.h.b16 %v3373
    %v3665 = vunpack.c.l.b16 %v3374
    %v3666 = vunpack.c.h.b16 %v3374
    %v3667 = vunpack.c.l.b16 %v3375
    %v3668 = vunpack.c.h.b16 %v3375
    %v3669 = vunpack.c.l.b16 %v3376
    %v3670 = vunpack.c.h.b16 %v3376
    %v3671 = vunpack.c.l.b16 %v3377
    %v3672 = vunpack.c.h.b16 %v3377
    %v3673 = vunpack.c.l.b16 %v3378
    %v3674 = vunpack.c.h.b16 %v3378
    %v3675 = vunpack.c.l.b16 %v3379
    %v3676 = vunpack.c.h.b16 %v3379
    %v3677 = vunpack.c.l.b16 %v3380
    %v3678 = vunpack.c.h.b16 %v3380
    %v3679 = vunpack.c.l.b16 %v3381
    %v3680 = vunpack.c.h.b16 %v3381
    %v3681 = vunpack.c.l.b16 %v3382
    %v3682 = vunpack.c.h.b16 %v3382
    %v3683 = vunpack.c.l.b16 %v3383
    %v3684 = vunpack.c.h.b16 %v3383
    %v3685 = vunpack.c.l.b16 %v3384
    %v3686 = vunpack.c.h.b16 %v3384
    %v3687 = vunpack.c.l.b16 %v3385
    %v3688 = vunpack.c.h.b16 %v3385
    %v3689 = vunpack.c.l.b16 %v3386
    %v3690 = vunpack.c.h.b16 %v3386
    %v3691 = vunpack.c.l.b16 %v3387
    %v3692 = vunpack.c.h.b16 %v3387
    %v3693 = vunpack.c.l.b16 %v3388
    %v3694 = vunpack.c.h.b16 %v3388
    %v3695 = vunpack.c.l.b16 %v3389
    %v3696 = vunpack.c.h.b16 %v3389
    %v3697 = vunpack.c.l.b16 %v3390
    %v3698 = vunpack.c.h.b16 %v3390
    %v3699 = vunpack.c.l.b16 %v3391
    %v3700 = vunpack.c.h.b16 %v3391
    %v3701 = vunpack.c.l.b16 %v3392
    %v3702 = vunpack.c.h.b16 %v3392
    %v3703 = vunpack.c.l.b16 %v3393
    %v3704 = vunpack.c.h.b16 %v3393
    %v3705 = vunpack.c.l.b16 %v3394
    %v3706 = vunpack.c.h.b16 %v3394
    %v3707 = vunpack.c.l.b16 %v3395
    %v3708 = vunpack.c.h.b16 %v3395
    %v3709 = vunpack.c.l.b16 %v3396
    %v3710 = vunpack.c.h.b16 %v3396
    %v3711 = vunpack.c.l.b16 %v3397
    %v3712 = vunpack.c.h.b16 %v3397
    %v3713 = vunpack.c.l.b16 %v3398
    %v3714 = vunpack.c.h.b16 %v3398
    %v3715 = vunpack.c.l.b16 %v3399
    %v3716 = vunpack.c.h.b16 %v3399
    %v3717 = vunpack.c.l.b16 %v3400
    %v3718 = vunpack.c.h.b16 %v3400
    %v3719 = vunpack.c.l.b16 %v3401
    %v3720 = vunpack.c.h.b16 %v3401
    %v3721 = vunpack.c.l.b16 %v3402
    %v3722 = vunpack.c.h.b16 %v3402
    %v3723 = vunpack.c.l.b16 %v3403
    %v3724 = vunpack.c.h.b16 %v3403
    %v3725 = vunpack.c.l.b16 %v3404
    %v3726 = vunpack.c.h.b16 %v3404
    %v3727 = vunpack.c.l.b16 %v3405
    %v3728 = vunpack.c.h.b16 %v3405
    %v3729 = vunpack.c.l.b16 %v3406
    %v3730 = vunpack.c.h.b16 %v3406
    %v3731 = vunpack.c.l.b16 %v3407
    %v3732 = vunpack.c.h.b16 %v3407
    %v3733 = vunpack.c.l.b16 %v3408
    %v3734 = vunpack.c.h.b16 %v3408
    %v3735 = vunpack.c.l.b16 %v3409
    %v3736 = vunpack.c.h.b16 %v3409
    %v3737 = vpack.c.b16 %v3541, %v3537
    %v3738 = vpack.c.b16 %v3542, %v3538
    %v3739 = vpack.c.b16 %v3543, %v3539
    %v3740 = vpack.c.b16 %v3544, %v3540
    %v3741 = vpack.c.b16 %v3549, %v3545
    %v3742 = vpack.c.b16 %v3550, %v3546
    %v3743 = vpack.c.b16 %v3551, %v3547
    %v3744 = vpack.c.b16 %v3552, %v3548
    %v3745 = vpack.c.b16 %v3557, %v3553
    %v3746 = vpack.c.b16 %v3558, %v3554
    %v3747 = vpack.c.b16 %v3559, %v3555
    %v3748 = vpack.c.b16 %v3560, %v3556
    %v3749 = vpack.c.b16 %v3565, %v3561
    %v3750 = vpack.c.b16 %v3566, %v3562
    %v3751 = vpack.c.b16 %v3567, %v3563
    %v3752 = vpack.c.b16 %v3568, %v3564
    %v3753 = vpack.c.b16 %v3573, %v3569
    %v3754 = vpack.c.b16 %v3574, %v3570
    %v3755 = vpack.c.b16 %v3575, %v3571
    %v3756 = vpack.c.b16 %v3576, %v3572
    %v3757 = vpack.c.b16 %v3581, %v3577
    %v3758 = vpack.c.b16 %v3582, %v3578
    %v3759 = vpack.c.b16 %v3583, %v3579
    %v3760 = vpack.c.b16 %v3584, %v3580
    %v3761 = vpack.c.b16 %v3589, %v3585
    %v3762 = vpack.c.b16 %v3590, %v3586
    %v3763 = vpack.c.b16 %v3591, %v3587
    %v3764 = vpack.c.b16 %v3592, %v3588
    %v3765 = vpack.c.b16 %v3597, %v3593
    %v3766 = vpack.c.b16 %v3598, %v3594
    %v3767 = vpack.c.b16 %v3599, %v3595
    %v3768 = vpack.c.b16 %v3600, %v3596
    %v3769 = vpack.c.b16 %v3605, %v3601
    %v3770 = vpack.c.b16 %v3606, %v3602
    %v3771 = vpack.c.b16 %v3607, %v3603
    %v3772 = vpack.c.b16 %v3608, %v3604
    %v3773 = vpack.c.b16 %v3613, %v3609
    %v3774 = vpack.c.b16 %v3614, %v3610
    %v3775 = vpack.c.b16 %v3615, %v3611
    %v3776 = vpack.c.b16 %v3616, %v3612
    %v3777 = vpack.c.b16 %v3621, %v3617
    %v3778 = vpack.c.b16 %v3622, %v3618
    %v3779 = vpack.c.b16 %v3623, %v3619
    %v3780 = vpack.c.b16 %v3624, %v3620
    %v3781 = vpack.c.b16 %v3629, %v3625
    %v3782 = vpack.c.b16 %v3630, %v3626
    %v3783 = vpack.c.b16 %v3631, %v3627
    %v3784 = vpack.c.b16 %v3632, %v3628
    %v3785 = vpack.c.b16 %v3637, %v3633
    %v3786 = vpack.c.b16 %v3638, %v3634
    %v3787 = vpack.c.b16 %v3639, %v3635
    %v3788 = vpack.c.b16 %v3640, %v3636
    %v3789 = vpack.c.b16 %v3645, %v3641
    %v3790 = vpack.c.b16 %v3646, %v3642
    %v3791 = vpack.c.b16 %v3647, %v3643
    %v3792 = vpack.c.b16 %v3648, %v3644
    %v3793 = vpack.c.b16 %v3653, %v3649
    %v3794 = vpack.c.b16 %v3654, %v3650
    %v3795 = vpack.c.b16 %v3655, %v3651
    %v3796 = vpack.c.b16 %v3656, %v3652
    %v3797 = vpack.c.b16 %v3661, %v3657
    %v3798 = vpack.c.b16 %v3662, %v3658
    %v3799 = vpack.c.b16 %v3663, %v3659
    %v3800 = vpack.c.b16 %v3664, %v3660
    %v3801 = vpack.c.b16 %v3669, %v3665
    %v3802 = vpack.c.b16 %v3670, %v3666
    %v3803 = vpack.c.b16 %v3671, %v3667
    %v3804 = vpack.c.b16 %v3672, %v3668
    %v3805 = vpack.c.b16 %v3677, %v3673
    %v3806 = vpack.c.b16 %v3678, %v3674
    %v3807 = vpack.c.b16 %v3679, %v3675
    %v3808 = vpack.c.b16 %v3680, %v3676
    %v3809 = vpack.c.b16 %v3685, %v3681
    %v3810 = vpack.c.b16 %v3686, %v3682
    %v3811 = vpack.c.b16 %v3687, %v3683
    %v3812 = vpack.c.b16 %v3688, %v3684
    %v3813 = vpack.c.b16 %v3693, %v3689
    %v3814 = vpack.c.b16 %v3694, %v3690
    %v3815 = vpack.c.b16 %v3695, %v3691
    %v3816 = vpack.c.b16 %v3696, %v3692
    %v3817 = vpack.c.b16 %v3701, %v3697
    %v3818 = vpack.c.b16 %v3702, %v3698
    %v3819 = vpack.c.b16 %v3703, %v3699
    %v3820 = vpack.c.b16 %v3704, %v3700
    %v3821 = vpack.c.b16 %v3709, %v3705
    %v3822 = vpack.c.b16 %v3710, %v3706
    %v3823 = vpack.c.b16 %v3711, %v3707
    %v3824 = vpack.c.b16 %v3712, %v3708
    %v3825 = vpack.c.b16 %v3717, %v3713
    %v3826 = vpack.c.b16 %v3718, %v3714
    %v3827 = vpack.c.b16 %v3719, %v3715
    %v3828 = vpack.c.b16 %v3720, %v3716
    %v3829 = vpack.c.b16 %v3725, %v3721
    %v3830 = vpack.c.b16 %v3726, %v3722
    %v3831 = vpack.c.b16 %v3727, %v3723
    %v3832 = vpack.c.b16 %v3728, %v3724
    %v3833 = vpack.c.b16 %v3733, %v3729
    %v3834 = vpack.c.b16 %v3734, %v3730
    %v3835 = vpack.c.b16 %v3735, %v3731
    %v3836 = vpack.c.b16 %v3736, %v3732
    %v3938 = vsel %vm935, %v3413, 0
    %3940 = vmatprep.subr.bf16.mxu0 %v3738
    %3941 = vmatpush1.bf16.msra.mxu0 %v3737
    %3942 = vmatprep.subr.bf16.mxu0 %v3742
    %3943 = vmatpush1.bf16.msra.mxu0 %v3741
    %3944 = vmatprep.subr.bf16.mxu0 %v3746
    %3945 = vmatpush1.bf16.msra.mxu0 %v3745
    %3946 = vmatprep.subr.bf16.mxu0 %v3750
    %3947 = vmatpush1.bf16.msra.mxu0 %v3749
    %3948 = vmatprep.subr.bf16.mxu0 %v3754
    %3949 = vmatpush1.bf16.msra.mxu0 %v3753
    %3950 = vmatprep.subr.bf16.mxu0 %v3758
    %3951 = vmatpush1.bf16.msra.mxu0 %v3757
    %3952 = vmatprep.subr.bf16.mxu0 %v3762
    %3953 = vmatpush1.bf16.msra.mxu0 %v3761
    %3954 = vmatprep.subr.bf16.mxu0 %v3766
    %3955 = vmatpush1.bf16.msra.mxu0 %v3765
    %3956 = vmatprep.subr.bf16.mxu0 %v3770
    %3957 = vmatpush1.bf16.msra.mxu0 %v3769
    %3958 = vmatprep.subr.bf16.mxu0 %v3774
    %3959 = vmatpush1.bf16.msra.mxu0 %v3773
    %3960 = vmatprep.subr.bf16.mxu0 %v3778
    %3961 = vmatpush1.bf16.msra.mxu0 %v3777
    %3962 = vmatprep.subr.bf16.mxu0 %v3782
    %3963 = vmatpush1.bf16.msra.mxu0 %v3781
    %3964 = vmatprep.subr.bf16.mxu0 %v3786
    %3965 = vmatpush1.bf16.msra.mxu0 %v3785
    %3966 = vmatprep.subr.bf16.mxu0 %v3790
    %3967 = vmatpush1.bf16.msra.mxu0 %v3789
    %3968 = vmatprep.subr.bf16.mxu0 %v3794
    %3969 = vmatpush1.bf16.msra.mxu0 %v3793
    %3970 = vmatprep.subr.bf16.mxu0 %v3798
    %3971 = vmatpush1.bf16.msra.mxu0 %v3797
    %3972 = vmatprep.mubr.bf16.mxu0 %v3411
    %3973 = vmatmul.mubr.bf16.gmra.mrb[0].mxu0 %v3410
    %v3974 = vpop.f32.mrb[0].mxu0
    %v3975 = vadd.f32 %v3420, %v3974
    %v3976 = vpop.f32.mrb[0].mxu0
    %v3977 = vadd.f32 %v3424, %v3976
    %v3978 = vpop.f32.mrb[0].mxu0
    %v3979 = vadd.f32 %v3420, %v3978
    %v3980 = vpop.f32.mrb[0].mxu0
    %v3981 = vadd.f32 %v3424, %v3980
    %3982 = vdwg.mxu0
    %3983 = vmatprep.subr.bf16.mxu0 %v3802
    %3984 = vmatpush1.bf16.msra.mxu0 %v3801
    %3985 = vmatprep.subr.bf16.mxu0 %v3806
    %3986 = vmatpush1.bf16.msra.mxu0 %v3805
    %3987 = vmatprep.subr.bf16.mxu0 %v3810
    %3988 = vmatpush1.bf16.msra.mxu0 %v3809
    %3989 = vmatprep.subr.bf16.mxu0 %v3814
    %3990 = vmatpush1.bf16.msra.mxu0 %v3813
    %3991 = vmatprep.subr.bf16.mxu0 %v3818
    %3992 = vmatpush1.bf16.msra.mxu0 %v3817
    %3993 = vmatprep.subr.bf16.mxu0 %v3822
    %3994 = vmatpush1.bf16.msra.mxu0 %v3821
    %3995 = vmatprep.subr.bf16.mxu0 %v3826
    %3996 = vmatpush1.bf16.msra.mxu0 %v3825
    %3997 = vmatprep.subr.bf16.mxu0 %v3830
    %3998 = vmatpush1.bf16.msra.mxu0 %v3829
    %3999 = vmatprep.subr.bf16.mxu0 %v3834
    %4000 = vmatpush1.bf16.msra.mxu0 %v3833
    %4001 = vmatprep.subr.bf16.mxu0 0
    %4002 = vmatpush1.bf16.msra.mxu0 0
    %4003 = vmatprep.subr.bf16.mxu0 0
    %4004 = vmatpush1.bf16.msra.mxu0 0
    %4005 = vmatprep.subr.bf16.mxu0 0
    %4006 = vmatpush1.bf16.msra.mxu0 0
    %4007 = vmatprep.subr.bf16.mxu0 0
    %4008 = vmatpush1.bf16.msra.mxu0 0
    %4009 = vmatprep.subr.bf16.mxu0 0
    %4010 = vmatpush1.bf16.msra.mxu0 0
    %4011 = vmatprep.subr.bf16.mxu0 0
    %4012 = vmatpush1.bf16.msra.mxu0 0
    %4013 = vmatprep.subr.bf16.mxu0 0
    %4014 = vmatpush1.bf16.msra.mxu0 0
    %4015 = vmatprep.mubr.bf16.mxu0 %v3938
    %4016 = vmatmul.mubr.bf16.gmra.mrb[0].mxu0 %v3412
    %v4017 = vpop.f32.mrb[0].mxu0
    %v4018 = vadd.f32 %v3975, %v4017
    %v4019 = vpop.f32.mrb[0].mxu0
    %v4020 = vadd.f32 %v3977, %v4019
    %v4021 = vpop.f32.mrb[0].mxu0
    %v4022 = vadd.f32 %v3979, %v4021
    %v4023 = vpop.f32.mrb[0].mxu0
    %v4024 = vadd.f32 %v3981, %v4023
    %4025 = vdwg.mxu0
    %4026 = vmatprep.subr.bf16.mxu0 %v3740
    %4027 = vmatpush1.bf16.msra.mxu0 %v3739
    %4028 = vmatprep.subr.bf16.mxu0 %v3744
    %4029 = vmatpush1.bf16.msra.mxu0 %v3743
    %4030 = vmatprep.subr.bf16.mxu0 %v3748
    %4031 = vmatpush1.bf16.msra.mxu0 %v3747
    %4032 = vmatprep.subr.bf16.mxu0 %v3752
    %4033 = vmatpush1.bf16.msra.mxu0 %v3751
    %4034 = vmatprep.subr.bf16.mxu0 %v3756
    %4035 = vmatpush1.bf16.msra.mxu0 %v3755
    %4036 = vmatprep.subr.bf16.mxu0 %v3760
    %4037 = vmatpush1.bf16.msra.mxu0 %v3759
    %4038 = vmatprep.subr.bf16.mxu0 %v3764
    %4039 = vmatpush1.bf16.msra.mxu0 %v3763
    %4040 = vmatprep.subr.bf16.mxu0 %v3768
    %4041 = vmatpush1.bf16.msra.mxu0 %v3767
    %4042 = vmatprep.subr.bf16.mxu0 %v3772
    %4043 = vmatpush1.bf16.msra.mxu0 %v3771
    %4044 = vmatprep.subr.bf16.mxu0 %v3776
    %4045 = vmatpush1.bf16.msra.mxu0 %v3775
    %4046 = vmatprep.subr.bf16.mxu0 %v3780
    %4047 = vmatpush1.bf16.msra.mxu0 %v3779
    %4048 = vmatprep.subr.bf16.mxu0 %v3784
    %4049 = vmatpush1.bf16.msra.mxu0 %v3783
    %4050 = vmatprep.subr.bf16.mxu0 %v3788
    %4051 = vmatpush1.bf16.msra.mxu0 %v3787
    %4052 = vmatprep.subr.bf16.mxu0 %v3792
    %4053 = vmatpush1.bf16.msra.mxu0 %v3791
    %4054 = vmatprep.subr.bf16.mxu0 %v3796
    %4055 = vmatpush1.bf16.msra.mxu0 %v3795
    %4056 = vmatprep.subr.bf16.mxu0 %v3800
    %4057 = vmatpush1.bf16.msra.mxu0 %v3799
    %4058 = vmatprep.mubr.bf16.mxu0 %v3411
    %4059 = vmatmul.mubr.bf16.gmra.mrb[0].mxu0 %v3410
    %v4060 = vpop.f32.mrb[0].mxu0
    %v4061 = vadd.f32 %v3428, %v4060
    %v4062 = vpop.f32.mrb[0].mxu0
    %v4063 = vadd.f32 %v3432, %v4062
    %v4064 = vpop.f32.mrb[0].mxu0
    %v4065 = vadd.f32 %v3428, %v4064
    %v4066 = vpop.f32.mrb[0].mxu0
    %v4067 = vadd.f32 %v3432, %v4066
    %4068 = vdwg.mxu0
    %4069 = vmatprep.subr.bf16.mxu0 %v3804
    %4070 = vmatpush1.bf16.msra.mxu0 %v3803
    %4071 = vmatprep.subr.bf16.mxu0 %v3808
    %4072 = vmatpush1.bf16.msra.mxu0 %v3807
    %4073 = vmatprep.subr.bf16.mxu0 %v3812
    %4074 = vmatpush1.bf16.msra.mxu0 %v3811
    %4075 = vmatprep.subr.bf16.mxu0 %v3816
    %4076 = vmatpush1.bf16.msra.mxu0 %v3815
    %4077 = vmatprep.subr.bf16.mxu0 %v3820
    %4078 = vmatpush1.bf16.msra.mxu0 %v3819
    %4079 = vmatprep.subr.bf16.mxu0 %v3824
    %4080 = vmatpush1.bf16.msra.mxu0 %v3823
    %4081 = vmatprep.subr.bf16.mxu0 %v3828
    %4082 = vmatpush1.bf16.msra.mxu0 %v3827
    %4083 = vmatprep.subr.bf16.mxu0 %v3832
    %4084 = vmatpush1.bf16.msra.mxu0 %v3831
    %4085 = vmatprep.subr.bf16.mxu0 %v3836
    %4086 = vmatpush1.bf16.msra.mxu0 %v3835
    %4087 = vmatprep.subr.bf16.mxu0 0
    %4088 = vmatpush1.bf16.msra.mxu0 0
    %4089 = vmatprep.subr.bf16.mxu0 0
    %4090 = vmatpush1.bf16.msra.mxu0 0
    %4091 = vmatprep.subr.bf16.mxu0 0
    %4092 = vmatpush1.bf16.msra.mxu0 0
    %4093 = vmatprep.subr.bf16.mxu0 0
    %4094 = vmatpush1.bf16.msra.mxu0 0
    %4095 = vmatprep.subr.bf16.mxu0 0
    %4096 = vmatpush1.bf16.msra.mxu0 0
    %4097 = vmatprep.subr.bf16.mxu0 0
    %4098 = vmatpush1.bf16.msra.mxu0 0
    %4099 = vmatprep.subr.bf16.mxu0 0
    %4100 = vmatpush1.bf16.msra.mxu0 0
    %4101 = vmatprep.mubr.bf16.mxu0 %v3938
    %4102 = vmatmul.mubr.bf16.gmra.mrb[0].mxu0 %v3412
    %v4103 = vpop.f32.mrb[0].mxu0
    %v4104 = vadd.f32 %v4061, %v4103
    %v4105 = vpop.f32.mrb[0].mxu0
    %v4106 = vadd.f32 %v4063, %v4105
    %v4107 = vpop.f32.mrb[0].mxu0
    %v4108 = vadd.f32 %v4065, %v4107
    %v4109 = vpop.f32.mrb[0].mxu0
    %v4110 = vadd.f32 %v4067, %v4109
    %4111 = vdwg.mxu0
    %v4112 = vmax.f32 %v4018, 0.0
    %v4113 = vmax.f32 %v4020, 0.0
    %v4114 = vmax.f32 %v4104, 0.0
    %v4115 = vmax.f32 %v4106, 0.0
    %v4116 = vmax.f32 %v4022, 0.0
    %v4117 = vmax.f32 %v4024, 0.0
    %v4118 = vmax.f32 %v4108, 0.0
    %v4119 = vmax.f32 %v4110, 0.0
    %s4120 = scalar_lea.vmem [#allocation11], 800
    %v4121 = vld [vmem:[%s4120] sm:$0xff]
    %v4122 = vld [vmem:[%s4120 + $0x8] sm:$0xff]
    %v4123 = vld [vmem:[%s4120 + $0x10] sm:$0xff]
    %v4124 = vld [vmem:[%s4120 + $0x18] sm:$0xff]
    %v4125 = vld [vmem:[%s4120 + $0x20] sm:$0xff]
    %v4126 = vld [vmem:[%s4120 + $0x28] sm:$0xff]
    %v4127 = vld [vmem:[%s4120 + $0x30] sm:$0xff]
    %v4128 = vld [vmem:[%s4120 + $0x38] sm:$0xff]
    %v4129 = vld [vmem:[%s4120 + $0x40] sm:$0xff]
    %v4130 = vld [vmem:[%s4120 + $0x48] sm:$0xff]
    %v4131 = vld [vmem:[%s4120 + $0x50] sm:$0xff]
    %v4132 = vld [vmem:[%s4120 + $0x58] sm:$0xff]
    %v4133 = vld [vmem:[%s4120 + $0x60] sm:$0xff]
    %v4134 = vld [vmem:[%s4120 + $0x68] sm:$0xff]
    %v4135 = vld [vmem:[%s4120 + $0x70] sm:$0xff]
    %v4136 = vld [vmem:[%s4120 + $0x78] sm:$0xff]
    %v4137 = vld [vmem:[%s4120 + $0x80] sm:$0xff]
    %v4138 = vld [vmem:[%s4120 + $0x88] sm:$0xff]
    %v4139 = vld [vmem:[%s4120 + $0x90] sm:$0xff]
    %v4140 = vld [vmem:[%s4120 + $0x98] sm:$0xff]
    %v4141 = vld [vmem:[%s4120 + $0xa0] sm:$0xff]
    %v4142 = vld [vmem:[%s4120 + $0xa8] sm:$0xff]
    %v4143 = vld [vmem:[%s4120 + $0xb0] sm:$0xff]
    %v4144 = vld [vmem:[%s4120 + $0xb8] sm:$0xff]
    %v4145 = vld [vmem:[%s4120 + $0xc0] sm:$0xff]
    %v4146 = vld [vmem:[%s4120 + $0xc8] sm:$0xff]
    %v4147 = vld [vmem:[%s4120 + $0xd0] sm:$0xff]
    %v4148 = vld [vmem:[%s4120 + $0xd8] sm:$0xff]
    %v4149 = vld [vmem:[%s4120 + $0xe0] sm:$0xff]
    %v4150 = vld [vmem:[%s4120 + $0xe8] sm:$0xff]
    %v4151 = vld [vmem:[%s4120 + $0xf0] sm:$0xff]
    %v4152 = vld [vmem:[%s4120 + $0xf8] sm:$0xff]
    %v4153 = vld [vmem:[%s4120 + $0x100] sm:$0xff]
    %v4154 = vld [vmem:[%s4120 + $0x108] sm:$0xff]
    %v4155 = vld [vmem:[%s4120 + $0x110] sm:$0xff]
    %v4156 = vld [vmem:[%s4120 + $0x118] sm:$0xff]
    %v4157 = vld [vmem:[%s4120 + $0x120] sm:$0xff]
    %v4158 = vld [vmem:[%s4120 + $0x128] sm:$0xff]
    %v4159 = vld [vmem:[%s4120 + $0x130] sm:$0xff]
    %v4160 = vld [vmem:[%s4120 + $0x138] sm:$0xff]
    %v4161 = vld [vmem:[%s4120 + $0x140] sm:$0xff]
    %v4162 = vld [vmem:[%s4120 + $0x148] sm:$0xff]
    %v4163 = vld [vmem:[%s4120 + $0x150] sm:$0xff]
    %v4164 = vld [vmem:[%s4120 + $0x158] sm:$0xff]
    %v4165 = vld [vmem:[%s4120 + $0x160] sm:$0xff]
    %v4166 = vld [vmem:[%s4120 + $0x168] sm:$0xff]
    %v4167 = vld [vmem:[%s4120 + $0x170] sm:$0xff]
    %v4168 = vld [vmem:[%s4120 + $0x178] sm:$0xff]
    %v4169 = vld [vmem:[%s4120 + $0x180] sm:$0xff]
    %v4170 = vld [vmem:[%s4120 + $0x188] sm:$0xff]
    %v4171 = vld [vmem:[%s4120 + $0x190] sm:$0xff]
    %v4172 = vld [vmem:[%s4120 + $0x198] sm:$0xff]
    %v4173 = vld [vmem:[%s4120 + $0x1a0] sm:$0xff]
    %v4174 = vld [vmem:[%s4120 + $0x1a8] sm:$0xff]
    %v4175 = vld [vmem:[%s4120 + $0x1b0] sm:$0xff]
    %v4176 = vld [vmem:[%s4120 + $0x1b8] sm:$0xff]
    %v4177 = vld [vmem:[%s4120 + $0x1c0] sm:$0xff]
    %v4178 = vld [vmem:[%s4120 + $0x1c8] sm:$0xff]
    %v4179 = vld [vmem:[%s4120 + $0x1d0] sm:$0xff]
    %v4180 = vld [vmem:[%s4120 + $0x1d8] sm:$0xff]
    %v4181 = vld [vmem:[%s4120 + $0x1e0] sm:$0xff]
    %v4182 = vld [vmem:[%s4120 + $0x1e8] sm:$0xff]
    %v4183 = vld [vmem:[%s4120 + $0x1f0] sm:$0xff]
    %v4184 = vld [vmem:[%s4120 + $0x1f8] sm:$0xff]
    %v4185 = vld [vmem:[%s4120 + $0x200] sm:$0xff]
    %v4186 = vld [vmem:[%s4120 + $0x208] sm:$0xff]
    %v4187 = vld [vmem:[%s4120 + $0x210] sm:$0xff]
    %v4188 = vld [vmem:[%s4120 + $0x218] sm:$0xff]
    %v4189 = vld [vmem:[%s4120 + $0x220] sm:$0xff]
    %v4190 = vld [vmem:[%s4120 + $0x228] sm:$0xff]
    %v4191 = vld [vmem:[%s4120 + $0x230] sm:$0xff]
    %v4192 = vld [vmem:[%s4120 + $0x238] sm:$0xff]
    %v4193 = vld [vmem:[%s4120 + $0x240] sm:$0xff]
    %v4194 = vld [vmem:[%s4120 + $0x248] sm:$0xff]
    %v4195 = vld [vmem:[%s4120 + $0x250] sm:$0xff]
    %v4196 = vld [vmem:[%s4120 + $0x258] sm:$0xff]
    %v4197 = vld [vmem:[%s4120 + $0x260] sm:$0xff]
    %v4198 = vld [vmem:[%s4120 + $0x268] sm:$0xff]
    %v4199 = vld [vmem:[%s4120 + $0x270] sm:$0xff]
    %v4200 = vld [vmem:[%s4120 + $0x278] sm:$0xff]
    %v4201 = vld [vmem:[%s4120 + $0x280] sm:$0xff]
    %v4202 = vld [vmem:[%s4120 + $0x288] sm:$0xff]
    %v4203 = vld [vmem:[%s4120 + $0x290] sm:$0xff]
    %v4204 = vld [vmem:[%s4120 + $0x298] sm:$0xff]
    %v4205 = vld [vmem:[%s4120 + $0x2a0] sm:$0xff]
    %v4206 = vld [vmem:[%s4120 + $0x2a8] sm:$0xff]
    %v4207 = vld [vmem:[%s4120 + $0x2b0] sm:$0xff]
    %v4208 = vld [vmem:[%s4120 + $0x2b8] sm:$0xff]
    %v4209 = vld [vmem:[%s4120 + $0x2c0] sm:$0xff]
    %v4210 = vld [vmem:[%s4120 + $0x2c8] sm:$0xff]
    %v4211 = vld [vmem:[%s4120 + $0x2d0] sm:$0xff]
    %v4212 = vld [vmem:[%s4120 + $0x2d8] sm:$0xff]
    %v4213 = vld [vmem:[%s4120 + $0x2e0] sm:$0xff]
    %v4214 = vld [vmem:[%s4120 + $0x2e8] sm:$0xff]
    %v4215 = vld [vmem:[%s4120 + $0x2f0] sm:$0xff]
    %v4216 = vld [vmem:[%s4120 + $0x2f8] sm:$0xff]
    %v4217 = vld [vmem:[%s4120 + $0x300] sm:$0xff]
    %v4218 = vld [vmem:[%s4120 + $0x308] sm:$0xff]
    %v4219 = vld [vmem:[%s4120 + $0x310] sm:$0xff]
    %v4220 = vld [vmem:[%s4120 + $0x318] sm:$0xff]
    %v4221 = vpack.c.bf16 %v4116, %v4112
    %v4222 = vpack.c.bf16 %v4117, %v4113
    %v4223 = vpack.c.bf16 %v4118, %v4114
    %v4224 = vpack.c.bf16 %v4119, %v4115
    %s4225 = scalar_lea.vmem [#allocation13], 7
    %v4226 = vld [vmem:[%s4225] ss:$8 sm:$0xf]
    %v4228 = vlaneseq
    %v4229 = vshrl.u32 %v4228, 7
    %v4230 = vsub.s32 0, %v4229
    %v4231 = vrot.slane %v4226, %v4230
    %v4232 = vlaneseq
    %v4233 = vshrl.u32 %v4232, 7
    %v4234 = vsub.s32 1, %v4233
    %v4235 = vrot.slane %v4226, %v4234
    %v4236 = vlaneseq
    %v4237 = vshrl.u32 %v4236, 7
    %v4238 = vsub.s32 2, %v4237
    %v4239 = vrot.slane %v4226, %v4238
    %v4240 = vlaneseq
    %v4241 = vshrl.u32 %v4240, 7
    %v4242 = vsub.s32 3, %v4241
    %v4243 = vrot.slane %v4226, %v4242
    %v4348 = vunpack.c.l.b16 %v4121
    %v4349 = vunpack.c.h.b16 %v4121
    %v4350 = vunpack.c.l.b16 %v4122
    %v4351 = vunpack.c.h.b16 %v4122
    %v4352 = vunpack.c.l.b16 %v4123
    %v4353 = vunpack.c.h.b16 %v4123
    %v4354 = vunpack.c.l.b16 %v4124
    %v4355 = vunpack.c.h.b16 %v4124
    %v4356 = vunpack.c.l.b16 %v4125
    %v4357 = vunpack.c.h.b16 %v4125
    %v4358 = vunpack.c.l.b16 %v4126
    %v4359 = vunpack.c.h.b16 %v4126
    %v4360 = vunpack.c.l.b16 %v4127
    %v4361 = vunpack.c.h.b16 %v4127
    %v4362 = vunpack.c.l.b16 %v4128
    %v4363 = vunpack.c.h.b16 %v4128
    %v4364 = vunpack.c.l.b16 %v4129
    %v4365 = vunpack.c.h.b16 %v4129
    %v4366 = vunpack.c.l.b16 %v4130
    %v4367 = vunpack.c.h.b16 %v4130
    %v4368 = vunpack.c.l.b16 %v4131
    %v4369 = vunpack.c.h.b16 %v4131
    %v4370 = vunpack.c.l.b16 %v4132
    %v4371 = vunpack.c.h.b16 %v4132
    %v4372 = vunpack.c.l.b16 %v4133
    %v4373 = vunpack.c.h.b16 %v4133
    %v4374 = vunpack.c.l.b16 %v4134
    %v4375 = vunpack.c.h.b16 %v4134
    %v4376 = vunpack.c.l.b16 %v4135
    %v4377 = vunpack.c.h.b16 %v4135
    %v4378 = vunpack.c.l.b16 %v4136
    %v4379 = vunpack.c.h.b16 %v4136
    %v4380 = vunpack.c.l.b16 %v4137
    %v4381 = vunpack.c.h.b16 %v4137
    %v4382 = vunpack.c.l.b16 %v4138
    %v4383 = vunpack.c.h.b16 %v4138
    %v4384 = vunpack.c.l.b16 %v4139
    %v4385 = vunpack.c.h.b16 %v4139
    %v4386 = vunpack.c.l.b16 %v4140
    %v4387 = vunpack.c.h.b16 %v4140
    %v4388 = vunpack.c.l.b16 %v4141
    %v4389 = vunpack.c.h.b16 %v4141
    %v4390 = vunpack.c.l.b16 %v4142
    %v4391 = vunpack.c.h.b16 %v4142
    %v4392 = vunpack.c.l.b16 %v4143
    %v4393 = vunpack.c.h.b16 %v4143
    %v4394 = vunpack.c.l.b16 %v4144
    %v4395 = vunpack.c.h.b16 %v4144
    %v4396 = vunpack.c.l.b16 %v4145
    %v4397 = vunpack.c.h.b16 %v4145
    %v4398 = vunpack.c.l.b16 %v4146
    %v4399 = vunpack.c.h.b16 %v4146
    %v4400 = vunpack.c.l.b16 %v4147
    %v4401 = vunpack.c.h.b16 %v4147
    %v4402 = vunpack.c.l.b16 %v4148
    %v4403 = vunpack.c.h.b16 %v4148
    %v4404 = vunpack.c.l.b16 %v4149
    %v4405 = vunpack.c.h.b16 %v4149
    %v4406 = vunpack.c.l.b16 %v4150
    %v4407 = vunpack.c.h.b16 %v4150
    %v4408 = vunpack.c.l.b16 %v4151
    %v4409 = vunpack.c.h.b16 %v4151
    %v4410 = vunpack.c.l.b16 %v4152
    %v4411 = vunpack.c.h.b16 %v4152
    %v4412 = vunpack.c.l.b16 %v4153
    %v4413 = vunpack.c.h.b16 %v4153
    %v4414 = vunpack.c.l.b16 %v4154
    %v4415 = vunpack.c.h.b16 %v4154
    %v4416 = vunpack.c.l.b16 %v4155
    %v4417 = vunpack.c.h.b16 %v4155
    %v4418 = vunpack.c.l.b16 %v4156
    %v4419 = vunpack.c.h.b16 %v4156
    %v4420 = vunpack.c.l.b16 %v4157
    %v4421 = vunpack.c.h.b16 %v4157
    %v4422 = vunpack.c.l.b16 %v4158
    %v4423 = vunpack.c.h.b16 %v4158
    %v4424 = vunpack.c.l.b16 %v4159
    %v4425 = vunpack.c.h.b16 %v4159
    %v4426 = vunpack.c.l.b16 %v4160
    %v4427 = vunpack.c.h.b16 %v4160
    %v4428 = vunpack.c.l.b16 %v4161
    %v4429 = vunpack.c.h.b16 %v4161
    %v4430 = vunpack.c.l.b16 %v4162
    %v4431 = vunpack.c.h.b16 %v4162
    %v4432 = vunpack.c.l.b16 %v4163
    %v4433 = vunpack.c.h.b16 %v4163
    %v4434 = vunpack.c.l.b16 %v4164
    %v4435 = vunpack.c.h.b16 %v4164
    %v4436 = vunpack.c.l.b16 %v4165
    %v4437 = vunpack.c.h.b16 %v4165
    %v4438 = vunpack.c.l.b16 %v4166
    %v4439 = vunpack.c.h.b16 %v4166
    %v4440 = vunpack.c.l.b16 %v4167
    %v4441 = vunpack.c.h.b16 %v4167
    %v4442 = vunpack.c.l.b16 %v4168
    %v4443 = vunpack.c.h.b16 %v4168
    %v4444 = vunpack.c.l.b16 %v4169
    %v4445 = vunpack.c.h.b16 %v4169
    %v4446 = vunpack.c.l.b16 %v4170
    %v4447 = vunpack.c.h.b16 %v4170
    %v4448 = vunpack.c.l.b16 %v4171
    %v4449 = vunpack.c.h.b16 %v4171
    %v4450 = vunpack.c.l.b16 %v4172
    %v4451 = vunpack.c.h.b16 %v4172
    %v4452 = vunpack.c.l.b16 %v4173
    %v4453 = vunpack.c.h.b16 %v4173
    %v4454 = vunpack.c.l.b16 %v4174
    %v4455 = vunpack.c.h.b16 %v4174
    %v4456 = vunpack.c.l.b16 %v4175
    %v4457 = vunpack.c.h.b16 %v4175
    %v4458 = vunpack.c.l.b16 %v4176
    %v4459 = vunpack.c.h.b16 %v4176
    %v4460 = vunpack.c.l.b16 %v4177
    %v4461 = vunpack.c.h.b16 %v4177
    %v4462 = vunpack.c.l.b16 %v4178
    %v4463 = vunpack.c.h.b16 %v4178
    %v4464 = vunpack.c.l.b16 %v4179
    %v4465 = vunpack.c.h.b16 %v4179
    %v4466 = vunpack.c.l.b16 %v4180
    %v4467 = vunpack.c.h.b16 %v4180
    %v4468 = vunpack.c.l.b16 %v4181
    %v4469 = vunpack.c.h.b16 %v4181
    %v4470 = vunpack.c.l.b16 %v4182
    %v4471 = vunpack.c.h.b16 %v4182
    %v4472 = vunpack.c.l.b16 %v4183
    %v4473 = vunpack.c.h.b16 %v4183
    %v4474 = vunpack.c.l.b16 %v4184
    %v4475 = vunpack.c.h.b16 %v4184
    %v4476 = vunpack.c.l.b16 %v4185
    %v4477 = vunpack.c.h.b16 %v4185
    %v4478 = vunpack.c.l.b16 %v4186
    %v4479 = vunpack.c.h.b16 %v4186
    %v4480 = vunpack.c.l.b16 %v4187
    %v4481 = vunpack.c.h.b16 %v4187
    %v4482 = vunpack.c.l.b16 %v4188
    %v4483 = vunpack.c.h.b16 %v4188
    %v4484 = vunpack.c.l.b16 %v4189
    %v4485 = vunpack.c.h.b16 %v4189
    %v4486 = vunpack.c.l.b16 %v4190
    %v4487 = vunpack.c.h.b16 %v4190
    %v4488 = vunpack.c.l.b16 %v4191
    %v4489 = vunpack.c.h.b16 %v4191
    %v4490 = vunpack.c.l.b16 %v4192
    %v4491 = vunpack.c.h.b16 %v4192
    %v4492 = vunpack.c.l.b16 %v4193
    %v4493 = vunpack.c.h.b16 %v4193
    %v4494 = vunpack.c.l.b16 %v4194
    %v4495 = vunpack.c.h.b16 %v4194
    %v4496 = vunpack.c.l.b16 %v4195
    %v4497 = vunpack.c.h.b16 %v4195
    %v4498 = vunpack.c.l.b16 %v4196
    %v4499 = vunpack.c.h.b16 %v4196
    %v4500 = vunpack.c.l.b16 %v4197
    %v4501 = vunpack.c.h.b16 %v4197
    %v4502 = vunpack.c.l.b16 %v4198
    %v4503 = vunpack.c.h.b16 %v4198
    %v4504 = vunpack.c.l.b16 %v4199
    %v4505 = vunpack.c.h.b16 %v4199
    %v4506 = vunpack.c.l.b16 %v4200
    %v4507 = vunpack.c.h.b16 %v4200
    %v4508 = vunpack.c.l.b16 %v4201
    %v4509 = vunpack.c.h.b16 %v4201
    %v4510 = vunpack.c.l.b16 %v4202
    %v4511 = vunpack.c.h.b16 %v4202
    %v4512 = vunpack.c.l.b16 %v4203
    %v4513 = vunpack.c.h.b16 %v4203
    %v4514 = vunpack.c.l.b16 %v4204
    %v4515 = vunpack.c.h.b16 %v4204
    %v4516 = vunpack.c.l.b16 %v4205
    %v4517 = vunpack.c.h.b16 %v4205
    %v4518 = vunpack.c.l.b16 %v4206
    %v4519 = vunpack.c.h.b16 %v4206
    %v4520 = vunpack.c.l.b16 %v4207
    %v4521 = vunpack.c.h.b16 %v4207
    %v4522 = vunpack.c.l.b16 %v4208
    %v4523 = vunpack.c.h.b16 %v4208
    %v4524 = vunpack.c.l.b16 %v4209
    %v4525 = vunpack.c.h.b16 %v4209
    %v4526 = vunpack.c.l.b16 %v4210
    %v4527 = vunpack.c.h.b16 %v4210
    %v4528 = vunpack.c.l.b16 %v4211
    %v4529 = vunpack.c.h.b16 %v4211
    %v4530 = vunpack.c.l.b16 %v4212
    %v4531 = vunpack.c.h.b16 %v4212
    %v4532 = vunpack.c.l.b16 %v4213
    %v4533 = vunpack.c.h.b16 %v4213
    %v4534 = vunpack.c.l.b16 %v4214
    %v4535 = vunpack.c.h.b16 %v4214
    %v4536 = vunpack.c.l.b16 %v4215
    %v4537 = vunpack.c.h.b16 %v4215
    %v4538 = vunpack.c.l.b16 %v4216
    %v4539 = vunpack.c.h.b16 %v4216
    %v4540 = vunpack.c.l.b16 %v4217
    %v4541 = vunpack.c.h.b16 %v4217
    %v4542 = vunpack.c.l.b16 %v4218
    %v4543 = vunpack.c.h.b16 %v4218
    %v4544 = vunpack.c.l.b16 %v4219
    %v4545 = vunpack.c.h.b16 %v4219
    %v4546 = vunpack.c.l.b16 %v4220
    %v4547 = vunpack.c.h.b16 %v4220
    %v4548 = vpack.c.b16 %v4352, %v4348
    %v4549 = vpack.c.b16 %v4353, %v4349
    %v4550 = vpack.c.b16 %v4354, %v4350
    %v4551 = vpack.c.b16 %v4355, %v4351
    %v4552 = vpack.c.b16 %v4360, %v4356
    %v4553 = vpack.c.b16 %v4361, %v4357
    %v4554 = vpack.c.b16 %v4362, %v4358
    %v4555 = vpack.c.b16 %v4363, %v4359
    %v4556 = vpack.c.b16 %v4368, %v4364
    %v4557 = vpack.c.b16 %v4369, %v4365
    %v4558 = vpack.c.b16 %v4370, %v4366
    %v4559 = vpack.c.b16 %v4371, %v4367
    %v4560 = vpack.c.b16 %v4376, %v4372
    %v4561 = vpack.c.b16 %v4377, %v4373
    %v4562 = vpack.c.b16 %v4378, %v4374
    %v4563 = vpack.c.b16 %v4379, %v4375
    %v4564 = vpack.c.b16 %v4384, %v4380
    %v4565 = vpack.c.b16 %v4385, %v4381
    %v4566 = vpack.c.b16 %v4386, %v4382
    %v4567 = vpack.c.b16 %v4387, %v4383
    %v4568 = vpack.c.b16 %v4392, %v4388
    %v4569 = vpack.c.b16 %v4393, %v4389
    %v4570 = vpack.c.b16 %v4394, %v4390
    %v4571 = vpack.c.b16 %v4395, %v4391
    %v4572 = vpack.c.b16 %v4400, %v4396
    %v4573 = vpack.c.b16 %v4401, %v4397
    %v4574 = vpack.c.b16 %v4402, %v4398
    %v4575 = vpack.c.b16 %v4403, %v4399
    %v4576 = vpack.c.b16 %v4408, %v4404
    %v4577 = vpack.c.b16 %v4409, %v4405
    %v4578 = vpack.c.b16 %v4410, %v4406
    %v4579 = vpack.c.b16 %v4411, %v4407
    %v4580 = vpack.c.b16 %v4416, %v4412
    %v4581 = vpack.c.b16 %v4417, %v4413
    %v4582 = vpack.c.b16 %v4418, %v4414
    %v4583 = vpack.c.b16 %v4419, %v4415
    %v4584 = vpack.c.b16 %v4424, %v4420
    %v4585 = vpack.c.b16 %v4425, %v4421
    %v4586 = vpack.c.b16 %v4426, %v4422
    %v4587 = vpack.c.b16 %v4427, %v4423
    %v4588 = vpack.c.b16 %v4432, %v4428
    %v4589 = vpack.c.b16 %v4433, %v4429
    %v4590 = vpack.c.b16 %v4434, %v4430
    %v4591 = vpack.c.b16 %v4435, %v4431
    %v4592 = vpack.c.b16 %v4440, %v4436
    %v4593 = vpack.c.b16 %v4441, %v4437
    %v4594 = vpack.c.b16 %v4442, %v4438
    %v4595 = vpack.c.b16 %v4443, %v4439
    %v4596 = vpack.c.b16 %v4448, %v4444
    %v4597 = vpack.c.b16 %v4449, %v4445
    %v4598 = vpack.c.b16 %v4450, %v4446
    %v4599 = vpack.c.b16 %v4451, %v4447
    %v4600 = vpack.c.b16 %v4456, %v4452
    %v4601 = vpack.c.b16 %v4457, %v4453
    %v4602 = vpack.c.b16 %v4458, %v4454
    %v4603 = vpack.c.b16 %v4459, %v4455
    %v4604 = vpack.c.b16 %v4464, %v4460
    %v4605 = vpack.c.b16 %v4465, %v4461
    %v4606 = vpack.c.b16 %v4466, %v4462
    %v4607 = vpack.c.b16 %v4467, %v4463
    %v4608 = vpack.c.b16 %v4472, %v4468
    %v4609 = vpack.c.b16 %v4473, %v4469
    %v4610 = vpack.c.b16 %v4474, %v4470
    %v4611 = vpack.c.b16 %v4475, %v4471
    %v4612 = vpack.c.b16 %v4480, %v4476
    %v4613 = vpack.c.b16 %v4481, %v4477
    %v4614 = vpack.c.b16 %v4482, %v4478
    %v4615 = vpack.c.b16 %v4483, %v4479
    %v4616 = vpack.c.b16 %v4488, %v4484
    %v4617 = vpack.c.b16 %v4489, %v4485
    %v4618 = vpack.c.b16 %v4490, %v4486
    %v4619 = vpack.c.b16 %v4491, %v4487
    %v4620 = vpack.c.b16 %v4496, %v4492
    %v4621 = vpack.c.b16 %v4497, %v4493
    %v4622 = vpack.c.b16 %v4498, %v4494
    %v4623 = vpack.c.b16 %v4499, %v4495
    %v4624 = vpack.c.b16 %v4504, %v4500
    %v4625 = vpack.c.b16 %v4505, %v4501
    %v4626 = vpack.c.b16 %v4506, %v4502
    %v4627 = vpack.c.b16 %v4507, %v4503
    %v4628 = vpack.c.b16 %v4512, %v4508
    %v4629 = vpack.c.b16 %v4513, %v4509
    %v4630 = vpack.c.b16 %v4514, %v4510
    %v4631 = vpack.c.b16 %v4515, %v4511
    %v4632 = vpack.c.b16 %v4520, %v4516
    %v4633 = vpack.c.b16 %v4521, %v4517
    %v4634 = vpack.c.b16 %v4522, %v4518
    %v4635 = vpack.c.b16 %v4523, %v4519
    %v4636 = vpack.c.b16 %v4528, %v4524
    %v4637 = vpack.c.b16 %v4529, %v4525
    %v4638 = vpack.c.b16 %v4530, %v4526
    %v4639 = vpack.c.b16 %v4531, %v4527
    %v4640 = vpack.c.b16 %v4536, %v4532
    %v4641 = vpack.c.b16 %v4537, %v4533
    %v4642 = vpack.c.b16 %v4538, %v4534
    %v4643 = vpack.c.b16 %v4539, %v4535
    %v4644 = vpack.c.b16 %v4544, %v4540
    %v4645 = vpack.c.b16 %v4545, %v4541
    %v4646 = vpack.c.b16 %v4546, %v4542
    %v4647 = vpack.c.b16 %v4547, %v4543
    %v4749 = vsel %vm935, %v4224, 0
    %4751 = vmatprep.subr.bf16.mxu0 %v4549
    %4752 = vmatpush1.bf16.msra.mxu0 %v4548
    %4753 = vmatprep.subr.bf16.mxu0 %v4553
    %4754 = vmatpush1.bf16.msra.mxu0 %v4552
    %4755 = vmatprep.subr.bf16.mxu0 %v4557
    %4756 = vmatpush1.bf16.msra.mxu0 %v4556
    %4757 = vmatprep.subr.bf16.mxu0 %v4561
    %4758 = vmatpush1.bf16.msra.mxu0 %v4560
    %4759 = vmatprep.subr.bf16.mxu0 %v4565
    %4760 = vmatpush1.bf16.msra.mxu0 %v4564
    %4761 = vmatprep.subr.bf16.mxu0 %v4569
    %4762 = vmatpush1.bf16.msra.mxu0 %v4568
    %4763 = vmatprep.subr.bf16.mxu0 %v4573
    %4764 = vmatpush1.bf16.msra.mxu0 %v4572
    %4765 = vmatprep.subr.bf16.mxu0 %v4577
    %4766 = vmatpush1.bf16.msra.mxu0 %v4576
    %4767 = vmatprep.subr.bf16.mxu0 %v4581
    %4768 = vmatpush1.bf16.msra.mxu0 %v4580
    %4769 = vmatprep.subr.bf16.mxu0 %v4585
    %4770 = vmatpush1.bf16.msra.mxu0 %v4584
    %4771 = vmatprep.subr.bf16.mxu0 %v4589
    %4772 = vmatpush1.bf16.msra.mxu0 %v4588
    %4773 = vmatprep.subr.bf16.mxu0 %v4593
    %4774 = vmatpush1.bf16.msra.mxu0 %v4592
    %4775 = vmatprep.subr.bf16.mxu0 %v4597
    %4776 = vmatpush1.bf16.msra.mxu0 %v4596
    %4777 = vmatprep.subr.bf16.mxu0 %v4601
    %4778 = vmatpush1.bf16.msra.mxu0 %v4600
    %4779 = vmatprep.subr.bf16.mxu0 %v4605
    %4780 = vmatpush1.bf16.msra.mxu0 %v4604
    %4781 = vmatprep.subr.bf16.mxu0 %v4609
    %4782 = vmatpush1.bf16.msra.mxu0 %v4608
    %4783 = vmatprep.mubr.bf16.mxu0 %v4222
    %4784 = vmatmul.mubr.bf16.gmra.mrb[0].mxu0 %v4221
    %v4785 = vpop.f32.mrb[0].mxu0
    %v4786 = vadd.f32 %v4231, %v4785
    %v4787 = vpop.f32.mrb[0].mxu0
    %v4788 = vadd.f32 %v4235, %v4787
    %v4789 = vpop.f32.mrb[0].mxu0
    %v4790 = vadd.f32 %v4231, %v4789
    %v4791 = vpop.f32.mrb[0].mxu0
    %v4792 = vadd.f32 %v4235, %v4791
    %4793 = vdwg.mxu0
    %4794 = vmatprep.subr.bf16.mxu0 %v4613
    %4795 = vmatpush1.bf16.msra.mxu0 %v4612
    %4796 = vmatprep.subr.bf16.mxu0 %v4617
    %4797 = vmatpush1.bf16.msra.mxu0 %v4616
    %4798 = vmatprep.subr.bf16.mxu0 %v4621
    %4799 = vmatpush1.bf16.msra.mxu0 %v4620
    %4800 = vmatprep.subr.bf16.mxu0 %v4625
    %4801 = vmatpush1.bf16.msra.mxu0 %v4624
    %4802 = vmatprep.subr.bf16.mxu0 %v4629
    %4803 = vmatpush1.bf16.msra.mxu0 %v4628
    %4804 = vmatprep.subr.bf16.mxu0 %v4633
    %4805 = vmatpush1.bf16.msra.mxu0 %v4632
    %4806 = vmatprep.subr.bf16.mxu0 %v4637
    %4807 = vmatpush1.bf16.msra.mxu0 %v4636
    %4808 = vmatprep.subr.bf16.mxu0 %v4641
    %4809 = vmatpush1.bf16.msra.mxu0 %v4640
    %4810 = vmatprep.subr.bf16.mxu0 %v4645
    %4811 = vmatpush1.bf16.msra.mxu0 %v4644
    %4812 = vmatprep.subr.bf16.mxu0 0
    %4813 = vmatpush1.bf16.msra.mxu0 0
    %4814 = vmatprep.subr.bf16.mxu0 0
    %4815 = vmatpush1.bf16.msra.mxu0 0
    %4816 = vmatprep.subr.bf16.mxu0 0
    %4817 = vmatpush1.bf16.msra.mxu0 0
    %4818 = vmatprep.subr.bf16.mxu0 0
    %4819 = vmatpush1.bf16.msra.mxu0 0
    %4820 = vmatprep.subr.bf16.mxu0 0
    %4821 = vmatpush1.bf16.msra.mxu0 0
    %4822 = vmatprep.subr.bf16.mxu0 0
    %4823 = vmatpush1.bf16.msra.mxu0 0
    %4824 = vmatprep.subr.bf16.mxu0 0
    %4825 = vmatpush1.bf16.msra.mxu0 0
    %4826 = vmatprep.mubr.bf16.mxu0 %v4749
    %4827 = vmatmul.mubr.bf16.gmra.mrb[0].mxu0 %v4223
    %v4828 = vpop.f32.mrb[0].mxu0
    %v4829 = vadd.f32 %v4786, %v4828
    %v4830 = vpop.f32.mrb[0].mxu0
    %v4831 = vadd.f32 %v4788, %v4830
    %v4832 = vpop.f32.mrb[0].mxu0
    %v4833 = vadd.f32 %v4790, %v4832
    %v4834 = vpop.f32.mrb[0].mxu0
    %v4835 = vadd.f32 %v4792, %v4834
    %4836 = vdwg.mxu0
    %4837 = vmatprep.subr.bf16.mxu0 %v4551
    %4838 = vmatpush1.bf16.msra.mxu0 %v4550
    %4839 = vmatprep.subr.bf16.mxu0 %v4555
    %4840 = vmatpush1.bf16.msra.mxu0 %v4554
    %4841 = vmatprep.subr.bf16.mxu0 %v4559
    %4842 = vmatpush1.bf16.msra.mxu0 %v4558
    %4843 = vmatprep.subr.bf16.mxu0 %v4563
    %4844 = vmatpush1.bf16.msra.mxu0 %v4562
    %4845 = vmatprep.subr.bf16.mxu0 %v4567
    %4846 = vmatpush1.bf16.msra.mxu0 %v4566
    %4847 = vmatprep.subr.bf16.mxu0 %v4571
    %4848 = vmatpush1.bf16.msra.mxu0 %v4570
    %4849 = vmatprep.subr.bf16.mxu0 %v4575
    %4850 = vmatpush1.bf16.msra.mxu0 %v4574
    %4851 = vmatprep.subr.bf16.mxu0 %v4579
    %4852 = vmatpush1.bf16.msra.mxu0 %v4578
    %4853 = vmatprep.subr.bf16.mxu0 %v4583
    %4854 = vmatpush1.bf16.msra.mxu0 %v4582
    %4855 = vmatprep.subr.bf16.mxu0 %v4587
    %4856 = vmatpush1.bf16.msra.mxu0 %v4586
    %4857 = vmatprep.subr.bf16.mxu0 %v4591
    %4858 = vmatpush1.bf16.msra.mxu0 %v4590
    %4859 = vmatprep.subr.bf16.mxu0 %v4595
    %4860 = vmatpush1.bf16.msra.mxu0 %v4594
    %4861 = vmatprep.subr.bf16.mxu0 %v4599
    %4862 = vmatpush1.bf16.msra.mxu0 %v4598
    %4863 = vmatprep.subr.bf16.mxu0 %v4603
    %4864 = vmatpush1.bf16.msra.mxu0 %v4602
    %4865 = vmatprep.subr.bf16.mxu0 %v4607
    %4866 = vmatpush1.bf16.msra.mxu0 %v4606
    %4867 = vmatprep.subr.bf16.mxu0 %v4611
    %4868 = vmatpush1.bf16.msra.mxu0 %v4610
    %4869 = vmatprep.mubr.bf16.mxu0 %v4222
    %4870 = vmatmul.mubr.bf16.gmra.mrb[0].mxu0 %v4221
    %v4871 = vpop.f32.mrb[0].mxu0
    %v4872 = vadd.f32 %v4239, %v4871
    %v4873 = vpop.f32.mrb[0].mxu0
    %v4874 = vadd.f32 %v4243, %v4873
    %v4875 = vpop.f32.mrb[0].mxu0
    %v4876 = vadd.f32 %v4239, %v4875
    %v4877 = vpop.f32.mrb[0].mxu0
    %v4878 = vadd.f32 %v4243, %v4877
    %4879 = vdwg.mxu0
    %4880 = vmatprep.subr.bf16.mxu0 %v4615
    %4881 = vmatpush1.bf16.msra.mxu0 %v4614
    %4882 = vmatprep.subr.bf16.mxu0 %v4619
    %4883 = vmatpush1.bf16.msra.mxu0 %v4618
    %4884 = vmatprep.subr.bf16.mxu0 %v4623
    %4885 = vmatpush1.bf16.msra.mxu0 %v4622
    %4886 = vmatprep.subr.bf16.mxu0 %v4627
    %4887 = vmatpush1.bf16.msra.mxu0 %v4626
    %4888 = vmatprep.subr.bf16.mxu0 %v4631
    %4889 = vmatpush1.bf16.msra.mxu0 %v4630
    %4890 = vmatprep.subr.bf16.mxu0 %v4635
    %4891 = vmatpush1.bf16.msra.mxu0 %v4634
    %4892 = vmatprep.subr.bf16.mxu0 %v4639
    %4893 = vmatpush1.bf16.msra.mxu0 %v4638
    %4894 = vmatprep.subr.bf16.mxu0 %v4643
    %4895 = vmatpush1.bf16.msra.mxu0 %v4642
    %4896 = vmatprep.subr.bf16.mxu0 %v4647
    %4897 = vmatpush1.bf16.msra.mxu0 %v4646
    %4898 = vmatprep.subr.bf16.mxu0 0
    %4899 = vmatpush1.bf16.msra.mxu0 0
    %4900 = vmatprep.subr.bf16.mxu0 0
    %4901 = vmatpush1.bf16.msra.mxu0 0
    %4902 = vmatprep.subr.bf16.mxu0 0
    %4903 = vmatpush1.bf16.msra.mxu0 0
    %4904 = vmatprep.subr.bf16.mxu0 0
    %4905 = vmatpush1.bf16.msra.mxu0 0
    %4906 = vmatprep.subr.bf16.mxu0 0
    %4907 = vmatpush1.bf16.msra.mxu0 0
    %4908 = vmatprep.subr.bf16.mxu0 0
    %4909 = vmatpush1.bf16.msra.mxu0 0
    %4910 = vmatprep.subr.bf16.mxu0 0
    %4911 = vmatpush1.bf16.msra.mxu0 0
    %4912 = vmatprep.mubr.bf16.mxu0 %v4749
    %4913 = vmatmul.mubr.bf16.gmra.mrb[0].mxu0 %v4223
    %v4914 = vpop.f32.mrb[0].mxu0
    %v4915 = vadd.f32 %v4872, %v4914
    %v4916 = vpop.f32.mrb[0].mxu0
    %v4917 = vadd.f32 %v4874, %v4916
    %v4918 = vpop.f32.mrb[0].mxu0
    %v4919 = vadd.f32 %v4876, %v4918
    %v4920 = vpop.f32.mrb[0].mxu0
    %v4921 = vadd.f32 %v4878, %v4920
    %4922 = vdwg.mxu0
    %v4923 = vmax.f32 %v4829, 0.0
    %v4924 = vmax.f32 %v4831, 0.0
    %v4925 = vmax.f32 %v4915, 0.0
    %v4926 = vmax.f32 %v4917, 0.0
    %v4927 = vmax.f32 %v4833, 0.0
    %v4928 = vmax.f32 %v4835, 0.0
    %v4929 = vmax.f32 %v4919, 0.0
    %v4930 = vmax.f32 %v4921, 0.0
    %s4931 = scalar_lea.vmem [#allocation11], 1600
    %v4932 = vld [vmem:[%s4931] sm:$0xff]
    %v4933 = vld [vmem:[%s4931 + $0x8] sm:$0xff]
    %v4934 = vld [vmem:[%s4931 + $0x10] sm:$0xff]
    %v4935 = vld [vmem:[%s4931 + $0x18] sm:$0xff]
    %v4936 = vld [vmem:[%s4931 + $0x20] sm:$0xff]
    %v4937 = vld [vmem:[%s4931 + $0x28] sm:$0xff]
    %v4938 = vld [vmem:[%s4931 + $0x30] sm:$0xff]
    %v4939 = vld [vmem:[%s4931 + $0x38] sm:$0xff]
    %v4940 = vld [vmem:[%s4931 + $0x40] sm:$0xff]
    %v4941 = vld [vmem:[%s4931 + $0x48] sm:$0xff]
    %v4942 = vld [vmem:[%s4931 + $0x50] sm:$0xff]
    %v4943 = vld [vmem:[%s4931 + $0x58] sm:$0xff]
    %v4944 = vld [vmem:[%s4931 + $0x60] sm:$0xff]
    %v4945 = vld [vmem:[%s4931 + $0x68] sm:$0xff]
    %v4946 = vld [vmem:[%s4931 + $0x70] sm:$0xff]
    %v4947 = vld [vmem:[%s4931 + $0x78] sm:$0xff]
    %v4948 = vld [vmem:[%s4931 + $0x80] sm:$0xff]
    %v4949 = vld [vmem:[%s4931 + $0x88] sm:$0xff]
    %v4950 = vld [vmem:[%s4931 + $0x90] sm:$0xff]
    %v4951 = vld [vmem:[%s4931 + $0x98] sm:$0xff]
    %v4952 = vld [vmem:[%s4931 + $0xa0] sm:$0xff]
    %v4953 = vld [vmem:[%s4931 + $0xa8] sm:$0xff]
    %v4954 = vld [vmem:[%s4931 + $0xb0] sm:$0xff]
    %v4955 = vld [vmem:[%s4931 + $0xb8] sm:$0xff]
    %v4956 = vld [vmem:[%s4931 + $0xc0] sm:$0xff]
    %v4957 = vld [vmem:[%s4931 + $0xc8] sm:$0xff]
    %v4958 = vld [vmem:[%s4931 + $0xd0] sm:$0xff]
    %v4959 = vld [vmem:[%s4931 + $0xd8] sm:$0xff]
    %v4960 = vld [vmem:[%s4931 + $0xe0] sm:$0xff]
    %v4961 = vld [vmem:[%s4931 + $0xe8] sm:$0xff]
    %v4962 = vld [vmem:[%s4931 + $0xf0] sm:$0xff]
    %v4963 = vld [vmem:[%s4931 + $0xf8] sm:$0xff]
    %v4964 = vld [vmem:[%s4931 + $0x100] sm:$0xff]
    %v4965 = vld [vmem:[%s4931 + $0x108] sm:$0xff]
    %v4966 = vld [vmem:[%s4931 + $0x110] sm:$0xff]
    %v4967 = vld [vmem:[%s4931 + $0x118] sm:$0xff]
    %v4968 = vld [vmem:[%s4931 + $0x120] sm:$0xff]
    %v4969 = vld [vmem:[%s4931 + $0x128] sm:$0xff]
    %v4970 = vld [vmem:[%s4931 + $0x130] sm:$0xff]
    %v4971 = vld [vmem:[%s4931 + $0x138] sm:$0xff]
    %v4972 = vld [vmem:[%s4931 + $0x140] sm:$0xff]
    %v4973 = vld [vmem:[%s4931 + $0x148] sm:$0xff]
    %v4974 = vld [vmem:[%s4931 + $0x150] sm:$0xff]
    %v4975 = vld [vmem:[%s4931 + $0x158] sm:$0xff]
    %v4976 = vld [vmem:[%s4931 + $0x160] sm:$0xff]
    %v4977 = vld [vmem:[%s4931 + $0x168] sm:$0xff]
    %v4978 = vld [vmem:[%s4931 + $0x170] sm:$0xff]
    %v4979 = vld [vmem:[%s4931 + $0x178] sm:$0xff]
    %v4980 = vld [vmem:[%s4931 + $0x180] sm:$0xff]
    %v4981 = vld [vmem:[%s4931 + $0x188] sm:$0xff]
    %v4982 = vld [vmem:[%s4931 + $0x190] sm:$0xff]
    %v4983 = vld [vmem:[%s4931 + $0x198] sm:$0xff]
    %v4984 = vld [vmem:[%s4931 + $0x1a0] sm:$0xff]
    %v4985 = vld [vmem:[%s4931 + $0x1a8] sm:$0xff]
    %v4986 = vld [vmem:[%s4931 + $0x1b0] sm:$0xff]
    %v4987 = vld [vmem:[%s4931 + $0x1b8] sm:$0xff]
    %v4988 = vld [vmem:[%s4931 + $0x1c0] sm:$0xff]
    %v4989 = vld [vmem:[%s4931 + $0x1c8] sm:$0xff]
    %v4990 = vld [vmem:[%s4931 + $0x1d0] sm:$0xff]
    %v4991 = vld [vmem:[%s4931 + $0x1d8] sm:$0xff]
    %v4992 = vld [vmem:[%s4931 + $0x1e0] sm:$0xff]
    %v4993 = vld [vmem:[%s4931 + $0x1e8] sm:$0xff]
    %v4994 = vld [vmem:[%s4931 + $0x1f0] sm:$0xff]
    %v4995 = vld [vmem:[%s4931 + $0x1f8] sm:$0xff]
    %v4996 = vld [vmem:[%s4931 + $0x200] sm:$0xff]
    %v4997 = vld [vmem:[%s4931 + $0x208] sm:$0xff]
    %v4998 = vld [vmem:[%s4931 + $0x210] sm:$0xff]
    %v4999 = vld [vmem:[%s4931 + $0x218] sm:$0xff]
    %v5000 = vld [vmem:[%s4931 + $0x220] sm:$0xff]
    %v5001 = vld [vmem:[%s4931 + $0x228] sm:$0xff]
    %v5002 = vld [vmem:[%s4931 + $0x230] sm:$0xff]
    %v5003 = vld [vmem:[%s4931 + $0x238] sm:$0xff]
    %v5004 = vld [vmem:[%s4931 + $0x240] sm:$0xff]
    %v5005 = vld [vmem:[%s4931 + $0x248] sm:$0xff]
    %v5006 = vld [vmem:[%s4931 + $0x250] sm:$0xff]
    %v5007 = vld [vmem:[%s4931 + $0x258] sm:$0xff]
    %v5008 = vld [vmem:[%s4931 + $0x260] sm:$0xff]
    %v5009 = vld [vmem:[%s4931 + $0x268] sm:$0xff]
    %v5010 = vld [vmem:[%s4931 + $0x270] sm:$0xff]
    %v5011 = vld [vmem:[%s4931 + $0x278] sm:$0xff]
    %v5012 = vld [vmem:[%s4931 + $0x280] sm:$0xff]
    %v5013 = vld [vmem:[%s4931 + $0x288] sm:$0xff]
    %v5014 = vld [vmem:[%s4931 + $0x290] sm:$0xff]
    %v5015 = vld [vmem:[%s4931 + $0x298] sm:$0xff]
    %v5016 = vld [vmem:[%s4931 + $0x2a0] sm:$0xff]
    %v5017 = vld [vmem:[%s4931 + $0x2a8] sm:$0xff]
    %v5018 = vld [vmem:[%s4931 + $0x2b0] sm:$0xff]
    %v5019 = vld [vmem:[%s4931 + $0x2b8] sm:$0xff]
    %v5020 = vld [vmem:[%s4931 + $0x2c0] sm:$0xff]
    %v5021 = vld [vmem:[%s4931 + $0x2c8] sm:$0xff]
    %v5022 = vld [vmem:[%s4931 + $0x2d0] sm:$0xff]
    %v5023 = vld [vmem:[%s4931 + $0x2d8] sm:$0xff]
    %v5024 = vld [vmem:[%s4931 + $0x2e0] sm:$0xff]
    %v5025 = vld [vmem:[%s4931 + $0x2e8] sm:$0xff]
    %v5026 = vld [vmem:[%s4931 + $0x2f0] sm:$0xff]
    %v5027 = vld [vmem:[%s4931 + $0x2f8] sm:$0xff]
    %v5028 = vld [vmem:[%s4931 + $0x300] sm:$0xff]
    %v5029 = vld [vmem:[%s4931 + $0x308] sm:$0xff]
    %v5030 = vld [vmem:[%s4931 + $0x310] sm:$0xff]
    %v5031 = vld [vmem:[%s4931 + $0x318] sm:$0xff]
    %v5032 = vpack.c.bf16 %v4927, %v4923
    %v5033 = vpack.c.bf16 %v4928, %v4924
    %v5034 = vpack.c.bf16 %v4929, %v4925
    %v5035 = vpack.c.bf16 %v4930, %v4926
    %s5036 = scalar_lea.vmem [#allocation13], 32
    %v5037 = vld [vmem:[%s5036] ss:$8 sm:$0xf]
    %v5039 = vlaneseq
    %v5040 = vshrl.u32 %v5039, 7
    %v5041 = vsub.s32 0, %v5040
    %v5042 = vrot.slane %v5037, %v5041
    %v5043 = vlaneseq
    %v5044 = vshrl.u32 %v5043, 7
    %v5045 = vsub.s32 1, %v5044
    %v5046 = vrot.slane %v5037, %v5045
    %v5047 = vlaneseq
    %v5048 = vshrl.u32 %v5047, 7
    %v5049 = vsub.s32 2, %v5048
    %v5050 = vrot.slane %v5037, %v5049
    %v5051 = vlaneseq
    %v5052 = vshrl.u32 %v5051, 7
    %v5053 = vsub.s32 3, %v5052
    %v5054 = vrot.slane %v5037, %v5053
    %v5159 = vunpack.c.l.b16 %v4932
    %v5160 = vunpack.c.h.b16 %v4932
    %v5161 = vunpack.c.l.b16 %v4933
    %v5162 = vunpack.c.h.b16 %v4933
    %v5163 = vunpack.c.l.b16 %v4934
    %v5164 = vunpack.c.h.b16 %v4934
    %v5165 = vunpack.c.l.b16 %v4935
    %v5166 = vunpack.c.h.b16 %v4935
    %v5167 = vunpack.c.l.b16 %v4936
    %v5168 = vunpack.c.h.b16 %v4936
    %v5169 = vunpack.c.l.b16 %v4937
    %v5170 = vunpack.c.h.b16 %v4937
    %v5171 = vunpack.c.l.b16 %v4938
    %v5172 = vunpack.c.h.b16 %v4938
    %v5173 = vunpack.c.l.b16 %v4939
    %v5174 = vunpack.c.h.b16 %v4939
    %v5175 = vunpack.c.l.b16 %v4940
    %v5176 = vunpack.c.h.b16 %v4940
    %v5177 = vunpack.c.l.b16 %v4941
    %v5178 = vunpack.c.h.b16 %v4941
    %v5179 = vunpack.c.l.b16 %v4942
    %v5180 = vunpack.c.h.b16 %v4942
    %v5181 = vunpack.c.l.b16 %v4943
    %v5182 = vunpack.c.h.b16 %v4943
    %v5183 = vunpack.c.l.b16 %v4944
    %v5184 = vunpack.c.h.b16 %v4944
    %v5185 = vunpack.c.l.b16 %v4945
    %v5186 = vunpack.c.h.b16 %v4945
    %v5187 = vunpack.c.l.b16 %v4946
    %v5188 = vunpack.c.h.b16 %v4946
    %v5189 = vunpack.c.l.b16 %v4947
    %v5190 = vunpack.c.h.b16 %v4947
    %v5191 = vunpack.c.l.b16 %v4948
    %v5192 = vunpack.c.h.b16 %v4948
    %v5193 = vunpack.c.l.b16 %v4949
    %v5194 = vunpack.c.h.b16 %v4949
    %v5195 = vunpack.c.l.b16 %v4950
    %v5196 = vunpack.c.h.b16 %v4950
    %v5197 = vunpack.c.l.b16 %v4951
    %v5198 = vunpack.c.h.b16 %v4951
    %v5199 = vunpack.c.l.b16 %v4952
    %v5200 = vunpack.c.h.b16 %v4952
    %v5201 = vunpack.c.l.b16 %v4953
    %v5202 = vunpack.c.h.b16 %v4953
    %v5203 = vunpack.c.l.b16 %v4954
    %v5204 = vunpack.c.h.b16 %v4954
    %v5205 = vunpack.c.l.b16 %v4955
    %v5206 = vunpack.c.h.b16 %v4955
    %v5207 = vunpack.c.l.b16 %v4956
    %v5208 = vunpack.c.h.b16 %v4956
    %v5209 = vunpack.c.l.b16 %v4957
    %v5210 = vunpack.c.h.b16 %v4957
    %v5211 = vunpack.c.l.b16 %v4958
    %v5212 = vunpack.c.h.b16 %v4958
    %v5213 = vunpack.c.l.b16 %v4959
    %v5214 = vunpack.c.h.b16 %v4959
    %v5215 = vunpack.c.l.b16 %v4960
    %v5216 = vunpack.c.h.b16 %v4960
    %v5217 = vunpack.c.l.b16 %v4961
    %v5218 = vunpack.c.h.b16 %v4961
    %v5219 = vunpack.c.l.b16 %v4962
    %v5220 = vunpack.c.h.b16 %v4962
    %v5221 = vunpack.c.l.b16 %v4963
    %v5222 = vunpack.c.h.b16 %v4963
    %v5223 = vunpack.c.l.b16 %v4964
    %v5224 = vunpack.c.h.b16 %v4964
    %v5225 = vunpack.c.l.b16 %v4965
    %v5226 = vunpack.c.h.b16 %v4965
    %v5227 = vunpack.c.l.b16 %v4966
    %v5228 = vunpack.c.h.b16 %v4966
    %v5229 = vunpack.c.l.b16 %v4967
    %v5230 = vunpack.c.h.b16 %v4967
    %v5231 = vunpack.c.l.b16 %v4968
    %v5232 = vunpack.c.h.b16 %v4968
    %v5233 = vunpack.c.l.b16 %v4969
    %v5234 = vunpack.c.h.b16 %v4969
    %v5235 = vunpack.c.l.b16 %v4970
    %v5236 = vunpack.c.h.b16 %v4970
    %v5237 = vunpack.c.l.b16 %v4971
    %v5238 = vunpack.c.h.b16 %v4971
    %v5239 = vunpack.c.l.b16 %v4972
    %v5240 = vunpack.c.h.b16 %v4972
    %v5241 = vunpack.c.l.b16 %v4973
    %v5242 = vunpack.c.h.b16 %v4973
    %v5243 = vunpack.c.l.b16 %v4974
    %v5244 = vunpack.c.h.b16 %v4974
    %v5245 = vunpack.c.l.b16 %v4975
    %v5246 = vunpack.c.h.b16 %v4975
    %v5247 = vunpack.c.l.b16 %v4976
    %v5248 = vunpack.c.h.b16 %v4976
    %v5249 = vunpack.c.l.b16 %v4977
    %v5250 = vunpack.c.h.b16 %v4977
    %v5251 = vunpack.c.l.b16 %v4978
    %v5252 = vunpack.c.h.b16 %v4978
    %v5253 = vunpack.c.l.b16 %v4979
    %v5254 = vunpack.c.h.b16 %v4979
    %v5255 = vunpack.c.l.b16 %v4980
    %v5256 = vunpack.c.h.b16 %v4980
    %v5257 = vunpack.c.l.b16 %v4981
    %v5258 = vunpack.c.h.b16 %v4981
    %v5259 = vunpack.c.l.b16 %v4982
    %v5260 = vunpack.c.h.b16 %v4982
    %v5261 = vunpack.c.l.b16 %v4983
    %v5262 = vunpack.c.h.b16 %v4983
    %v5263 = vunpack.c.l.b16 %v4984
    %v5264 = vunpack.c.h.b16 %v4984
    %v5265 = vunpack.c.l.b16 %v4985
    %v5266 = vunpack.c.h.b16 %v4985
    %v5267 = vunpack.c.l.b16 %v4986
    %v5268 = vunpack.c.h.b16 %v4986
    %v5269 = vunpack.c.l.b16 %v4987
    %v5270 = vunpack.c.h.b16 %v4987
    %v5271 = vunpack.c.l.b16 %v4988
    %v5272 = vunpack.c.h.b16 %v4988
    %v5273 = vunpack.c.l.b16 %v4989
    %v5274 = vunpack.c.h.b16 %v4989
    %v5275 = vunpack.c.l.b16 %v4990
    %v5276 = vunpack.c.h.b16 %v4990
    %v5277 = vunpack.c.l.b16 %v4991
    %v5278 = vunpack.c.h.b16 %v4991
    %v5279 = vunpack.c.l.b16 %v4992
    %v5280 = vunpack.c.h.b16 %v4992
    %v5281 = vunpack.c.l.b16 %v4993
    %v5282 = vunpack.c.h.b16 %v4993
    %v5283 = vunpack.c.l.b16 %v4994
    %v5284 = vunpack.c.h.b16 %v4994
    %v5285 = vunpack.c.l.b16 %v4995
    %v5286 = vunpack.c.h.b16 %v4995
    %v5287 = vunpack.c.l.b16 %v4996
    %v5288 = vunpack.c.h.b16 %v4996
    %v5289 = vunpack.c.l.b16 %v4997
    %v5290 = vunpack.c.h.b16 %v4997
    %v5291 = vunpack.c.l.b16 %v4998
    %v5292 = vunpack.c.h.b16 %v4998
    %v5293 = vunpack.c.l.b16 %v4999
    %v5294 = vunpack.c.h.b16 %v4999
    %v5295 = vunpack.c.l.b16 %v5000
    %v5296 = vunpack.c.h.b16 %v5000
    %v5297 = vunpack.c.l.b16 %v5001
    %v5298 = vunpack.c.h.b16 %v5001
    %v5299 = vunpack.c.l.b16 %v5002
    %v5300 = vunpack.c.h.b16 %v5002
    %v5301 = vunpack.c.l.b16 %v5003
    %v5302 = vunpack.c.h.b16 %v5003
    %v5303 = vunpack.c.l.b16 %v5004
    %v5304 = vunpack.c.h.b16 %v5004
    %v5305 = vunpack.c.l.b16 %v5005
    %v5306 = vunpack.c.h.b16 %v5005
    %v5307 = vunpack.c.l.b16 %v5006
    %v5308 = vunpack.c.h.b16 %v5006
    %v5309 = vunpack.c.l.b16 %v5007
    %v5310 = vunpack.c.h.b16 %v5007
    %v5311 = vunpack.c.l.b16 %v5008
    %v5312 = vunpack.c.h.b16 %v5008
    %v5313 = vunpack.c.l.b16 %v5009
    %v5314 = vunpack.c.h.b16 %v5009
    %v5315 = vunpack.c.l.b16 %v5010
    %v5316 = vunpack.c.h.b16 %v5010
    %v5317 = vunpack.c.l.b16 %v5011
    %v5318 = vunpack.c.h.b16 %v5011
    %v5319 = vunpack.c.l.b16 %v5012
    %v5320 = vunpack.c.h.b16 %v5012
    %v5321 = vunpack.c.l.b16 %v5013
    %v5322 = vunpack.c.h.b16 %v5013
    %v5323 = vunpack.c.l.b16 %v5014
    %v5324 = vunpack.c.h.b16 %v5014
    %v5325 = vunpack.c.l.b16 %v5015
    %v5326 = vunpack.c.h.b16 %v5015
    %v5327 = vunpack.c.l.b16 %v5016
    %v5328 = vunpack.c.h.b16 %v5016
    %v5329 = vunpack.c.l.b16 %v5017
    %v5330 = vunpack.c.h.b16 %v5017
    %v5331 = vunpack.c.l.b16 %v5018
    %v5332 = vunpack.c.h.b16 %v5018
    %v5333 = vunpack.c.l.b16 %v5019
    %v5334 = vunpack.c.h.b16 %v5019
    %v5335 = vunpack.c.l.b16 %v5020
    %v5336 = vunpack.c.h.b16 %v5020
    %v5337 = vunpack.c.l.b16 %v5021
    %v5338 = vunpack.c.h.b16 %v5021
    %v5339 = vunpack.c.l.b16 %v5022
    %v5340 = vunpack.c.h.b16 %v5022
    %v5341 = vunpack.c.l.b16 %v5023
    %v5342 = vunpack.c.h.b16 %v5023
    %v5343 = vunpack.c.l.b16 %v5024
    %v5344 = vunpack.c.h.b16 %v5024
    %v5345 = vunpack.c.l.b16 %v5025
    %v5346 = vunpack.c.h.b16 %v5025
    %v5347 = vunpack.c.l.b16 %v5026
    %v5348 = vunpack.c.h.b16 %v5026
    %v5349 = vunpack.c.l.b16 %v5027
    %v5350 = vunpack.c.h.b16 %v5027
    %v5351 = vunpack.c.l.b16 %v5028
    %v5352 = vunpack.c.h.b16 %v5028
    %v5353 = vunpack.c.l.b16 %v5029
    %v5354 = vunpack.c.h.b16 %v5029
    %v5355 = vunpack.c.l.b16 %v5030
    %v5356 = vunpack.c.h.b16 %v5030
    %v5357 = vunpack.c.l.b16 %v5031
    %v5358 = vunpack.c.h.b16 %v5031
    %v5359 = vpack.c.b16 %v5163, %v5159
    %v5360 = vpack.c.b16 %v5164, %v5160
    %v5361 = vpack.c.b16 %v5165, %v5161
    %v5362 = vpack.c.b16 %v5166, %v5162
    %v5363 = vpack.c.b16 %v5171, %v5167
    %v5364 = vpack.c.b16 %v5172, %v5168
    %v5365 = vpack.c.b16 %v5173, %v5169
    %v5366 = vpack.c.b16 %v5174, %v5170
    %v5367 = vpack.c.b16 %v5179, %v5175
    %v5368 = vpack.c.b16 %v5180, %v5176
    %v5369 = vpack.c.b16 %v5181, %v5177
    %v5370 = vpack.c.b16 %v5182, %v5178
    %v5371 = vpack.c.b16 %v5187, %v5183
    %v5372 = vpack.c.b16 %v5188, %v5184
    %v5373 = vpack.c.b16 %v5189, %v5185
    %v5374 = vpack.c.b16 %v5190, %v5186
    %v5375 = vpack.c.b16 %v5195, %v5191
    %v5376 = vpack.c.b16 %v5196, %v5192
    %v5377 = vpack.c.b16 %v5197, %v5193
    %v5378 = vpack.c.b16 %v5198, %v5194
    %v5379 = vpack.c.b16 %v5203, %v5199
    %v5380 = vpack.c.b16 %v5204, %v5200
    %v5381 = vpack.c.b16 %v5205, %v5201
    %v5382 = vpack.c.b16 %v5206, %v5202
    %v5383 = vpack.c.b16 %v5211, %v5207
    %v5384 = vpack.c.b16 %v5212, %v5208
    %v5385 = vpack.c.b16 %v5213, %v5209
    %v5386 = vpack.c.b16 %v5214, %v5210
    %v5387 = vpack.c.b16 %v5219, %v5215
    %v5388 = vpack.c.b16 %v5220, %v5216
    %v5389 = vpack.c.b16 %v5221, %v5217
    %v5390 = vpack.c.b16 %v5222, %v5218
    %v5391 = vpack.c.b16 %v5227, %v5223
    %v5392 = vpack.c.b16 %v5228, %v5224
    %v5393 = vpack.c.b16 %v5229, %v5225
    %v5394 = vpack.c.b16 %v5230, %v5226
    %v5395 = vpack.c.b16 %v5235, %v5231
    %v5396 = vpack.c.b16 %v5236, %v5232
    %v5397 = vpack.c.b16 %v5237, %v5233
    %v5398 = vpack.c.b16 %v5238, %v5234
    %v5399 = vpack.c.b16 %v5243, %v5239
    %v5400 = vpack.c.b16 %v5244, %v5240
    %v5401 = vpack.c.b16 %v5245, %v5241
    %v5402 = vpack.c.b16 %v5246, %v5242
    %v5403 = vpack.c.b16 %v5251, %v5247
    %v5404 = vpack.c.b16 %v5252, %v5248
    %v5405 = vpack.c.b16 %v5253, %v5249
    %v5406 = vpack.c.b16 %v5254, %v5250
    %v5407 = vpack.c.b16 %v5259, %v5255
    %v5408 = vpack.c.b16 %v5260, %v5256
    %v5409 = vpack.c.b16 %v5261, %v5257
    %v5410 = vpack.c.b16 %v5262, %v5258
    %v5411 = vpack.c.b16 %v5267, %v5263
    %v5412 = vpack.c.b16 %v5268, %v5264
    %v5413 = vpack.c.b16 %v5269, %v5265
    %v5414 = vpack.c.b16 %v5270, %v5266
    %v5415 = vpack.c.b16 %v5275, %v5271
    %v5416 = vpack.c.b16 %v5276, %v5272
    %v5417 = vpack.c.b16 %v5277, %v5273
    %v5418 = vpack.c.b16 %v5278, %v5274
    %v5419 = vpack.c.b16 %v5283, %v5279
    %v5420 = vpack.c.b16 %v5284, %v5280
    %v5421 = vpack.c.b16 %v5285, %v5281
    %v5422 = vpack.c.b16 %v5286, %v5282
    %v5423 = vpack.c.b16 %v5291, %v5287
    %v5424 = vpack.c.b16 %v5292, %v5288
    %v5425 = vpack.c.b16 %v5293, %v5289
    %v5426 = vpack.c.b16 %v5294, %v5290
    %v5427 = vpack.c.b16 %v5299, %v5295
    %v5428 = vpack.c.b16 %v5300, %v5296
    %v5429 = vpack.c.b16 %v5301, %v5297
    %v5430 = vpack.c.b16 %v5302, %v5298
    %v5431 = vpack.c.b16 %v5307, %v5303
    %v5432 = vpack.c.b16 %v5308, %v5304
    %v5433 = vpack.c.b16 %v5309, %v5305
    %v5434 = vpack.c.b16 %v5310, %v5306
    %v5435 = vpack.c.b16 %v5315, %v5311
    %v5436 = vpack.c.b16 %v5316, %v5312
    %v5437 = vpack.c.b16 %v5317, %v5313
    %v5438 = vpack.c.b16 %v5318, %v5314
    %v5439 = vpack.c.b16 %v5323, %v5319
    %v5440 = vpack.c.b16 %v5324, %v5320
    %v5441 = vpack.c.b16 %v5325, %v5321
    %v5442 = vpack.c.b16 %v5326, %v5322
    %v5443 = vpack.c.b16 %v5331, %v5327
    %v5444 = vpack.c.b16 %v5332, %v5328
    %v5445 = vpack.c.b16 %v5333, %v5329
    %v5446 = vpack.c.b16 %v5334, %v5330
    %v5447 = vpack.c.b16 %v5339, %v5335
    %v5448 = vpack.c.b16 %v5340, %v5336
    %v5449 = vpack.c.b16 %v5341, %v5337
    %v5450 = vpack.c.b16 %v5342, %v5338
    %v5451 = vpack.c.b16 %v5347, %v5343
    %v5452 = vpack.c.b16 %v5348, %v5344
    %v5453 = vpack.c.b16 %v5349, %v5345
    %v5454 = vpack.c.b16 %v5350, %v5346
    %v5455 = vpack.c.b16 %v5355, %v5351
    %v5456 = vpack.c.b16 %v5356, %v5352
    %v5457 = vpack.c.b16 %v5357, %v5353
    %v5458 = vpack.c.b16 %v5358, %v5354
    %v5560 = vsel %vm935, %v5035, 0
    %5562 = vmatprep.subr.bf16.mxu0 %v5360
    %5563 = vmatpush1.bf16.msra.mxu0 %v5359
    %5564 = vmatprep.subr.bf16.mxu0 %v5364
    %5565 = vmatpush1.bf16.msra.mxu0 %v5363
    %5566 = vmatprep.subr.bf16.mxu0 %v5368
    %5567 = vmatpush1.bf16.msra.mxu0 %v5367
    %5568 = vmatprep.subr.bf16.mxu0 %v5372
    %5569 = vmatpush1.bf16.msra.mxu0 %v5371
    %5570 = vmatprep.subr.bf16.mxu0 %v5376
    %5571 = vmatpush1.bf16.msra.mxu0 %v5375
    %5572 = vmatprep.subr.bf16.mxu0 %v5380
    %5573 = vmatpush1.bf16.msra.mxu0 %v5379
    %5574 = vmatprep.subr.bf16.mxu0 %v5384
    %5575 = vmatpush1.bf16.msra.mxu0 %v5383
    %5576 = vmatprep.subr.bf16.mxu0 %v5388
    %5577 = vmatpush1.bf16.msra.mxu0 %v5387
    %5578 = vmatprep.subr.bf16.mxu0 %v5392
    %5579 = vmatpush1.bf16.msra.mxu0 %v5391
    %5580 = vmatprep.subr.bf16.mxu0 %v5396
    %5581 = vmatpush1.bf16.msra.mxu0 %v5395
    %5582 = vmatprep.subr.bf16.mxu0 %v5400
    %5583 = vmatpush1.bf16.msra.mxu0 %v5399
    %5584 = vmatprep.subr.bf16.mxu0 %v5404
    %5585 = vmatpush1.bf16.msra.mxu0 %v5403
    %5586 = vmatprep.subr.bf16.mxu0 %v5408
    %5587 = vmatpush1.bf16.msra.mxu0 %v5407
    %5588 = vmatprep.subr.bf16.mxu0 %v5412
    %5589 = vmatpush1.bf16.msra.mxu0 %v5411
    %5590 = vmatprep.subr.bf16.mxu0 %v5416
    %5591 = vmatpush1.bf16.msra.mxu0 %v5415
    %5592 = vmatprep.subr.bf16.mxu0 %v5420
    %5593 = vmatpush1.bf16.msra.mxu0 %v5419
    %5594 = vmatprep.mubr.bf16.mxu0 %v5033
    %5595 = vmatmul.mubr.bf16.gmra.mrb[0].mxu0 %v5032
    %v5596 = vpop.f32.mrb[0].mxu0
    %v5597 = vadd.f32 %v5042, %v5596
    %v5598 = vpop.f32.mrb[0].mxu0
    %v5599 = vadd.f32 %v5046, %v5598
    %v5600 = vpop.f32.mrb[0].mxu0
    %v5601 = vadd.f32 %v5042, %v5600
    %v5602 = vpop.f32.mrb[0].mxu0
    %v5603 = vadd.f32 %v5046, %v5602
    %5604 = vdwg.mxu0
    %5605 = vmatprep.subr.bf16.mxu0 %v5424
    %5606 = vmatpush1.bf16.msra.mxu0 %v5423
    %5607 = vmatprep.subr.bf16.mxu0 %v5428
    %5608 = vmatpush1.bf16.msra.mxu0 %v5427
    %5609 = vmatprep.subr.bf16.mxu0 %v5432
    %5610 = vmatpush1.bf16.msra.mxu0 %v5431
    %5611 = vmatprep.subr.bf16.mxu0 %v5436
    %5612 = vmatpush1.bf16.msra.mxu0 %v5435
    %5613 = vmatprep.subr.bf16.mxu0 %v5440
    %5614 = vmatpush1.bf16.msra.mxu0 %v5439
    %5615 = vmatprep.subr.bf16.mxu0 %v5444
    %5616 = vmatpush1.bf16.msra.mxu0 %v5443
    %5617 = vmatprep.subr.bf16.mxu0 %v5448
    %5618 = vmatpush1.bf16.msra.mxu0 %v5447
    %5619 = vmatprep.subr.bf16.mxu0 %v5452
    %5620 = vmatpush1.bf16.msra.mxu0 %v5451
    %5621 = vmatprep.subr.bf16.mxu0 %v5456
    %5622 = vmatpush1.bf16.msra.mxu0 %v5455
    %5623 = vmatprep.subr.bf16.mxu0 0
    %5624 = vmatpush1.bf16.msra.mxu0 0
    %5625 = vmatprep.subr.bf16.mxu0 0
    %5626 = vmatpush1.bf16.msra.mxu0 0
    %5627 = vmatprep.subr.bf16.mxu0 0
    %5628 = vmatpush1.bf16.msra.mxu0 0
    %5629 = vmatprep.subr.bf16.mxu0 0
    %5630 = vmatpush1.bf16.msra.mxu0 0
    %5631 = vmatprep.subr.bf16.mxu0 0
    %5632 = vmatpush1.bf16.msra.mxu0 0
    %5633 = vmatprep.subr.bf16.mxu0 0
    %5634 = vmatpush1.bf16.msra.mxu0 0
    %5635 = vmatprep.subr.bf16.mxu0 0
    %5636 = vmatpush1.bf16.msra.mxu0 0
    %5637 = vmatprep.mubr.bf16.mxu0 %v5560
    %5638 = vmatmul.mubr.bf16.gmra.mrb[0].mxu0 %v5034
    %v5639 = vpop.f32.mrb[0].mxu0
    %v5640 = vadd.f32 %v5597, %v5639
    %v5641 = vpop.f32.mrb[0].mxu0
    %v5642 = vadd.f32 %v5599, %v5641
    %v5643 = vpop.f32.mrb[0].mxu0
    %v5644 = vadd.f32 %v5601, %v5643
    %v5645 = vpop.f32.mrb[0].mxu0
    %v5646 = vadd.f32 %v5603, %v5645
    %5647 = vdwg.mxu0
    %5648 = vmatprep.subr.bf16.mxu0 %v5362
    %5649 = vmatpush1.bf16.msra.mxu0 %v5361
    %5650 = vmatprep.subr.bf16.mxu0 %v5366
    %5651 = vmatpush1.bf16.msra.mxu0 %v5365
    %5652 = vmatprep.subr.bf16.mxu0 %v5370
    %5653 = vmatpush1.bf16.msra.mxu0 %v5369
    %5654 = vmatprep.subr.bf16.mxu0 %v5374
    %5655 = vmatpush1.bf16.msra.mxu0 %v5373
    %5656 = vmatprep.subr.bf16.mxu0 %v5378
    %5657 = vmatpush1.bf16.msra.mxu0 %v5377
    %5658 = vmatprep.subr.bf16.mxu0 %v5382
    %5659 = vmatpush1.bf16.msra.mxu0 %v5381
    %5660 = vmatprep.subr.bf16.mxu0 %v5386
    %5661 = vmatpush1.bf16.msra.mxu0 %v5385
    %5662 = vmatprep.subr.bf16.mxu0 %v5390
    %5663 = vmatpush1.bf16.msra.mxu0 %v5389
    %5664 = vmatprep.subr.bf16.mxu0 %v5394
    %5665 = vmatpush1.bf16.msra.mxu0 %v5393
    %5666 = vmatprep.subr.bf16.mxu0 %v5398
    %5667 = vmatpush1.bf16.msra.mxu0 %v5397
    %5668 = vmatprep.subr.bf16.mxu0 %v5402
    %5669 = vmatpush1.bf16.msra.mxu0 %v5401
    %5670 = vmatprep.subr.bf16.mxu0 %v5406
    %5671 = vmatpush1.bf16.msra.mxu0 %v5405
    %5672 = vmatprep.subr.bf16.mxu0 %v5410
    %5673 = vmatpush1.bf16.msra.mxu0 %v5409
    %5674 = vmatprep.subr.bf16.mxu0 %v5414
    %5675 = vmatpush1.bf16.msra.mxu0 %v5413
    %5676 = vmatprep.subr.bf16.mxu0 %v5418
    %5677 = vmatpush1.bf16.msra.mxu0 %v5417
    %5678 = vmatprep.subr.bf16.mxu0 %v5422
    %5679 = vmatpush1.bf16.msra.mxu0 %v5421
    %5680 = vmatprep.mubr.bf16.mxu0 %v5033
    %5681 = vmatmul.mubr.bf16.gmra.mrb[0].mxu0 %v5032
    %v5682 = vpop.f32.mrb[0].mxu0
    %v5683 = vadd.f32 %v5050, %v5682
    %v5684 = vpop.f32.mrb[0].mxu0
    %v5685 = vadd.f32 %v5054, %v5684
    %v5686 = vpop.f32.mrb[0].mxu0
    %v5687 = vadd.f32 %v5050, %v5686
    %v5688 = vpop.f32.mrb[0].mxu0
    %v5689 = vadd.f32 %v5054, %v5688
    %5690 = vdwg.mxu0
    %5691 = vmatprep.subr.bf16.mxu0 %v5426
    %5692 = vmatpush1.bf16.msra.mxu0 %v5425
    %5693 = vmatprep.subr.bf16.mxu0 %v5430
    %5694 = vmatpush1.bf16.msra.mxu0 %v5429
    %5695 = vmatprep.subr.bf16.mxu0 %v5434
    %5696 = vmatpush1.bf16.msra.mxu0 %v5433
    %5697 = vmatprep.subr.bf16.mxu0 %v5438
    %5698 = vmatpush1.bf16.msra.mxu0 %v5437
    %5699 = vmatprep.subr.bf16.mxu0 %v5442
    %5700 = vmatpush1.bf16.msra.mxu0 %v5441
    %5701 = vmatprep.subr.bf16.mxu0 %v5446
    %5702 = vmatpush1.bf16.msra.mxu0 %v5445
    %5703 = vmatprep.subr.bf16.mxu0 %v5450
    %5704 = vmatpush1.bf16.msra.mxu0 %v5449
    %5705 = vmatprep.subr.bf16.mxu0 %v5454
    %5706 = vmatpush1.bf16.msra.mxu0 %v5453
    %5707 = vmatprep.subr.bf16.mxu0 %v5458
    %5708 = vmatpush1.bf16.msra.mxu0 %v5457
    %5709 = vmatprep.subr.bf16.mxu0 0
    %5710 = vmatpush1.bf16.msra.mxu0 0
    %5711 = vmatprep.subr.bf16.mxu0 0
    %5712 = vmatpush1.bf16.msra.mxu0 0
    %5713 = vmatprep.subr.bf16.mxu0 0
    %5714 = vmatpush1.bf16.msra.mxu0 0
    %5715 = vmatprep.subr.bf16.mxu0 0
    %5716 = vmatpush1.bf16.msra.mxu0 0
    %5717 = vmatprep.subr.bf16.mxu0 0
    %5718 = vmatpush1.bf16.msra.mxu0 0
    %5719 = vmatprep.subr.bf16.mxu0 0
    %5720 = vmatpush1.bf16.msra.mxu0 0
    %5721 = vmatprep.subr.bf16.mxu0 0
    %5722 = vmatpush1.bf16.msra.mxu0 0
    %5723 = vmatprep.mubr.bf16.mxu0 %v5560
    %5724 = vmatmul.mubr.bf16.gmra.mrb[0].mxu0 %v5034
    %v5725 = vpop.f32.mrb[0].mxu0
    %v5726 = vadd.f32 %v5683, %v5725
    %v5727 = vpop.f32.mrb[0].mxu0
    %v5728 = vadd.f32 %v5685, %v5727
    %v5729 = vpop.f32.mrb[0].mxu0
    %v5730 = vadd.f32 %v5687, %v5729
    %v5731 = vpop.f32.mrb[0].mxu0
    %v5732 = vadd.f32 %v5689, %v5731
    %5733 = vdwg.mxu0
    %v5734 = vmax.f32 %v5640, 0.0
    %v5735 = vmax.f32 %v5642, 0.0
    %v5736 = vmax.f32 %v5726, 0.0
    %v5737 = vmax.f32 %v5728, 0.0
    %v5738 = vmax.f32 %v5644, 0.0
    %v5739 = vmax.f32 %v5646, 0.0
    %v5740 = vmax.f32 %v5730, 0.0
    %v5741 = vmax.f32 %v5732, 0.0
    %v5742 = vld [vmem:[%s8] sm:$0xf]
    %v5743 = vld [vmem:[%s8 + $0x4] sm:$0xf]
    %v5744 = vld [vmem:[%s8 + $0x8] sm:$0xf]
    %v5745 = vld [vmem:[%s8 + $0xc] sm:$0xf]
    %v5746 = vld [vmem:[%s8 + $0x10] sm:$0xf]
    %v5747 = vld [vmem:[%s8 + $0x14] sm:$0xf]
    %v5748 = vld [vmem:[%s8 + $0x18] sm:$0xf]
    %v5749 = vld [vmem:[%s8 + $0x1c] sm:$0xf]
    %v5750 = vld [vmem:[%s8 + $0x20] sm:$0xf]
    %v5751 = vld [vmem:[%s8 + $0x24] sm:$0xf]
    %v5752 = vld [vmem:[%s8 + $0x28] sm:$0xf]
    %v5753 = vld [vmem:[%s8 + $0x2c] sm:$0xf]
    %v5754 = vld [vmem:[%s8 + $0x30] sm:$0xf]
    %v5755 = vld [vmem:[%s8 + $0x34] sm:$0xf]
    %v5756 = vld [vmem:[%s8 + $0x38] sm:$0xf]
    %v5757 = vld [vmem:[%s8 + $0x3c] sm:$0xf]
    %v5758 = vld [vmem:[%s8 + $0x40] sm:$0xf]
    %v5759 = vld [vmem:[%s8 + $0x44] sm:$0xf]
    %v5760 = vld [vmem:[%s8 + $0x48] sm:$0xf]
    %v5761 = vld [vmem:[%s8 + $0x4c] sm:$0xf]
    %v5762 = vld [vmem:[%s8 + $0x50] sm:$0xf]
    %v5763 = vld [vmem:[%s8 + $0x54] sm:$0xf]
    %v5764 = vld [vmem:[%s8 + $0x58] sm:$0xf]
    %v5765 = vld [vmem:[%s8 + $0x5c] sm:$0xf]
    %v5766 = vld [vmem:[%s8 + $0x60] sm:$0xf]
    %v5767 = vld [vmem:[%s8 + $0x64] sm:$0xf]
    %v5768 = vld [vmem:[%s8 + $0x68] sm:$0xf]
    %v5769 = vld [vmem:[%s8 + $0x6c] sm:$0xf]
    %v5770 = vld [vmem:[%s8 + $0x70] sm:$0xf]
    %v5771 = vld [vmem:[%s8 + $0x74] sm:$0xf]
    %v5772 = vld [vmem:[%s8 + $0x78] sm:$0xf]
    %v5773 = vld [vmem:[%s8 + $0x7c] sm:$0xf]
    %v5774 = vld [vmem:[%s8 + $0x80] sm:$0xf]
    %v5775 = vld [vmem:[%s8 + $0x84] sm:$0xf]
    %v5776 = vld [vmem:[%s8 + $0x88] sm:$0xf]
    %v5777 = vld [vmem:[%s8 + $0x8c] sm:$0xf]
    %v5778 = vld [vmem:[%s8 + $0x90] sm:$0xf]
    %v5779 = vld [vmem:[%s8 + $0x94] sm:$0xf]
    %v5780 = vld [vmem:[%s8 + $0x98] sm:$0xf]
    %v5781 = vld [vmem:[%s8 + $0x9c] sm:$0xf]
    %v5782 = vld [vmem:[%s8 + $0xa0] sm:$0xf]
    %v5783 = vld [vmem:[%s8 + $0xa4] sm:$0xf]
    %v5784 = vld [vmem:[%s8 + $0xa8] sm:$0xf]
    %v5785 = vld [vmem:[%s8 + $0xac] sm:$0xf]
    %v5786 = vld [vmem:[%s8 + $0xb0] sm:$0xf]
    %v5787 = vld [vmem:[%s8 + $0xb4] sm:$0xf]
    %v5788 = vld [vmem:[%s8 + $0xb8] sm:$0xf]
    %v5789 = vld [vmem:[%s8 + $0xbc] sm:$0xf]
    %v5790 = vld [vmem:[%s8 + $0xc0] sm:$0xf]
    %v5791 = vld [vmem:[%s8 + $0xc4] sm:$0xf]
    %v5792 = vpack.c.bf16 %v5738, %v5734
    %v5793 = vpack.c.bf16 %v5739, %v5735
    %v5794 = vpack.c.bf16 %v5740, %v5736
    %v5795 = vpack.c.bf16 %v5741, %v5737
    %v5796 = vld [vmem:[#allocation13 + $0x21] ss:$0 sm:$0xff]
    %v5847 = vunpack.c.l.b16 %v5742
    %v5848 = vunpack.c.l.b16 %v5743
    %v5849 = vunpack.c.l.b16 %v5744
    %v5850 = vunpack.c.l.b16 %v5745
    %v5851 = vunpack.c.l.b16 %v5746
    %v5852 = vunpack.c.l.b16 %v5747
    %v5853 = vunpack.c.l.b16 %v5748
    %v5854 = vunpack.c.l.b16 %v5749
    %v5855 = vunpack.c.l.b16 %v5750
    %v5856 = vunpack.c.l.b16 %v5751
    %v5857 = vunpack.c.l.b16 %v5752
    %v5858 = vunpack.c.l.b16 %v5753
    %v5859 = vunpack.c.l.b16 %v5754
    %v5860 = vunpack.c.l.b16 %v5755
    %v5861 = vunpack.c.l.b16 %v5756
    %v5862 = vunpack.c.l.b16 %v5757
    %v5863 = vunpack.c.l.b16 %v5758
    %v5864 = vunpack.c.l.b16 %v5759
    %v5865 = vunpack.c.l.b16 %v5760
    %v5866 = vunpack.c.l.b16 %v5761
    %v5867 = vunpack.c.l.b16 %v5762
    %v5868 = vunpack.c.l.b16 %v5763
    %v5869 = vunpack.c.l.b16 %v5764
    %v5870 = vunpack.c.l.b16 %v5765
    %v5871 = vunpack.c.l.b16 %v5766
    %v5872 = vunpack.c.l.b16 %v5767
    %v5873 = vunpack.c.l.b16 %v5768
    %v5874 = vunpack.c.l.b16 %v5769
    %v5875 = vunpack.c.l.b16 %v5770
    %v5876 = vunpack.c.l.b16 %v5771
    %v5877 = vunpack.c.l.b16 %v5772
    %v5878 = vunpack.c.l.b16 %v5773
    %v5879 = vunpack.c.l.b16 %v5774
    %v5880 = vunpack.c.l.b16 %v5775
    %v5881 = vunpack.c.l.b16 %v5776
    %v5882 = vunpack.c.l.b16 %v5777
    %v5883 = vunpack.c.l.b16 %v5778
    %v5884 = vunpack.c.l.b16 %v5779
    %v5885 = vunpack.c.l.b16 %v5780
    %v5886 = vunpack.c.l.b16 %v5781
    %v5887 = vunpack.c.l.b16 %v5782
    %v5888 = vunpack.c.l.b16 %v5783
    %v5889 = vunpack.c.l.b16 %v5784
    %v5890 = vunpack.c.l.b16 %v5785
    %v5891 = vunpack.c.l.b16 %v5786
    %v5892 = vunpack.c.l.b16 %v5787
    %v5893 = vunpack.c.l.b16 %v5788
    %v5894 = vunpack.c.l.b16 %v5789
    %v5895 = vunpack.c.l.b16 %v5790
    %v5896 = vunpack.c.l.b16 %v5791
    %v5897 = vpack.c.b16 %v5848, %v5847
    %v5898 = vpack.c.b16 %v5850, %v5849
    %v5899 = vpack.c.b16 %v5852, %v5851
    %v5900 = vpack.c.b16 %v5854, %v5853
    %v5901 = vpack.c.b16 %v5856, %v5855
    %v5902 = vpack.c.b16 %v5858, %v5857
    %v5903 = vpack.c.b16 %v5860, %v5859
    %v5904 = vpack.c.b16 %v5862, %v5861
    %v5905 = vpack.c.b16 %v5864, %v5863
    %v5906 = vpack.c.b16 %v5866, %v5865
    %v5907 = vpack.c.b16 %v5868, %v5867
    %v5908 = vpack.c.b16 %v5870, %v5869
    %v5909 = vpack.c.b16 %v5872, %v5871
    %v5910 = vpack.c.b16 %v5874, %v5873
    %v5911 = vpack.c.b16 %v5876, %v5875
    %v5912 = vpack.c.b16 %v5878, %v5877
    %v5913 = vpack.c.b16 %v5880, %v5879
    %v5914 = vpack.c.b16 %v5882, %v5881
    %v5915 = vpack.c.b16 %v5884, %v5883
    %v5916 = vpack.c.b16 %v5886, %v5885
    %v5917 = vpack.c.b16 %v5888, %v5887
    %v5918 = vpack.c.b16 %v5890, %v5889
    %v5919 = vpack.c.b16 %v5892, %v5891
    %v5920 = vpack.c.b16 %v5894, %v5893
    %v5921 = vpack.c.b16 %v5896, %v5895
    %v5948 = vsel %vm935, %v5795, 0
    %5950 = vmatprep.subr.bf16.mxu0 0
    %5951 = vmatpush1.bf16.msra.mxu0 %v5897
    %5952 = vmatprep.subr.bf16.mxu0 0
    %5953 = vmatpush1.bf16.msra.mxu0 %v5898
    %5954 = vmatprep.subr.bf16.mxu0 0
    %5955 = vmatpush1.bf16.msra.mxu0 %v5899
    %5956 = vmatprep.subr.bf16.mxu0 0
    %5957 = vmatpush1.bf16.msra.mxu0 %v5900
    %5958 = vmatprep.subr.bf16.mxu0 0
    %5959 = vmatpush1.bf16.msra.mxu0 %v5901
    %5960 = vmatprep.subr.bf16.mxu0 0
    %5961 = vmatpush1.bf16.msra.mxu0 %v5902
    %5962 = vmatprep.subr.bf16.mxu0 0
    %5963 = vmatpush1.bf16.msra.mxu0 %v5903
    %5964 = vmatprep.subr.bf16.mxu0 0
    %5965 = vmatpush1.bf16.msra.mxu0 %v5904
    %5966 = vmatprep.subr.bf16.mxu0 0
    %5967 = vmatpush1.bf16.msra.mxu0 %v5905
    %5968 = vmatprep.subr.bf16.mxu0 0
    %5969 = vmatpush1.bf16.msra.mxu0 %v5906
    %5970 = vmatprep.subr.bf16.mxu0 0
    %5971 = vmatpush1.bf16.msra.mxu0 %v5907
    %5972 = vmatprep.subr.bf16.mxu0 0
    %5973 = vmatpush1.bf16.msra.mxu0 %v5908
    %5974 = vmatprep.subr.bf16.mxu0 0
    %5975 = vmatpush1.bf16.msra.mxu0 %v5909
    %5976 = vmatprep.subr.bf16.mxu0 0
    %5977 = vmatpush1.bf16.msra.mxu0 %v5910
    %5978 = vmatprep.subr.bf16.mxu0 0
    %5979 = vmatpush1.bf16.msra.mxu0 %v5911
    %5980 = vmatprep.subr.bf16.mxu0 0
    %5981 = vmatpush1.bf16.msra.mxu0 %v5912
    %5982 = vmatprep.mubr.bf16.mxu0 %v5793
    %5983 = vmatmul.mubr.bf16.gmra.mrb[0].mxu0 %v5792
    %v5984 = vpop.f32.mrb[0].mxu0
    %v5985 = vadd.f32 %v5796, %v5984
    %v5986 = vpop.f32.mrb[0].mxu0
    %v5987 = vpop.f32.mrb[0].mxu0
    %v5988 = vadd.f32 %v5796, %v5987
    %v5989 = vpop.f32.mrb[0].mxu0
    %5990 = vdwg.mxu0
    %5991 = vmatprep.subr.bf16.mxu0 0
    %5992 = vmatpush1.bf16.msra.mxu0 %v5913
    %5993 = vmatprep.subr.bf16.mxu0 0
    %5994 = vmatpush1.bf16.msra.mxu0 %v5914
    %5995 = vmatprep.subr.bf16.mxu0 0
    %5996 = vmatpush1.bf16.msra.mxu0 %v5915
    %5997 = vmatprep.subr.bf16.mxu0 0
    %5998 = vmatpush1.bf16.msra.mxu0 %v5916
    %5999 = vmatprep.subr.bf16.mxu0 0
    %6000 = vmatpush1.bf16.msra.mxu0 %v5917
    %6001 = vmatprep.subr.bf16.mxu0 0
    %6002 = vmatpush1.bf16.msra.mxu0 %v5918
    %6003 = vmatprep.subr.bf16.mxu0 0
    %6004 = vmatpush1.bf16.msra.mxu0 %v5919
    %6005 = vmatprep.subr.bf16.mxu0 0
    %6006 = vmatpush1.bf16.msra.mxu0 %v5920
    %6007 = vmatprep.subr.bf16.mxu0 0
    %6008 = vmatpush1.bf16.msra.mxu0 %v5921
    %6009 = vmatprep.subr.bf16.mxu0 0
    %6010 = vmatpush1.bf16.msra.mxu0 0
    %6011 = vmatprep.subr.bf16.mxu0 0
    %6012 = vmatpush1.bf16.msra.mxu0 0
    %6013 = vmatprep.subr.bf16.mxu0 0
    %6014 = vmatpush1.bf16.msra.mxu0 0
    %6015 = vmatprep.subr.bf16.mxu0 0
    %6016 = vmatpush1.bf16.msra.mxu0 0
    %6017 = vmatprep.subr.bf16.mxu0 0
    %6018 = vmatpush1.bf16.msra.mxu0 0
    %6019 = vmatprep.subr.bf16.mxu0 0
    %6020 = vmatpush1.bf16.msra.mxu0 0
    %6021 = vmatprep.subr.bf16.mxu0 0
    %6022 = vmatpush1.bf16.msra.mxu0 0
    %6023 = vmatprep.mubr.bf16.mxu0 %v5948
    %6024 = vmatmul.mubr.bf16.gmra.mrb[0].mxu0 %v5794
    %v6025 = vpop.f32.mrb[0].mxu0
    %v6026 = vadd.f32 %v5985, %v6025
    %v6027 = vpop.f32.mrb[0].mxu0
    %v6028 = vpop.f32.mrb[0].mxu0
    %v6029 = vadd.f32 %v5988, %v6028
    %v6030 = vpop.f32.mrb[0].mxu0
    %6031 = vdwg.mxu0
    %v6032 = vsel %vm3060, %v6026, -inf
    %6033 = vmax.xlane.f32.xlu0 %v6032
    %v6034 = vpop.xlane.xlu0 %6033
    %v6035 = vsel %vm3060, %v6029, -inf
    %6036 = vmax.xlane.f32.xlu0 %v6035
    %v6037 = vpop.xlane.xlu0 %6036
    %6040 = vrot.lane.b32.xlu0 %v6026, 16
    %v6041 = vpop.permute.xlu0 %6040
    %6042 = vrot.lane.b32.xlu0 %v6029, 16
    %v6043 = vpop.permute.xlu0 %6042
    %v6046 = vsel %vm935, %v3025, %v6041
    %v6047 = vsel %vm935, %v3028, %v6043
    %v6048 = vsel %vm197, %v6046, %v6034
    %v6049 = vsel %vm197, %v6047, %v6037
    %vm6050 = vcmask 171008
    %v6051 = vsel %vm6050, %v6048, 0.0
    %v6052 = vsel %vm6050, %v6049, 0.0
    %6053 = vst [vmem:[#allocation14] sm:$0xff] %v6051
    %6054 = vst [vmem:[#allocation14 + $0x8] sm:$0xff] %v6052
    // Predicated region
    $region70: #{tpu_custom_call.1} parent=1 // pred_check
      _
    $region71: #{tpu_custom_call.1} parent=1 // pred_check_branch
      %6056 = sbr.rel (0) target = $region73
    $region72: #{tpu_custom_call.1} parent=1 // pred_region
      %s6058 = ssub.s32 256, 256
      %6059 = vsyncadd [#allocation4], %s6058
      %s6060 = sshll.u32 [#allocation14], 4
      %s6061 = int_to_ptr.vmem [resolvable:$true] %s6060
      %6066 = dma.vmem_to_hbm [thread:$0]  %s6061, 256, %s10, [#allocation4], 128, 128, 8
    $region73: #{tpu_custom_call.1} parent=1 // pred_fallthru
      _
    // Predicated region
    $region74: #{tpu_custom_call.1} parent=1 // pred_check
      _
    $region75: #{tpu_custom_call.1} parent=1 // pred_check_branch
      %6068 = sbr.rel (0) target = $region77
    $region76: #{tpu_custom_call.1} parent=1 // pred_region
      %6069 = dma.done [#allocation4], 256
    $region77: #{tpu_custom_call.1} parent=1 // pred_fallthru
      _
    %6070 = vsyncpa [#allocation3], 1
    %6071 = vsyncpa [#allocation6], 1
    %6072 = vsyncpa [#allocation9], 1
    %6073 = vsyncpa [#allocation12], 1
    %6074 = vsyncpa [#allocation4], 1

</llo_original>
